<compile_context>
chip_gen: v7x
topology: tpu7x:2x2x1
jax: 0.10.0
libtpu: 0.0.40
codegen_flags: <defaults>
</compile_context>

<pallas_src>
import numpy as np
import jax
import jax.numpy as jnp
from jax.experimental import pallas as pl
from jax.experimental.pallas import tpu as pltpu

BOARD = 12
D_MODEL = 144               # 12 * 12
FF_DIM = 2048               # TransformerEncoderLayer default dim_feedforward
POOL_OUT = 2048             # AdaptiveAvgPool1d(2048)
ACTION_SIZE = 12 * 12 * 13  # 1872
PAD_N = 2048                # dense2+value padded to 16*128 lanes (stacks with dense3)
NUM_LAYERS = 2
LN_EPS = 1e-5
TN = 1024                   # head weight streaming tile width (lane-dense)
N_TILES = PAD_N // TN       # 2 tiles per head matmul

PARAM_ORDER = ("wq", "bq", "wk", "bk", "wv", "bv", "wo", "bo",
               "ln1_g", "ln1_b", "w1", "b1", "w2", "b2", "ln2_g", "ln2_b")


# --------------------------- Pallas kernels ---------------------------------

def _encoder_d1_kernel(x_ref, wq, bq, wk, bk, wv, bv, wo, bo,
                       ln1g, ln1b, w1, b1, w2, b2, ln2g, ln2b,
                       d1w, d1b, h1_ref):
    """Both transformer encoder layers + (pool-folded) dense1+relu, one kernel.
    Per-layer params are stacked on axis 0; FF weights are bf16 fed natively to the MXU."""
    x = x_ref[...]                                                   # (B, D) f32
    for l in range(NUM_LAYERS):
        q = jnp.dot(x, wq[l], preferred_element_type=jnp.float32) + bq[l]
        k = jnp.dot(x, wk[l], preferred_element_type=jnp.float32) + bk[l]
        v = jnp.dot(x, wv[l], preferred_element_type=jnp.float32) + bv[l]

        # nhead == d_model  ->  head_dim == 1, scale = 1/sqrt(1) = 1.
        # scores[i, j, h] = q[i, h] * k[j, h]; softmax over keys j (no p materialized).
        scores = q[:, None, :] * k[None, :, :]                       # (B, B, D)
        m = jnp.max(scores, axis=1, keepdims=True)
        e = jnp.exp(scores - m)
        attn = jnp.sum(e * v[None, :, :], axis=1) / jnp.sum(e, axis=1)   # (B, D)
        attn = jnp.dot(attn, wo[l], preferred_element_type=jnp.float32) + bo[l]

        # residual + LayerNorm 1 (post-norm, PyTorch default norm_first=False)
        h = x + attn
        mu = jnp.mean(h, axis=1, keepdims=True)
        var = jnp.mean((h - mu) ** 2, axis=1, keepdims=True)
        h = (h - mu) * jax.lax.rsqrt(var + LN_EPS) * ln1g[l] + ln1b[l]

        # feed-forward (relu); bf16 weights * bf16 activations -> f32 accumulation
        ff = jnp.dot(h.astype(jnp.bfloat16), w1[l],
                     preferred_element_type=jnp.float32) + b1[l]
        ff = jnp.maximum(ff, 0.0)
        ff = jnp.dot(ff.astype(jnp.bfloat16), w2[l],
                     preferred_element_type=jnp.float32) + b2[l]

        # residual + LayerNorm 2
        h2 = h + ff
        mu2 = jnp.mean(h2, axis=1, keepdims=True)
        var2 = jnp.mean((h2 - mu2) ** 2, axis=1, keepdims=True)
        x = (h2 - mu2) * jax.lax.rsqrt(var2 + LN_EPS) * ln2g[l] + ln2b[l]

    # Epilogue: dense1 with AdaptiveAvgPool folded into the weight (f32, exact), relu,
    # h1 emitted in bf16 (ready for the MXU in the head kernel).
    h1 = jnp.dot(x, d1w[...], preferred_element_type=jnp.float32) + d1b[...]
    h1_ref[...] = jnp.maximum(h1, 0.0).astype(h1_ref.dtype)


def encoder_dense1(x, stacked, d1_w, d1_b):
    B = x.shape[0]
    args = (x,) + tuple(stacked[k] for k in PARAM_ORDER) + (d1_w, d1_b)
    return pl.pallas_call(
        _encoder_d1_kernel,
        out_shape=jax.ShapeDtypeStruct((B, POOL_OUT), jnp.bfloat16),
        compiler_params=pltpu.CompilerParams(vmem_limit_bytes=32 * 1024 * 1024),
    )(*args)


def _head_kernel(h1_ref, w_ref, b_ref, pi_ref, v_ref, h2_ref):
    """4-step grid: steps 0-1 = dense3 tiles, steps 2-3 = dense2+value tiles,
    last step also runs the log-softmax / tanh finalize.  Weight tiles arrive as
    bf16 (2048, TN) blocks of the stacked (2, 2048, 2048) weight; single K block."""
    s = pl.program_id(0)
    n = s % N_TILES
    col0 = pl.multiple_of(n * TN, TN)

    @pl.when(s < N_TILES)                          # phase 0: dense3 (+bias, relu)
    def _():
        acc = jnp.dot(h1_ref[...], w_ref[0],
                      preferred_element_type=jnp.float32) + b_ref[0]
        h2_ref[:, pl.ds(col0, TN)] = jnp.maximum(acc, 0.0).astype(h2_ref.dtype)

    @pl.when(s >= N_TILES)                         # phase 1: dense2 + value head
    def _():
        acc = jnp.dot(h2_ref[...], w_ref[0],
                      preferred_element_type=jnp.float32) + b_ref[0]
        pi_ref[:, pl.ds(col0, TN)] = acc           # stage z in the resident output block

    @pl.when(s == pl.num_programs(0) - 1)          # finalize: log-softmax + tanh(value)
    def _():
        z = pi_ref[...]                                              # (B, PAD_N) f32
        col = jax.lax.broadcasted_iota(jnp.int32, z.shape, 1)
        valid = col < ACTION_SIZE
        logits = jnp.where(valid, z, jnp.float32(-1e30))
        m = jnp.max(logits, axis=1, keepdims=True)
        e = jnp.where(valid, jnp.exp(logits - m), 0.0)
        ssum = jnp.sum(e, axis=1, keepdims=True)
        pi_ref[...] = logits - m - jnp.log(ssum)                     # pad lanes sliced outside
        vcol = jnp.where(col == ACTION_SIZE, z, 0.0)
        v_ref[...] = jnp.tanh(jnp.sum(vcol, axis=1, keepdims=True))


def head_forward(h1, w_big, b_big):
    B = h1.shape[0]
    return pl.pallas_call(
        _head_kernel,
        grid=(2 * N_TILES,),
        in_specs=[pl.BlockSpec((B, FF_DIM), lambda s: (0, 0)),
                  pl.BlockSpec((1, FF_DIM, TN), lambda s: (s // N_TILES, 0, s % N_TILES)),
                  pl.BlockSpec((1, 1, TN), lambda s: (s // N_TILES, 0, s % N_TILES))],
        out_specs=(pl.BlockSpec((B, PAD_N), lambda s: (0, 0)),
                   pl.BlockSpec((B, 1), lambda s: (0, 0))),
        out_shape=(jax.ShapeDtypeStruct((B, PAD_N), jnp.float32),
                   jax.ShapeDtypeStruct((B, 1), jnp.float32)),
        scratch_shapes=[pltpu.VMEM((B, FF_DIM), jnp.bfloat16)],
        compiler_params=pltpu.CompilerParams(
            dimension_semantics=("arbitrary",),
            vmem_limit_bytes=32 * 1024 * 1024),
    )(h1, w_big, b_big)


# --------------------------- constants / params -----------------------------

def positional_encoding_2d(h, w, org_channels=1):
    """tatp22-style 2D sinusoidal positional encoding, returned as (1, h, w, org_channels)."""
    channels = int(np.ceil(org_channels / 4) * 2)
    inv_freq = 1.0 / (10000.0 ** (np.arange(0, channels, 2, dtype=np.float64) / channels))
    pos_x = np.arange(h, dtype=np.float64)
    pos_y = np.arange(w, dtype=np.float64)
    sin_x = np.einsum("i,j->ij", pos_x, inv_freq)
    sin_y = np.einsum("i,j->ij", pos_y, inv_freq)
    emb_x = np.concatenate([np.sin(sin_x), np.cos(sin_x)], axis=-1)[:, None, :]
    emb_y = np.concatenate([np.sin(sin_y), np.cos(sin_y)], axis=-1)[None, :, :]
    emb = np.zeros((h, w, 2 * channels), dtype=np.float64)
    emb[:, :, :channels] = emb_x
    emb[:, :, channels:2 * channels] = emb_y
    return jnp.asarray(emb[None, :, :, :org_channels], dtype=jnp.float32)


def adaptive_avg_pool1d_matrix(l_in, l_out):
    """P such that x @ P == nn.AdaptiveAvgPool1d(l_out)(x) for x of shape (C, l_in)."""
    P = np.zeros((l_in, l_out), dtype=np.float32)
    for i in range(l_out):
        start = (i * l_in) // l_out
        end = -((-(i + 1) * l_in) // l_out)  # ceil((i+1)*l_in/l_out)
        P[start:end, i] = 1.0 / (end - start)
    return jnp.asarray(P)


def init_params(key):
    """Random model weights.  Large (streamed) matrices are held in bfloat16; the
    plain-JAX reference uses the exact same (quantized) values."""
    def nrm(k, shape, scale=0.05, dtype=jnp.float32):
        return (scale * jax.random.normal(k, shape, dtype=jnp.float32)).astype(dtype)

    keys = iter(jax.random.split(key, 64))
    layers = []
    for _ in range(NUM_LAYERS):
        layers.append(dict(
            wq=nrm(next(keys), (D_MODEL, D_MODEL)), bq=nrm(next(keys), (1, D_MODEL)),
            wk=nrm(next(keys), (D_MODEL, D_MODEL)), bk=nrm(next(keys), (1, D_MODEL)),
            wv=nrm(next(keys), (D_MODEL, D_MODEL)), bv=nrm(next(keys), (1, D_MODEL)),
            wo=nrm(next(keys), (D_MODEL, D_MODEL)), bo=nrm(next(keys), (1, D_MODEL)),
            ln1_g=jnp.ones((1, D_MODEL), jnp.float32),
            ln1_b=jnp.zeros((1, D_MODEL), jnp.float32),
            w1=nrm(next(keys), (D_MODEL, FF_DIM), dtype=jnp.bfloat16),
            b1=nrm(next(keys), (1, FF_DIM)),
            w2=nrm(next(keys), (FF_DIM, D_MODEL), dtype=jnp.bfloat16),
            b2=nrm(next(keys), (1, D_MODEL)),
            ln2_g=jnp.ones((1, D_MODEL), jnp.float32),
            ln2_b=jnp.zeros((1, D_MODEL), jnp.float32),
        ))
    head = dict(
        d1_w=nrm(next(keys), (POOL_OUT, 2048), dtype=jnp.bfloat16), d1_b=nrm(next(keys), (1, 2048)),
        d3_w=nrm(next(keys), (2048, 2048), dtype=jnp.bfloat16), d3_b=nrm(next(keys), (1, 2048)),
        d2_w=nrm(next(keys), (2048, ACTION_SIZE), dtype=jnp.bfloat16), d2_b=nrm(next(keys), (1, ACTION_SIZE)),
        out_w=nrm(next(keys), (2048, 1), dtype=jnp.bfloat16), out_b=nrm(next(keys), (1, 1)),
    )
    return dict(layers=layers, head=head)


def prepare_weights(params, pool_mat):
    """One-time weight prep: stack transformer layers, fold the adaptive-avg-pool into
    dense1 (kept f32 so the fold is exact), fuse dense2 + value head and stack it with
    dense3 into one streamable (2, 2048, 2048) bf16 tensor."""
    hd = params["head"]
    d1_eff = jnp.dot(pool_mat, hd["d1_w"].astype(jnp.float32))       # (144, 2048) f32
    d2v_w = jnp.zeros((FF_DIM, PAD_N), jnp.bfloat16)
    d2v_w = d2v_w.at[:, :ACTION_SIZE].set(hd["d2_w"])
    d2v_w = d2v_w.at[:, ACTION_SIZE:ACTION_SIZE + 1].set(hd["out_w"])
    d2v_b = jnp.zeros((1, PAD_N), jnp.float32)
    d2v_b = d2v_b.at[:, :ACTION_SIZE].set(hd["d2_b"])
    d2v_b = d2v_b.at[:, ACTION_SIZE:ACTION_SIZE + 1].set(hd["out_b"])
    w_big = jnp.stack([hd["d3_w"], d2v_w])                           # (2, 2048, 2048) bf16
    b_big = jnp.stack([hd["d3_b"], d2v_b])                           # (2, 1, 2048) f32
    stacked = {k: jnp.stack([lp[k] for lp in params["layers"]]) for k in PARAM_ORDER}
    return dict(encoder=stacked, d1_w=d1_eff, d1_b=hd["d1_b"], w_big=w_big, b_big=b_big)


# --------------------------- forward (Pallas) --------------------------------

def forward(s, w, pe):
    B = s.shape[0]
    x = (s.reshape(B, BOARD, BOARD, 1) + pe).reshape(B, D_MODEL)     # pos-enc (glue)
    h1 = encoder_dense1(x, w["encoder"], w["d1_w"], w["d1_b"])       # (B, 2048) bf16
    pi_padded, v = head_forward(h1, w["w_big"], w["b_big"])          # fused d3+d2v+finalize
    return pi_padded[:, :ACTION_SIZE], v


# --------------------------- plain-JAX reference -----------------------------

def reference_forward(s, params, pe, pool_mat):
    B = s.shape[0]
    x = (s.reshape(B, BOARD, BOARD, 1) + pe).reshape(B, D_MODEL)
    for p in params["layers"]:
        q = x @ p["wq"] + p["bq"]
        k = x @ p["wk"] + p["bk"]
        v = x @ p["wv"] + p["bv"]
        scores = q[:, None, :] * k[None, :, :]
        pa = jax.nn.softmax(scores, axis=1)
        attn = jnp.sum(pa * v[None, :, :], axis=1) @ p["wo"] + p["bo"]
        h = x + attn
        h = (h - h.mean(1, keepdims=True)) * jax.lax.rsqrt(h.var(1, keepdims=True) + LN_EPS) \
            * p["ln1_g"] + p["ln1_b"]
        ff = jax.nn.relu(jnp.dot(h.astype(jnp.bfloat16), p["w1"],
                                 preferred_element_type=jnp.float32) + p["b1"])
        ff = jnp.dot(ff.astype(jnp.bfloat16), p["w2"],
                     preferred_element_type=jnp.float32) + p["b2"]
        h2 = h + ff
        x = (h2 - h2.mean(1, keepdims=True)) * jax.lax.rsqrt(h2.var(1, keepdims=True) + LN_EPS) \
            * p["ln2_g"] + p["ln2_b"]
    hd = params["head"]
    xp = x @ pool_mat
    h1 = jax.nn.relu(xp @ hd["d1_w"].astype(jnp.float32) + hd["d1_b"])
    h2 = jax.nn.relu(jnp.dot(h1.astype(jnp.bfloat16), hd["d3_w"],
                             preferred_element_type=jnp.float32) + hd["d3_b"])
    pi = jnp.dot(h2.astype(jnp.bfloat16), hd["d2_w"],
                 preferred_element_type=jnp.float32) + hd["d2_b"]
    v = jnp.tanh(jnp.dot(h2.astype(jnp.bfloat16), hd["out_w"],
                         preferred_element_type=jnp.float32) + hd["out_b"])
    return jax.nn.log_softmax(pi, axis=1), v


# --------------------------------- main ---------------------------------------

if __name__ == "__main__":
    key = jax.random.PRNGKey(0)
    k_param, k_data = jax.random.split(key)

    params = init_params(k_param)
    pe = positional_encoding_2d(BOARD, BOARD, 1)
    pool_mat = adaptive_avg_pool1d_matrix(D_MODEL, POOL_OUT)
    weights = prepare_weights(params, pool_mat)

    B = 8  # batch of boards (== transformer sequence length under PyTorch 2D-input rules)
    s = jax.random.normal(k_data, (B, BOARD, BOARD), dtype=jnp.float32)

    logp, v = forward(s, weights, pe)
    logp = jax.block_until_ready(logp)
    v = jax.block_until_ready(v)
    assert logp.shape == (B, ACTION_SIZE) and v.shape == (B, 1)

    # sanity check against a plain-JAX reference using the same bf16 weights/activations
    ref_logp, ref_v = reference_forward(s, params, pe, pool_mat)
    assert jnp.allclose(logp, ref_logp, atol=5e-2, rtol=5e-2), \
        float(jnp.max(jnp.abs(logp - ref_logp)))
    assert jnp.allclose(v, ref_v, atol=5e-2, rtol=5e-2), \
        float(jnp.max(jnp.abs(v - ref_v)))

    print("KERNEL_OK")
</pallas_src>

<mosaic_0001>
module attributes {stable_mosaic.version = 11 : i64} {
  func.func @_encoder_d1_kernel(%arg0: memref<8x144xf32, #tpu.memory_space<vmem>>, %arg1: memref<2x144x144xf32, #tpu.memory_space<vmem>>, %arg2: memref<2x1x144xf32, #tpu.memory_space<vmem>>, %arg3: memref<2x144x144xf32, #tpu.memory_space<vmem>>, %arg4: memref<2x1x144xf32, #tpu.memory_space<vmem>>, %arg5: memref<2x144x144xf32, #tpu.memory_space<vmem>>, %arg6: memref<2x1x144xf32, #tpu.memory_space<vmem>>, %arg7: memref<2x144x144xf32, #tpu.memory_space<vmem>>, %arg8: memref<2x1x144xf32, #tpu.memory_space<vmem>>, %arg9: memref<2x1x144xf32, #tpu.memory_space<vmem>>, %arg10: memref<2x1x144xf32, #tpu.memory_space<vmem>>, %arg11: memref<2x144x2048xbf16, #tpu.memory_space<vmem>>, %arg12: memref<2x1x2048xf32, #tpu.memory_space<vmem>>, %arg13: memref<2x2048x144xbf16, #tpu.memory_space<vmem>>, %arg14: memref<2x1x144xf32, #tpu.memory_space<vmem>>, %arg15: memref<2x1x144xf32, #tpu.memory_space<vmem>>, %arg16: memref<2x1x144xf32, #tpu.memory_space<vmem>>, %arg17: memref<144x2048xf32, #tpu.memory_space<vmem>>, %arg18: memref<1x2048xf32, #tpu.memory_space<vmem>>, %arg19: memref<8x2048xbf16, #tpu.memory_space<vmem>>) attributes {dimension_semantics = [], scalar_prefetch = 0 : i64, scratch_operands = 0 : i64, tpu.core_type = #tpu.core_type<tc>} {
    %c0 = arith.constant 0 : index
    %c0_0 = arith.constant 0 : index
    %0 = vector.load %arg0[%c0, %c0_0] : memref<8x144xf32, #tpu.memory_space<vmem>>, vector<8x144xf32>
    %c0_1 = arith.constant 0 : index
    %c0_2 = arith.constant 0 : index
    %c0_3 = arith.constant 0 : index
    %1 = vector.load %arg1[%c0_1, %c0_2, %c0_3] : memref<2x144x144xf32, #tpu.memory_space<vmem>>, vector<1x144x144xf32>
    %2 = vector.shape_cast %1 : vector<1x144x144xf32> to vector<144x144xf32>
    %cst = arith.constant dense<0.000000e+00> : vector<8x144xf32>
    %3 = tpu.matmul %0, %2, %cst {dimension_numbers = #tpu.dot_dimension_numbers<[1], [0], [0], [1], [0, 0, 1, 1], [], []>} : vector<8x144xf32>, vector<144x144xf32>, vector<8x144xf32> -> vector<8x144xf32>
    %c0_4 = arith.constant 0 : index
    %c0_5 = arith.constant 0 : index
    %c0_6 = arith.constant 0 : index
    %4 = vector.load %arg2[%c0_4, %c0_5, %c0_6] : memref<2x1x144xf32, #tpu.memory_space<vmem>>, vector<1x1x144xf32>
    %5 = vector.shape_cast %4 : vector<1x1x144xf32> to vector<1x144xf32>
    %6 = vector.broadcast %5 : vector<1x144xf32> to vector<8x144xf32>
    %7 = arith.addf %3, %6 : vector<8x144xf32>
    %c0_7 = arith.constant 0 : index
    %c0_8 = arith.constant 0 : index
    %c0_9 = arith.constant 0 : index
    %8 = vector.load %arg3[%c0_7, %c0_8, %c0_9] : memref<2x144x144xf32, #tpu.memory_space<vmem>>, vector<1x144x144xf32>
    %9 = vector.shape_cast %8 : vector<1x144x144xf32> to vector<144x144xf32>
    %cst_10 = arith.constant dense<0.000000e+00> : vector<8x144xf32>
    %10 = tpu.matmul %0, %9, %cst_10 {dimension_numbers = #tpu.dot_dimension_numbers<[1], [0], [0], [1], [0, 0, 1, 1], [], []>} : vector<8x144xf32>, vector<144x144xf32>, vector<8x144xf32> -> vector<8x144xf32>
    %c0_11 = arith.constant 0 : index
    %c0_12 = arith.constant 0 : index
    %c0_13 = arith.constant 0 : index
    %11 = vector.load %arg4[%c0_11, %c0_12, %c0_13] : memref<2x1x144xf32, #tpu.memory_space<vmem>>, vector<1x1x144xf32>
    %12 = vector.shape_cast %11 : vector<1x1x144xf32> to vector<1x144xf32>
    %13 = vector.broadcast %12 : vector<1x144xf32> to vector<8x144xf32>
    %14 = arith.addf %10, %13 : vector<8x144xf32>
    %c0_14 = arith.constant 0 : index
    %c0_15 = arith.constant 0 : index
    %c0_16 = arith.constant 0 : index
    %15 = vector.load %arg5[%c0_14, %c0_15, %c0_16] : memref<2x144x144xf32, #tpu.memory_space<vmem>>, vector<1x144x144xf32>
    %16 = vector.shape_cast %15 : vector<1x144x144xf32> to vector<144x144xf32>
    %cst_17 = arith.constant dense<0.000000e+00> : vector<8x144xf32>
    %17 = tpu.matmul %0, %16, %cst_17 {dimension_numbers = #tpu.dot_dimension_numbers<[1], [0], [0], [1], [0, 0, 1, 1], [], []>} : vector<8x144xf32>, vector<144x144xf32>, vector<8x144xf32> -> vector<8x144xf32>
    %c0_18 = arith.constant 0 : index
    %c0_19 = arith.constant 0 : index
    %c0_20 = arith.constant 0 : index
    %18 = vector.load %arg6[%c0_18, %c0_19, %c0_20] : memref<2x1x144xf32, #tpu.memory_space<vmem>>, vector<1x1x144xf32>
    %19 = vector.shape_cast %18 : vector<1x1x144xf32> to vector<1x144xf32>
    %20 = vector.broadcast %19 : vector<1x144xf32> to vector<8x144xf32>
    %21 = arith.addf %17, %20 : vector<8x144xf32>
    %22 = vector.shape_cast %7 : vector<8x144xf32> to vector<8x1x144xf32>
    %23 = vector.shape_cast %14 : vector<8x144xf32> to vector<1x8x144xf32>
    %24 = vector.broadcast %22 : vector<8x1x144xf32> to vector<8x8x144xf32>
    %25 = vector.broadcast %23 : vector<1x8x144xf32> to vector<8x8x144xf32>
    %26 = arith.mulf %24, %25 : vector<8x8x144xf32>
    %cst_21 = arith.constant dense<0xFF800000> : vector<8x144xf32>
    %27 = vector.multi_reduction <maximumf>, %26, %cst_21 [1] : vector<8x8x144xf32> to vector<8x144xf32>
    %28 = vector.shape_cast %27 : vector<8x144xf32> to vector<8x1x144xf32>
    %29 = vector.broadcast %28 : vector<8x1x144xf32> to vector<8x8x144xf32>
    %30 = arith.subf %26, %29 : vector<8x8x144xf32>
    %31 = math.exp %30 : vector<8x8x144xf32>
    %32 = vector.shape_cast %21 : vector<8x144xf32> to vector<1x8x144xf32>
    %33 = vector.broadcast %32 : vector<1x8x144xf32> to vector<8x8x144xf32>
    %34 = arith.mulf %31, %33 : vector<8x8x144xf32>
    %cst_22 = arith.constant dense<0.000000e+00> : vector<8x144xf32>
    %35 = vector.multi_reduction <add>, %34, %cst_22 [1] : vector<8x8x144xf32> to vector<8x144xf32>
    %cst_23 = arith.constant dense<0.000000e+00> : vector<8x144xf32>
    %36 = vector.multi_reduction <add>, %31, %cst_23 [1] : vector<8x8x144xf32> to vector<8x144xf32>
    %37 = arith.divf %35, %36 : vector<8x144xf32>
    %c0_24 = arith.constant 0 : index
    %c0_25 = arith.constant 0 : index
    %c0_26 = arith.constant 0 : index
    %38 = vector.load %arg7[%c0_24, %c0_25, %c0_26] : memref<2x144x144xf32, #tpu.memory_space<vmem>>, vector<1x144x144xf32>
    %39 = vector.shape_cast %38 : vector<1x144x144xf32> to vector<144x144xf32>
    %cst_27 = arith.constant dense<0.000000e+00> : vector<8x144xf32>
    %40 = tpu.matmul %37, %39, %cst_27 {dimension_numbers = #tpu.dot_dimension_numbers<[1], [0], [0], [1], [0, 0, 1, 1], [], []>} : vector<8x144xf32>, vector<144x144xf32>, vector<8x144xf32> -> vector<8x144xf32>
    %c0_28 = arith.constant 0 : index
    %c0_29 = arith.constant 0 : index
    %c0_30 = arith.constant 0 : index
    %41 = vector.load %arg8[%c0_28, %c0_29, %c0_30] : memref<2x1x144xf32, #tpu.memory_space<vmem>>, vector<1x1x144xf32>
    %42 = vector.shape_cast %41 : vector<1x1x144xf32> to vector<1x144xf32>
    %43 = vector.broadcast %42 : vector<1x144xf32> to vector<8x144xf32>
    %44 = arith.addf %40, %43 : vector<8x144xf32>
    %45 = arith.addf %0, %44 : vector<8x144xf32>
    %cst_31 = arith.constant dense<0.000000e+00> : vector<8xf32>
    %46 = vector.multi_reduction <add>, %45, %cst_31 [1] : vector<8x144xf32> to vector<8xf32>
    %47 = vector.shape_cast %46 : vector<8xf32> to vector<8x1xf32>
    %cst_32 = arith.constant 1.440000e+02 : f32
    %48 = vector.broadcast %cst_32 : f32 to vector<8x1xf32>
    %49 = arith.divf %47, %48 : vector<8x1xf32>
    %50 = vector.broadcast %49 : vector<8x1xf32> to vector<8x144xf32>
    %51 = arith.subf %45, %50 : vector<8x144xf32>
    %52 = arith.mulf %51, %51 : vector<8x144xf32>
    %cst_33 = arith.constant dense<0.000000e+00> : vector<8xf32>
    %53 = vector.multi_reduction <add>, %52, %cst_33 [1] : vector<8x144xf32> to vector<8xf32>
    %54 = vector.shape_cast %53 : vector<8xf32> to vector<8x1xf32>
    %cst_34 = arith.constant 1.440000e+02 : f32
    %55 = vector.broadcast %cst_34 : f32 to vector<8x1xf32>
    %56 = arith.divf %54, %55 : vector<8x1xf32>
    %57 = vector.broadcast %49 : vector<8x1xf32> to vector<8x144xf32>
    %58 = arith.subf %45, %57 : vector<8x144xf32>
    %cst_35 = arith.constant 9.99999974E-6 : f32
    %59 = vector.broadcast %cst_35 : f32 to vector<8x1xf32>
    %60 = arith.addf %56, %59 : vector<8x1xf32>
    %61 = math.rsqrt %60 : vector<8x1xf32>
    %62 = vector.broadcast %61 : vector<8x1xf32> to vector<8x144xf32>
    %63 = arith.mulf %58, %62 : vector<8x144xf32>
    %c0_36 = arith.constant 0 : index
    %c0_37 = arith.constant 0 : index
    %c0_38 = arith.constant 0 : index
    %64 = vector.load %arg9[%c0_36, %c0_37, %c0_38] : memref<2x1x144xf32, #tpu.memory_space<vmem>>, vector<1x1x144xf32>
    %65 = vector.shape_cast %64 : vector<1x1x144xf32> to vector<1x144xf32>
    %66 = vector.broadcast %65 : vector<1x144xf32> to vector<8x144xf32>
    %67 = arith.mulf %63, %66 : vector<8x144xf32>
    %c0_39 = arith.constant 0 : index
    %c0_40 = arith.constant 0 : index
    %c0_41 = arith.constant 0 : index
    %68 = vector.load %arg10[%c0_39, %c0_40, %c0_41] : memref<2x1x144xf32, #tpu.memory_space<vmem>>, vector<1x1x144xf32>
    %69 = vector.shape_cast %68 : vector<1x1x144xf32> to vector<1x144xf32>
    %70 = vector.broadcast %69 : vector<1x144xf32> to vector<8x144xf32>
    %71 = arith.addf %67, %70 : vector<8x144xf32>
    %72 = arith.truncf %71 : vector<8x144xf32> to vector<8x144xbf16>
    %c0_42 = arith.constant 0 : index
    %c0_43 = arith.constant 0 : index
    %c0_44 = arith.constant 0 : index
    %73 = vector.load %arg11[%c0_42, %c0_43, %c0_44] : memref<2x144x2048xbf16, #tpu.memory_space<vmem>>, vector<1x144x2048xbf16>
    %74 = vector.shape_cast %73 : vector<1x144x2048xbf16> to vector<144x2048xbf16>
    %cst_45 = arith.constant dense<0.000000e+00> : vector<8x2048xf32>
    %75 = tpu.matmul %72, %74, %cst_45 {dimension_numbers = #tpu.dot_dimension_numbers<[1], [0], [0], [1], [0, 0, 1, 1], [], []>} : vector<8x144xbf16>, vector<144x2048xbf16>, vector<8x2048xf32> -> vector<8x2048xf32>
    %c0_46 = arith.constant 0 : index
    %c0_47 = arith.constant 0 : index
    %c0_48 = arith.constant 0 : index
    %76 = vector.load %arg12[%c0_46, %c0_47, %c0_48] : memref<2x1x2048xf32, #tpu.memory_space<vmem>>, vector<1x1x2048xf32>
    %77 = vector.shape_cast %76 : vector<1x1x2048xf32> to vector<1x2048xf32>
    %78 = vector.broadcast %77 : vector<1x2048xf32> to vector<8x2048xf32>
    %79 = arith.addf %75, %78 : vector<8x2048xf32>
    %cst_49 = arith.constant 0.000000e+00 : f32
    %80 = vector.broadcast %cst_49 : f32 to vector<8x2048xf32>
    %81 = arith.maximumf %79, %80 : vector<8x2048xf32>
    %82 = arith.truncf %81 : vector<8x2048xf32> to vector<8x2048xbf16>
    %c0_50 = arith.constant 0 : index
    %c0_51 = arith.constant 0 : index
    %c0_52 = arith.constant 0 : index
    %83 = vector.load %arg13[%c0_50, %c0_51, %c0_52] : memref<2x2048x144xbf16, #tpu.memory_space<vmem>>, vector<1x2048x144xbf16>
    %84 = vector.shape_cast %83 : vector<1x2048x144xbf16> to vector<2048x144xbf16>
    %cst_53 = arith.constant dense<0.000000e+00> : vector<8x144xf32>
    %85 = tpu.matmul %82, %84, %cst_53 {dimension_numbers = #tpu.dot_dimension_numbers<[1], [0], [0], [1], [0, 0, 1, 1], [], []>} : vector<8x2048xbf16>, vector<2048x144xbf16>, vector<8x144xf32> -> vector<8x144xf32>
    %c0_54 = arith.constant 0 : index
    %c0_55 = arith.constant 0 : index
    %c0_56 = arith.constant 0 : index
    %86 = vector.load %arg14[%c0_54, %c0_55, %c0_56] : memref<2x1x144xf32, #tpu.memory_space<vmem>>, vector<1x1x144xf32>
    %87 = vector.shape_cast %86 : vector<1x1x144xf32> to vector<1x144xf32>
    %88 = vector.broadcast %87 : vector<1x144xf32> to vector<8x144xf32>
    %89 = arith.addf %85, %88 : vector<8x144xf32>
    %90 = arith.addf %71, %89 : vector<8x144xf32>
    %cst_57 = arith.constant dense<0.000000e+00> : vector<8xf32>
    %91 = vector.multi_reduction <add>, %90, %cst_57 [1] : vector<8x144xf32> to vector<8xf32>
    %92 = vector.shape_cast %91 : vector<8xf32> to vector<8x1xf32>
    %cst_58 = arith.constant 1.440000e+02 : f32
    %93 = vector.broadcast %cst_58 : f32 to vector<8x1xf32>
    %94 = arith.divf %92, %93 : vector<8x1xf32>
    %95 = vector.broadcast %94 : vector<8x1xf32> to vector<8x144xf32>
    %96 = arith.subf %90, %95 : vector<8x144xf32>
    %97 = arith.mulf %96, %96 : vector<8x144xf32>
    %cst_59 = arith.constant dense<0.000000e+00> : vector<8xf32>
    %98 = vector.multi_reduction <add>, %97, %cst_59 [1] : vector<8x144xf32> to vector<8xf32>
    %99 = vector.shape_cast %98 : vector<8xf32> to vector<8x1xf32>
    %cst_60 = arith.constant 1.440000e+02 : f32
    %100 = vector.broadcast %cst_60 : f32 to vector<8x1xf32>
    %101 = arith.divf %99, %100 : vector<8x1xf32>
    %102 = vector.broadcast %94 : vector<8x1xf32> to vector<8x144xf32>
    %103 = arith.subf %90, %102 : vector<8x144xf32>
    %cst_61 = arith.constant 9.99999974E-6 : f32
    %104 = vector.broadcast %cst_61 : f32 to vector<8x1xf32>
    %105 = arith.addf %101, %104 : vector<8x1xf32>
    %106 = math.rsqrt %105 : vector<8x1xf32>
    %107 = vector.broadcast %106 : vector<8x1xf32> to vector<8x144xf32>
    %108 = arith.mulf %103, %107 : vector<8x144xf32>
    %c0_62 = arith.constant 0 : index
    %c0_63 = arith.constant 0 : index
    %c0_64 = arith.constant 0 : index
    %109 = vector.load %arg15[%c0_62, %c0_63, %c0_64] : memref<2x1x144xf32, #tpu.memory_space<vmem>>, vector<1x1x144xf32>
    %110 = vector.shape_cast %109 : vector<1x1x144xf32> to vector<1x144xf32>
    %111 = vector.broadcast %110 : vector<1x144xf32> to vector<8x144xf32>
    %112 = arith.mulf %108, %111 : vector<8x144xf32>
    %c0_65 = arith.constant 0 : index
    %c0_66 = arith.constant 0 : index
    %c0_67 = arith.constant 0 : index
    %113 = vector.load %arg16[%c0_65, %c0_66, %c0_67] : memref<2x1x144xf32, #tpu.memory_space<vmem>>, vector<1x1x144xf32>
    %114 = vector.shape_cast %113 : vector<1x1x144xf32> to vector<1x144xf32>
    %115 = vector.broadcast %114 : vector<1x144xf32> to vector<8x144xf32>
    %116 = arith.addf %112, %115 : vector<8x144xf32>
    %c1 = arith.constant 1 : index
    %c0_68 = arith.constant 0 : index
    %c0_69 = arith.constant 0 : index
    %117 = vector.load %arg1[%c1, %c0_68, %c0_69] : memref<2x144x144xf32, #tpu.memory_space<vmem>>, vector<1x144x144xf32>
    %118 = vector.shape_cast %117 : vector<1x144x144xf32> to vector<144x144xf32>
    %cst_70 = arith.constant dense<0.000000e+00> : vector<8x144xf32>
    %119 = tpu.matmul %116, %118, %cst_70 {dimension_numbers = #tpu.dot_dimension_numbers<[1], [0], [0], [1], [0, 0, 1, 1], [], []>} : vector<8x144xf32>, vector<144x144xf32>, vector<8x144xf32> -> vector<8x144xf32>
    %c1_71 = arith.constant 1 : index
    %c0_72 = arith.constant 0 : index
    %c0_73 = arith.constant 0 : index
    %120 = vector.load %arg2[%c1_71, %c0_72, %c0_73] : memref<2x1x144xf32, #tpu.memory_space<vmem>>, vector<1x1x144xf32>
    %121 = vector.shape_cast %120 : vector<1x1x144xf32> to vector<1x144xf32>
    %122 = vector.broadcast %121 : vector<1x144xf32> to vector<8x144xf32>
    %123 = arith.addf %119, %122 : vector<8x144xf32>
    %c1_74 = arith.constant 1 : index
    %c0_75 = arith.constant 0 : index
    %c0_76 = arith.constant 0 : index
    %124 = vector.load %arg3[%c1_74, %c0_75, %c0_76] : memref<2x144x144xf32, #tpu.memory_space<vmem>>, vector<1x144x144xf32>
    %125 = vector.shape_cast %124 : vector<1x144x144xf32> to vector<144x144xf32>
    %cst_77 = arith.constant dense<0.000000e+00> : vector<8x144xf32>
    %126 = tpu.matmul %116, %125, %cst_77 {dimension_numbers = #tpu.dot_dimension_numbers<[1], [0], [0], [1], [0, 0, 1, 1], [], []>} : vector<8x144xf32>, vector<144x144xf32>, vector<8x144xf32> -> vector<8x144xf32>
    %c1_78 = arith.constant 1 : index
    %c0_79 = arith.constant 0 : index
    %c0_80 = arith.constant 0 : index
    %127 = vector.load %arg4[%c1_78, %c0_79, %c0_80] : memref<2x1x144xf32, #tpu.memory_space<vmem>>, vector<1x1x144xf32>
    %128 = vector.shape_cast %127 : vector<1x1x144xf32> to vector<1x144xf32>
    %129 = vector.broadcast %128 : vector<1x144xf32> to vector<8x144xf32>
    %130 = arith.addf %126, %129 : vector<8x144xf32>
    %c1_81 = arith.constant 1 : index
    %c0_82 = arith.constant 0 : index
    %c0_83 = arith.constant 0 : index
    %131 = vector.load %arg5[%c1_81, %c0_82, %c0_83] : memref<2x144x144xf32, #tpu.memory_space<vmem>>, vector<1x144x144xf32>
    %132 = vector.shape_cast %131 : vector<1x144x144xf32> to vector<144x144xf32>
    %cst_84 = arith.constant dense<0.000000e+00> : vector<8x144xf32>
    %133 = tpu.matmul %116, %132, %cst_84 {dimension_numbers = #tpu.dot_dimension_numbers<[1], [0], [0], [1], [0, 0, 1, 1], [], []>} : vector<8x144xf32>, vector<144x144xf32>, vector<8x144xf32> -> vector<8x144xf32>
    %c1_85 = arith.constant 1 : index
    %c0_86 = arith.constant 0 : index
    %c0_87 = arith.constant 0 : index
    %134 = vector.load %arg6[%c1_85, %c0_86, %c0_87] : memref<2x1x144xf32, #tpu.memory_space<vmem>>, vector<1x1x144xf32>
    %135 = vector.shape_cast %134 : vector<1x1x144xf32> to vector<1x144xf32>
    %136 = vector.broadcast %135 : vector<1x144xf32> to vector<8x144xf32>
    %137 = arith.addf %133, %136 : vector<8x144xf32>
    %138 = vector.shape_cast %123 : vector<8x144xf32> to vector<8x1x144xf32>
    %139 = vector.shape_cast %130 : vector<8x144xf32> to vector<1x8x144xf32>
    %140 = vector.broadcast %138 : vector<8x1x144xf32> to vector<8x8x144xf32>
    %141 = vector.broadcast %139 : vector<1x8x144xf32> to vector<8x8x144xf32>
    %142 = arith.mulf %140, %141 : vector<8x8x144xf32>
    %cst_88 = arith.constant dense<0xFF800000> : vector<8x144xf32>
    %143 = vector.multi_reduction <maximumf>, %142, %cst_88 [1] : vector<8x8x144xf32> to vector<8x144xf32>
    %144 = vector.shape_cast %143 : vector<8x144xf32> to vector<8x1x144xf32>
    %145 = vector.broadcast %144 : vector<8x1x144xf32> to vector<8x8x144xf32>
    %146 = arith.subf %142, %145 : vector<8x8x144xf32>
    %147 = math.exp %146 : vector<8x8x144xf32>
    %148 = vector.shape_cast %137 : vector<8x144xf32> to vector<1x8x144xf32>
    %149 = vector.broadcast %148 : vector<1x8x144xf32> to vector<8x8x144xf32>
    %150 = arith.mulf %147, %149 : vector<8x8x144xf32>
    %cst_89 = arith.constant dense<0.000000e+00> : vector<8x144xf32>
    %151 = vector.multi_reduction <add>, %150, %cst_89 [1] : vector<8x8x144xf32> to vector<8x144xf32>
    %cst_90 = arith.constant dense<0.000000e+00> : vector<8x144xf32>
    %152 = vector.multi_reduction <add>, %147, %cst_90 [1] : vector<8x8x144xf32> to vector<8x144xf32>
    %153 = arith.divf %151, %152 : vector<8x144xf32>
    %c1_91 = arith.constant 1 : index
    %c0_92 = arith.constant 0 : index
    %c0_93 = arith.constant 0 : index
    %154 = vector.load %arg7[%c1_91, %c0_92, %c0_93] : memref<2x144x144xf32, #tpu.memory_space<vmem>>, vector<1x144x144xf32>
    %155 = vector.shape_cast %154 : vector<1x144x144xf32> to vector<144x144xf32>
    %cst_94 = arith.constant dense<0.000000e+00> : vector<8x144xf32>
    %156 = tpu.matmul %153, %155, %cst_94 {dimension_numbers = #tpu.dot_dimension_numbers<[1], [0], [0], [1], [0, 0, 1, 1], [], []>} : vector<8x144xf32>, vector<144x144xf32>, vector<8x144xf32> -> vector<8x144xf32>
    %c1_95 = arith.constant 1 : index
    %c0_96 = arith.constant 0 : index
    %c0_97 = arith.constant 0 : index
    %157 = vector.load %arg8[%c1_95, %c0_96, %c0_97] : memref<2x1x144xf32, #tpu.memory_space<vmem>>, vector<1x1x144xf32>
    %158 = vector.shape_cast %157 : vector<1x1x144xf32> to vector<1x144xf32>
    %159 = vector.broadcast %158 : vector<1x144xf32> to vector<8x144xf32>
    %160 = arith.addf %156, %159 : vector<8x144xf32>
    %161 = arith.addf %116, %160 : vector<8x144xf32>
    %cst_98 = arith.constant dense<0.000000e+00> : vector<8xf32>
    %162 = vector.multi_reduction <add>, %161, %cst_98 [1] : vector<8x144xf32> to vector<8xf32>
    %163 = vector.shape_cast %162 : vector<8xf32> to vector<8x1xf32>
    %cst_99 = arith.constant 1.440000e+02 : f32
    %164 = vector.broadcast %cst_99 : f32 to vector<8x1xf32>
    %165 = arith.divf %163, %164 : vector<8x1xf32>
    %166 = vector.broadcast %165 : vector<8x1xf32> to vector<8x144xf32>
    %167 = arith.subf %161, %166 : vector<8x144xf32>
    %168 = arith.mulf %167, %167 : vector<8x144xf32>
    %cst_100 = arith.constant dense<0.000000e+00> : vector<8xf32>
    %169 = vector.multi_reduction <add>, %168, %cst_100 [1] : vector<8x144xf32> to vector<8xf32>
    %170 = vector.shape_cast %169 : vector<8xf32> to vector<8x1xf32>
    %cst_101 = arith.constant 1.440000e+02 : f32
    %171 = vector.broadcast %cst_101 : f32 to vector<8x1xf32>
    %172 = arith.divf %170, %171 : vector<8x1xf32>
    %173 = vector.broadcast %165 : vector<8x1xf32> to vector<8x144xf32>
    %174 = arith.subf %161, %173 : vector<8x144xf32>
    %cst_102 = arith.constant 9.99999974E-6 : f32
    %175 = vector.broadcast %cst_102 : f32 to vector<8x1xf32>
    %176 = arith.addf %172, %175 : vector<8x1xf32>
    %177 = math.rsqrt %176 : vector<8x1xf32>
    %178 = vector.broadcast %177 : vector<8x1xf32> to vector<8x144xf32>
    %179 = arith.mulf %174, %178 : vector<8x144xf32>
    %c1_103 = arith.constant 1 : index
    %c0_104 = arith.constant 0 : index
    %c0_105 = arith.constant 0 : index
    %180 = vector.load %arg9[%c1_103, %c0_104, %c0_105] : memref<2x1x144xf32, #tpu.memory_space<vmem>>, vector<1x1x144xf32>
    %181 = vector.shape_cast %180 : vector<1x1x144xf32> to vector<1x144xf32>
    %182 = vector.broadcast %181 : vector<1x144xf32> to vector<8x144xf32>
    %183 = arith.mulf %179, %182 : vector<8x144xf32>
    %c1_106 = arith.constant 1 : index
    %c0_107 = arith.constant 0 : index
    %c0_108 = arith.constant 0 : index
    %184 = vector.load %arg10[%c1_106, %c0_107, %c0_108] : memref<2x1x144xf32, #tpu.memory_space<vmem>>, vector<1x1x144xf32>
    %185 = vector.shape_cast %184 : vector<1x1x144xf32> to vector<1x144xf32>
    %186 = vector.broadcast %185 : vector<1x144xf32> to vector<8x144xf32>
    %187 = arith.addf %183, %186 : vector<8x144xf32>
    %188 = arith.truncf %187 : vector<8x144xf32> to vector<8x144xbf16>
    %c1_109 = arith.constant 1 : index
    %c0_110 = arith.constant 0 : index
    %c0_111 = arith.constant 0 : index
    %189 = vector.load %arg11[%c1_109, %c0_110, %c0_111] : memref<2x144x2048xbf16, #tpu.memory_space<vmem>>, vector<1x144x2048xbf16>
    %190 = vector.shape_cast %189 : vector<1x144x2048xbf16> to vector<144x2048xbf16>
    %cst_112 = arith.constant dense<0.000000e+00> : vector<8x2048xf32>
    %191 = tpu.matmul %188, %190, %cst_112 {dimension_numbers = #tpu.dot_dimension_numbers<[1], [0], [0], [1], [0, 0, 1, 1], [], []>} : vector<8x144xbf16>, vector<144x2048xbf16>, vector<8x2048xf32> -> vector<8x2048xf32>
    %c1_113 = arith.constant 1 : index
    %c0_114 = arith.constant 0 : index
    %c0_115 = arith.constant 0 : index
    %192 = vector.load %arg12[%c1_113, %c0_114, %c0_115] : memref<2x1x2048xf32, #tpu.memory_space<vmem>>, vector<1x1x2048xf32>
    %193 = vector.shape_cast %192 : vector<1x1x2048xf32> to vector<1x2048xf32>
    %194 = vector.broadcast %193 : vector<1x2048xf32> to vector<8x2048xf32>
    %195 = arith.addf %191, %194 : vector<8x2048xf32>
    %cst_116 = arith.constant 0.000000e+00 : f32
    %196 = vector.broadcast %cst_116 : f32 to vector<8x2048xf32>
    %197 = arith.maximumf %195, %196 : vector<8x2048xf32>
    %198 = arith.truncf %197 : vector<8x2048xf32> to vector<8x2048xbf16>
    %c1_117 = arith.constant 1 : index
    %c0_118 = arith.constant 0 : index
    %c0_119 = arith.constant 0 : index
    %199 = vector.load %arg13[%c1_117, %c0_118, %c0_119] : memref<2x2048x144xbf16, #tpu.memory_space<vmem>>, vector<1x2048x144xbf16>
    %200 = vector.shape_cast %199 : vector<1x2048x144xbf16> to vector<2048x144xbf16>
    %cst_120 = arith.constant dense<0.000000e+00> : vector<8x144xf32>
    %201 = tpu.matmul %198, %200, %cst_120 {dimension_numbers = #tpu.dot_dimension_numbers<[1], [0], [0], [1], [0, 0, 1, 1], [], []>} : vector<8x2048xbf16>, vector<2048x144xbf16>, vector<8x144xf32> -> vector<8x144xf32>
    %c1_121 = arith.constant 1 : index
    %c0_122 = arith.constant 0 : index
    %c0_123 = arith.constant 0 : index
    %202 = vector.load %arg14[%c1_121, %c0_122, %c0_123] : memref<2x1x144xf32, #tpu.memory_space<vmem>>, vector<1x1x144xf32>
    %203 = vector.shape_cast %202 : vector<1x1x144xf32> to vector<1x144xf32>
    %204 = vector.broadcast %203 : vector<1x144xf32> to vector<8x144xf32>
    %205 = arith.addf %201, %204 : vector<8x144xf32>
    %206 = arith.addf %187, %205 : vector<8x144xf32>
    %cst_124 = arith.constant dense<0.000000e+00> : vector<8xf32>
    %207 = vector.multi_reduction <add>, %206, %cst_124 [1] : vector<8x144xf32> to vector<8xf32>
    %208 = vector.shape_cast %207 : vector<8xf32> to vector<8x1xf32>
    %cst_125 = arith.constant 1.440000e+02 : f32
    %209 = vector.broadcast %cst_125 : f32 to vector<8x1xf32>
    %210 = arith.divf %208, %209 : vector<8x1xf32>
    %211 = vector.broadcast %210 : vector<8x1xf32> to vector<8x144xf32>
    %212 = arith.subf %206, %211 : vector<8x144xf32>
    %213 = arith.mulf %212, %212 : vector<8x144xf32>
    %cst_126 = arith.constant dense<0.000000e+00> : vector<8xf32>
    %214 = vector.multi_reduction <add>, %213, %cst_126 [1] : vector<8x144xf32> to vector<8xf32>
    %215 = vector.shape_cast %214 : vector<8xf32> to vector<8x1xf32>
    %cst_127 = arith.constant 1.440000e+02 : f32
    %216 = vector.broadcast %cst_127 : f32 to vector<8x1xf32>
    %217 = arith.divf %215, %216 : vector<8x1xf32>
    %218 = vector.broadcast %210 : vector<8x1xf32> to vector<8x144xf32>
    %219 = arith.subf %206, %218 : vector<8x144xf32>
    %cst_128 = arith.constant 9.99999974E-6 : f32
    %220 = vector.broadcast %cst_128 : f32 to vector<8x1xf32>
    %221 = arith.addf %217, %220 : vector<8x1xf32>
    %222 = math.rsqrt %221 : vector<8x1xf32>
    %223 = vector.broadcast %222 : vector<8x1xf32> to vector<8x144xf32>
    %224 = arith.mulf %219, %223 : vector<8x144xf32>
    %c1_129 = arith.constant 1 : index
    %c0_130 = arith.constant 0 : index
    %c0_131 = arith.constant 0 : index
    %225 = vector.load %arg15[%c1_129, %c0_130, %c0_131] : memref<2x1x144xf32, #tpu.memory_space<vmem>>, vector<1x1x144xf32>
    %226 = vector.shape_cast %225 : vector<1x1x144xf32> to vector<1x144xf32>
    %227 = vector.broadcast %226 : vector<1x144xf32> to vector<8x144xf32>
    %228 = arith.mulf %224, %227 : vector<8x144xf32>
    %c1_132 = arith.constant 1 : index
    %c0_133 = arith.constant 0 : index
    %c0_134 = arith.constant 0 : index
    %229 = vector.load %arg16[%c1_132, %c0_133, %c0_134] : memref<2x1x144xf32, #tpu.memory_space<vmem>>, vector<1x1x144xf32>
    %230 = vector.shape_cast %229 : vector<1x1x144xf32> to vector<1x144xf32>
    %231 = vector.broadcast %230 : vector<1x144xf32> to vector<8x144xf32>
    %232 = arith.addf %228, %231 : vector<8x144xf32>
    %c0_135 = arith.constant 0 : index
    %c0_136 = arith.constant 0 : index
    %233 = vector.load %arg17[%c0_135, %c0_136] : memref<144x2048xf32, #tpu.memory_space<vmem>>, vector<144x2048xf32>
    %cst_137 = arith.constant dense<0.000000e+00> : vector<8x2048xf32>
    %234 = tpu.matmul %232, %233, %cst_137 {dimension_numbers = #tpu.dot_dimension_numbers<[1], [0], [0], [1], [0, 0, 1, 1], [], []>} : vector<8x144xf32>, vector<144x2048xf32>, vector<8x2048xf32> -> vector<8x2048xf32>
    %c0_138 = arith.constant 0 : index
    %c0_139 = arith.constant 0 : index
    %235 = vector.load %arg18[%c0_138, %c0_139] : memref<1x2048xf32, #tpu.memory_space<vmem>>, vector<1x2048xf32>
    %236 = vector.broadcast %235 : vector<1x2048xf32> to vector<8x2048xf32>
    %237 = arith.addf %234, %236 : vector<8x2048xf32>
    %cst_140 = arith.constant 0.000000e+00 : f32
    %238 = vector.broadcast %cst_140 : f32 to vector<8x2048xf32>
    %239 = arith.maximumf %237, %238 : vector<8x2048xf32>
    %240 = arith.truncf %239 : vector<8x2048xf32> to vector<8x2048xbf16>
    %c0_141 = arith.constant 0 : index
    %c0_142 = arith.constant 0 : index
    %241 = vector.load %arg19[%c0_141, %c0_142] : memref<8x2048xbf16, #tpu.memory_space<vmem>>, vector<8x2048xbf16>
    tpu.vector_store %arg19[%c0_141, %c0_142], %240 {strides = array<i32>} : memref<8x2048xbf16, #tpu.memory_space<vmem>>, vector<8x2048xbf16>,
    return
  }
}

</mosaic_0001>

<llo_original>
// kernel: tpu_custom_call.1
$region0: #{tpu_custom_call.1}
  #allocation0 [shape = 'u32[]', space=smem, size = 0x4, offset = 0x4, fixed_abs, tag = 'smem constant byte address 0x4 - core index']
  #allocation1 [shape = 'u32[144,128]{1,0:T(1,128)}', space=vmem, size = 0x12000, scoped, tag = 'internal scratch']
  %s0 = inlined_call_operand.vmem [shape: f32[8,144], index: 0, kind: input, shape index: {}]
  %s1 = inlined_call_operand.vmem [shape: f32[2,144,144], index: 1, kind: input, shape index: {}]
  %s2 = inlined_call_operand.hbm [shape: f32[2,1,144], index: 2, kind: input, shape index: {}]
  %s3 = inlined_call_operand.vmem [shape: f32[2,144,144], index: 3, kind: input, shape index: {}]
  %s4 = inlined_call_operand.hbm [shape: f32[2,1,144], index: 4, kind: input, shape index: {}]
  %s5 = inlined_call_operand.vmem [shape: f32[2,144,144], index: 5, kind: input, shape index: {}]
  %s6 = inlined_call_operand.hbm [shape: f32[2,1,144], index: 6, kind: input, shape index: {}]
  %s7 = inlined_call_operand.hbm [shape: f32[2,144,144], index: 7, kind: input, shape index: {}]
  %s8 = inlined_call_operand.hbm [shape: f32[2,1,144], index: 8, kind: input, shape index: {}]
  %s9 = inlined_call_operand.hbm [shape: f32[2,1,144], index: 9, kind: input, shape index: {}]
  %s10 = inlined_call_operand.hbm [shape: f32[2,1,144], index: 10, kind: input, shape index: {}]
  %s11 = inlined_call_operand.vmem [shape: bf16[2,144,2048], index: 11, kind: input, shape index: {}]
  %s12 = inlined_call_operand.vmem [shape: f32[2,1,2048], index: 12, kind: input, shape index: {}]
  %s13 = inlined_call_operand.vmem [shape: bf16[2,2048,144], index: 13, kind: input, shape index: {}]
  %s14 = inlined_call_operand.hbm [shape: f32[2,1,144], index: 14, kind: input, shape index: {}]
  %s15 = inlined_call_operand.hbm [shape: f32[2,1,144], index: 15, kind: input, shape index: {}]
  %s16 = inlined_call_operand.hbm [shape: f32[2,1,144], index: 16, kind: input, shape index: {}]
  %s17 = inlined_call_operand.vmem [shape: f32[144,2048], index: 17, kind: input, shape index: {}]
  %s18 = inlined_call_operand.vmem [shape: f32[1,2048], index: 18, kind: input, shape index: {}]
  %s19 = inlined_call_operand.hbm [shape: bf16[8,2048], index: 19, kind: output, shape index: {}]
  %s20 = sld [smem:[#allocation0]]
  $region126: #{tpu_custom_call.1} parent=0
    _
  %s22 = ssub.s32 1, %s20
  %s23 = scalar_select 0, %s22, %s20
  $region1: #{tpu_custom_call.1} parent=0
    #allocation2 [shape = 'u8[2048]{0}', space=vmem, size = 0x800, scoped, tag = 'input window, operand 2, single buffered']
    #allocation3 [shape = 's32[1]{0}', space=sflag, size = 0x4, scoped, tag = 'scoped memory for tpu_custom_call.1']
    #allocation4 [shape = 's32[1]{0}', space=sflag, size = 0x4, scoped, tag = 'scoped memory for tpu_custom_call.1']
    #allocation5 [shape = 'u8[2048]{0}', space=vmem, size = 0x800, scoped, tag = 'input window, operand 4, single buffered']
    #allocation6 [shape = 's32[1]{0}', space=sflag, size = 0x4, scoped, tag = 'scoped memory for tpu_custom_call.1']
    #allocation7 [shape = 'u8[2048]{0}', space=vmem, size = 0x800, scoped, tag = 'input window, operand 6, single buffered']
    #allocation8 [shape = 'u8[294912]{0}', space=vmem, size = 0x48000, scoped, tag = 'input window, operand 7, single buffered']
    #allocation9 [shape = 's32[1]{0}', space=sflag, size = 0x4, scoped, tag = 'scoped memory for tpu_custom_call.1']
    #allocation10 [shape = 'u8[2048]{0}', space=vmem, size = 0x800, scoped, tag = 'input window, operand 8, single buffered']
    #allocation11 [shape = 'u8[2048]{0}', space=vmem, size = 0x800, scoped, tag = 'input window, operand 9, single buffered']
    #allocation12 [shape = 's32[1]{0}', space=sflag, size = 0x4, scoped, tag = 'scoped memory for tpu_custom_call.1']
    #allocation13 [shape = 'u8[2048]{0}', space=vmem, size = 0x800, scoped, tag = 'input window, operand 10, single buffered']
    #allocation14 [shape = 'u8[2048]{0}', space=vmem, size = 0x800, scoped, tag = 'input window, operand 14, single buffered']
    #allocation15 [shape = 's32[1]{0}', space=sflag, size = 0x4, scoped, tag = 'scoped memory for tpu_custom_call.1']
    #allocation16 [shape = 'u8[2048]{0}', space=vmem, size = 0x800, scoped, tag = 'input window, operand 15, single buffered']
    #allocation17 [shape = 'u8[2048]{0}', space=vmem, size = 0x800, scoped, tag = 'input window, operand 16, single buffered']
    #allocation18 [shape = 's32[1]{0}', space=sflag, size = 0x4, scoped, tag = 'scoped memory for tpu_custom_call.1']
    #allocation19 [shape = 'u8[32768]{0}', space=vmem, size = 0x8000, scoped, tag = 'output window, operand 0, single buffered']
    %24 = vsyncpa [#allocation3], 0
    %25 = vsyncpa [#allocation6], 0
    %26 = vsyncpa [#allocation9], 0
    %27 = vsyncpa [#allocation12], 0
    %28 = vsyncpa [#allocation15], 0
    %29 = vsyncpa [#allocation18], 0
    %30 = vsyncpa [#allocation4], 0
    // Predicated region
    $region2: #{tpu_custom_call.1} parent=1 // pred_check
      _
    $region3: #{tpu_custom_call.1} parent=1 // pred_check_branch
      %32 = sbr.rel (0) target = $region5
    $region4: #{tpu_custom_call.1} parent=1 // pred_region
      _
    $region5: #{tpu_custom_call.1} parent=1 // pred_fallthru
      _
    // Predicated region
    $region6: #{tpu_custom_call.1} parent=1 // pred_check
      _
    $region7: #{tpu_custom_call.1} parent=1 // pred_check_branch
      %34 = sbr.rel (0) target = $region9
    $region8: #{tpu_custom_call.1} parent=1 // pred_region
      _
    $region9: #{tpu_custom_call.1} parent=1 // pred_fallthru
      _
    // Predicated region
    $region10: #{tpu_custom_call.1} parent=1 // pred_check
      _
    $region11: #{tpu_custom_call.1} parent=1 // pred_check_branch
      %36 = sbr.rel (0) target = $region13
    $region12: #{tpu_custom_call.1} parent=1 // pred_region
      %s38 = ssub.s32 64, 64
      %39 = vsyncadd [#allocation3], %s38
      %s40 = sshll.u32 [#allocation2], 4
      %s41 = int_to_ptr.vmem [resolvable:$true] %s40
      %46 = dma.hbm_to_vmem [thread:$0]  %s2, 64, %s41, [#allocation3], 32, 32, 2
    $region13: #{tpu_custom_call.1} parent=1 // pred_fallthru
      _
    // Predicated region
    $region14: #{tpu_custom_call.1} parent=1 // pred_check
      _
    $region15: #{tpu_custom_call.1} parent=1 // pred_check_branch
      %48 = sbr.rel (0) target = $region17
    $region16: #{tpu_custom_call.1} parent=1 // pred_region
      _
    $region17: #{tpu_custom_call.1} parent=1 // pred_fallthru
      _
    // Predicated region
    $region18: #{tpu_custom_call.1} parent=1 // pred_check
      _
    $region19: #{tpu_custom_call.1} parent=1 // pred_check_branch
      %50 = sbr.rel (0) target = $region21
    $region20: #{tpu_custom_call.1} parent=1 // pred_region
      %s52 = ssub.s32 64, 64
      %53 = vsyncadd [#allocation6], %s52
      %s54 = sshll.u32 [#allocation5], 4
      %s55 = int_to_ptr.vmem [resolvable:$true] %s54
      %60 = dma.hbm_to_vmem [thread:$0]  %s4, 64, %s55, [#allocation6], 32, 32, 2
    $region21: #{tpu_custom_call.1} parent=1 // pred_fallthru
      _
    // Predicated region
    $region22: #{tpu_custom_call.1} parent=1 // pred_check
      _
    $region23: #{tpu_custom_call.1} parent=1 // pred_check_branch
      %62 = sbr.rel (0) target = $region25
    $region24: #{tpu_custom_call.1} parent=1 // pred_region
      _
    $region25: #{tpu_custom_call.1} parent=1 // pred_fallthru
      _
    // Predicated region
    $region26: #{tpu_custom_call.1} parent=1 // pred_check
      _
    $region27: #{tpu_custom_call.1} parent=1 // pred_check_branch
      %64 = sbr.rel (0) target = $region29
    $region28: #{tpu_custom_call.1} parent=1 // pred_region
      %s66 = ssub.s32 64, 64
      %67 = vsyncadd [#allocation6], %s66
      %s68 = sshll.u32 [#allocation7], 4
      %s69 = int_to_ptr.vmem [resolvable:$true] %s68
      %74 = dma.hbm_to_vmem [thread:$0]  %s6, 64, %s69, [#allocation6], 32, 32, 2
    $region29: #{tpu_custom_call.1} parent=1 // pred_fallthru
      _
    // Predicated region
    $region30: #{tpu_custom_call.1} parent=1 // pred_check
      _
    $region31: #{tpu_custom_call.1} parent=1 // pred_check_branch
      %76 = sbr.rel (0) target = $region33
    $region32: #{tpu_custom_call.1} parent=1 // pred_region
      %s78 = ssub.s32 9216, 9216
      %79 = vsyncadd [#allocation9], %s78
      %s80 = sshll.u32 [#allocation8], 4
      %s81 = int_to_ptr.vmem [resolvable:$true] %s80
      %86 = dma.hbm_to_vmem [thread:$0]  %s7, 9216, %s81, [#allocation9], 256, 256, 16
    $region33: #{tpu_custom_call.1} parent=1 // pred_fallthru
      _
    // Predicated region
    $region34: #{tpu_custom_call.1} parent=1 // pred_check
      _
    $region35: #{tpu_custom_call.1} parent=1 // pred_check_branch
      %88 = sbr.rel (0) target = $region37
    $region36: #{tpu_custom_call.1} parent=1 // pred_region
      %s90 = ssub.s32 64, 64
      %91 = vsyncadd [#allocation9], %s90
      %s92 = sshll.u32 [#allocation10], 4
      %s93 = int_to_ptr.vmem [resolvable:$true] %s92
      %98 = dma.hbm_to_vmem [thread:$0]  %s8, 64, %s93, [#allocation9], 32, 32, 2
    $region37: #{tpu_custom_call.1} parent=1 // pred_fallthru
      _
    // Predicated region
    $region38: #{tpu_custom_call.1} parent=1 // pred_check
      _
    $region39: #{tpu_custom_call.1} parent=1 // pred_check_branch
      %100 = sbr.rel (0) target = $region41
    $region40: #{tpu_custom_call.1} parent=1 // pred_region
      %s102 = ssub.s32 64, 64
      %103 = vsyncadd [#allocation12], %s102
      %s104 = sshll.u32 [#allocation11], 4
      %s105 = int_to_ptr.vmem [resolvable:$true] %s104
      %110 = dma.hbm_to_vmem [thread:$0]  %s9, 64, %s105, [#allocation12], 32, 32, 2
    $region41: #{tpu_custom_call.1} parent=1 // pred_fallthru
      _
    // Predicated region
    $region42: #{tpu_custom_call.1} parent=1 // pred_check
      _
    $region43: #{tpu_custom_call.1} parent=1 // pred_check_branch
      %112 = sbr.rel (0) target = $region45
    $region44: #{tpu_custom_call.1} parent=1 // pred_region
      %s114 = ssub.s32 64, 64
      %115 = vsyncadd [#allocation12], %s114
      %s116 = sshll.u32 [#allocation13], 4
      %s117 = int_to_ptr.vmem [resolvable:$true] %s116
      %122 = dma.hbm_to_vmem [thread:$0]  %s10, 64, %s117, [#allocation12], 32, 32, 2
    $region45: #{tpu_custom_call.1} parent=1 // pred_fallthru
      _
    // Predicated region
    $region46: #{tpu_custom_call.1} parent=1 // pred_check
      _
    $region47: #{tpu_custom_call.1} parent=1 // pred_check_branch
      %124 = sbr.rel (0) target = $region49
    $region48: #{tpu_custom_call.1} parent=1 // pred_region
      _
    $region49: #{tpu_custom_call.1} parent=1 // pred_fallthru
      _
    // Predicated region
    $region50: #{tpu_custom_call.1} parent=1 // pred_check
      _
    $region51: #{tpu_custom_call.1} parent=1 // pred_check_branch
      %126 = sbr.rel (0) target = $region53
    $region52: #{tpu_custom_call.1} parent=1 // pred_region
      _
    $region53: #{tpu_custom_call.1} parent=1 // pred_fallthru
      _
    // Predicated region
    $region54: #{tpu_custom_call.1} parent=1 // pred_check
      _
    $region55: #{tpu_custom_call.1} parent=1 // pred_check_branch
      %128 = sbr.rel (0) target = $region57
    $region56: #{tpu_custom_call.1} parent=1 // pred_region
      _
    $region57: #{tpu_custom_call.1} parent=1 // pred_fallthru
      _
    // Predicated region
    $region58: #{tpu_custom_call.1} parent=1 // pred_check
      _
    $region59: #{tpu_custom_call.1} parent=1 // pred_check_branch
      %130 = sbr.rel (0) target = $region61
    $region60: #{tpu_custom_call.1} parent=1 // pred_region
      %s132 = ssub.s32 64, 64
      %133 = vsyncadd [#allocation15], %s132
      %s134 = sshll.u32 [#allocation14], 4
      %s135 = int_to_ptr.vmem [resolvable:$true] %s134
      %140 = dma.hbm_to_vmem [thread:$0]  %s14, 64, %s135, [#allocation15], 32, 32, 2
    $region61: #{tpu_custom_call.1} parent=1 // pred_fallthru
      _
    // Predicated region
    $region62: #{tpu_custom_call.1} parent=1 // pred_check
      _
    $region63: #{tpu_custom_call.1} parent=1 // pred_check_branch
      %142 = sbr.rel (0) target = $region65
    $region64: #{tpu_custom_call.1} parent=1 // pred_region
      %s144 = ssub.s32 64, 64
      %145 = vsyncadd [#allocation15], %s144
      %s146 = sshll.u32 [#allocation16], 4
      %s147 = int_to_ptr.vmem [resolvable:$true] %s146
      %152 = dma.hbm_to_vmem [thread:$0]  %s15, 64, %s147, [#allocation15], 32, 32, 2
    $region65: #{tpu_custom_call.1} parent=1 // pred_fallthru
      _
    // Predicated region
    $region66: #{tpu_custom_call.1} parent=1 // pred_check
      _
    $region67: #{tpu_custom_call.1} parent=1 // pred_check_branch
      %154 = sbr.rel (0) target = $region69
    $region68: #{tpu_custom_call.1} parent=1 // pred_region
      %s156 = ssub.s32 64, 64
      %157 = vsyncadd [#allocation18], %s156
      %s158 = sshll.u32 [#allocation17], 4
      %s159 = int_to_ptr.vmem [resolvable:$true] %s158
      %164 = dma.hbm_to_vmem [thread:$0]  %s16, 64, %s159, [#allocation18], 32, 32, 2
    $region69: #{tpu_custom_call.1} parent=1 // pred_fallthru
      _
    // Predicated region
    $region70: #{tpu_custom_call.1} parent=1 // pred_check
      _
    $region71: #{tpu_custom_call.1} parent=1 // pred_check_branch
      %166 = sbr.rel (0) target = $region73
    $region72: #{tpu_custom_call.1} parent=1 // pred_region
      _
    $region73: #{tpu_custom_call.1} parent=1 // pred_fallthru
      _
    // Predicated region
    $region74: #{tpu_custom_call.1} parent=1 // pred_check
      _
    $region75: #{tpu_custom_call.1} parent=1 // pred_check_branch
      %168 = sbr.rel (0) target = $region77
    $region76: #{tpu_custom_call.1} parent=1 // pred_region
      _
    $region77: #{tpu_custom_call.1} parent=1 // pred_fallthru
      _
    // Predicated region
    $region78: #{tpu_custom_call.1} parent=1 // pred_check
      _
    $region79: #{tpu_custom_call.1} parent=1 // pred_check_branch
      %170 = sbr.rel (0) target = $region81
    $region80: #{tpu_custom_call.1} parent=1 // pred_region
      %171 = dma.done [#allocation3], 64
    $region81: #{tpu_custom_call.1} parent=1 // pred_fallthru
      _
    // Predicated region
    $region82: #{tpu_custom_call.1} parent=1 // pred_check
      _
    $region83: #{tpu_custom_call.1} parent=1 // pred_check_branch
      %173 = sbr.rel (0) target = $region85
    $region84: #{tpu_custom_call.1} parent=1 // pred_region
      %174 = dma.done [#allocation6], 64
    $region85: #{tpu_custom_call.1} parent=1 // pred_fallthru
      _
    // Predicated region
    $region86: #{tpu_custom_call.1} parent=1 // pred_check
      _
    $region87: #{tpu_custom_call.1} parent=1 // pred_check_branch
      %176 = sbr.rel (0) target = $region89
    $region88: #{tpu_custom_call.1} parent=1 // pred_region
      %177 = dma.done [#allocation6], 64
    $region89: #{tpu_custom_call.1} parent=1 // pred_fallthru
      _
    // Predicated region
    $region90: #{tpu_custom_call.1} parent=1 // pred_check
      _
    $region91: #{tpu_custom_call.1} parent=1 // pred_check_branch
      %179 = sbr.rel (0) target = $region93
    $region92: #{tpu_custom_call.1} parent=1 // pred_region
      %180 = dma.done [#allocation9], 9216
    $region93: #{tpu_custom_call.1} parent=1 // pred_fallthru
      _
    // Predicated region
    $region94: #{tpu_custom_call.1} parent=1 // pred_check
      _
    $region95: #{tpu_custom_call.1} parent=1 // pred_check_branch
      %182 = sbr.rel (0) target = $region97
    $region96: #{tpu_custom_call.1} parent=1 // pred_region
      %183 = dma.done [#allocation9], 64
    $region97: #{tpu_custom_call.1} parent=1 // pred_fallthru
      _
    // Predicated region
    $region98: #{tpu_custom_call.1} parent=1 // pred_check
      _
    $region99: #{tpu_custom_call.1} parent=1 // pred_check_branch
      %185 = sbr.rel (0) target = $region101
    $region100: #{tpu_custom_call.1} parent=1 // pred_region
      %186 = dma.done [#allocation12], 64
    $region101: #{tpu_custom_call.1} parent=1 // pred_fallthru
      _
    // Predicated region
    $region102: #{tpu_custom_call.1} parent=1 // pred_check
      _
    $region103: #{tpu_custom_call.1} parent=1 // pred_check_branch
      %188 = sbr.rel (0) target = $region105
    $region104: #{tpu_custom_call.1} parent=1 // pred_region
      %189 = dma.done [#allocation12], 64
    $region105: #{tpu_custom_call.1} parent=1 // pred_fallthru
      _
    // Predicated region
    $region106: #{tpu_custom_call.1} parent=1 // pred_check
      _
    $region107: #{tpu_custom_call.1} parent=1 // pred_check_branch
      %191 = sbr.rel (0) target = $region109
    $region108: #{tpu_custom_call.1} parent=1 // pred_region
      %192 = dma.done [#allocation15], 64
    $region109: #{tpu_custom_call.1} parent=1 // pred_fallthru
      _
    // Predicated region
    $region110: #{tpu_custom_call.1} parent=1 // pred_check
      _
    $region111: #{tpu_custom_call.1} parent=1 // pred_check_branch
      %194 = sbr.rel (0) target = $region113
    $region112: #{tpu_custom_call.1} parent=1 // pred_region
      %195 = dma.done [#allocation15], 64
    $region113: #{tpu_custom_call.1} parent=1 // pred_fallthru
      _
    // Predicated region
    $region114: #{tpu_custom_call.1} parent=1 // pred_check
      _
    $region115: #{tpu_custom_call.1} parent=1 // pred_check_branch
      %197 = sbr.rel (0) target = $region117
    $region116: #{tpu_custom_call.1} parent=1 // pred_region
      %198 = dma.done [#allocation18], 64
    $region117: #{tpu_custom_call.1} parent=1 // pred_fallthru
      _
    %v200 = vld [vmem:[%s0] sm:$0xff]
    %v201 = vld [vmem:[%s0 + $0x8] sm:$0xff]
    %v202 = vld [vmem:[%s1] sm:$0xff]
    %v203 = vld [vmem:[%s1 + $0x8] sm:$0xff]
    %v204 = vld [vmem:[%s1 + $0x10] sm:$0xff]
    %v205 = vld [vmem:[%s1 + $0x18] sm:$0xff]
    %v206 = vld [vmem:[%s1 + $0x20] sm:$0xff]
    %v207 = vld [vmem:[%s1 + $0x28] sm:$0xff]
    %v208 = vld [vmem:[%s1 + $0x30] sm:$0xff]
    %v209 = vld [vmem:[%s1 + $0x38] sm:$0xff]
    %v210 = vld [vmem:[%s1 + $0x40] sm:$0xff]
    %v211 = vld [vmem:[%s1 + $0x48] sm:$0xff]
    %v212 = vld [vmem:[%s1 + $0x50] sm:$0xff]
    %v213 = vld [vmem:[%s1 + $0x58] sm:$0xff]
    %v214 = vld [vmem:[%s1 + $0x60] sm:$0xff]
    %v215 = vld [vmem:[%s1 + $0x68] sm:$0xff]
    %v216 = vld [vmem:[%s1 + $0x70] sm:$0xff]
    %v217 = vld [vmem:[%s1 + $0x78] sm:$0xff]
    %v218 = vld [vmem:[%s1 + $0x80] sm:$0xff]
    %v219 = vld [vmem:[%s1 + $0x88] sm:$0xff]
    %v220 = vld [vmem:[%s1 + $0x90] sm:$0xff]
    %v221 = vld [vmem:[%s1 + $0x98] sm:$0xff]
    %v222 = vld [vmem:[%s1 + $0xa0] sm:$0xff]
    %v223 = vld [vmem:[%s1 + $0xa8] sm:$0xff]
    %v224 = vld [vmem:[%s1 + $0xb0] sm:$0xff]
    %v225 = vld [vmem:[%s1 + $0xb8] sm:$0xff]
    %v226 = vld [vmem:[%s1 + $0xc0] sm:$0xff]
    %v227 = vld [vmem:[%s1 + $0xc8] sm:$0xff]
    %v228 = vld [vmem:[%s1 + $0xd0] sm:$0xff]
    %v229 = vld [vmem:[%s1 + $0xd8] sm:$0xff]
    %v230 = vld [vmem:[%s1 + $0xe0] sm:$0xff]
    %v231 = vld [vmem:[%s1 + $0xe8] sm:$0xff]
    %v232 = vld [vmem:[%s1 + $0xf0] sm:$0xff]
    %v233 = vld [vmem:[%s1 + $0xf8] sm:$0xff]
    %v234 = vld [vmem:[%s1 + $0x100] sm:$0xff]
    %v235 = vld [vmem:[%s1 + $0x108] sm:$0xff]
    %v236 = vld [vmem:[%s1 + $0x110] sm:$0xff]
    %v237 = vld [vmem:[%s1 + $0x118] sm:$0xff]
    %v238 = vld [vmem:[#allocation2] sm:$0x3]
    %v240 = vlaneseq
    %v241 = vshrl.u32 %v240, 7
    %v242 = vsub.s32 0, %v241
    %v243 = vrot.slane %v238, %v242
    %v244 = vlaneseq
    %v245 = vshrl.u32 %v244, 7
    %v246 = vsub.s32 1, %v245
    %v247 = vrot.slane %v238, %v246
    %vm250 = vcmask 130048
    %v252 = vsel %vm250, %v201, 0
    %254 = vmatprep.subr.mxu0 %v203
    %255 = vmatpush1.msra.mxu0 %v202
    %256 = vmatprep.subr.mxu0 %v205
    %257 = vmatpush1.msra.mxu0 %v204
    %258 = vmatprep.subr.mxu0 %v207
    %259 = vmatpush1.msra.mxu0 %v206
    %260 = vmatprep.subr.mxu0 %v209
    %261 = vmatpush1.msra.mxu0 %v208
    %262 = vmatprep.subr.mxu0 %v211
    %263 = vmatpush1.msra.mxu0 %v210
    %264 = vmatprep.subr.mxu0 %v213
    %265 = vmatpush1.msra.mxu0 %v212
    %266 = vmatprep.subr.mxu0 %v215
    %267 = vmatpush1.msra.mxu0 %v214
    %268 = vmatprep.subr.mxu0 %v217
    %269 = vmatpush1.msra.mxu0 %v216
    %270 = vmatprep.subr.mxu0 %v219
    %271 = vmatpush1.msra.mxu0 %v218
    %272 = vmatprep.subr.mxu0 %v221
    %273 = vmatpush1.msra.mxu0 %v220
    %274 = vmatprep.subr.mxu0 %v223
    %275 = vmatpush1.msra.mxu0 %v222
    %276 = vmatprep.subr.mxu0 %v225
    %277 = vmatpush1.msra.mxu0 %v224
    %278 = vmatprep.subr.mxu0 %v227
    %279 = vmatpush1.msra.mxu0 %v226
    %280 = vmatprep.subr.mxu0 %v229
    %281 = vmatpush1.msra.mxu0 %v228
    %282 = vmatprep.subr.mxu0 %v231
    %283 = vmatpush1.msra.mxu0 %v230
    %284 = vmatprep.subr.mxu0 %v233
    %285 = vmatpush1.msra.mxu0 %v232
    %286 = vmatprep.subr.mxu0 %v235
    %287 = vmatpush1.msra.mxu0 %v234
    %288 = vmatprep.subr.mxu0 %v237
    %289 = vmatpush1.msra.mxu0 %v236
    %290 = vmatprep.subr.mxu0 0.0
    %291 = vmatpush1.msra.mxu0 0.0
    %292 = vmatprep.subr.mxu0 0.0
    %293 = vmatpush1.msra.mxu0 0.0
    %294 = vmatprep.subr.mxu0 0.0
    %295 = vmatpush1.msra.mxu0 0.0
    %296 = vmatprep.subr.mxu0 0.0
    %297 = vmatpush1.msra.mxu0 0.0
    %298 = vmatprep.subr.mxu0 0.0
    %299 = vmatpush1.msra.mxu0 0.0
    %300 = vmatprep.subr.mxu0 0.0
    %301 = vmatpush1.msra.mxu0 0.0
    %302 = vmatprep.subr.mxu0 0.0
    %303 = vmatpush1.msra.mxu0 0.0
    %304 = vmatprep.subr.mxu0 0.0
    %305 = vmatpush1.msra.mxu0 0.0
    %306 = vmatprep.subr.mxu0 0.0
    %307 = vmatpush1.msra.mxu0 0.0
    %308 = vmatprep.subr.mxu0 0.0
    %309 = vmatpush1.msra.mxu0 0.0
    %310 = vmatprep.subr.mxu0 0.0
    %311 = vmatpush1.msra.mxu0 0.0
    %312 = vmatprep.subr.mxu0 0.0
    %313 = vmatpush1.msra.mxu0 0.0
    %314 = vmatprep.subr.mxu0 0.0
    %315 = vmatpush1.msra.mxu0 0.0
    %316 = vmatprep.subr.mxu0 0.0
    %317 = vmatpush1.msra.mxu0 0.0
    %318 = vmatprep.mubr.f32.mxu0 %v252
    %319 = vmatmul.mubr.f32.gmra.mrb[0].mxu0 %v200
    %v320 = vpop.f32.mrb[0].mxu0
    %v321 = vadd.f32 %v243, %v320
    %v322 = vpop.f32.mrb[0].mxu0
    %v323 = vadd.f32 %v247, %v322
    %324 = vdwg.mxu0
    %v325 = vld [vmem:[%s3] sm:$0xff]
    %v326 = vld [vmem:[%s3 + $0x8] sm:$0xff]
    %v327 = vld [vmem:[%s3 + $0x10] sm:$0xff]
    %v328 = vld [vmem:[%s3 + $0x18] sm:$0xff]
    %v329 = vld [vmem:[%s3 + $0x20] sm:$0xff]
    %v330 = vld [vmem:[%s3 + $0x28] sm:$0xff]
    %v331 = vld [vmem:[%s3 + $0x30] sm:$0xff]
    %v332 = vld [vmem:[%s3 + $0x38] sm:$0xff]
    %v333 = vld [vmem:[%s3 + $0x40] sm:$0xff]
    %v334 = vld [vmem:[%s3 + $0x48] sm:$0xff]
    %v335 = vld [vmem:[%s3 + $0x50] sm:$0xff]
    %v336 = vld [vmem:[%s3 + $0x58] sm:$0xff]
    %v337 = vld [vmem:[%s3 + $0x60] sm:$0xff]
    %v338 = vld [vmem:[%s3 + $0x68] sm:$0xff]
    %v339 = vld [vmem:[%s3 + $0x70] sm:$0xff]
    %v340 = vld [vmem:[%s3 + $0x78] sm:$0xff]
    %v341 = vld [vmem:[%s3 + $0x80] sm:$0xff]
    %v342 = vld [vmem:[%s3 + $0x88] sm:$0xff]
    %v343 = vld [vmem:[%s3 + $0x90] sm:$0xff]
    %v344 = vld [vmem:[%s3 + $0x98] sm:$0xff]
    %v345 = vld [vmem:[%s3 + $0xa0] sm:$0xff]
    %v346 = vld [vmem:[%s3 + $0xa8] sm:$0xff]
    %v347 = vld [vmem:[%s3 + $0xb0] sm:$0xff]
    %v348 = vld [vmem:[%s3 + $0xb8] sm:$0xff]
    %v349 = vld [vmem:[%s3 + $0xc0] sm:$0xff]
    %v350 = vld [vmem:[%s3 + $0xc8] sm:$0xff]
    %v351 = vld [vmem:[%s3 + $0xd0] sm:$0xff]
    %v352 = vld [vmem:[%s3 + $0xd8] sm:$0xff]
    %v353 = vld [vmem:[%s3 + $0xe0] sm:$0xff]
    %v354 = vld [vmem:[%s3 + $0xe8] sm:$0xff]
    %v355 = vld [vmem:[%s3 + $0xf0] sm:$0xff]
    %v356 = vld [vmem:[%s3 + $0xf8] sm:$0xff]
    %v357 = vld [vmem:[%s3 + $0x100] sm:$0xff]
    %v358 = vld [vmem:[%s3 + $0x108] sm:$0xff]
    %v359 = vld [vmem:[%s3 + $0x110] sm:$0xff]
    %v360 = vld [vmem:[%s3 + $0x118] sm:$0xff]
    %v361 = vld [vmem:[#allocation5] sm:$0x3]
    %v363 = vlaneseq
    %v364 = vshrl.u32 %v363, 7
    %v365 = vsub.s32 0, %v364
    %v366 = vrot.slane %v361, %v365
    %v367 = vlaneseq
    %v368 = vshrl.u32 %v367, 7
    %v369 = vsub.s32 1, %v368
    %v370 = vrot.slane %v361, %v369
    %373 = vmatprep.subr.mxu0 %v326
    %374 = vmatpush1.msra.mxu0 %v325
    %375 = vmatprep.subr.mxu0 %v328
    %376 = vmatpush1.msra.mxu0 %v327
    %377 = vmatprep.subr.mxu0 %v330
    %378 = vmatpush1.msra.mxu0 %v329
    %379 = vmatprep.subr.mxu0 %v332
    %380 = vmatpush1.msra.mxu0 %v331
    %381 = vmatprep.subr.mxu0 %v334
    %382 = vmatpush1.msra.mxu0 %v333
    %383 = vmatprep.subr.mxu0 %v336
    %384 = vmatpush1.msra.mxu0 %v335
    %385 = vmatprep.subr.mxu0 %v338
    %386 = vmatpush1.msra.mxu0 %v337
    %387 = vmatprep.subr.mxu0 %v340
    %388 = vmatpush1.msra.mxu0 %v339
    %389 = vmatprep.subr.mxu0 %v342
    %390 = vmatpush1.msra.mxu0 %v341
    %391 = vmatprep.subr.mxu0 %v344
    %392 = vmatpush1.msra.mxu0 %v343
    %393 = vmatprep.subr.mxu0 %v346
    %394 = vmatpush1.msra.mxu0 %v345
    %395 = vmatprep.subr.mxu0 %v348
    %396 = vmatpush1.msra.mxu0 %v347
    %397 = vmatprep.subr.mxu0 %v350
    %398 = vmatpush1.msra.mxu0 %v349
    %399 = vmatprep.subr.mxu0 %v352
    %400 = vmatpush1.msra.mxu0 %v351
    %401 = vmatprep.subr.mxu0 %v354
    %402 = vmatpush1.msra.mxu0 %v353
    %403 = vmatprep.subr.mxu0 %v356
    %404 = vmatpush1.msra.mxu0 %v355
    %405 = vmatprep.subr.mxu0 %v358
    %406 = vmatpush1.msra.mxu0 %v357
    %407 = vmatprep.subr.mxu0 %v360
    %408 = vmatpush1.msra.mxu0 %v359
    %409 = vmatprep.subr.mxu0 0.0
    %410 = vmatpush1.msra.mxu0 0.0
    %411 = vmatprep.subr.mxu0 0.0
    %412 = vmatpush1.msra.mxu0 0.0
    %413 = vmatprep.subr.mxu0 0.0
    %414 = vmatpush1.msra.mxu0 0.0
    %415 = vmatprep.subr.mxu0 0.0
    %416 = vmatpush1.msra.mxu0 0.0
    %417 = vmatprep.subr.mxu0 0.0
    %418 = vmatpush1.msra.mxu0 0.0
    %419 = vmatprep.subr.mxu0 0.0
    %420 = vmatpush1.msra.mxu0 0.0
    %421 = vmatprep.subr.mxu0 0.0
    %422 = vmatpush1.msra.mxu0 0.0
    %423 = vmatprep.subr.mxu0 0.0
    %424 = vmatpush1.msra.mxu0 0.0
    %425 = vmatprep.subr.mxu0 0.0
    %426 = vmatpush1.msra.mxu0 0.0
    %427 = vmatprep.subr.mxu0 0.0
    %428 = vmatpush1.msra.mxu0 0.0
    %429 = vmatprep.subr.mxu0 0.0
    %430 = vmatpush1.msra.mxu0 0.0
    %431 = vmatprep.subr.mxu0 0.0
    %432 = vmatpush1.msra.mxu0 0.0
    %433 = vmatprep.subr.mxu0 0.0
    %434 = vmatpush1.msra.mxu0 0.0
    %435 = vmatprep.subr.mxu0 0.0
    %436 = vmatpush1.msra.mxu0 0.0
    %437 = vmatprep.mubr.f32.mxu0 %v252
    %438 = vmatmul.mubr.f32.gmra.mrb[0].mxu0 %v200
    %v439 = vpop.f32.mrb[0].mxu0
    %v440 = vadd.f32 %v366, %v439
    %v441 = vpop.f32.mrb[0].mxu0
    %v442 = vadd.f32 %v370, %v441
    %443 = vdwg.mxu0
    %v444 = vld [vmem:[%s5] sm:$0xff]
    %v445 = vld [vmem:[%s5 + $0x8] sm:$0xff]
    %v446 = vld [vmem:[%s5 + $0x10] sm:$0xff]
    %v447 = vld [vmem:[%s5 + $0x18] sm:$0xff]
    %v448 = vld [vmem:[%s5 + $0x20] sm:$0xff]
    %v449 = vld [vmem:[%s5 + $0x28] sm:$0xff]
    %v450 = vld [vmem:[%s5 + $0x30] sm:$0xff]
    %v451 = vld [vmem:[%s5 + $0x38] sm:$0xff]
    %v452 = vld [vmem:[%s5 + $0x40] sm:$0xff]
    %v453 = vld [vmem:[%s5 + $0x48] sm:$0xff]
    %v454 = vld [vmem:[%s5 + $0x50] sm:$0xff]
    %v455 = vld [vmem:[%s5 + $0x58] sm:$0xff]
    %v456 = vld [vmem:[%s5 + $0x60] sm:$0xff]
    %v457 = vld [vmem:[%s5 + $0x68] sm:$0xff]
    %v458 = vld [vmem:[%s5 + $0x70] sm:$0xff]
    %v459 = vld [vmem:[%s5 + $0x78] sm:$0xff]
    %v460 = vld [vmem:[%s5 + $0x80] sm:$0xff]
    %v461 = vld [vmem:[%s5 + $0x88] sm:$0xff]
    %v462 = vld [vmem:[%s5 + $0x90] sm:$0xff]
    %v463 = vld [vmem:[%s5 + $0x98] sm:$0xff]
    %v464 = vld [vmem:[%s5 + $0xa0] sm:$0xff]
    %v465 = vld [vmem:[%s5 + $0xa8] sm:$0xff]
    %v466 = vld [vmem:[%s5 + $0xb0] sm:$0xff]
    %v467 = vld [vmem:[%s5 + $0xb8] sm:$0xff]
    %v468 = vld [vmem:[%s5 + $0xc0] sm:$0xff]
    %v469 = vld [vmem:[%s5 + $0xc8] sm:$0xff]
    %v470 = vld [vmem:[%s5 + $0xd0] sm:$0xff]
    %v471 = vld [vmem:[%s5 + $0xd8] sm:$0xff]
    %v472 = vld [vmem:[%s5 + $0xe0] sm:$0xff]
    %v473 = vld [vmem:[%s5 + $0xe8] sm:$0xff]
    %v474 = vld [vmem:[%s5 + $0xf0] sm:$0xff]
    %v475 = vld [vmem:[%s5 + $0xf8] sm:$0xff]
    %v476 = vld [vmem:[%s5 + $0x100] sm:$0xff]
    %v477 = vld [vmem:[%s5 + $0x108] sm:$0xff]
    %v478 = vld [vmem:[%s5 + $0x110] sm:$0xff]
    %v479 = vld [vmem:[%s5 + $0x118] sm:$0xff]
    %v480 = vld [vmem:[#allocation7] sm:$0x3]
    %v482 = vlaneseq
    %v483 = vshrl.u32 %v482, 7
    %v484 = vsub.s32 0, %v483
    %v485 = vrot.slane %v480, %v484
    %v486 = vlaneseq
    %v487 = vshrl.u32 %v486, 7
    %v488 = vsub.s32 1, %v487
    %v489 = vrot.slane %v480, %v488
    %492 = vmatprep.subr.mxu0 %v445
    %493 = vmatpush1.msra.mxu0 %v444
    %494 = vmatprep.subr.mxu0 %v447
    %495 = vmatpush1.msra.mxu0 %v446
    %496 = vmatprep.subr.mxu0 %v449
    %497 = vmatpush1.msra.mxu0 %v448
    %498 = vmatprep.subr.mxu0 %v451
    %499 = vmatpush1.msra.mxu0 %v450
    %500 = vmatprep.subr.mxu0 %v453
    %501 = vmatpush1.msra.mxu0 %v452
    %502 = vmatprep.subr.mxu0 %v455
    %503 = vmatpush1.msra.mxu0 %v454
    %504 = vmatprep.subr.mxu0 %v457
    %505 = vmatpush1.msra.mxu0 %v456
    %506 = vmatprep.subr.mxu0 %v459
    %507 = vmatpush1.msra.mxu0 %v458
    %508 = vmatprep.subr.mxu0 %v461
    %509 = vmatpush1.msra.mxu0 %v460
    %510 = vmatprep.subr.mxu0 %v463
    %511 = vmatpush1.msra.mxu0 %v462
    %512 = vmatprep.subr.mxu0 %v465
    %513 = vmatpush1.msra.mxu0 %v464
    %514 = vmatprep.subr.mxu0 %v467
    %515 = vmatpush1.msra.mxu0 %v466
    %516 = vmatprep.subr.mxu0 %v469
    %517 = vmatpush1.msra.mxu0 %v468
    %518 = vmatprep.subr.mxu0 %v471
    %519 = vmatpush1.msra.mxu0 %v470
    %520 = vmatprep.subr.mxu0 %v473
    %521 = vmatpush1.msra.mxu0 %v472
    %522 = vmatprep.subr.mxu0 %v475
    %523 = vmatpush1.msra.mxu0 %v474
    %524 = vmatprep.subr.mxu0 %v477
    %525 = vmatpush1.msra.mxu0 %v476
    %526 = vmatprep.subr.mxu0 %v479
    %527 = vmatpush1.msra.mxu0 %v478
    %528 = vmatprep.subr.mxu0 0.0
    %529 = vmatpush1.msra.mxu0 0.0
    %530 = vmatprep.subr.mxu0 0.0
    %531 = vmatpush1.msra.mxu0 0.0
    %532 = vmatprep.subr.mxu0 0.0
    %533 = vmatpush1.msra.mxu0 0.0
    %534 = vmatprep.subr.mxu0 0.0
    %535 = vmatpush1.msra.mxu0 0.0
    %536 = vmatprep.subr.mxu0 0.0
    %537 = vmatpush1.msra.mxu0 0.0
    %538 = vmatprep.subr.mxu0 0.0
    %539 = vmatpush1.msra.mxu0 0.0
    %540 = vmatprep.subr.mxu0 0.0
    %541 = vmatpush1.msra.mxu0 0.0
    %542 = vmatprep.subr.mxu0 0.0
    %543 = vmatpush1.msra.mxu0 0.0
    %544 = vmatprep.subr.mxu0 0.0
    %545 = vmatpush1.msra.mxu0 0.0
    %546 = vmatprep.subr.mxu0 0.0
    %547 = vmatpush1.msra.mxu0 0.0
    %548 = vmatprep.subr.mxu0 0.0
    %549 = vmatpush1.msra.mxu0 0.0
    %550 = vmatprep.subr.mxu0 0.0
    %551 = vmatpush1.msra.mxu0 0.0
    %552 = vmatprep.subr.mxu0 0.0
    %553 = vmatpush1.msra.mxu0 0.0
    %554 = vmatprep.subr.mxu0 0.0
    %555 = vmatpush1.msra.mxu0 0.0
    %556 = vmatprep.mubr.f32.mxu0 %v252
    %557 = vmatmul.mubr.f32.gmra.mrb[0].mxu0 %v200
    %v558 = vpop.f32.mrb[0].mxu0
    %v559 = vadd.f32 %v485, %v558
    %v560 = vpop.f32.mrb[0].mxu0
    %v561 = vadd.f32 %v489, %v560
    %562 = vdwg.mxu0
    %v565 = vcombine.low %v321, %v323
    %v566 = vcombine.high %v321, %v323
    %v568 = vunpack.c.l.s4 1966171168
    %v569 = vunpack.c.0.s8 %v568
    %v570 = vlaneseq
    %v571 = vshrl.u32 %v570, 7
    %v572 = vsub.s32 %v569, %v571
    %v573 = vrot.slane %v565, %v572
    %v575 = vunpack.c.l.s4 1966171168
    %v576 = vunpack.c.0.s8 %v575
    %v577 = vlaneseq
    %v578 = vshrl.u32 %v577, 7
    %v579 = vsub.s32 %v576, %v578
    %v580 = vrot.slane %v566, %v579
    %v581 = vcombine.high %v573, %v573
    %v582 = vcombine.high %v580, %v580
    %v584 = vunpack.c.l.s4 1966171168
    %v585 = vunpack.c.0.s8 %v584
    %v586 = vlaneseq
    %v587 = vshrl.u32 %v586, 7
    %v588 = vsub.s32 %v585, %v587
    %v589 = vrot.slane %v573, %v588
    %v591 = vunpack.c.l.s4 1966171168
    %v592 = vunpack.c.0.s8 %v591
    %v593 = vlaneseq
    %v594 = vshrl.u32 %v593, 7
    %v595 = vsub.s32 %v592, %v594
    %v596 = vrot.slane %v580, %v595
    %v598 = vunpack.c.l.s4 1966171168
    %v599 = vunpack.c.0.s8 %v598
    %v600 = vlaneseq
    %v601 = vshrl.u32 %v600, 7
    %v602 = vsub.s32 %v599, %v601
    %v603 = vrot.slane %v581, %v602
    %v605 = vunpack.c.l.s4 1966171168
    %v606 = vunpack.c.0.s8 %v605
    %v607 = vlaneseq
    %v608 = vshrl.u32 %v607, 7
    %v609 = vsub.s32 %v606, %v608
    %v610 = vrot.slane %v582, %v609
    %v611 = vcombine.high %v589, %v589
    %v612 = vcombine.high %v596, %v596
    %v613 = vcombine.high %v603, %v603
    %v614 = vcombine.high %v610, %v610
    %v615 = vlaneseq
    %v616 = vshrl.u32 %v615, 7
    %v617 = vsub.s32 0, %v616
    %v618 = vrot.slane %v589, %v617
    %v619 = vlaneseq
    %v620 = vshrl.u32 %v619, 7
    %v621 = vsub.s32 1, %v620
    %v622 = vrot.slane %v589, %v621
    %v623 = vlaneseq
    %v624 = vshrl.u32 %v623, 7
    %v625 = vsub.s32 0, %v624
    %v626 = vrot.slane %v603, %v625
    %v627 = vlaneseq
    %v628 = vshrl.u32 %v627, 7
    %v629 = vsub.s32 1, %v628
    %v630 = vrot.slane %v603, %v629
    %v631 = vlaneseq
    %v632 = vshrl.u32 %v631, 7
    %v633 = vsub.s32 0, %v632
    %v634 = vrot.slane %v611, %v633
    %v635 = vlaneseq
    %v636 = vshrl.u32 %v635, 7
    %v637 = vsub.s32 1, %v636
    %v638 = vrot.slane %v611, %v637
    %v639 = vlaneseq
    %v640 = vshrl.u32 %v639, 7
    %v641 = vsub.s32 0, %v640
    %v642 = vrot.slane %v613, %v641
    %v643 = vlaneseq
    %v644 = vshrl.u32 %v643, 7
    %v645 = vsub.s32 1, %v644
    %v646 = vrot.slane %v613, %v645
    %v647 = vlaneseq
    %v648 = vshrl.u32 %v647, 7
    %v649 = vsub.s32 0, %v648
    %v650 = vrot.slane %v596, %v649
    %v651 = vlaneseq
    %v652 = vshrl.u32 %v651, 7
    %v653 = vsub.s32 1, %v652
    %v654 = vrot.slane %v596, %v653
    %v655 = vlaneseq
    %v656 = vshrl.u32 %v655, 7
    %v657 = vsub.s32 0, %v656
    %v658 = vrot.slane %v610, %v657
    %v659 = vlaneseq
    %v660 = vshrl.u32 %v659, 7
    %v661 = vsub.s32 1, %v660
    %v662 = vrot.slane %v610, %v661
    %v663 = vlaneseq
    %v664 = vshrl.u32 %v663, 7
    %v665 = vsub.s32 0, %v664
    %v666 = vrot.slane %v612, %v665
    %v667 = vlaneseq
    %v668 = vshrl.u32 %v667, 7
    %v669 = vsub.s32 1, %v668
    %v670 = vrot.slane %v612, %v669
    %v671 = vlaneseq
    %v672 = vshrl.u32 %v671, 7
    %v673 = vsub.s32 0, %v672
    %v674 = vrot.slane %v614, %v673
    %v675 = vlaneseq
    %v676 = vshrl.u32 %v675, 7
    %v677 = vsub.s32 1, %v676
    %v678 = vrot.slane %v614, %v677
    %v695 = vmul.f32 %v618, %v440
    %v696 = vmul.f32 %v622, %v442
    %v697 = vmul.f32 %v626, %v440
    %v698 = vmul.f32 %v630, %v442
    %v699 = vmul.f32 %v634, %v440
    %v700 = vmul.f32 %v638, %v442
    %v701 = vmul.f32 %v642, %v440
    %v702 = vmul.f32 %v646, %v442
    %v703 = vmul.f32 %v650, %v440
    %v704 = vmul.f32 %v654, %v442
    %v705 = vmul.f32 %v658, %v440
    %v706 = vmul.f32 %v662, %v442
    %v707 = vmul.f32 %v666, %v440
    %v708 = vmul.f32 %v670, %v442
    %v709 = vmul.f32 %v674, %v440
    %v710 = vmul.f32 %v678, %v442
    %v711 = vrot.slane %v695, 4
    %v712 = vmax.f32 %v695, %v711
    %v713 = vrot.slane %v712, 2
    %v714 = vmax.f32 %v712, %v713
    %v715 = vrot.slane %v714, 1
    %v716 = vmax.f32 %v714, %v715
    %v717 = vsel %vm250, %v696, -inf
    %v718 = vrot.slane %v717, 4
    %v719 = vmax.f32 %v717, %v718
    %v720 = vrot.slane %v719, 2
    %v721 = vmax.f32 %v719, %v720
    %v722 = vrot.slane %v721, 1
    %v723 = vmax.f32 %v721, %v722
    %v724 = vrot.slane %v697, 4
    %v725 = vmax.f32 %v697, %v724
    %v726 = vrot.slane %v725, 2
    %v727 = vmax.f32 %v725, %v726
    %v728 = vrot.slane %v727, 1
    %v729 = vmax.f32 %v727, %v728
    %v730 = vsel %vm250, %v698, -inf
    %v731 = vrot.slane %v730, 4
    %v732 = vmax.f32 %v730, %v731
    %v733 = vrot.slane %v732, 2
    %v734 = vmax.f32 %v732, %v733
    %v735 = vrot.slane %v734, 1
    %v736 = vmax.f32 %v734, %v735
    %v737 = vrot.slane %v699, 4
    %v738 = vmax.f32 %v699, %v737
    %v739 = vrot.slane %v738, 2
    %v740 = vmax.f32 %v738, %v739
    %v741 = vrot.slane %v740, 1
    %v742 = vmax.f32 %v740, %v741
    %v743 = vsel %vm250, %v700, -inf
    %v744 = vrot.slane %v743, 4
    %v745 = vmax.f32 %v743, %v744
    %v746 = vrot.slane %v745, 2
    %v747 = vmax.f32 %v745, %v746
    %v748 = vrot.slane %v747, 1
    %v749 = vmax.f32 %v747, %v748
    %v750 = vrot.slane %v701, 4
    %v751 = vmax.f32 %v701, %v750
    %v752 = vrot.slane %v751, 2
    %v753 = vmax.f32 %v751, %v752
    %v754 = vrot.slane %v753, 1
    %v755 = vmax.f32 %v753, %v754
    %v756 = vsel %vm250, %v702, -inf
    %v757 = vrot.slane %v756, 4
    %v758 = vmax.f32 %v756, %v757
    %v759 = vrot.slane %v758, 2
    %v760 = vmax.f32 %v758, %v759
    %v761 = vrot.slane %v760, 1
    %v762 = vmax.f32 %v760, %v761
    %v763 = vrot.slane %v703, 4
    %v764 = vmax.f32 %v703, %v763
    %v765 = vrot.slane %v764, 2
    %v766 = vmax.f32 %v764, %v765
    %v767 = vrot.slane %v766, 1
    %v768 = vmax.f32 %v766, %v767
    %v769 = vsel %vm250, %v704, -inf
    %v770 = vrot.slane %v769, 4
    %v771 = vmax.f32 %v769, %v770
    %v772 = vrot.slane %v771, 2
    %v773 = vmax.f32 %v771, %v772
    %v774 = vrot.slane %v773, 1
    %v775 = vmax.f32 %v773, %v774
    %v776 = vrot.slane %v705, 4
    %v777 = vmax.f32 %v705, %v776
    %v778 = vrot.slane %v777, 2
    %v779 = vmax.f32 %v777, %v778
    %v780 = vrot.slane %v779, 1
    %v781 = vmax.f32 %v779, %v780
    %v782 = vsel %vm250, %v706, -inf
    %v783 = vrot.slane %v782, 4
    %v784 = vmax.f32 %v782, %v783
    %v785 = vrot.slane %v784, 2
    %v786 = vmax.f32 %v784, %v785
    %v787 = vrot.slane %v786, 1
    %v788 = vmax.f32 %v786, %v787
    %v789 = vrot.slane %v707, 4
    %v790 = vmax.f32 %v707, %v789
    %v791 = vrot.slane %v790, 2
    %v792 = vmax.f32 %v790, %v791
    %v793 = vrot.slane %v792, 1
    %v794 = vmax.f32 %v792, %v793
    %v795 = vsel %vm250, %v708, -inf
    %v796 = vrot.slane %v795, 4
    %v797 = vmax.f32 %v795, %v796
    %v798 = vrot.slane %v797, 2
    %v799 = vmax.f32 %v797, %v798
    %v800 = vrot.slane %v799, 1
    %v801 = vmax.f32 %v799, %v800
    %v802 = vrot.slane %v709, 4
    %v803 = vmax.f32 %v709, %v802
    %v804 = vrot.slane %v803, 2
    %v805 = vmax.f32 %v803, %v804
    %v806 = vrot.slane %v805, 1
    %v807 = vmax.f32 %v805, %v806
    %v808 = vsel %vm250, %v710, -inf
    %v809 = vrot.slane %v808, 4
    %v810 = vmax.f32 %v808, %v809
    %v811 = vrot.slane %v810, 2
    %v812 = vmax.f32 %v810, %v811
    %v813 = vrot.slane %v812, 1
    %v814 = vmax.f32 %v812, %v813
    %v815 = vsub.f32 %v695, %v716
    %v816 = vsub.f32 %v696, %v723
    %v817 = vsub.f32 %v697, %v729
    %v818 = vsub.f32 %v698, %v736
    %v819 = vsub.f32 %v699, %v742
    %v820 = vsub.f32 %v700, %v749
    %v821 = vsub.f32 %v701, %v755
    %v822 = vsub.f32 %v702, %v762
    %v823 = vsub.f32 %v703, %v768
    %v824 = vsub.f32 %v704, %v775
    %v825 = vsub.f32 %v705, %v781
    %v826 = vsub.f32 %v706, %v788
    %v827 = vsub.f32 %v707, %v794
    %v828 = vsub.f32 %v708, %v801
    %v829 = vsub.f32 %v709, %v807
    %v830 = vsub.f32 %v710, %v814
    %v831 = vmul.f32 %v815, 1.442695
    %v832 = vpow.pop %v831
    %v833 = vmul.f32 %v816, 1.442695
    %v834 = vpow.pop %v833
    %v835 = vmul.f32 %v817, 1.442695
    %v836 = vpow.pop %v835
    %v837 = vmul.f32 %v818, 1.442695
    %v838 = vpow.pop %v837
    %v839 = vmul.f32 %v819, 1.442695
    %v840 = vpow.pop %v839
    %v841 = vmul.f32 %v820, 1.442695
    %v842 = vpow.pop %v841
    %v843 = vmul.f32 %v821, 1.442695
    %v844 = vpow.pop %v843
    %v845 = vmul.f32 %v822, 1.442695
    %v846 = vpow.pop %v845
    %v847 = vmul.f32 %v823, 1.442695
    %v848 = vpow.pop %v847
    %v849 = vmul.f32 %v824, 1.442695
    %v850 = vpow.pop %v849
    %v851 = vmul.f32 %v825, 1.442695
    %v852 = vpow.pop %v851
    %v853 = vmul.f32 %v826, 1.442695
    %v854 = vpow.pop %v853
    %v855 = vmul.f32 %v827, 1.442695
    %v856 = vpow.pop %v855
    %v857 = vmul.f32 %v828, 1.442695
    %v858 = vpow.pop %v857
    %v859 = vmul.f32 %v829, 1.442695
    %v860 = vpow.pop %v859
    %v861 = vmul.f32 %v830, 1.442695
    %v862 = vpow.pop %v861
    %v863 = vmul.f32 %v832, %v559
    %v864 = vmul.f32 %v834, %v561
    %v865 = vmul.f32 %v836, %v559
    %v866 = vmul.f32 %v838, %v561
    %v867 = vmul.f32 %v840, %v559
    %v868 = vmul.f32 %v842, %v561
    %v869 = vmul.f32 %v844, %v559
    %v870 = vmul.f32 %v846, %v561
    %v871 = vmul.f32 %v848, %v559
    %v872 = vmul.f32 %v850, %v561
    %v873 = vmul.f32 %v852, %v559
    %v874 = vmul.f32 %v854, %v561
    %v875 = vmul.f32 %v856, %v559
    %v876 = vmul.f32 %v858, %v561
    %v877 = vmul.f32 %v860, %v559
    %v878 = vmul.f32 %v862, %v561
    %v879 = vrot.slane %v863, 4
    %v880 = vadd.f32 %v863, %v879
    %v881 = vrot.slane %v880, 2
    %v882 = vadd.f32 %v880, %v881
    %v883 = vrot.slane %v882, 1
    %v884 = vadd.f32 %v882, %v883
    %v885 = vsel %vm250, %v864, 0.0
    %v886 = vrot.slane %v885, 4
    %v887 = vadd.f32 %v885, %v886
    %v888 = vrot.slane %v887, 2
    %v889 = vadd.f32 %v887, %v888
    %v890 = vrot.slane %v889, 1
    %v891 = vadd.f32 %v889, %v890
    %v892 = vrot.slane %v865, 4
    %v893 = vadd.f32 %v865, %v892
    %v894 = vrot.slane %v893, 2
    %v895 = vadd.f32 %v893, %v894
    %v896 = vrot.slane %v895, 1
    %v897 = vadd.f32 %v895, %v896
    %v898 = vsel %vm250, %v866, 0.0
    %v899 = vrot.slane %v898, 4
    %v900 = vadd.f32 %v898, %v899
    %v901 = vrot.slane %v900, 2
    %v902 = vadd.f32 %v900, %v901
    %v903 = vrot.slane %v902, 1
    %v904 = vadd.f32 %v902, %v903
    %v905 = vrot.slane %v867, 4
    %v906 = vadd.f32 %v867, %v905
    %v907 = vrot.slane %v906, 2
    %v908 = vadd.f32 %v906, %v907
    %v909 = vrot.slane %v908, 1
    %v910 = vadd.f32 %v908, %v909
    %v911 = vsel %vm250, %v868, 0.0
    %v912 = vrot.slane %v911, 4
    %v913 = vadd.f32 %v911, %v912
    %v914 = vrot.slane %v913, 2
    %v915 = vadd.f32 %v913, %v914
    %v916 = vrot.slane %v915, 1
    %v917 = vadd.f32 %v915, %v916
    %v918 = vrot.slane %v869, 4
    %v919 = vadd.f32 %v869, %v918
    %v920 = vrot.slane %v919, 2
    %v921 = vadd.f32 %v919, %v920
    %v922 = vrot.slane %v921, 1
    %v923 = vadd.f32 %v921, %v922
    %v924 = vsel %vm250, %v870, 0.0
    %v925 = vrot.slane %v924, 4
    %v926 = vadd.f32 %v924, %v925
    %v927 = vrot.slane %v926, 2
    %v928 = vadd.f32 %v926, %v927
    %v929 = vrot.slane %v928, 1
    %v930 = vadd.f32 %v928, %v929
    %v931 = vrot.slane %v871, 4
    %v932 = vadd.f32 %v871, %v931
    %v933 = vrot.slane %v932, 2
    %v934 = vadd.f32 %v932, %v933
    %v935 = vrot.slane %v934, 1
    %v936 = vadd.f32 %v934, %v935
    %v937 = vsel %vm250, %v872, 0.0
    %v938 = vrot.slane %v937, 4
    %v939 = vadd.f32 %v937, %v938
    %v940 = vrot.slane %v939, 2
    %v941 = vadd.f32 %v939, %v940
    %v942 = vrot.slane %v941, 1
    %v943 = vadd.f32 %v941, %v942
    %v944 = vrot.slane %v873, 4
    %v945 = vadd.f32 %v873, %v944
    %v946 = vrot.slane %v945, 2
    %v947 = vadd.f32 %v945, %v946
    %v948 = vrot.slane %v947, 1
    %v949 = vadd.f32 %v947, %v948
    %v950 = vsel %vm250, %v874, 0.0
    %v951 = vrot.slane %v950, 4
    %v952 = vadd.f32 %v950, %v951
    %v953 = vrot.slane %v952, 2
    %v954 = vadd.f32 %v952, %v953
    %v955 = vrot.slane %v954, 1
    %v956 = vadd.f32 %v954, %v955
    %v957 = vrot.slane %v875, 4
    %v958 = vadd.f32 %v875, %v957
    %v959 = vrot.slane %v958, 2
    %v960 = vadd.f32 %v958, %v959
    %v961 = vrot.slane %v960, 1
    %v962 = vadd.f32 %v960, %v961
    %v963 = vsel %vm250, %v876, 0.0
    %v964 = vrot.slane %v963, 4
    %v965 = vadd.f32 %v963, %v964
    %v966 = vrot.slane %v965, 2
    %v967 = vadd.f32 %v965, %v966
    %v968 = vrot.slane %v967, 1
    %v969 = vadd.f32 %v967, %v968
    %v970 = vrot.slane %v877, 4
    %v971 = vadd.f32 %v877, %v970
    %v972 = vrot.slane %v971, 2
    %v973 = vadd.f32 %v971, %v972
    %v974 = vrot.slane %v973, 1
    %v975 = vadd.f32 %v973, %v974
    %v976 = vsel %vm250, %v878, 0.0
    %v977 = vrot.slane %v976, 4
    %v978 = vadd.f32 %v976, %v977
    %v979 = vrot.slane %v978, 2
    %v980 = vadd.f32 %v978, %v979
    %v981 = vrot.slane %v980, 1
    %v982 = vadd.f32 %v980, %v981
    %v983 = vrot.slane %v832, 4
    %v984 = vadd.f32 %v832, %v983
    %v985 = vrot.slane %v984, 2
    %v986 = vadd.f32 %v984, %v985
    %v987 = vrot.slane %v986, 1
    %v988 = vadd.f32 %v986, %v987
    %v989 = vsel %vm250, %v834, 0.0
    %v990 = vrot.slane %v989, 4
    %v991 = vadd.f32 %v989, %v990
    %v992 = vrot.slane %v991, 2
    %v993 = vadd.f32 %v991, %v992
    %v994 = vrot.slane %v993, 1
    %v995 = vadd.f32 %v993, %v994
    %v996 = vrot.slane %v836, 4
    %v997 = vadd.f32 %v836, %v996
    %v998 = vrot.slane %v997, 2
    %v999 = vadd.f32 %v997, %v998
    %v1000 = vrot.slane %v999, 1
    %v1001 = vadd.f32 %v999, %v1000
    %v1002 = vsel %vm250, %v838, 0.0
    %v1003 = vrot.slane %v1002, 4
    %v1004 = vadd.f32 %v1002, %v1003
    %v1005 = vrot.slane %v1004, 2
    %v1006 = vadd.f32 %v1004, %v1005
    %v1007 = vrot.slane %v1006, 1
    %v1008 = vadd.f32 %v1006, %v1007
    %v1009 = vrot.slane %v840, 4
    %v1010 = vadd.f32 %v840, %v1009
    %v1011 = vrot.slane %v1010, 2
    %v1012 = vadd.f32 %v1010, %v1011
    %v1013 = vrot.slane %v1012, 1
    %v1014 = vadd.f32 %v1012, %v1013
    %v1015 = vsel %vm250, %v842, 0.0
    %v1016 = vrot.slane %v1015, 4
    %v1017 = vadd.f32 %v1015, %v1016
    %v1018 = vrot.slane %v1017, 2
    %v1019 = vadd.f32 %v1017, %v1018
    %v1020 = vrot.slane %v1019, 1
    %v1021 = vadd.f32 %v1019, %v1020
    %v1022 = vrot.slane %v844, 4
    %v1023 = vadd.f32 %v844, %v1022
    %v1024 = vrot.slane %v1023, 2
    %v1025 = vadd.f32 %v1023, %v1024
    %v1026 = vrot.slane %v1025, 1
    %v1027 = vadd.f32 %v1025, %v1026
    %v1028 = vsel %vm250, %v846, 0.0
    %v1029 = vrot.slane %v1028, 4
    %v1030 = vadd.f32 %v1028, %v1029
    %v1031 = vrot.slane %v1030, 2
    %v1032 = vadd.f32 %v1030, %v1031
    %v1033 = vrot.slane %v1032, 1
    %v1034 = vadd.f32 %v1032, %v1033
    %v1035 = vrot.slane %v848, 4
    %v1036 = vadd.f32 %v848, %v1035
    %v1037 = vrot.slane %v1036, 2
    %v1038 = vadd.f32 %v1036, %v1037
    %v1039 = vrot.slane %v1038, 1
    %v1040 = vadd.f32 %v1038, %v1039
    %v1041 = vsel %vm250, %v850, 0.0
    %v1042 = vrot.slane %v1041, 4
    %v1043 = vadd.f32 %v1041, %v1042
    %v1044 = vrot.slane %v1043, 2
    %v1045 = vadd.f32 %v1043, %v1044
    %v1046 = vrot.slane %v1045, 1
    %v1047 = vadd.f32 %v1045, %v1046
    %v1048 = vrot.slane %v852, 4
    %v1049 = vadd.f32 %v852, %v1048
    %v1050 = vrot.slane %v1049, 2
    %v1051 = vadd.f32 %v1049, %v1050
    %v1052 = vrot.slane %v1051, 1
    %v1053 = vadd.f32 %v1051, %v1052
    %v1054 = vsel %vm250, %v854, 0.0
    %v1055 = vrot.slane %v1054, 4
    %v1056 = vadd.f32 %v1054, %v1055
    %v1057 = vrot.slane %v1056, 2
    %v1058 = vadd.f32 %v1056, %v1057
    %v1059 = vrot.slane %v1058, 1
    %v1060 = vadd.f32 %v1058, %v1059
    %v1061 = vrot.slane %v856, 4
    %v1062 = vadd.f32 %v856, %v1061
    %v1063 = vrot.slane %v1062, 2
    %v1064 = vadd.f32 %v1062, %v1063
    %v1065 = vrot.slane %v1064, 1
    %v1066 = vadd.f32 %v1064, %v1065
    %v1067 = vsel %vm250, %v858, 0.0
    %v1068 = vrot.slane %v1067, 4
    %v1069 = vadd.f32 %v1067, %v1068
    %v1070 = vrot.slane %v1069, 2
    %v1071 = vadd.f32 %v1069, %v1070
    %v1072 = vrot.slane %v1071, 1
    %v1073 = vadd.f32 %v1071, %v1072
    %v1074 = vrot.slane %v860, 4
    %v1075 = vadd.f32 %v860, %v1074
    %v1076 = vrot.slane %v1075, 2
    %v1077 = vadd.f32 %v1075, %v1076
    %v1078 = vrot.slane %v1077, 1
    %v1079 = vadd.f32 %v1077, %v1078
    %v1080 = vsel %vm250, %v862, 0.0
    %v1081 = vrot.slane %v1080, 4
    %v1082 = vadd.f32 %v1080, %v1081
    %v1083 = vrot.slane %v1082, 2
    %v1084 = vadd.f32 %v1082, %v1083
    %v1085 = vrot.slane %v1084, 1
    %v1086 = vadd.f32 %v1084, %v1085
    %v1087 = vrcp.pop %v988
    %v1088 = vmul.f32 %v884, %v1087
    %v1089 = vrcp.pop %v995
    %v1090 = vmul.f32 %v891, %v1089
    %v1091 = vrcp.pop %v1001
    %v1092 = vmul.f32 %v897, %v1091
    %v1093 = vrcp.pop %v1008
    %v1094 = vmul.f32 %v904, %v1093
    %v1095 = vrcp.pop %v1014
    %v1096 = vmul.f32 %v910, %v1095
    %v1097 = vrcp.pop %v1021
    %v1098 = vmul.f32 %v917, %v1097
    %v1099 = vrcp.pop %v1027
    %v1100 = vmul.f32 %v923, %v1099
    %v1101 = vrcp.pop %v1034
    %v1102 = vmul.f32 %v930, %v1101
    %v1103 = vrcp.pop %v1040
    %v1104 = vmul.f32 %v936, %v1103
    %v1105 = vrcp.pop %v1047
    %v1106 = vmul.f32 %v943, %v1105
    %v1107 = vrcp.pop %v1053
    %v1108 = vmul.f32 %v949, %v1107
    %v1109 = vrcp.pop %v1060
    %v1110 = vmul.f32 %v956, %v1109
    %v1111 = vrcp.pop %v1066
    %v1112 = vmul.f32 %v962, %v1111
    %v1113 = vrcp.pop %v1073
    %v1114 = vmul.f32 %v969, %v1113
    %v1115 = vrcp.pop %v1079
    %v1116 = vmul.f32 %v975, %v1115
    %v1117 = vrcp.pop %v1086
    %v1118 = vmul.f32 %v982, %v1117
    %v1119 = vld [vmem:[#allocation8] sm:$0xff]
    %v1120 = vld [vmem:[#allocation8 + $0x8] sm:$0xff]
    %v1121 = vld [vmem:[#allocation8 + $0x10] sm:$0xff]
    %v1122 = vld [vmem:[#allocation8 + $0x18] sm:$0xff]
    %v1123 = vld [vmem:[#allocation8 + $0x20] sm:$0xff]
    %v1124 = vld [vmem:[#allocation8 + $0x28] sm:$0xff]
    %v1125 = vld [vmem:[#allocation8 + $0x30] sm:$0xff]
    %v1126 = vld [vmem:[#allocation8 + $0x38] sm:$0xff]
    %v1127 = vld [vmem:[#allocation8 + $0x40] sm:$0xff]
    %v1128 = vld [vmem:[#allocation8 + $0x48] sm:$0xff]
    %v1129 = vld [vmem:[#allocation8 + $0x50] sm:$0xff]
    %v1130 = vld [vmem:[#allocation8 + $0x58] sm:$0xff]
    %v1131 = vld [vmem:[#allocation8 + $0x60] sm:$0xff]
    %v1132 = vld [vmem:[#allocation8 + $0x68] sm:$0xff]
    %v1133 = vld [vmem:[#allocation8 + $0x70] sm:$0xff]
    %v1134 = vld [vmem:[#allocation8 + $0x78] sm:$0xff]
    %v1135 = vld [vmem:[#allocation8 + $0x80] sm:$0xff]
    %v1136 = vld [vmem:[#allocation8 + $0x88] sm:$0xff]
    %v1137 = vld [vmem:[#allocation8 + $0x90] sm:$0xff]
    %v1138 = vld [vmem:[#allocation8 + $0x98] sm:$0xff]
    %v1139 = vld [vmem:[#allocation8 + $0xa0] sm:$0xff]
    %v1140 = vld [vmem:[#allocation8 + $0xa8] sm:$0xff]
    %v1141 = vld [vmem:[#allocation8 + $0xb0] sm:$0xff]
    %v1142 = vld [vmem:[#allocation8 + $0xb8] sm:$0xff]
    %v1143 = vld [vmem:[#allocation8 + $0xc0] sm:$0xff]
    %v1144 = vld [vmem:[#allocation8 + $0xc8] sm:$0xff]
    %v1145 = vld [vmem:[#allocation8 + $0xd0] sm:$0xff]
    %v1146 = vld [vmem:[#allocation8 + $0xd8] sm:$0xff]
    %v1147 = vld [vmem:[#allocation8 + $0xe0] sm:$0xff]
    %v1148 = vld [vmem:[#allocation8 + $0xe8] sm:$0xff]
    %v1149 = vld [vmem:[#allocation8 + $0xf0] sm:$0xff]
    %v1150 = vld [vmem:[#allocation8 + $0xf8] sm:$0xff]
    %v1151 = vld [vmem:[#allocation8 + $0x100] sm:$0xff]
    %v1152 = vld [vmem:[#allocation8 + $0x108] sm:$0xff]
    %v1153 = vld [vmem:[#allocation8 + $0x110] sm:$0xff]
    %v1154 = vld [vmem:[#allocation8 + $0x118] sm:$0xff]
    %v1155 = vld [vmem:[#allocation10] sm:$0x3]
    %v1157 = vlaneseq
    %v1158 = vshrl.u32 %v1157, 7
    %v1159 = vsub.s32 0, %v1158
    %v1160 = vrot.slane %v1155, %v1159
    %v1161 = vlaneseq
    %v1162 = vshrl.u32 %v1161, 7
    %v1163 = vsub.s32 1, %v1162
    %v1164 = vrot.slane %v1155, %v1163
    %vm1183 = vcmask 1041409
    %v1184 = vsel %vm1183, %v1092, %v1088
    %vm1185 = vcmask 1042434
    %v1186 = vsel %vm1185, %v1096, %v1184
    %vm1187 = vcmask 1043459
    %v1188 = vsel %vm1187, %v1100, %v1186
    %vm1189 = vcmask 1044484
    %v1190 = vsel %vm1189, %v1104, %v1188
    %vm1191 = vcmask 1045509
    %v1192 = vsel %vm1191, %v1108, %v1190
    %vm1193 = vcmask 1046534
    %v1194 = vsel %vm1193, %v1112, %v1192
    %vm1195 = vcmask 1047559
    %v1196 = vsel %vm1195, %v1116, %v1194
    %v1197 = vsel %vm1183, %v1094, %v1090
    %v1198 = vsel %vm1185, %v1098, %v1197
    %v1199 = vsel %vm1187, %v1102, %v1198
    %v1200 = vsel %vm1189, %v1106, %v1199
    %v1201 = vsel %vm1191, %v1110, %v1200
    %v1202 = vsel %vm1193, %v1114, %v1201
    %v1203 = vsel %vm1195, %v1118, %v1202
    %v1205 = vsel %vm250, %v1203, 0
    %1207 = vmatprep.subr.mxu0 %v1120
    %1208 = vmatpush1.msra.mxu0 %v1119
    %1209 = vmatprep.subr.mxu0 %v1122
    %1210 = vmatpush1.msra.mxu0 %v1121
    %1211 = vmatprep.subr.mxu0 %v1124
    %1212 = vmatpush1.msra.mxu0 %v1123
    %1213 = vmatprep.subr.mxu0 %v1126
    %1214 = vmatpush1.msra.mxu0 %v1125
    %1215 = vmatprep.subr.mxu0 %v1128
    %1216 = vmatpush1.msra.mxu0 %v1127
    %1217 = vmatprep.subr.mxu0 %v1130
    %1218 = vmatpush1.msra.mxu0 %v1129
    %1219 = vmatprep.subr.mxu0 %v1132
    %1220 = vmatpush1.msra.mxu0 %v1131
    %1221 = vmatprep.subr.mxu0 %v1134
    %1222 = vmatpush1.msra.mxu0 %v1133
    %1223 = vmatprep.subr.mxu0 %v1136
    %1224 = vmatpush1.msra.mxu0 %v1135
    %1225 = vmatprep.subr.mxu0 %v1138
    %1226 = vmatpush1.msra.mxu0 %v1137
    %1227 = vmatprep.subr.mxu0 %v1140
    %1228 = vmatpush1.msra.mxu0 %v1139
    %1229 = vmatprep.subr.mxu0 %v1142
    %1230 = vmatpush1.msra.mxu0 %v1141
    %1231 = vmatprep.subr.mxu0 %v1144
    %1232 = vmatpush1.msra.mxu0 %v1143
    %1233 = vmatprep.subr.mxu0 %v1146
    %1234 = vmatpush1.msra.mxu0 %v1145
    %1235 = vmatprep.subr.mxu0 %v1148
    %1236 = vmatpush1.msra.mxu0 %v1147
    %1237 = vmatprep.subr.mxu0 %v1150
    %1238 = vmatpush1.msra.mxu0 %v1149
    %1239 = vmatprep.subr.mxu0 %v1152
    %1240 = vmatpush1.msra.mxu0 %v1151
    %1241 = vmatprep.subr.mxu0 %v1154
    %1242 = vmatpush1.msra.mxu0 %v1153
    %1243 = vmatprep.subr.mxu0 0.0
    %1244 = vmatpush1.msra.mxu0 0.0
    %1245 = vmatprep.subr.mxu0 0.0
    %1246 = vmatpush1.msra.mxu0 0.0
    %1247 = vmatprep.subr.mxu0 0.0
    %1248 = vmatpush1.msra.mxu0 0.0
    %1249 = vmatprep.subr.mxu0 0.0
    %1250 = vmatpush1.msra.mxu0 0.0
    %1251 = vmatprep.subr.mxu0 0.0
    %1252 = vmatpush1.msra.mxu0 0.0
    %1253 = vmatprep.subr.mxu0 0.0
    %1254 = vmatpush1.msra.mxu0 0.0
    %1255 = vmatprep.subr.mxu0 0.0
    %1256 = vmatpush1.msra.mxu0 0.0
    %1257 = vmatprep.subr.mxu0 0.0
    %1258 = vmatpush1.msra.mxu0 0.0
    %1259 = vmatprep.subr.mxu0 0.0
    %1260 = vmatpush1.msra.mxu0 0.0
    %1261 = vmatprep.subr.mxu0 0.0
    %1262 = vmatpush1.msra.mxu0 0.0
    %1263 = vmatprep.subr.mxu0 0.0
    %1264 = vmatpush1.msra.mxu0 0.0
    %1265 = vmatprep.subr.mxu0 0.0
    %1266 = vmatpush1.msra.mxu0 0.0
    %1267 = vmatprep.subr.mxu0 0.0
    %1268 = vmatpush1.msra.mxu0 0.0
    %1269 = vmatprep.subr.mxu0 0.0
    %1270 = vmatpush1.msra.mxu0 0.0
    %1271 = vmatprep.mubr.f32.mxu0 %v1205
    %1272 = vmatmul.mubr.f32.gmra.mrb[0].mxu0 %v1196
    %v1273 = vpop.f32.mrb[0].mxu0
    %v1274 = vadd.f32 %v1160, %v1273
    %v1275 = vpop.f32.mrb[0].mxu0
    %v1276 = vadd.f32 %v1164, %v1275
    %1277 = vdwg.mxu0
    %v1278 = vadd.f32 %v200, %v1274
    %v1279 = vadd.f32 %v201, %v1276
    %v1280 = vsel %vm250, %v1279, 0.0
    %v1281 = vadd.f32 %v1278, %v1280
    %1282 = vadd.xlane.f32.xlu0 %v1281
    %v1283 = vpop.xlane.xlu0 %1282
    %v1284 = vrcp.pop 144.0
    %v1285 = vmul.f32 %v1283, %v1284
    %v1286 = vsub.f32 %v1278, %v1285
    %v1287 = vsub.f32 %v1279, %v1285
    %v1288 = vmul.f32 %v1286, %v1286
    %v1289 = vmul.f32 %v1287, %v1287
    %v1290 = vsel %vm250, %v1289, 0.0
    %v1291 = vadd.f32 %v1288, %v1290
    %1292 = vadd.xlane.f32.xlu0 %v1291
    %v1293 = vpop.xlane.xlu0 %1292
    %v1294 = vmul.f32 %v1293, %v1284
    %v1295 = vadd.f32 %v1294, 1e-05
    %v1296 = vrsqrt.pop %v1295
    %v1297 = vmul.f32 %v1286, %v1296
    %v1298 = vmul.f32 %v1287, %v1296
    %v1299 = vld [vmem:[#allocation11] sm:$0x3]
    %v1301 = vlaneseq
    %v1302 = vshrl.u32 %v1301, 7
    %v1303 = vsub.s32 0, %v1302
    %v1304 = vrot.slane %v1299, %v1303
    %v1305 = vlaneseq
    %v1306 = vshrl.u32 %v1305, 7
    %v1307 = vsub.s32 1, %v1306
    %v1308 = vrot.slane %v1299, %v1307
    %v1311 = vmul.f32 %v1297, %v1304
    %v1312 = vmul.f32 %v1298, %v1308
    %v1313 = vld [vmem:[#allocation13] sm:$0x3]
    %v1315 = vlaneseq
    %v1316 = vshrl.u32 %v1315, 7
    %v1317 = vsub.s32 0, %v1316
    %v1318 = vrot.slane %v1313, %v1317
    %v1319 = vlaneseq
    %v1320 = vshrl.u32 %v1319, 7
    %v1321 = vsub.s32 1, %v1320
    %v1322 = vrot.slane %v1313, %v1321
    %v1325 = vadd.f32 %v1311, %v1318
    %v1326 = vadd.f32 %v1312, %v1322
    %v1327 = vpack.c.bf16 %v1325, %v1325
    %v1328 = vpack.c.bf16 %v1326, %v1326
    %v1329 = vld [vmem:[%s11] sm:$0xff]
    %v1330 = vld [vmem:[%s11 + $0x8] sm:$0xff]
    %v1331 = vld [vmem:[%s11 + $0x10] sm:$0xff]
    %v1332 = vld [vmem:[%s11 + $0x18] sm:$0xff]
    %v1333 = vld [vmem:[%s11 + $0x20] sm:$0xff]
    %v1334 = vld [vmem:[%s11 + $0x28] sm:$0xff]
    %v1335 = vld [vmem:[%s11 + $0x30] sm:$0xff]
    %v1336 = vld [vmem:[%s11 + $0x38] sm:$0xff]
    %v1337 = vld [vmem:[%s11 + $0x40] sm:$0xff]
    %v1338 = vld [vmem:[%s11 + $0x48] sm:$0xff]
    %v1339 = vld [vmem:[%s11 + $0x50] sm:$0xff]
    %v1340 = vld [vmem:[%s11 + $0x58] sm:$0xff]
    %v1341 = vld [vmem:[%s11 + $0x60] sm:$0xff]
    %v1342 = vld [vmem:[%s11 + $0x68] sm:$0xff]
    %v1343 = vld [vmem:[%s11 + $0x70] sm:$0xff]
    %v1344 = vld [vmem:[%s11 + $0x78] sm:$0xff]
    %v1345 = vld [vmem:[%s11 + $0x80] sm:$0xff]
    %v1346 = vld [vmem:[%s11 + $0x88] sm:$0xff]
    %v1347 = vld [vmem:[%s11 + $0x90] sm:$0xff]
    %v1348 = vld [vmem:[%s11 + $0x98] sm:$0xff]
    %v1349 = vld [vmem:[%s11 + $0xa0] sm:$0xff]
    %v1350 = vld [vmem:[%s11 + $0xa8] sm:$0xff]
    %v1351 = vld [vmem:[%s11 + $0xb0] sm:$0xff]
    %v1352 = vld [vmem:[%s11 + $0xb8] sm:$0xff]
    %v1353 = vld [vmem:[%s11 + $0xc0] sm:$0xff]
    %v1354 = vld [vmem:[%s11 + $0xc8] sm:$0xff]
    %v1355 = vld [vmem:[%s11 + $0xd0] sm:$0xff]
    %v1356 = vld [vmem:[%s11 + $0xd8] sm:$0xff]
    %v1357 = vld [vmem:[%s11 + $0xe0] sm:$0xff]
    %v1358 = vld [vmem:[%s11 + $0xe8] sm:$0xff]
    %v1359 = vld [vmem:[%s11 + $0xf0] sm:$0xff]
    %v1360 = vld [vmem:[%s11 + $0xf8] sm:$0xff]
    %v1361 = vld [vmem:[%s11 + $0x100] sm:$0xff]
    %v1362 = vld [vmem:[%s11 + $0x108] sm:$0xff]
    %v1363 = vld [vmem:[%s11 + $0x110] sm:$0xff]
    %v1364 = vld [vmem:[%s11 + $0x118] sm:$0xff]
    %v1365 = vld [vmem:[%s11 + $0x120] sm:$0xff]
    %v1366 = vld [vmem:[%s11 + $0x128] sm:$0xff]
    %v1367 = vld [vmem:[%s11 + $0x130] sm:$0xff]
    %v1368 = vld [vmem:[%s11 + $0x138] sm:$0xff]
    %v1369 = vld [vmem:[%s11 + $0x140] sm:$0xff]
    %v1370 = vld [vmem:[%s11 + $0x148] sm:$0xff]
    %v1371 = vld [vmem:[%s11 + $0x150] sm:$0xff]
    %v1372 = vld [vmem:[%s11 + $0x158] sm:$0xff]
    %v1373 = vld [vmem:[%s11 + $0x160] sm:$0xff]
    %v1374 = vld [vmem:[%s11 + $0x168] sm:$0xff]
    %v1375 = vld [vmem:[%s11 + $0x170] sm:$0xff]
    %v1376 = vld [vmem:[%s11 + $0x178] sm:$0xff]
    %v1377 = vld [vmem:[%s11 + $0x180] sm:$0xff]
    %v1378 = vld [vmem:[%s11 + $0x188] sm:$0xff]
    %v1379 = vld [vmem:[%s11 + $0x190] sm:$0xff]
    %v1380 = vld [vmem:[%s11 + $0x198] sm:$0xff]
    %v1381 = vld [vmem:[%s11 + $0x1a0] sm:$0xff]
    %v1382 = vld [vmem:[%s11 + $0x1a8] sm:$0xff]
    %v1383 = vld [vmem:[%s11 + $0x1b0] sm:$0xff]
    %v1384 = vld [vmem:[%s11 + $0x1b8] sm:$0xff]
    %v1385 = vld [vmem:[%s11 + $0x1c0] sm:$0xff]
    %v1386 = vld [vmem:[%s11 + $0x1c8] sm:$0xff]
    %v1387 = vld [vmem:[%s11 + $0x1d0] sm:$0xff]
    %v1388 = vld [vmem:[%s11 + $0x1d8] sm:$0xff]
    %v1389 = vld [vmem:[%s11 + $0x1e0] sm:$0xff]
    %v1390 = vld [vmem:[%s11 + $0x1e8] sm:$0xff]
    %v1391 = vld [vmem:[%s11 + $0x1f0] sm:$0xff]
    %v1392 = vld [vmem:[%s11 + $0x1f8] sm:$0xff]
    %v1393 = vld [vmem:[%s11 + $0x200] sm:$0xff]
    %v1394 = vld [vmem:[%s11 + $0x208] sm:$0xff]
    %v1395 = vld [vmem:[%s11 + $0x210] sm:$0xff]
    %v1396 = vld [vmem:[%s11 + $0x218] sm:$0xff]
    %v1397 = vld [vmem:[%s11 + $0x220] sm:$0xff]
    %v1398 = vld [vmem:[%s11 + $0x228] sm:$0xff]
    %v1399 = vld [vmem:[%s11 + $0x230] sm:$0xff]
    %v1400 = vld [vmem:[%s11 + $0x238] sm:$0xff]
    %v1401 = vld [vmem:[%s11 + $0x240] sm:$0xff]
    %v1402 = vld [vmem:[%s11 + $0x248] sm:$0xff]
    %v1403 = vld [vmem:[%s11 + $0x250] sm:$0xff]
    %v1404 = vld [vmem:[%s11 + $0x258] sm:$0xff]
    %v1405 = vld [vmem:[%s11 + $0x260] sm:$0xff]
    %v1406 = vld [vmem:[%s11 + $0x268] sm:$0xff]
    %v1407 = vld [vmem:[%s11 + $0x270] sm:$0xff]
    %v1408 = vld [vmem:[%s11 + $0x278] sm:$0xff]
    %v1409 = vld [vmem:[%s11 + $0x280] sm:$0xff]
    %v1410 = vld [vmem:[%s11 + $0x288] sm:$0xff]
    %v1411 = vld [vmem:[%s11 + $0x290] sm:$0xff]
    %v1412 = vld [vmem:[%s11 + $0x298] sm:$0xff]
    %v1413 = vld [vmem:[%s11 + $0x2a0] sm:$0xff]
    %v1414 = vld [vmem:[%s11 + $0x2a8] sm:$0xff]
    %v1415 = vld [vmem:[%s11 + $0x2b0] sm:$0xff]
    %v1416 = vld [vmem:[%s11 + $0x2b8] sm:$0xff]
    %v1417 = vld [vmem:[%s11 + $0x2c0] sm:$0xff]
    %v1418 = vld [vmem:[%s11 + $0x2c8] sm:$0xff]
    %v1419 = vld [vmem:[%s11 + $0x2d0] sm:$0xff]
    %v1420 = vld [vmem:[%s11 + $0x2d8] sm:$0xff]
    %v1421 = vld [vmem:[%s11 + $0x2e0] sm:$0xff]
    %v1422 = vld [vmem:[%s11 + $0x2e8] sm:$0xff]
    %v1423 = vld [vmem:[%s11 + $0x2f0] sm:$0xff]
    %v1424 = vld [vmem:[%s11 + $0x2f8] sm:$0xff]
    %v1425 = vld [vmem:[%s11 + $0x300] sm:$0xff]
    %v1426 = vld [vmem:[%s11 + $0x308] sm:$0xff]
    %v1427 = vld [vmem:[%s11 + $0x310] sm:$0xff]
    %v1428 = vld [vmem:[%s11 + $0x318] sm:$0xff]
    %v1429 = vld [vmem:[%s11 + $0x320] sm:$0xff]
    %v1430 = vld [vmem:[%s11 + $0x328] sm:$0xff]
    %v1431 = vld [vmem:[%s11 + $0x330] sm:$0xff]
    %v1432 = vld [vmem:[%s11 + $0x338] sm:$0xff]
    %v1433 = vld [vmem:[%s11 + $0x340] sm:$0xff]
    %v1434 = vld [vmem:[%s11 + $0x348] sm:$0xff]
    %v1435 = vld [vmem:[%s11 + $0x350] sm:$0xff]
    %v1436 = vld [vmem:[%s11 + $0x358] sm:$0xff]
    %v1437 = vld [vmem:[%s11 + $0x360] sm:$0xff]
    %v1438 = vld [vmem:[%s11 + $0x368] sm:$0xff]
    %v1439 = vld [vmem:[%s11 + $0x370] sm:$0xff]
    %v1440 = vld [vmem:[%s11 + $0x378] sm:$0xff]
    %v1441 = vld [vmem:[%s11 + $0x380] sm:$0xff]
    %v1442 = vld [vmem:[%s11 + $0x388] sm:$0xff]
    %v1443 = vld [vmem:[%s11 + $0x390] sm:$0xff]
    %v1444 = vld [vmem:[%s11 + $0x398] sm:$0xff]
    %v1445 = vld [vmem:[%s11 + $0x3a0] sm:$0xff]
    %v1446 = vld [vmem:[%s11 + $0x3a8] sm:$0xff]
    %v1447 = vld [vmem:[%s11 + $0x3b0] sm:$0xff]
    %v1448 = vld [vmem:[%s11 + $0x3b8] sm:$0xff]
    %v1449 = vld [vmem:[%s11 + $0x3c0] sm:$0xff]
    %v1450 = vld [vmem:[%s11 + $0x3c8] sm:$0xff]
    %v1451 = vld [vmem:[%s11 + $0x3d0] sm:$0xff]
    %v1452 = vld [vmem:[%s11 + $0x3d8] sm:$0xff]
    %v1453 = vld [vmem:[%s11 + $0x3e0] sm:$0xff]
    %v1454 = vld [vmem:[%s11 + $0x3e8] sm:$0xff]
    %v1455 = vld [vmem:[%s11 + $0x3f0] sm:$0xff]
    %v1456 = vld [vmem:[%s11 + $0x3f8] sm:$0xff]
    %v1457 = vld [vmem:[%s11 + $0x400] sm:$0xff]
    %v1458 = vld [vmem:[%s11 + $0x408] sm:$0xff]
    %v1459 = vld [vmem:[%s11 + $0x410] sm:$0xff]
    %v1460 = vld [vmem:[%s11 + $0x418] sm:$0xff]
    %v1461 = vld [vmem:[%s11 + $0x420] sm:$0xff]
    %v1462 = vld [vmem:[%s11 + $0x428] sm:$0xff]
    %v1463 = vld [vmem:[%s11 + $0x430] sm:$0xff]
    %v1464 = vld [vmem:[%s11 + $0x438] sm:$0xff]
    %v1465 = vld [vmem:[%s11 + $0x440] sm:$0xff]
    %v1466 = vld [vmem:[%s11 + $0x448] sm:$0xff]
    %v1467 = vld [vmem:[%s11 + $0x450] sm:$0xff]
    %v1468 = vld [vmem:[%s11 + $0x458] sm:$0xff]
    %v1469 = vld [vmem:[%s11 + $0x460] sm:$0xff]
    %v1470 = vld [vmem:[%s11 + $0x468] sm:$0xff]
    %v1471 = vld [vmem:[%s11 + $0x470] sm:$0xff]
    %v1472 = vld [vmem:[%s11 + $0x478] sm:$0xff]
    %v1473 = vld [vmem:[%s12] sm:$0xff]
    %v1474 = vld [vmem:[%s12 + $0x8] sm:$0xff]
    %v1477 = vlaneseq
    %v1478 = vshrl.u32 %v1477, 7
    %v1479 = vsub.s32 0, %v1478
    %v1480 = vrot.slane %v1473, %v1479
    %v1481 = vlaneseq
    %v1482 = vshrl.u32 %v1481, 7
    %v1483 = vsub.s32 1, %v1482
    %v1484 = vrot.slane %v1473, %v1483
    %v1485 = vlaneseq
    %v1486 = vshrl.u32 %v1485, 7
    %v1487 = vsub.s32 2, %v1486
    %v1488 = vrot.slane %v1473, %v1487
    %v1489 = vlaneseq
    %v1490 = vshrl.u32 %v1489, 7
    %v1491 = vsub.s32 3, %v1490
    %v1492 = vrot.slane %v1473, %v1491
    %v1493 = vlaneseq
    %v1494 = vshrl.u32 %v1493, 7
    %v1495 = vsub.s32 4, %v1494
    %v1496 = vrot.slane %v1473, %v1495
    %v1497 = vlaneseq
    %v1498 = vshrl.u32 %v1497, 7
    %v1499 = vsub.s32 5, %v1498
    %v1500 = vrot.slane %v1473, %v1499
    %v1501 = vlaneseq
    %v1502 = vshrl.u32 %v1501, 7
    %v1503 = vsub.s32 6, %v1502
    %v1504 = vrot.slane %v1473, %v1503
    %v1505 = vlaneseq
    %v1506 = vshrl.u32 %v1505, 7
    %v1507 = vsub.s32 7, %v1506
    %v1508 = vrot.slane %v1473, %v1507
    %v1509 = vlaneseq
    %v1510 = vshrl.u32 %v1509, 7
    %v1511 = vsub.s32 0, %v1510
    %v1512 = vrot.slane %v1474, %v1511
    %v1513 = vlaneseq
    %v1514 = vshrl.u32 %v1513, 7
    %v1515 = vsub.s32 1, %v1514
    %v1516 = vrot.slane %v1474, %v1515
    %v1517 = vlaneseq
    %v1518 = vshrl.u32 %v1517, 7
    %v1519 = vsub.s32 2, %v1518
    %v1520 = vrot.slane %v1474, %v1519
    %v1521 = vlaneseq
    %v1522 = vshrl.u32 %v1521, 7
    %v1523 = vsub.s32 3, %v1522
    %v1524 = vrot.slane %v1474, %v1523
    %v1525 = vlaneseq
    %v1526 = vshrl.u32 %v1525, 7
    %v1527 = vsub.s32 4, %v1526
    %v1528 = vrot.slane %v1474, %v1527
    %v1529 = vlaneseq
    %v1530 = vshrl.u32 %v1529, 7
    %v1531 = vsub.s32 5, %v1530
    %v1532 = vrot.slane %v1474, %v1531
    %v1533 = vlaneseq
    %v1534 = vshrl.u32 %v1533, 7
    %v1535 = vsub.s32 6, %v1534
    %v1536 = vrot.slane %v1474, %v1535
    %v1537 = vlaneseq
    %v1538 = vshrl.u32 %v1537, 7
    %v1539 = vsub.s32 7, %v1538
    %v1540 = vrot.slane %v1474, %v1539
    %v1701 = vunpack.c.l.b16 %v1329
    %v1702 = vunpack.c.h.b16 %v1329
    %v1703 = vunpack.c.l.b16 %v1330
    %v1704 = vunpack.c.h.b16 %v1330
    %v1705 = vunpack.c.l.b16 %v1331
    %v1706 = vunpack.c.h.b16 %v1331
    %v1707 = vunpack.c.l.b16 %v1332
    %v1708 = vunpack.c.h.b16 %v1332
    %v1709 = vunpack.c.l.b16 %v1333
    %v1710 = vunpack.c.h.b16 %v1333
    %v1711 = vunpack.c.l.b16 %v1334
    %v1712 = vunpack.c.h.b16 %v1334
    %v1713 = vunpack.c.l.b16 %v1335
    %v1714 = vunpack.c.h.b16 %v1335
    %v1715 = vunpack.c.l.b16 %v1336
    %v1716 = vunpack.c.h.b16 %v1336
    %v1717 = vunpack.c.l.b16 %v1337
    %v1718 = vunpack.c.h.b16 %v1337
    %v1719 = vunpack.c.l.b16 %v1338
    %v1720 = vunpack.c.h.b16 %v1338
    %v1721 = vunpack.c.l.b16 %v1339
    %v1722 = vunpack.c.h.b16 %v1339
    %v1723 = vunpack.c.l.b16 %v1340
    %v1724 = vunpack.c.h.b16 %v1340
    %v1725 = vunpack.c.l.b16 %v1341
    %v1726 = vunpack.c.h.b16 %v1341
    %v1727 = vunpack.c.l.b16 %v1342
    %v1728 = vunpack.c.h.b16 %v1342
    %v1729 = vunpack.c.l.b16 %v1343
    %v1730 = vunpack.c.h.b16 %v1343
    %v1731 = vunpack.c.l.b16 %v1344
    %v1732 = vunpack.c.h.b16 %v1344
    %v1733 = vunpack.c.l.b16 %v1345
    %v1734 = vunpack.c.h.b16 %v1345
    %v1735 = vunpack.c.l.b16 %v1346
    %v1736 = vunpack.c.h.b16 %v1346
    %v1737 = vunpack.c.l.b16 %v1347
    %v1738 = vunpack.c.h.b16 %v1347
    %v1739 = vunpack.c.l.b16 %v1348
    %v1740 = vunpack.c.h.b16 %v1348
    %v1741 = vunpack.c.l.b16 %v1349
    %v1742 = vunpack.c.h.b16 %v1349
    %v1743 = vunpack.c.l.b16 %v1350
    %v1744 = vunpack.c.h.b16 %v1350
    %v1745 = vunpack.c.l.b16 %v1351
    %v1746 = vunpack.c.h.b16 %v1351
    %v1747 = vunpack.c.l.b16 %v1352
    %v1748 = vunpack.c.h.b16 %v1352
    %v1749 = vunpack.c.l.b16 %v1353
    %v1750 = vunpack.c.h.b16 %v1353
    %v1751 = vunpack.c.l.b16 %v1354
    %v1752 = vunpack.c.h.b16 %v1354
    %v1753 = vunpack.c.l.b16 %v1355
    %v1754 = vunpack.c.h.b16 %v1355
    %v1755 = vunpack.c.l.b16 %v1356
    %v1756 = vunpack.c.h.b16 %v1356
    %v1757 = vunpack.c.l.b16 %v1357
    %v1758 = vunpack.c.h.b16 %v1357
    %v1759 = vunpack.c.l.b16 %v1358
    %v1760 = vunpack.c.h.b16 %v1358
    %v1761 = vunpack.c.l.b16 %v1359
    %v1762 = vunpack.c.h.b16 %v1359
    %v1763 = vunpack.c.l.b16 %v1360
    %v1764 = vunpack.c.h.b16 %v1360
    %v1765 = vunpack.c.l.b16 %v1361
    %v1766 = vunpack.c.h.b16 %v1361
    %v1767 = vunpack.c.l.b16 %v1362
    %v1768 = vunpack.c.h.b16 %v1362
    %v1769 = vunpack.c.l.b16 %v1363
    %v1770 = vunpack.c.h.b16 %v1363
    %v1771 = vunpack.c.l.b16 %v1364
    %v1772 = vunpack.c.h.b16 %v1364
    %v1773 = vunpack.c.l.b16 %v1365
    %v1774 = vunpack.c.h.b16 %v1365
    %v1775 = vunpack.c.l.b16 %v1366
    %v1776 = vunpack.c.h.b16 %v1366
    %v1777 = vunpack.c.l.b16 %v1367
    %v1778 = vunpack.c.h.b16 %v1367
    %v1779 = vunpack.c.l.b16 %v1368
    %v1780 = vunpack.c.h.b16 %v1368
    %v1781 = vunpack.c.l.b16 %v1369
    %v1782 = vunpack.c.h.b16 %v1369
    %v1783 = vunpack.c.l.b16 %v1370
    %v1784 = vunpack.c.h.b16 %v1370
    %v1785 = vunpack.c.l.b16 %v1371
    %v1786 = vunpack.c.h.b16 %v1371
    %v1787 = vunpack.c.l.b16 %v1372
    %v1788 = vunpack.c.h.b16 %v1372
    %v1789 = vunpack.c.l.b16 %v1373
    %v1790 = vunpack.c.h.b16 %v1373
    %v1791 = vunpack.c.l.b16 %v1374
    %v1792 = vunpack.c.h.b16 %v1374
    %v1793 = vunpack.c.l.b16 %v1375
    %v1794 = vunpack.c.h.b16 %v1375
    %v1795 = vunpack.c.l.b16 %v1376
    %v1796 = vunpack.c.h.b16 %v1376
    %v1797 = vunpack.c.l.b16 %v1377
    %v1798 = vunpack.c.h.b16 %v1377
    %v1799 = vunpack.c.l.b16 %v1378
    %v1800 = vunpack.c.h.b16 %v1378
    %v1801 = vunpack.c.l.b16 %v1379
    %v1802 = vunpack.c.h.b16 %v1379
    %v1803 = vunpack.c.l.b16 %v1380
    %v1804 = vunpack.c.h.b16 %v1380
    %v1805 = vunpack.c.l.b16 %v1381
    %v1806 = vunpack.c.h.b16 %v1381
    %v1807 = vunpack.c.l.b16 %v1382
    %v1808 = vunpack.c.h.b16 %v1382
    %v1809 = vunpack.c.l.b16 %v1383
    %v1810 = vunpack.c.h.b16 %v1383
    %v1811 = vunpack.c.l.b16 %v1384
    %v1812 = vunpack.c.h.b16 %v1384
    %v1813 = vunpack.c.l.b16 %v1385
    %v1814 = vunpack.c.h.b16 %v1385
    %v1815 = vunpack.c.l.b16 %v1386
    %v1816 = vunpack.c.h.b16 %v1386
    %v1817 = vunpack.c.l.b16 %v1387
    %v1818 = vunpack.c.h.b16 %v1387
    %v1819 = vunpack.c.l.b16 %v1388
    %v1820 = vunpack.c.h.b16 %v1388
    %v1821 = vunpack.c.l.b16 %v1389
    %v1822 = vunpack.c.h.b16 %v1389
    %v1823 = vunpack.c.l.b16 %v1390
    %v1824 = vunpack.c.h.b16 %v1390
    %v1825 = vunpack.c.l.b16 %v1391
    %v1826 = vunpack.c.h.b16 %v1391
    %v1827 = vunpack.c.l.b16 %v1392
    %v1828 = vunpack.c.h.b16 %v1392
    %v1829 = vunpack.c.l.b16 %v1393
    %v1830 = vunpack.c.h.b16 %v1393
    %v1831 = vunpack.c.l.b16 %v1394
    %v1832 = vunpack.c.h.b16 %v1394
    %v1833 = vunpack.c.l.b16 %v1395
    %v1834 = vunpack.c.h.b16 %v1395
    %v1835 = vunpack.c.l.b16 %v1396
    %v1836 = vunpack.c.h.b16 %v1396
    %v1837 = vunpack.c.l.b16 %v1397
    %v1838 = vunpack.c.h.b16 %v1397
    %v1839 = vunpack.c.l.b16 %v1398
    %v1840 = vunpack.c.h.b16 %v1398
    %v1841 = vunpack.c.l.b16 %v1399
    %v1842 = vunpack.c.h.b16 %v1399
    %v1843 = vunpack.c.l.b16 %v1400
    %v1844 = vunpack.c.h.b16 %v1400
    %v1845 = vunpack.c.l.b16 %v1401
    %v1846 = vunpack.c.h.b16 %v1401
    %v1847 = vunpack.c.l.b16 %v1402
    %v1848 = vunpack.c.h.b16 %v1402
    %v1849 = vunpack.c.l.b16 %v1403
    %v1850 = vunpack.c.h.b16 %v1403
    %v1851 = vunpack.c.l.b16 %v1404
    %v1852 = vunpack.c.h.b16 %v1404
    %v1853 = vunpack.c.l.b16 %v1405
    %v1854 = vunpack.c.h.b16 %v1405
    %v1855 = vunpack.c.l.b16 %v1406
    %v1856 = vunpack.c.h.b16 %v1406
    %v1857 = vunpack.c.l.b16 %v1407
    %v1858 = vunpack.c.h.b16 %v1407
    %v1859 = vunpack.c.l.b16 %v1408
    %v1860 = vunpack.c.h.b16 %v1408
    %v1861 = vunpack.c.l.b16 %v1409
    %v1862 = vunpack.c.h.b16 %v1409
    %v1863 = vunpack.c.l.b16 %v1410
    %v1864 = vunpack.c.h.b16 %v1410
    %v1865 = vunpack.c.l.b16 %v1411
    %v1866 = vunpack.c.h.b16 %v1411
    %v1867 = vunpack.c.l.b16 %v1412
    %v1868 = vunpack.c.h.b16 %v1412
    %v1869 = vunpack.c.l.b16 %v1413
    %v1870 = vunpack.c.h.b16 %v1413
    %v1871 = vunpack.c.l.b16 %v1414
    %v1872 = vunpack.c.h.b16 %v1414
    %v1873 = vunpack.c.l.b16 %v1415
    %v1874 = vunpack.c.h.b16 %v1415
    %v1875 = vunpack.c.l.b16 %v1416
    %v1876 = vunpack.c.h.b16 %v1416
    %v1877 = vunpack.c.l.b16 %v1417
    %v1878 = vunpack.c.h.b16 %v1417
    %v1879 = vunpack.c.l.b16 %v1418
    %v1880 = vunpack.c.h.b16 %v1418
    %v1881 = vunpack.c.l.b16 %v1419
    %v1882 = vunpack.c.h.b16 %v1419
    %v1883 = vunpack.c.l.b16 %v1420
    %v1884 = vunpack.c.h.b16 %v1420
    %v1885 = vunpack.c.l.b16 %v1421
    %v1886 = vunpack.c.h.b16 %v1421
    %v1887 = vunpack.c.l.b16 %v1422
    %v1888 = vunpack.c.h.b16 %v1422
    %v1889 = vunpack.c.l.b16 %v1423
    %v1890 = vunpack.c.h.b16 %v1423
    %v1891 = vunpack.c.l.b16 %v1424
    %v1892 = vunpack.c.h.b16 %v1424
    %v1893 = vunpack.c.l.b16 %v1425
    %v1894 = vunpack.c.h.b16 %v1425
    %v1895 = vunpack.c.l.b16 %v1426
    %v1896 = vunpack.c.h.b16 %v1426
    %v1897 = vunpack.c.l.b16 %v1427
    %v1898 = vunpack.c.h.b16 %v1427
    %v1899 = vunpack.c.l.b16 %v1428
    %v1900 = vunpack.c.h.b16 %v1428
    %v1901 = vunpack.c.l.b16 %v1429
    %v1902 = vunpack.c.h.b16 %v1429
    %v1903 = vunpack.c.l.b16 %v1430
    %v1904 = vunpack.c.h.b16 %v1430
    %v1905 = vunpack.c.l.b16 %v1431
    %v1906 = vunpack.c.h.b16 %v1431
    %v1907 = vunpack.c.l.b16 %v1432
    %v1908 = vunpack.c.h.b16 %v1432
    %v1909 = vunpack.c.l.b16 %v1433
    %v1910 = vunpack.c.h.b16 %v1433
    %v1911 = vunpack.c.l.b16 %v1434
    %v1912 = vunpack.c.h.b16 %v1434
    %v1913 = vunpack.c.l.b16 %v1435
    %v1914 = vunpack.c.h.b16 %v1435
    %v1915 = vunpack.c.l.b16 %v1436
    %v1916 = vunpack.c.h.b16 %v1436
    %v1917 = vunpack.c.l.b16 %v1437
    %v1918 = vunpack.c.h.b16 %v1437
    %v1919 = vunpack.c.l.b16 %v1438
    %v1920 = vunpack.c.h.b16 %v1438
    %v1921 = vunpack.c.l.b16 %v1439
    %v1922 = vunpack.c.h.b16 %v1439
    %v1923 = vunpack.c.l.b16 %v1440
    %v1924 = vunpack.c.h.b16 %v1440
    %v1925 = vunpack.c.l.b16 %v1441
    %v1926 = vunpack.c.h.b16 %v1441
    %v1927 = vunpack.c.l.b16 %v1442
    %v1928 = vunpack.c.h.b16 %v1442
    %v1929 = vunpack.c.l.b16 %v1443
    %v1930 = vunpack.c.h.b16 %v1443
    %v1931 = vunpack.c.l.b16 %v1444
    %v1932 = vunpack.c.h.b16 %v1444
    %v1933 = vunpack.c.l.b16 %v1445
    %v1934 = vunpack.c.h.b16 %v1445
    %v1935 = vunpack.c.l.b16 %v1446
    %v1936 = vunpack.c.h.b16 %v1446
    %v1937 = vunpack.c.l.b16 %v1447
    %v1938 = vunpack.c.h.b16 %v1447
    %v1939 = vunpack.c.l.b16 %v1448
    %v1940 = vunpack.c.h.b16 %v1448
    %v1941 = vunpack.c.l.b16 %v1449
    %v1942 = vunpack.c.h.b16 %v1449
    %v1943 = vunpack.c.l.b16 %v1450
    %v1944 = vunpack.c.h.b16 %v1450
    %v1945 = vunpack.c.l.b16 %v1451
    %v1946 = vunpack.c.h.b16 %v1451
    %v1947 = vunpack.c.l.b16 %v1452
    %v1948 = vunpack.c.h.b16 %v1452
    %v1949 = vunpack.c.l.b16 %v1453
    %v1950 = vunpack.c.h.b16 %v1453
    %v1951 = vunpack.c.l.b16 %v1454
    %v1952 = vunpack.c.h.b16 %v1454
    %v1953 = vunpack.c.l.b16 %v1455
    %v1954 = vunpack.c.h.b16 %v1455
    %v1955 = vunpack.c.l.b16 %v1456
    %v1956 = vunpack.c.h.b16 %v1456
    %v1957 = vunpack.c.l.b16 %v1457
    %v1958 = vunpack.c.h.b16 %v1457
    %v1959 = vunpack.c.l.b16 %v1458
    %v1960 = vunpack.c.h.b16 %v1458
    %v1961 = vunpack.c.l.b16 %v1459
    %v1962 = vunpack.c.h.b16 %v1459
    %v1963 = vunpack.c.l.b16 %v1460
    %v1964 = vunpack.c.h.b16 %v1460
    %v1965 = vunpack.c.l.b16 %v1461
    %v1966 = vunpack.c.h.b16 %v1461
    %v1967 = vunpack.c.l.b16 %v1462
    %v1968 = vunpack.c.h.b16 %v1462
    %v1969 = vunpack.c.l.b16 %v1463
    %v1970 = vunpack.c.h.b16 %v1463
    %v1971 = vunpack.c.l.b16 %v1464
    %v1972 = vunpack.c.h.b16 %v1464
    %v1973 = vunpack.c.l.b16 %v1465
    %v1974 = vunpack.c.h.b16 %v1465
    %v1975 = vunpack.c.l.b16 %v1466
    %v1976 = vunpack.c.h.b16 %v1466
    %v1977 = vunpack.c.l.b16 %v1467
    %v1978 = vunpack.c.h.b16 %v1467
    %v1979 = vunpack.c.l.b16 %v1468
    %v1980 = vunpack.c.h.b16 %v1468
    %v1981 = vunpack.c.l.b16 %v1469
    %v1982 = vunpack.c.h.b16 %v1469
    %v1983 = vunpack.c.l.b16 %v1470
    %v1984 = vunpack.c.h.b16 %v1470
    %v1985 = vunpack.c.l.b16 %v1471
    %v1986 = vunpack.c.h.b16 %v1471
    %v1987 = vunpack.c.l.b16 %v1472
    %v1988 = vunpack.c.h.b16 %v1472
    %v1989 = vpack.c.b16 %v1717, %v1701
    %v1990 = vpack.c.b16 %v1718, %v1702
    %v1991 = vpack.c.b16 %v1719, %v1703
    %v1992 = vpack.c.b16 %v1720, %v1704
    %v1993 = vpack.c.b16 %v1721, %v1705
    %v1994 = vpack.c.b16 %v1722, %v1706
    %v1995 = vpack.c.b16 %v1723, %v1707
    %v1996 = vpack.c.b16 %v1724, %v1708
    %v1997 = vpack.c.b16 %v1725, %v1709
    %v1998 = vpack.c.b16 %v1726, %v1710
    %v1999 = vpack.c.b16 %v1727, %v1711
    %v2000 = vpack.c.b16 %v1728, %v1712
    %v2001 = vpack.c.b16 %v1729, %v1713
    %v2002 = vpack.c.b16 %v1730, %v1714
    %v2003 = vpack.c.b16 %v1731, %v1715
    %v2004 = vpack.c.b16 %v1732, %v1716
    %v2005 = vpack.c.b16 %v1749, %v1733
    %v2006 = vpack.c.b16 %v1750, %v1734
    %v2007 = vpack.c.b16 %v1751, %v1735
    %v2008 = vpack.c.b16 %v1752, %v1736
    %v2009 = vpack.c.b16 %v1753, %v1737
    %v2010 = vpack.c.b16 %v1754, %v1738
    %v2011 = vpack.c.b16 %v1755, %v1739
    %v2012 = vpack.c.b16 %v1756, %v1740
    %v2013 = vpack.c.b16 %v1757, %v1741
    %v2014 = vpack.c.b16 %v1758, %v1742
    %v2015 = vpack.c.b16 %v1759, %v1743
    %v2016 = vpack.c.b16 %v1760, %v1744
    %v2017 = vpack.c.b16 %v1761, %v1745
    %v2018 = vpack.c.b16 %v1762, %v1746
    %v2019 = vpack.c.b16 %v1763, %v1747
    %v2020 = vpack.c.b16 %v1764, %v1748
    %v2021 = vpack.c.b16 %v1781, %v1765
    %v2022 = vpack.c.b16 %v1782, %v1766
    %v2023 = vpack.c.b16 %v1783, %v1767
    %v2024 = vpack.c.b16 %v1784, %v1768
    %v2025 = vpack.c.b16 %v1785, %v1769
    %v2026 = vpack.c.b16 %v1786, %v1770
    %v2027 = vpack.c.b16 %v1787, %v1771
    %v2028 = vpack.c.b16 %v1788, %v1772
    %v2029 = vpack.c.b16 %v1789, %v1773
    %v2030 = vpack.c.b16 %v1790, %v1774
    %v2031 = vpack.c.b16 %v1791, %v1775
    %v2032 = vpack.c.b16 %v1792, %v1776
    %v2033 = vpack.c.b16 %v1793, %v1777
    %v2034 = vpack.c.b16 %v1794, %v1778
    %v2035 = vpack.c.b16 %v1795, %v1779
    %v2036 = vpack.c.b16 %v1796, %v1780
    %v2037 = vpack.c.b16 %v1813, %v1797
    %v2038 = vpack.c.b16 %v1814, %v1798
    %v2039 = vpack.c.b16 %v1815, %v1799
    %v2040 = vpack.c.b16 %v1816, %v1800
    %v2041 = vpack.c.b16 %v1817, %v1801
    %v2042 = vpack.c.b16 %v1818, %v1802
    %v2043 = vpack.c.b16 %v1819, %v1803
    %v2044 = vpack.c.b16 %v1820, %v1804
    %v2045 = vpack.c.b16 %v1821, %v1805
    %v2046 = vpack.c.b16 %v1822, %v1806
    %v2047 = vpack.c.b16 %v1823, %v1807
    %v2048 = vpack.c.b16 %v1824, %v1808
    %v2049 = vpack.c.b16 %v1825, %v1809
    %v2050 = vpack.c.b16 %v1826, %v1810
    %v2051 = vpack.c.b16 %v1827, %v1811
    %v2052 = vpack.c.b16 %v1828, %v1812
    %v2053 = vpack.c.b16 %v1845, %v1829
    %v2054 = vpack.c.b16 %v1846, %v1830
    %v2055 = vpack.c.b16 %v1847, %v1831
    %v2056 = vpack.c.b16 %v1848, %v1832
    %v2057 = vpack.c.b16 %v1849, %v1833
    %v2058 = vpack.c.b16 %v1850, %v1834
    %v2059 = vpack.c.b16 %v1851, %v1835
    %v2060 = vpack.c.b16 %v1852, %v1836
    %v2061 = vpack.c.b16 %v1853, %v1837
    %v2062 = vpack.c.b16 %v1854, %v1838
    %v2063 = vpack.c.b16 %v1855, %v1839
    %v2064 = vpack.c.b16 %v1856, %v1840
    %v2065 = vpack.c.b16 %v1857, %v1841
    %v2066 = vpack.c.b16 %v1858, %v1842
    %v2067 = vpack.c.b16 %v1859, %v1843
    %v2068 = vpack.c.b16 %v1860, %v1844
    %v2069 = vpack.c.b16 %v1877, %v1861
    %v2070 = vpack.c.b16 %v1878, %v1862
    %v2071 = vpack.c.b16 %v1879, %v1863
    %v2072 = vpack.c.b16 %v1880, %v1864
    %v2073 = vpack.c.b16 %v1881, %v1865
    %v2074 = vpack.c.b16 %v1882, %v1866
    %v2075 = vpack.c.b16 %v1883, %v1867
    %v2076 = vpack.c.b16 %v1884, %v1868
    %v2077 = vpack.c.b16 %v1885, %v1869
    %v2078 = vpack.c.b16 %v1886, %v1870
    %v2079 = vpack.c.b16 %v1887, %v1871
    %v2080 = vpack.c.b16 %v1888, %v1872
    %v2081 = vpack.c.b16 %v1889, %v1873
    %v2082 = vpack.c.b16 %v1890, %v1874
    %v2083 = vpack.c.b16 %v1891, %v1875
    %v2084 = vpack.c.b16 %v1892, %v1876
    %v2085 = vpack.c.b16 %v1909, %v1893
    %v2086 = vpack.c.b16 %v1910, %v1894
    %v2087 = vpack.c.b16 %v1911, %v1895
    %v2088 = vpack.c.b16 %v1912, %v1896
    %v2089 = vpack.c.b16 %v1913, %v1897
    %v2090 = vpack.c.b16 %v1914, %v1898
    %v2091 = vpack.c.b16 %v1915, %v1899
    %v2092 = vpack.c.b16 %v1916, %v1900
    %v2093 = vpack.c.b16 %v1917, %v1901
    %v2094 = vpack.c.b16 %v1918, %v1902
    %v2095 = vpack.c.b16 %v1919, %v1903
    %v2096 = vpack.c.b16 %v1920, %v1904
    %v2097 = vpack.c.b16 %v1921, %v1905
    %v2098 = vpack.c.b16 %v1922, %v1906
    %v2099 = vpack.c.b16 %v1923, %v1907
    %v2100 = vpack.c.b16 %v1924, %v1908
    %v2101 = vpack.c.b16 %v1941, %v1925
    %v2102 = vpack.c.b16 %v1942, %v1926
    %v2103 = vpack.c.b16 %v1943, %v1927
    %v2104 = vpack.c.b16 %v1944, %v1928
    %v2105 = vpack.c.b16 %v1945, %v1929
    %v2106 = vpack.c.b16 %v1946, %v1930
    %v2107 = vpack.c.b16 %v1947, %v1931
    %v2108 = vpack.c.b16 %v1948, %v1932
    %v2109 = vpack.c.b16 %v1949, %v1933
    %v2110 = vpack.c.b16 %v1950, %v1934
    %v2111 = vpack.c.b16 %v1951, %v1935
    %v2112 = vpack.c.b16 %v1952, %v1936
    %v2113 = vpack.c.b16 %v1953, %v1937
    %v2114 = vpack.c.b16 %v1954, %v1938
    %v2115 = vpack.c.b16 %v1955, %v1939
    %v2116 = vpack.c.b16 %v1956, %v1940
    %v2117 = vpack.c.b16 %v1973, %v1957
    %v2118 = vpack.c.b16 %v1974, %v1958
    %v2119 = vpack.c.b16 %v1975, %v1959
    %v2120 = vpack.c.b16 %v1976, %v1960
    %v2121 = vpack.c.b16 %v1977, %v1961
    %v2122 = vpack.c.b16 %v1978, %v1962
    %v2123 = vpack.c.b16 %v1979, %v1963
    %v2124 = vpack.c.b16 %v1980, %v1964
    %v2125 = vpack.c.b16 %v1981, %v1965
    %v2126 = vpack.c.b16 %v1982, %v1966
    %v2127 = vpack.c.b16 %v1983, %v1967
    %v2128 = vpack.c.b16 %v1984, %v1968
    %v2129 = vpack.c.b16 %v1985, %v1969
    %v2130 = vpack.c.b16 %v1986, %v1970
    %v2131 = vpack.c.b16 %v1987, %v1971
    %v2132 = vpack.c.b16 %v1988, %v1972
    %v2278 = vsel %vm250, %v1328, 0
    %2280 = vmatprep.subr.bf16.mxu0 %v1990
    %2281 = vmatpush1.bf16.msra.mxu0 %v1989
    %2282 = vmatprep.subr.bf16.mxu0 %v2006
    %2283 = vmatpush1.bf16.msra.mxu0 %v2005
    %2284 = vmatprep.subr.bf16.mxu0 %v2022
    %2285 = vmatpush1.bf16.msra.mxu0 %v2021
    %2286 = vmatprep.subr.bf16.mxu0 %v2038
    %2287 = vmatpush1.bf16.msra.mxu0 %v2037
    %2288 = vmatprep.subr.bf16.mxu0 %v2054
    %2289 = vmatpush1.bf16.msra.mxu0 %v2053
    %2290 = vmatprep.subr.bf16.mxu0 %v2070
    %2291 = vmatpush1.bf16.msra.mxu0 %v2069
    %2292 = vmatprep.subr.bf16.mxu0 %v2086
    %2293 = vmatpush1.bf16.msra.mxu0 %v2085
    %2294 = vmatprep.subr.bf16.mxu0 %v2102
    %2295 = vmatpush1.bf16.msra.mxu0 %v2101
    %2296 = vmatprep.subr.bf16.mxu0 %v2118
    %2297 = vmatpush1.bf16.msra.mxu0 %v2117
    %2298 = vmatprep.subr.bf16.mxu0 0
    %2299 = vmatpush1.bf16.msra.mxu0 0
    %2300 = vmatprep.subr.bf16.mxu0 0
    %2301 = vmatpush1.bf16.msra.mxu0 0
    %2302 = vmatprep.subr.bf16.mxu0 0
    %2303 = vmatpush1.bf16.msra.mxu0 0
    %2304 = vmatprep.subr.bf16.mxu0 0
    %2305 = vmatpush1.bf16.msra.mxu0 0
    %2306 = vmatprep.subr.bf16.mxu0 0
    %2307 = vmatpush1.bf16.msra.mxu0 0
    %2308 = vmatprep.subr.bf16.mxu0 0
    %2309 = vmatpush1.bf16.msra.mxu0 0
    %2310 = vmatprep.subr.bf16.mxu0 0
    %2311 = vmatpush1.bf16.msra.mxu0 0
    %2312 = vmatprep.mubr.bf16.mxu0 %v2278
    %2313 = vmatmul.mubr.bf16.gmra.mrb[0].mxu0 %v1327
    %v2314 = vpop.f32.mrb[0].mxu0
    %v2315 = vadd.f32 %v1480, %v2314
    %v2316 = vpop.f32.mrb[0].mxu0
    %v2317 = vadd.f32 %v1484, %v2316
    %v2318 = vpop.f32.mrb[0].mxu0
    %v2319 = vpop.f32.mrb[0].mxu0
    %2320 = vdwg.mxu0
    %2321 = vmatprep.subr.bf16.mxu0 %v1992
    %2322 = vmatpush1.bf16.msra.mxu0 %v1991
    %2323 = vmatprep.subr.bf16.mxu0 %v2008
    %2324 = vmatpush1.bf16.msra.mxu0 %v2007
    %2325 = vmatprep.subr.bf16.mxu0 %v2024
    %2326 = vmatpush1.bf16.msra.mxu0 %v2023
    %2327 = vmatprep.subr.bf16.mxu0 %v2040
    %2328 = vmatpush1.bf16.msra.mxu0 %v2039
    %2329 = vmatprep.subr.bf16.mxu0 %v2056
    %2330 = vmatpush1.bf16.msra.mxu0 %v2055
    %2331 = vmatprep.subr.bf16.mxu0 %v2072
    %2332 = vmatpush1.bf16.msra.mxu0 %v2071
    %2333 = vmatprep.subr.bf16.mxu0 %v2088
    %2334 = vmatpush1.bf16.msra.mxu0 %v2087
    %2335 = vmatprep.subr.bf16.mxu0 %v2104
    %2336 = vmatpush1.bf16.msra.mxu0 %v2103
    %2337 = vmatprep.subr.bf16.mxu0 %v2120
    %2338 = vmatpush1.bf16.msra.mxu0 %v2119
    %2339 = vmatprep.subr.bf16.mxu0 0
    %2340 = vmatpush1.bf16.msra.mxu0 0
    %2341 = vmatprep.subr.bf16.mxu0 0
    %2342 = vmatpush1.bf16.msra.mxu0 0
    %2343 = vmatprep.subr.bf16.mxu0 0
    %2344 = vmatpush1.bf16.msra.mxu0 0
    %2345 = vmatprep.subr.bf16.mxu0 0
    %2346 = vmatpush1.bf16.msra.mxu0 0
    %2347 = vmatprep.subr.bf16.mxu0 0
    %2348 = vmatpush1.bf16.msra.mxu0 0
    %2349 = vmatprep.subr.bf16.mxu0 0
    %2350 = vmatpush1.bf16.msra.mxu0 0
    %2351 = vmatprep.subr.bf16.mxu0 0
    %2352 = vmatpush1.bf16.msra.mxu0 0
    %2353 = vmatprep.mubr.bf16.mxu0 %v2278
    %2354 = vmatmul.mubr.bf16.gmra.mrb[0].mxu0 %v1327
    %v2355 = vpop.f32.mrb[0].mxu0
    %v2356 = vadd.f32 %v1488, %v2355
    %v2357 = vpop.f32.mrb[0].mxu0
    %v2358 = vadd.f32 %v1492, %v2357
    %v2359 = vpop.f32.mrb[0].mxu0
    %v2360 = vpop.f32.mrb[0].mxu0
    %2361 = vdwg.mxu0
    %2362 = vmatprep.subr.bf16.mxu0 %v1994
    %2363 = vmatpush1.bf16.msra.mxu0 %v1993
    %2364 = vmatprep.subr.bf16.mxu0 %v2010
    %2365 = vmatpush1.bf16.msra.mxu0 %v2009
    %2366 = vmatprep.subr.bf16.mxu0 %v2026
    %2367 = vmatpush1.bf16.msra.mxu0 %v2025
    %2368 = vmatprep.subr.bf16.mxu0 %v2042
    %2369 = vmatpush1.bf16.msra.mxu0 %v2041
    %2370 = vmatprep.subr.bf16.mxu0 %v2058
    %2371 = vmatpush1.bf16.msra.mxu0 %v2057
    %2372 = vmatprep.subr.bf16.mxu0 %v2074
    %2373 = vmatpush1.bf16.msra.mxu0 %v2073
    %2374 = vmatprep.subr.bf16.mxu0 %v2090
    %2375 = vmatpush1.bf16.msra.mxu0 %v2089
    %2376 = vmatprep.subr.bf16.mxu0 %v2106
    %2377 = vmatpush1.bf16.msra.mxu0 %v2105
    %2378 = vmatprep.subr.bf16.mxu0 %v2122
    %2379 = vmatpush1.bf16.msra.mxu0 %v2121
    %2380 = vmatprep.subr.bf16.mxu0 0
    %2381 = vmatpush1.bf16.msra.mxu0 0
    %2382 = vmatprep.subr.bf16.mxu0 0
    %2383 = vmatpush1.bf16.msra.mxu0 0
    %2384 = vmatprep.subr.bf16.mxu0 0
    %2385 = vmatpush1.bf16.msra.mxu0 0
    %2386 = vmatprep.subr.bf16.mxu0 0
    %2387 = vmatpush1.bf16.msra.mxu0 0
    %2388 = vmatprep.subr.bf16.mxu0 0
    %2389 = vmatpush1.bf16.msra.mxu0 0
    %2390 = vmatprep.subr.bf16.mxu0 0
    %2391 = vmatpush1.bf16.msra.mxu0 0
    %2392 = vmatprep.subr.bf16.mxu0 0
    %2393 = vmatpush1.bf16.msra.mxu0 0
    %2394 = vmatprep.mubr.bf16.mxu0 %v2278
    %2395 = vmatmul.mubr.bf16.gmra.mrb[0].mxu0 %v1327
    %v2396 = vpop.f32.mrb[0].mxu0
    %v2397 = vadd.f32 %v1496, %v2396
    %v2398 = vpop.f32.mrb[0].mxu0
    %v2399 = vadd.f32 %v1500, %v2398
    %v2400 = vpop.f32.mrb[0].mxu0
    %v2401 = vpop.f32.mrb[0].mxu0
    %2402 = vdwg.mxu0
    %2403 = vmatprep.subr.bf16.mxu0 %v1996
    %2404 = vmatpush1.bf16.msra.mxu0 %v1995
    %2405 = vmatprep.subr.bf16.mxu0 %v2012
    %2406 = vmatpush1.bf16.msra.mxu0 %v2011
    %2407 = vmatprep.subr.bf16.mxu0 %v2028
    %2408 = vmatpush1.bf16.msra.mxu0 %v2027
    %2409 = vmatprep.subr.bf16.mxu0 %v2044
    %2410 = vmatpush1.bf16.msra.mxu0 %v2043
    %2411 = vmatprep.subr.bf16.mxu0 %v2060
    %2412 = vmatpush1.bf16.msra.mxu0 %v2059
    %2413 = vmatprep.subr.bf16.mxu0 %v2076
    %2414 = vmatpush1.bf16.msra.mxu0 %v2075
    %2415 = vmatprep.subr.bf16.mxu0 %v2092
    %2416 = vmatpush1.bf16.msra.mxu0 %v2091
    %2417 = vmatprep.subr.bf16.mxu0 %v2108
    %2418 = vmatpush1.bf16.msra.mxu0 %v2107
    %2419 = vmatprep.subr.bf16.mxu0 %v2124
    %2420 = vmatpush1.bf16.msra.mxu0 %v2123
    %2421 = vmatprep.subr.bf16.mxu0 0
    %2422 = vmatpush1.bf16.msra.mxu0 0
    %2423 = vmatprep.subr.bf16.mxu0 0
    %2424 = vmatpush1.bf16.msra.mxu0 0
    %2425 = vmatprep.subr.bf16.mxu0 0
    %2426 = vmatpush1.bf16.msra.mxu0 0
    %2427 = vmatprep.subr.bf16.mxu0 0
    %2428 = vmatpush1.bf16.msra.mxu0 0
    %2429 = vmatprep.subr.bf16.mxu0 0
    %2430 = vmatpush1.bf16.msra.mxu0 0
    %2431 = vmatprep.subr.bf16.mxu0 0
    %2432 = vmatpush1.bf16.msra.mxu0 0
    %2433 = vmatprep.subr.bf16.mxu0 0
    %2434 = vmatpush1.bf16.msra.mxu0 0
    %2435 = vmatprep.mubr.bf16.mxu0 %v2278
    %2436 = vmatmul.mubr.bf16.gmra.mrb[0].mxu0 %v1327
    %v2437 = vpop.f32.mrb[0].mxu0
    %v2438 = vadd.f32 %v1504, %v2437
    %v2439 = vpop.f32.mrb[0].mxu0
    %v2440 = vadd.f32 %v1508, %v2439
    %v2441 = vpop.f32.mrb[0].mxu0
    %v2442 = vpop.f32.mrb[0].mxu0
    %2443 = vdwg.mxu0
    %2444 = vmatprep.subr.bf16.mxu0 %v1998
    %2445 = vmatpush1.bf16.msra.mxu0 %v1997
    %2446 = vmatprep.subr.bf16.mxu0 %v2014
    %2447 = vmatpush1.bf16.msra.mxu0 %v2013
    %2448 = vmatprep.subr.bf16.mxu0 %v2030
    %2449 = vmatpush1.bf16.msra.mxu0 %v2029
    %2450 = vmatprep.subr.bf16.mxu0 %v2046
    %2451 = vmatpush1.bf16.msra.mxu0 %v2045
    %2452 = vmatprep.subr.bf16.mxu0 %v2062
    %2453 = vmatpush1.bf16.msra.mxu0 %v2061
    %2454 = vmatprep.subr.bf16.mxu0 %v2078
    %2455 = vmatpush1.bf16.msra.mxu0 %v2077
    %2456 = vmatprep.subr.bf16.mxu0 %v2094
    %2457 = vmatpush1.bf16.msra.mxu0 %v2093
    %2458 = vmatprep.subr.bf16.mxu0 %v2110
    %2459 = vmatpush1.bf16.msra.mxu0 %v2109
    %2460 = vmatprep.subr.bf16.mxu0 %v2126
    %2461 = vmatpush1.bf16.msra.mxu0 %v2125
    %2462 = vmatprep.subr.bf16.mxu0 0
    %2463 = vmatpush1.bf16.msra.mxu0 0
    %2464 = vmatprep.subr.bf16.mxu0 0
    %2465 = vmatpush1.bf16.msra.mxu0 0
    %2466 = vmatprep.subr.bf16.mxu0 0
    %2467 = vmatpush1.bf16.msra.mxu0 0
    %2468 = vmatprep.subr.bf16.mxu0 0
    %2469 = vmatpush1.bf16.msra.mxu0 0
    %2470 = vmatprep.subr.bf16.mxu0 0
    %2471 = vmatpush1.bf16.msra.mxu0 0
    %2472 = vmatprep.subr.bf16.mxu0 0
    %2473 = vmatpush1.bf16.msra.mxu0 0
    %2474 = vmatprep.subr.bf16.mxu0 0
    %2475 = vmatpush1.bf16.msra.mxu0 0
    %2476 = vmatprep.mubr.bf16.mxu0 %v2278
    %2477 = vmatmul.mubr.bf16.gmra.mrb[0].mxu0 %v1327
    %v2478 = vpop.f32.mrb[0].mxu0
    %v2479 = vadd.f32 %v1512, %v2478
    %v2480 = vpop.f32.mrb[0].mxu0
    %v2481 = vadd.f32 %v1516, %v2480
    %v2482 = vpop.f32.mrb[0].mxu0
    %v2483 = vpop.f32.mrb[0].mxu0
    %2484 = vdwg.mxu0
    %2485 = vmatprep.subr.bf16.mxu0 %v2000
    %2486 = vmatpush1.bf16.msra.mxu0 %v1999
    %2487 = vmatprep.subr.bf16.mxu0 %v2016
    %2488 = vmatpush1.bf16.msra.mxu0 %v2015
    %2489 = vmatprep.subr.bf16.mxu0 %v2032
    %2490 = vmatpush1.bf16.msra.mxu0 %v2031
    %2491 = vmatprep.subr.bf16.mxu0 %v2048
    %2492 = vmatpush1.bf16.msra.mxu0 %v2047
    %2493 = vmatprep.subr.bf16.mxu0 %v2064
    %2494 = vmatpush1.bf16.msra.mxu0 %v2063
    %2495 = vmatprep.subr.bf16.mxu0 %v2080
    %2496 = vmatpush1.bf16.msra.mxu0 %v2079
    %2497 = vmatprep.subr.bf16.mxu0 %v2096
    %2498 = vmatpush1.bf16.msra.mxu0 %v2095
    %2499 = vmatprep.subr.bf16.mxu0 %v2112
    %2500 = vmatpush1.bf16.msra.mxu0 %v2111
    %2501 = vmatprep.subr.bf16.mxu0 %v2128
    %2502 = vmatpush1.bf16.msra.mxu0 %v2127
    %2503 = vmatprep.subr.bf16.mxu0 0
    %2504 = vmatpush1.bf16.msra.mxu0 0
    %2505 = vmatprep.subr.bf16.mxu0 0
    %2506 = vmatpush1.bf16.msra.mxu0 0
    %2507 = vmatprep.subr.bf16.mxu0 0
    %2508 = vmatpush1.bf16.msra.mxu0 0
    %2509 = vmatprep.subr.bf16.mxu0 0
    %2510 = vmatpush1.bf16.msra.mxu0 0
    %2511 = vmatprep.subr.bf16.mxu0 0
    %2512 = vmatpush1.bf16.msra.mxu0 0
    %2513 = vmatprep.subr.bf16.mxu0 0
    %2514 = vmatpush1.bf16.msra.mxu0 0
    %2515 = vmatprep.subr.bf16.mxu0 0
    %2516 = vmatpush1.bf16.msra.mxu0 0
    %2517 = vmatprep.mubr.bf16.mxu0 %v2278
    %2518 = vmatmul.mubr.bf16.gmra.mrb[0].mxu0 %v1327
    %v2519 = vpop.f32.mrb[0].mxu0
    %v2520 = vadd.f32 %v1520, %v2519
    %v2521 = vpop.f32.mrb[0].mxu0
    %v2522 = vadd.f32 %v1524, %v2521
    %v2523 = vpop.f32.mrb[0].mxu0
    %v2524 = vpop.f32.mrb[0].mxu0
    %2525 = vdwg.mxu0
    %2526 = vmatprep.subr.bf16.mxu0 %v2002
    %2527 = vmatpush1.bf16.msra.mxu0 %v2001
    %2528 = vmatprep.subr.bf16.mxu0 %v2018
    %2529 = vmatpush1.bf16.msra.mxu0 %v2017
    %2530 = vmatprep.subr.bf16.mxu0 %v2034
    %2531 = vmatpush1.bf16.msra.mxu0 %v2033
    %2532 = vmatprep.subr.bf16.mxu0 %v2050
    %2533 = vmatpush1.bf16.msra.mxu0 %v2049
    %2534 = vmatprep.subr.bf16.mxu0 %v2066
    %2535 = vmatpush1.bf16.msra.mxu0 %v2065
    %2536 = vmatprep.subr.bf16.mxu0 %v2082
    %2537 = vmatpush1.bf16.msra.mxu0 %v2081
    %2538 = vmatprep.subr.bf16.mxu0 %v2098
    %2539 = vmatpush1.bf16.msra.mxu0 %v2097
    %2540 = vmatprep.subr.bf16.mxu0 %v2114
    %2541 = vmatpush1.bf16.msra.mxu0 %v2113
    %2542 = vmatprep.subr.bf16.mxu0 %v2130
    %2543 = vmatpush1.bf16.msra.mxu0 %v2129
    %2544 = vmatprep.subr.bf16.mxu0 0
    %2545 = vmatpush1.bf16.msra.mxu0 0
    %2546 = vmatprep.subr.bf16.mxu0 0
    %2547 = vmatpush1.bf16.msra.mxu0 0
    %2548 = vmatprep.subr.bf16.mxu0 0
    %2549 = vmatpush1.bf16.msra.mxu0 0
    %2550 = vmatprep.subr.bf16.mxu0 0
    %2551 = vmatpush1.bf16.msra.mxu0 0
    %2552 = vmatprep.subr.bf16.mxu0 0
    %2553 = vmatpush1.bf16.msra.mxu0 0
    %2554 = vmatprep.subr.bf16.mxu0 0
    %2555 = vmatpush1.bf16.msra.mxu0 0
    %2556 = vmatprep.subr.bf16.mxu0 0
    %2557 = vmatpush1.bf16.msra.mxu0 0
    %2558 = vmatprep.mubr.bf16.mxu0 %v2278
    %2559 = vmatmul.mubr.bf16.gmra.mrb[0].mxu0 %v1327
    %v2560 = vpop.f32.mrb[0].mxu0
    %v2561 = vadd.f32 %v1528, %v2560
    %v2562 = vpop.f32.mrb[0].mxu0
    %v2563 = vadd.f32 %v1532, %v2562
    %v2564 = vpop.f32.mrb[0].mxu0
    %v2565 = vpop.f32.mrb[0].mxu0
    %2566 = vdwg.mxu0
    %2567 = vmatprep.subr.bf16.mxu0 %v2004
    %2568 = vmatpush1.bf16.msra.mxu0 %v2003
    %2569 = vmatprep.subr.bf16.mxu0 %v2020
    %2570 = vmatpush1.bf16.msra.mxu0 %v2019
    %2571 = vmatprep.subr.bf16.mxu0 %v2036
    %2572 = vmatpush1.bf16.msra.mxu0 %v2035
    %2573 = vmatprep.subr.bf16.mxu0 %v2052
    %2574 = vmatpush1.bf16.msra.mxu0 %v2051
    %2575 = vmatprep.subr.bf16.mxu0 %v2068
    %2576 = vmatpush1.bf16.msra.mxu0 %v2067
    %2577 = vmatprep.subr.bf16.mxu0 %v2084
    %2578 = vmatpush1.bf16.msra.mxu0 %v2083
    %2579 = vmatprep.subr.bf16.mxu0 %v2100
    %2580 = vmatpush1.bf16.msra.mxu0 %v2099
    %2581 = vmatprep.subr.bf16.mxu0 %v2116
    %2582 = vmatpush1.bf16.msra.mxu0 %v2115
    %2583 = vmatprep.subr.bf16.mxu0 %v2132
    %2584 = vmatpush1.bf16.msra.mxu0 %v2131
    %2585 = vmatprep.subr.bf16.mxu0 0
    %2586 = vmatpush1.bf16.msra.mxu0 0
    %2587 = vmatprep.subr.bf16.mxu0 0
    %2588 = vmatpush1.bf16.msra.mxu0 0
    %2589 = vmatprep.subr.bf16.mxu0 0
    %2590 = vmatpush1.bf16.msra.mxu0 0
    %2591 = vmatprep.subr.bf16.mxu0 0
    %2592 = vmatpush1.bf16.msra.mxu0 0
    %2593 = vmatprep.subr.bf16.mxu0 0
    %2594 = vmatpush1.bf16.msra.mxu0 0
    %2595 = vmatprep.subr.bf16.mxu0 0
    %2596 = vmatpush1.bf16.msra.mxu0 0
    %2597 = vmatprep.subr.bf16.mxu0 0
    %2598 = vmatpush1.bf16.msra.mxu0 0
    %2599 = vmatprep.mubr.bf16.mxu0 %v2278
    %2600 = vmatmul.mubr.bf16.gmra.mrb[0].mxu0 %v1327
    %v2601 = vpop.f32.mrb[0].mxu0
    %v2602 = vadd.f32 %v1536, %v2601
    %v2603 = vpop.f32.mrb[0].mxu0
    %v2604 = vadd.f32 %v1540, %v2603
    %v2605 = vpop.f32.mrb[0].mxu0
    %v2606 = vpop.f32.mrb[0].mxu0
    %2607 = vdwg.mxu0
    %v2608 = vmax.f32 %v2315, 0.0
    %v2609 = vmax.f32 %v2317, 0.0
    %v2610 = vmax.f32 %v2356, 0.0
    %v2611 = vmax.f32 %v2358, 0.0
    %v2612 = vmax.f32 %v2397, 0.0
    %v2613 = vmax.f32 %v2399, 0.0
    %v2614 = vmax.f32 %v2438, 0.0
    %v2615 = vmax.f32 %v2440, 0.0
    %v2616 = vmax.f32 %v2479, 0.0
    %v2617 = vmax.f32 %v2481, 0.0
    %v2618 = vmax.f32 %v2520, 0.0
    %v2619 = vmax.f32 %v2522, 0.0
    %v2620 = vmax.f32 %v2561, 0.0
    %v2621 = vmax.f32 %v2563, 0.0
    %v2622 = vmax.f32 %v2602, 0.0
    %v2623 = vmax.f32 %v2604, 0.0
    %v2624 = vpack.c.bf16 %v2608, %v2608
    %v2625 = vpack.c.bf16 %v2609, %v2609
    %v2626 = vpack.c.bf16 %v2610, %v2610
    %v2627 = vpack.c.bf16 %v2611, %v2611
    %v2628 = vpack.c.bf16 %v2612, %v2612
    %v2629 = vpack.c.bf16 %v2613, %v2613
    %v2630 = vpack.c.bf16 %v2614, %v2614
    %v2631 = vpack.c.bf16 %v2615, %v2615
    %v2632 = vpack.c.bf16 %v2616, %v2616
    %v2633 = vpack.c.bf16 %v2617, %v2617
    %v2634 = vpack.c.bf16 %v2618, %v2618
    %v2635 = vpack.c.bf16 %v2619, %v2619
    %v2636 = vpack.c.bf16 %v2620, %v2620
    %v2637 = vpack.c.bf16 %v2621, %v2621
    %v2638 = vpack.c.bf16 %v2622, %v2622
    %v2639 = vpack.c.bf16 %v2623, %v2623
    %v2640 = vld [vmem:[%s13] sm:$0xff]
    %v2641 = vld [vmem:[%s13 + $0x8] sm:$0xff]
    %v2642 = vld [vmem:[%s13 + $0x10] sm:$0xff]
    %v2643 = vld [vmem:[%s13 + $0x18] sm:$0xff]
    %v2644 = vld [vmem:[%s13 + $0x20] sm:$0xff]
    %v2645 = vld [vmem:[%s13 + $0x28] sm:$0xff]
    %v2646 = vld [vmem:[%s13 + $0x30] sm:$0xff]
    %v2647 = vld [vmem:[%s13 + $0x38] sm:$0xff]
    %v2648 = vld [vmem:[%s13 + $0x40] sm:$0xff]
    %v2649 = vld [vmem:[%s13 + $0x48] sm:$0xff]
    %v2650 = vld [vmem:[%s13 + $0x50] sm:$0xff]
    %v2651 = vld [vmem:[%s13 + $0x58] sm:$0xff]
    %v2652 = vld [vmem:[%s13 + $0x60] sm:$0xff]
    %v2653 = vld [vmem:[%s13 + $0x68] sm:$0xff]
    %v2654 = vld [vmem:[%s13 + $0x70] sm:$0xff]
    %v2655 = vld [vmem:[%s13 + $0x78] sm:$0xff]
    %v2656 = vld [vmem:[%s13 + $0x80] sm:$0xff]
    %v2657 = vld [vmem:[%s13 + $0x88] sm:$0xff]
    %v2658 = vld [vmem:[%s13 + $0x90] sm:$0xff]
    %v2659 = vld [vmem:[%s13 + $0x98] sm:$0xff]
    %v2660 = vld [vmem:[%s13 + $0xa0] sm:$0xff]
    %v2661 = vld [vmem:[%s13 + $0xa8] sm:$0xff]
    %v2662 = vld [vmem:[%s13 + $0xb0] sm:$0xff]
    %v2663 = vld [vmem:[%s13 + $0xb8] sm:$0xff]
    %v2664 = vld [vmem:[%s13 + $0xc0] sm:$0xff]
    %v2665 = vld [vmem:[%s13 + $0xc8] sm:$0xff]
    %v2666 = vld [vmem:[%s13 + $0xd0] sm:$0xff]
    %v2667 = vld [vmem:[%s13 + $0xd8] sm:$0xff]
    %v2668 = vld [vmem:[%s13 + $0xe0] sm:$0xff]
    %v2669 = vld [vmem:[%s13 + $0xe8] sm:$0xff]
    %v2670 = vld [vmem:[%s13 + $0xf0] sm:$0xff]
    %v2671 = vld [vmem:[%s13 + $0xf8] sm:$0xff]
    %v2672 = vld [vmem:[%s13 + $0x100] sm:$0xff]
    %v2673 = vld [vmem:[%s13 + $0x108] sm:$0xff]
    %v2674 = vld [vmem:[%s13 + $0x110] sm:$0xff]
    %v2675 = vld [vmem:[%s13 + $0x118] sm:$0xff]
    %v2676 = vld [vmem:[%s13 + $0x120] sm:$0xff]
    %v2677 = vld [vmem:[%s13 + $0x128] sm:$0xff]
    %v2678 = vld [vmem:[%s13 + $0x130] sm:$0xff]
    %v2679 = vld [vmem:[%s13 + $0x138] sm:$0xff]
    %v2680 = vld [vmem:[%s13 + $0x140] sm:$0xff]
    %v2681 = vld [vmem:[%s13 + $0x148] sm:$0xff]
    %v2682 = vld [vmem:[%s13 + $0x150] sm:$0xff]
    %v2683 = vld [vmem:[%s13 + $0x158] sm:$0xff]
    %v2684 = vld [vmem:[%s13 + $0x160] sm:$0xff]
    %v2685 = vld [vmem:[%s13 + $0x168] sm:$0xff]
    %v2686 = vld [vmem:[%s13 + $0x170] sm:$0xff]
    %v2687 = vld [vmem:[%s13 + $0x178] sm:$0xff]
    %v2688 = vld [vmem:[%s13 + $0x180] sm:$0xff]
    %v2689 = vld [vmem:[%s13 + $0x188] sm:$0xff]
    %v2690 = vld [vmem:[%s13 + $0x190] sm:$0xff]
    %v2691 = vld [vmem:[%s13 + $0x198] sm:$0xff]
    %v2692 = vld [vmem:[%s13 + $0x1a0] sm:$0xff]
    %v2693 = vld [vmem:[%s13 + $0x1a8] sm:$0xff]
    %v2694 = vld [vmem:[%s13 + $0x1b0] sm:$0xff]
    %v2695 = vld [vmem:[%s13 + $0x1b8] sm:$0xff]
    %v2696 = vld [vmem:[%s13 + $0x1c0] sm:$0xff]
    %v2697 = vld [vmem:[%s13 + $0x1c8] sm:$0xff]
    %v2698 = vld [vmem:[%s13 + $0x1d0] sm:$0xff]
    %v2699 = vld [vmem:[%s13 + $0x1d8] sm:$0xff]
    %v2700 = vld [vmem:[%s13 + $0x1e0] sm:$0xff]
    %v2701 = vld [vmem:[%s13 + $0x1e8] sm:$0xff]
    %v2702 = vld [vmem:[%s13 + $0x1f0] sm:$0xff]
    %v2703 = vld [vmem:[%s13 + $0x1f8] sm:$0xff]
    %v2704 = vld [vmem:[%s13 + $0x200] sm:$0xff]
    %v2705 = vld [vmem:[%s13 + $0x208] sm:$0xff]
    %v2706 = vld [vmem:[%s13 + $0x210] sm:$0xff]
    %v2707 = vld [vmem:[%s13 + $0x218] sm:$0xff]
    %v2708 = vld [vmem:[%s13 + $0x220] sm:$0xff]
    %v2709 = vld [vmem:[%s13 + $0x228] sm:$0xff]
    %v2710 = vld [vmem:[%s13 + $0x230] sm:$0xff]
    %v2711 = vld [vmem:[%s13 + $0x238] sm:$0xff]
    %v2712 = vld [vmem:[%s13 + $0x240] sm:$0xff]
    %v2713 = vld [vmem:[%s13 + $0x248] sm:$0xff]
    %v2714 = vld [vmem:[%s13 + $0x250] sm:$0xff]
    %v2715 = vld [vmem:[%s13 + $0x258] sm:$0xff]
    %v2716 = vld [vmem:[%s13 + $0x260] sm:$0xff]
    %v2717 = vld [vmem:[%s13 + $0x268] sm:$0xff]
    %v2718 = vld [vmem:[%s13 + $0x270] sm:$0xff]
    %v2719 = vld [vmem:[%s13 + $0x278] sm:$0xff]
    %v2720 = vld [vmem:[%s13 + $0x280] sm:$0xff]
    %v2721 = vld [vmem:[%s13 + $0x288] sm:$0xff]
    %v2722 = vld [vmem:[%s13 + $0x290] sm:$0xff]
    %v2723 = vld [vmem:[%s13 + $0x298] sm:$0xff]
    %v2724 = vld [vmem:[%s13 + $0x2a0] sm:$0xff]
    %v2725 = vld [vmem:[%s13 + $0x2a8] sm:$0xff]
    %v2726 = vld [vmem:[%s13 + $0x2b0] sm:$0xff]
    %v2727 = vld [vmem:[%s13 + $0x2b8] sm:$0xff]
    %v2728 = vld [vmem:[%s13 + $0x2c0] sm:$0xff]
    %v2729 = vld [vmem:[%s13 + $0x2c8] sm:$0xff]
    %v2730 = vld [vmem:[%s13 + $0x2d0] sm:$0xff]
    %v2731 = vld [vmem:[%s13 + $0x2d8] sm:$0xff]
    %v2732 = vld [vmem:[%s13 + $0x2e0] sm:$0xff]
    %v2733 = vld [vmem:[%s13 + $0x2e8] sm:$0xff]
    %v2734 = vld [vmem:[%s13 + $0x2f0] sm:$0xff]
    %v2735 = vld [vmem:[%s13 + $0x2f8] sm:$0xff]
    %v2736 = vld [vmem:[%s13 + $0x300] sm:$0xff]
    %v2737 = vld [vmem:[%s13 + $0x308] sm:$0xff]
    %v2738 = vld [vmem:[%s13 + $0x310] sm:$0xff]
    %v2739 = vld [vmem:[%s13 + $0x318] sm:$0xff]
    %v2740 = vld [vmem:[%s13 + $0x320] sm:$0xff]
    %v2741 = vld [vmem:[%s13 + $0x328] sm:$0xff]
    %v2742 = vld [vmem:[%s13 + $0x330] sm:$0xff]
    %v2743 = vld [vmem:[%s13 + $0x338] sm:$0xff]
    %v2744 = vld [vmem:[%s13 + $0x340] sm:$0xff]
    %v2745 = vld [vmem:[%s13 + $0x348] sm:$0xff]
    %v2746 = vld [vmem:[%s13 + $0x350] sm:$0xff]
    %v2747 = vld [vmem:[%s13 + $0x358] sm:$0xff]
    %v2748 = vld [vmem:[%s13 + $0x360] sm:$0xff]
    %v2749 = vld [vmem:[%s13 + $0x368] sm:$0xff]
    %v2750 = vld [vmem:[%s13 + $0x370] sm:$0xff]
    %v2751 = vld [vmem:[%s13 + $0x378] sm:$0xff]
    %v2752 = vld [vmem:[%s13 + $0x380] sm:$0xff]
    %v2753 = vld [vmem:[%s13 + $0x388] sm:$0xff]
    %v2754 = vld [vmem:[%s13 + $0x390] sm:$0xff]
    %v2755 = vld [vmem:[%s13 + $0x398] sm:$0xff]
    %v2756 = vld [vmem:[%s13 + $0x3a0] sm:$0xff]
    %v2757 = vld [vmem:[%s13 + $0x3a8] sm:$0xff]
    %v2758 = vld [vmem:[%s13 + $0x3b0] sm:$0xff]
    %v2759 = vld [vmem:[%s13 + $0x3b8] sm:$0xff]
    %v2760 = vld [vmem:[%s13 + $0x3c0] sm:$0xff]
    %v2761 = vld [vmem:[%s13 + $0x3c8] sm:$0xff]
    %v2762 = vld [vmem:[%s13 + $0x3d0] sm:$0xff]
    %v2763 = vld [vmem:[%s13 + $0x3d8] sm:$0xff]
    %v2764 = vld [vmem:[%s13 + $0x3e0] sm:$0xff]
    %v2765 = vld [vmem:[%s13 + $0x3e8] sm:$0xff]
    %v2766 = vld [vmem:[%s13 + $0x3f0] sm:$0xff]
    %v2767 = vld [vmem:[%s13 + $0x3f8] sm:$0xff]
    %v2768 = vld [vmem:[%s13 + $0x400] sm:$0xff]
    %v2769 = vld [vmem:[%s13 + $0x408] sm:$0xff]
    %v2770 = vld [vmem:[%s13 + $0x410] sm:$0xff]
    %v2771 = vld [vmem:[%s13 + $0x418] sm:$0xff]
    %v2772 = vld [vmem:[%s13 + $0x420] sm:$0xff]
    %v2773 = vld [vmem:[%s13 + $0x428] sm:$0xff]
    %v2774 = vld [vmem:[%s13 + $0x430] sm:$0xff]
    %v2775 = vld [vmem:[%s13 + $0x438] sm:$0xff]
    %v2776 = vld [vmem:[%s13 + $0x440] sm:$0xff]
    %v2777 = vld [vmem:[%s13 + $0x448] sm:$0xff]
    %v2778 = vld [vmem:[%s13 + $0x450] sm:$0xff]
    %v2779 = vld [vmem:[%s13 + $0x458] sm:$0xff]
    %v2780 = vld [vmem:[%s13 + $0x460] sm:$0xff]
    %v2781 = vld [vmem:[%s13 + $0x468] sm:$0xff]
    %v2782 = vld [vmem:[%s13 + $0x470] sm:$0xff]
    %v2783 = vld [vmem:[%s13 + $0x478] sm:$0xff]
    %v2784 = vld [vmem:[%s13 + $0x480] sm:$0xff]
    %v2785 = vld [vmem:[%s13 + $0x488] sm:$0xff]
    %v2786 = vld [vmem:[%s13 + $0x490] sm:$0xff]
    %v2787 = vld [vmem:[%s13 + $0x498] sm:$0xff]
    %v2788 = vld [vmem:[%s13 + $0x4a0] sm:$0xff]
    %v2789 = vld [vmem:[%s13 + $0x4a8] sm:$0xff]
    %v2790 = vld [vmem:[%s13 + $0x4b0] sm:$0xff]
    %v2791 = vld [vmem:[%s13 + $0x4b8] sm:$0xff]
    %v2792 = vld [vmem:[%s13 + $0x4c0] sm:$0xff]
    %v2793 = vld [vmem:[%s13 + $0x4c8] sm:$0xff]
    %v2794 = vld [vmem:[%s13 + $0x4d0] sm:$0xff]
    %v2795 = vld [vmem:[%s13 + $0x4d8] sm:$0xff]
    %v2796 = vld [vmem:[%s13 + $0x4e0] sm:$0xff]
    %v2797 = vld [vmem:[%s13 + $0x4e8] sm:$0xff]
    %v2798 = vld [vmem:[%s13 + $0x4f0] sm:$0xff]
    %v2799 = vld [vmem:[%s13 + $0x4f8] sm:$0xff]
    %v2800 = vld [vmem:[%s13 + $0x500] sm:$0xff]
    %v2801 = vld [vmem:[%s13 + $0x508] sm:$0xff]
    %v2802 = vld [vmem:[%s13 + $0x510] sm:$0xff]
    %v2803 = vld [vmem:[%s13 + $0x518] sm:$0xff]
    %v2804 = vld [vmem:[%s13 + $0x520] sm:$0xff]
    %v2805 = vld [vmem:[%s13 + $0x528] sm:$0xff]
    %v2806 = vld [vmem:[%s13 + $0x530] sm:$0xff]
    %v2807 = vld [vmem:[%s13 + $0x538] sm:$0xff]
    %v2808 = vld [vmem:[%s13 + $0x540] sm:$0xff]
    %v2809 = vld [vmem:[%s13 + $0x548] sm:$0xff]
    %v2810 = vld [vmem:[%s13 + $0x550] sm:$0xff]
    %v2811 = vld [vmem:[%s13 + $0x558] sm:$0xff]
    %v2812 = vld [vmem:[%s13 + $0x560] sm:$0xff]
    %v2813 = vld [vmem:[%s13 + $0x568] sm:$0xff]
    %v2814 = vld [vmem:[%s13 + $0x570] sm:$0xff]
    %v2815 = vld [vmem:[%s13 + $0x578] sm:$0xff]
    %v2816 = vld [vmem:[%s13 + $0x580] sm:$0xff]
    %v2817 = vld [vmem:[%s13 + $0x588] sm:$0xff]
    %v2818 = vld [vmem:[%s13 + $0x590] sm:$0xff]
    %v2819 = vld [vmem:[%s13 + $0x598] sm:$0xff]
    %v2820 = vld [vmem:[%s13 + $0x5a0] sm:$0xff]
    %v2821 = vld [vmem:[%s13 + $0x5a8] sm:$0xff]
    %v2822 = vld [vmem:[%s13 + $0x5b0] sm:$0xff]
    %v2823 = vld [vmem:[%s13 + $0x5b8] sm:$0xff]
    %v2824 = vld [vmem:[%s13 + $0x5c0] sm:$0xff]
    %v2825 = vld [vmem:[%s13 + $0x5c8] sm:$0xff]
    %v2826 = vld [vmem:[%s13 + $0x5d0] sm:$0xff]
    %v2827 = vld [vmem:[%s13 + $0x5d8] sm:$0xff]
    %v2828 = vld [vmem:[%s13 + $0x5e0] sm:$0xff]
    %v2829 = vld [vmem:[%s13 + $0x5e8] sm:$0xff]
    %v2830 = vld [vmem:[%s13 + $0x5f0] sm:$0xff]
    %v2831 = vld [vmem:[%s13 + $0x5f8] sm:$0xff]
    %v2832 = vld [vmem:[%s13 + $0x600] sm:$0xff]
    %v2833 = vld [vmem:[%s13 + $0x608] sm:$0xff]
    %v2834 = vld [vmem:[%s13 + $0x610] sm:$0xff]
    %v2835 = vld [vmem:[%s13 + $0x618] sm:$0xff]
    %v2836 = vld [vmem:[%s13 + $0x620] sm:$0xff]
    %v2837 = vld [vmem:[%s13 + $0x628] sm:$0xff]
    %v2838 = vld [vmem:[%s13 + $0x630] sm:$0xff]
    %v2839 = vld [vmem:[%s13 + $0x638] sm:$0xff]
    %v2840 = vld [vmem:[%s13 + $0x640] sm:$0xff]
    %v2841 = vld [vmem:[%s13 + $0x648] sm:$0xff]
    %v2842 = vld [vmem:[%s13 + $0x650] sm:$0xff]
    %v2843 = vld [vmem:[%s13 + $0x658] sm:$0xff]
    %v2844 = vld [vmem:[%s13 + $0x660] sm:$0xff]
    %v2845 = vld [vmem:[%s13 + $0x668] sm:$0xff]
    %v2846 = vld [vmem:[%s13 + $0x670] sm:$0xff]
    %v2847 = vld [vmem:[%s13 + $0x678] sm:$0xff]
    %v2848 = vld [vmem:[%s13 + $0x680] sm:$0xff]
    %v2849 = vld [vmem:[%s13 + $0x688] sm:$0xff]
    %v2850 = vld [vmem:[%s13 + $0x690] sm:$0xff]
    %v2851 = vld [vmem:[%s13 + $0x698] sm:$0xff]
    %v2852 = vld [vmem:[%s13 + $0x6a0] sm:$0xff]
    %v2853 = vld [vmem:[%s13 + $0x6a8] sm:$0xff]
    %v2854 = vld [vmem:[%s13 + $0x6b0] sm:$0xff]
    %v2855 = vld [vmem:[%s13 + $0x6b8] sm:$0xff]
    %v2856 = vld [vmem:[%s13 + $0x6c0] sm:$0xff]
    %v2857 = vld [vmem:[%s13 + $0x6c8] sm:$0xff]
    %v2858 = vld [vmem:[%s13 + $0x6d0] sm:$0xff]
    %v2859 = vld [vmem:[%s13 + $0x6d8] sm:$0xff]
    %v2860 = vld [vmem:[%s13 + $0x6e0] sm:$0xff]
    %v2861 = vld [vmem:[%s13 + $0x6e8] sm:$0xff]
    %v2862 = vld [vmem:[%s13 + $0x6f0] sm:$0xff]
    %v2863 = vld [vmem:[%s13 + $0x6f8] sm:$0xff]
    %v2864 = vld [vmem:[%s13 + $0x700] sm:$0xff]
    %v2865 = vld [vmem:[%s13 + $0x708] sm:$0xff]
    %v2866 = vld [vmem:[%s13 + $0x710] sm:$0xff]
    %v2867 = vld [vmem:[%s13 + $0x718] sm:$0xff]
    %v2868 = vld [vmem:[%s13 + $0x720] sm:$0xff]
    %v2869 = vld [vmem:[%s13 + $0x728] sm:$0xff]
    %v2870 = vld [vmem:[%s13 + $0x730] sm:$0xff]
    %v2871 = vld [vmem:[%s13 + $0x738] sm:$0xff]
    %v2872 = vld [vmem:[%s13 + $0x740] sm:$0xff]
    %v2873 = vld [vmem:[%s13 + $0x748] sm:$0xff]
    %v2874 = vld [vmem:[%s13 + $0x750] sm:$0xff]
    %v2875 = vld [vmem:[%s13 + $0x758] sm:$0xff]
    %v2876 = vld [vmem:[%s13 + $0x760] sm:$0xff]
    %v2877 = vld [vmem:[%s13 + $0x768] sm:$0xff]
    %v2878 = vld [vmem:[%s13 + $0x770] sm:$0xff]
    %v2879 = vld [vmem:[%s13 + $0x778] sm:$0xff]
    %v2880 = vld [vmem:[%s13 + $0x780] sm:$0xff]
    %v2881 = vld [vmem:[%s13 + $0x788] sm:$0xff]
    %v2882 = vld [vmem:[%s13 + $0x790] sm:$0xff]
    %v2883 = vld [vmem:[%s13 + $0x798] sm:$0xff]
    %v2884 = vld [vmem:[%s13 + $0x7a0] sm:$0xff]
    %v2885 = vld [vmem:[%s13 + $0x7a8] sm:$0xff]
    %v2886 = vld [vmem:[%s13 + $0x7b0] sm:$0xff]
    %v2887 = vld [vmem:[%s13 + $0x7b8] sm:$0xff]
    %v2888 = vld [vmem:[%s13 + $0x7c0] sm:$0xff]
    %v2889 = vld [vmem:[%s13 + $0x7c8] sm:$0xff]
    %v2890 = vld [vmem:[%s13 + $0x7d0] sm:$0xff]
    %v2891 = vld [vmem:[%s13 + $0x7d8] sm:$0xff]
    %v2892 = vld [vmem:[%s13 + $0x7e0] sm:$0xff]
    %v2893 = vld [vmem:[%s13 + $0x7e8] sm:$0xff]
    %v2894 = vld [vmem:[%s13 + $0x7f0] sm:$0xff]
    %v2895 = vld [vmem:[%s13 + $0x7f8] sm:$0xff]
    %v2896 = vld [vmem:[#allocation14] sm:$0x3]
    %v2898 = vlaneseq
    %v2899 = vshrl.u32 %v2898, 7
    %v2900 = vsub.s32 0, %v2899
    %v2901 = vrot.slane %v2896, %v2900
    %v2902 = vlaneseq
    %v2903 = vshrl.u32 %v2902, 7
    %v2904 = vsub.s32 1, %v2903
    %v2905 = vrot.slane %v2896, %v2904
    %v3164 = vunpack.c.l.b16 %v2640
    %v3165 = vunpack.c.h.b16 %v2640
    %v3166 = vunpack.c.l.b16 %v2641
    %v3167 = vunpack.c.h.b16 %v2641
    %v3168 = vunpack.c.l.b16 %v2642
    %v3169 = vunpack.c.h.b16 %v2642
    %v3170 = vunpack.c.l.b16 %v2643
    %v3171 = vunpack.c.h.b16 %v2643
    %v3172 = vunpack.c.l.b16 %v2644
    %v3173 = vunpack.c.h.b16 %v2644
    %v3174 = vunpack.c.l.b16 %v2645
    %v3175 = vunpack.c.h.b16 %v2645
    %v3176 = vunpack.c.l.b16 %v2646
    %v3177 = vunpack.c.h.b16 %v2646
    %v3178 = vunpack.c.l.b16 %v2647
    %v3179 = vunpack.c.h.b16 %v2647
    %v3180 = vunpack.c.l.b16 %v2648
    %v3181 = vunpack.c.h.b16 %v2648
    %v3182 = vunpack.c.l.b16 %v2649
    %v3183 = vunpack.c.h.b16 %v2649
    %v3184 = vunpack.c.l.b16 %v2650
    %v3185 = vunpack.c.h.b16 %v2650
    %v3186 = vunpack.c.l.b16 %v2651
    %v3187 = vunpack.c.h.b16 %v2651
    %v3188 = vunpack.c.l.b16 %v2652
    %v3189 = vunpack.c.h.b16 %v2652
    %v3190 = vunpack.c.l.b16 %v2653
    %v3191 = vunpack.c.h.b16 %v2653
    %v3192 = vunpack.c.l.b16 %v2654
    %v3193 = vunpack.c.h.b16 %v2654
    %v3194 = vunpack.c.l.b16 %v2655
    %v3195 = vunpack.c.h.b16 %v2655
    %v3196 = vunpack.c.l.b16 %v2656
    %v3197 = vunpack.c.h.b16 %v2656
    %v3198 = vunpack.c.l.b16 %v2657
    %v3199 = vunpack.c.h.b16 %v2657
    %v3200 = vunpack.c.l.b16 %v2658
    %v3201 = vunpack.c.h.b16 %v2658
    %v3202 = vunpack.c.l.b16 %v2659
    %v3203 = vunpack.c.h.b16 %v2659
    %v3204 = vunpack.c.l.b16 %v2660
    %v3205 = vunpack.c.h.b16 %v2660
    %v3206 = vunpack.c.l.b16 %v2661
    %v3207 = vunpack.c.h.b16 %v2661
    %v3208 = vunpack.c.l.b16 %v2662
    %v3209 = vunpack.c.h.b16 %v2662
    %v3210 = vunpack.c.l.b16 %v2663
    %v3211 = vunpack.c.h.b16 %v2663
    %v3212 = vunpack.c.l.b16 %v2664
    %v3213 = vunpack.c.h.b16 %v2664
    %v3214 = vunpack.c.l.b16 %v2665
    %v3215 = vunpack.c.h.b16 %v2665
    %v3216 = vunpack.c.l.b16 %v2666
    %v3217 = vunpack.c.h.b16 %v2666
    %v3218 = vunpack.c.l.b16 %v2667
    %v3219 = vunpack.c.h.b16 %v2667
    %v3220 = vunpack.c.l.b16 %v2668
    %v3221 = vunpack.c.h.b16 %v2668
    %v3222 = vunpack.c.l.b16 %v2669
    %v3223 = vunpack.c.h.b16 %v2669
    %v3224 = vunpack.c.l.b16 %v2670
    %v3225 = vunpack.c.h.b16 %v2670
    %v3226 = vunpack.c.l.b16 %v2671
    %v3227 = vunpack.c.h.b16 %v2671
    %v3228 = vunpack.c.l.b16 %v2672
    %v3229 = vunpack.c.h.b16 %v2672
    %v3230 = vunpack.c.l.b16 %v2673
    %v3231 = vunpack.c.h.b16 %v2673
    %v3232 = vunpack.c.l.b16 %v2674
    %v3233 = vunpack.c.h.b16 %v2674
    %v3234 = vunpack.c.l.b16 %v2675
    %v3235 = vunpack.c.h.b16 %v2675
    %v3236 = vunpack.c.l.b16 %v2676
    %v3237 = vunpack.c.h.b16 %v2676
    %v3238 = vunpack.c.l.b16 %v2677
    %v3239 = vunpack.c.h.b16 %v2677
    %v3240 = vunpack.c.l.b16 %v2678
    %v3241 = vunpack.c.h.b16 %v2678
    %v3242 = vunpack.c.l.b16 %v2679
    %v3243 = vunpack.c.h.b16 %v2679
    %v3244 = vunpack.c.l.b16 %v2680
    %v3245 = vunpack.c.h.b16 %v2680
    %v3246 = vunpack.c.l.b16 %v2681
    %v3247 = vunpack.c.h.b16 %v2681
    %v3248 = vunpack.c.l.b16 %v2682
    %v3249 = vunpack.c.h.b16 %v2682
    %v3250 = vunpack.c.l.b16 %v2683
    %v3251 = vunpack.c.h.b16 %v2683
    %v3252 = vunpack.c.l.b16 %v2684
    %v3253 = vunpack.c.h.b16 %v2684
    %v3254 = vunpack.c.l.b16 %v2685
    %v3255 = vunpack.c.h.b16 %v2685
    %v3256 = vunpack.c.l.b16 %v2686
    %v3257 = vunpack.c.h.b16 %v2686
    %v3258 = vunpack.c.l.b16 %v2687
    %v3259 = vunpack.c.h.b16 %v2687
    %v3260 = vunpack.c.l.b16 %v2688
    %v3261 = vunpack.c.h.b16 %v2688
    %v3262 = vunpack.c.l.b16 %v2689
    %v3263 = vunpack.c.h.b16 %v2689
    %v3264 = vunpack.c.l.b16 %v2690
    %v3265 = vunpack.c.h.b16 %v2690
    %v3266 = vunpack.c.l.b16 %v2691
    %v3267 = vunpack.c.h.b16 %v2691
    %v3268 = vunpack.c.l.b16 %v2692
    %v3269 = vunpack.c.h.b16 %v2692
    %v3270 = vunpack.c.l.b16 %v2693
    %v3271 = vunpack.c.h.b16 %v2693
    %v3272 = vunpack.c.l.b16 %v2694
    %v3273 = vunpack.c.h.b16 %v2694
    %v3274 = vunpack.c.l.b16 %v2695
    %v3275 = vunpack.c.h.b16 %v2695
    %v3276 = vunpack.c.l.b16 %v2696
    %v3277 = vunpack.c.h.b16 %v2696
    %v3278 = vunpack.c.l.b16 %v2697
    %v3279 = vunpack.c.h.b16 %v2697
    %v3280 = vunpack.c.l.b16 %v2698
    %v3281 = vunpack.c.h.b16 %v2698
    %v3282 = vunpack.c.l.b16 %v2699
    %v3283 = vunpack.c.h.b16 %v2699
    %v3284 = vunpack.c.l.b16 %v2700
    %v3285 = vunpack.c.h.b16 %v2700
    %v3286 = vunpack.c.l.b16 %v2701
    %v3287 = vunpack.c.h.b16 %v2701
    %v3288 = vunpack.c.l.b16 %v2702
    %v3289 = vunpack.c.h.b16 %v2702
    %v3290 = vunpack.c.l.b16 %v2703
    %v3291 = vunpack.c.h.b16 %v2703
    %v3292 = vunpack.c.l.b16 %v2704
    %v3293 = vunpack.c.h.b16 %v2704
    %v3294 = vunpack.c.l.b16 %v2705
    %v3295 = vunpack.c.h.b16 %v2705
    %v3296 = vunpack.c.l.b16 %v2706
    %v3297 = vunpack.c.h.b16 %v2706
    %v3298 = vunpack.c.l.b16 %v2707
    %v3299 = vunpack.c.h.b16 %v2707
    %v3300 = vunpack.c.l.b16 %v2708
    %v3301 = vunpack.c.h.b16 %v2708
    %v3302 = vunpack.c.l.b16 %v2709
    %v3303 = vunpack.c.h.b16 %v2709
    %v3304 = vunpack.c.l.b16 %v2710
    %v3305 = vunpack.c.h.b16 %v2710
    %v3306 = vunpack.c.l.b16 %v2711
    %v3307 = vunpack.c.h.b16 %v2711
    %v3308 = vunpack.c.l.b16 %v2712
    %v3309 = vunpack.c.h.b16 %v2712
    %v3310 = vunpack.c.l.b16 %v2713
    %v3311 = vunpack.c.h.b16 %v2713
    %v3312 = vunpack.c.l.b16 %v2714
    %v3313 = vunpack.c.h.b16 %v2714
    %v3314 = vunpack.c.l.b16 %v2715
    %v3315 = vunpack.c.h.b16 %v2715
    %v3316 = vunpack.c.l.b16 %v2716
    %v3317 = vunpack.c.h.b16 %v2716
    %v3318 = vunpack.c.l.b16 %v2717
    %v3319 = vunpack.c.h.b16 %v2717
    %v3320 = vunpack.c.l.b16 %v2718
    %v3321 = vunpack.c.h.b16 %v2718
    %v3322 = vunpack.c.l.b16 %v2719
    %v3323 = vunpack.c.h.b16 %v2719
    %v3324 = vunpack.c.l.b16 %v2720
    %v3325 = vunpack.c.h.b16 %v2720
    %v3326 = vunpack.c.l.b16 %v2721
    %v3327 = vunpack.c.h.b16 %v2721
    %v3328 = vunpack.c.l.b16 %v2722
    %v3329 = vunpack.c.h.b16 %v2722
    %v3330 = vunpack.c.l.b16 %v2723
    %v3331 = vunpack.c.h.b16 %v2723
    %v3332 = vunpack.c.l.b16 %v2724
    %v3333 = vunpack.c.h.b16 %v2724
    %v3334 = vunpack.c.l.b16 %v2725
    %v3335 = vunpack.c.h.b16 %v2725
    %v3336 = vunpack.c.l.b16 %v2726
    %v3337 = vunpack.c.h.b16 %v2726
    %v3338 = vunpack.c.l.b16 %v2727
    %v3339 = vunpack.c.h.b16 %v2727
    %v3340 = vunpack.c.l.b16 %v2728
    %v3341 = vunpack.c.h.b16 %v2728
    %v3342 = vunpack.c.l.b16 %v2729
    %v3343 = vunpack.c.h.b16 %v2729
    %v3344 = vunpack.c.l.b16 %v2730
    %v3345 = vunpack.c.h.b16 %v2730
    %v3346 = vunpack.c.l.b16 %v2731
    %v3347 = vunpack.c.h.b16 %v2731
    %v3348 = vunpack.c.l.b16 %v2732
    %v3349 = vunpack.c.h.b16 %v2732
    %v3350 = vunpack.c.l.b16 %v2733
    %v3351 = vunpack.c.h.b16 %v2733
    %v3352 = vunpack.c.l.b16 %v2734
    %v3353 = vunpack.c.h.b16 %v2734
    %v3354 = vunpack.c.l.b16 %v2735
    %v3355 = vunpack.c.h.b16 %v2735
    %v3356 = vunpack.c.l.b16 %v2736
    %v3357 = vunpack.c.h.b16 %v2736
    %v3358 = vunpack.c.l.b16 %v2737
    %v3359 = vunpack.c.h.b16 %v2737
    %v3360 = vunpack.c.l.b16 %v2738
    %v3361 = vunpack.c.h.b16 %v2738
    %v3362 = vunpack.c.l.b16 %v2739
    %v3363 = vunpack.c.h.b16 %v2739
    %v3364 = vunpack.c.l.b16 %v2740
    %v3365 = vunpack.c.h.b16 %v2740
    %v3366 = vunpack.c.l.b16 %v2741
    %v3367 = vunpack.c.h.b16 %v2741
    %v3368 = vunpack.c.l.b16 %v2742
    %v3369 = vunpack.c.h.b16 %v2742
    %v3370 = vunpack.c.l.b16 %v2743
    %v3371 = vunpack.c.h.b16 %v2743
    %v3372 = vunpack.c.l.b16 %v2744
    %v3373 = vunpack.c.h.b16 %v2744
    %v3374 = vunpack.c.l.b16 %v2745
    %v3375 = vunpack.c.h.b16 %v2745
    %v3376 = vunpack.c.l.b16 %v2746
    %v3377 = vunpack.c.h.b16 %v2746
    %v3378 = vunpack.c.l.b16 %v2747
    %v3379 = vunpack.c.h.b16 %v2747
    %v3380 = vunpack.c.l.b16 %v2748
    %v3381 = vunpack.c.h.b16 %v2748
    %v3382 = vunpack.c.l.b16 %v2749
    %v3383 = vunpack.c.h.b16 %v2749
    %v3384 = vunpack.c.l.b16 %v2750
    %v3385 = vunpack.c.h.b16 %v2750
    %v3386 = vunpack.c.l.b16 %v2751
    %v3387 = vunpack.c.h.b16 %v2751
    %v3388 = vunpack.c.l.b16 %v2752
    %v3389 = vunpack.c.h.b16 %v2752
    %v3390 = vunpack.c.l.b16 %v2753
    %v3391 = vunpack.c.h.b16 %v2753
    %v3392 = vunpack.c.l.b16 %v2754
    %v3393 = vunpack.c.h.b16 %v2754
    %v3394 = vunpack.c.l.b16 %v2755
    %v3395 = vunpack.c.h.b16 %v2755
    %v3396 = vunpack.c.l.b16 %v2756
    %v3397 = vunpack.c.h.b16 %v2756
    %v3398 = vunpack.c.l.b16 %v2757
    %v3399 = vunpack.c.h.b16 %v2757
    %v3400 = vunpack.c.l.b16 %v2758
    %v3401 = vunpack.c.h.b16 %v2758
    %v3402 = vunpack.c.l.b16 %v2759
    %v3403 = vunpack.c.h.b16 %v2759
    %v3404 = vunpack.c.l.b16 %v2760
    %v3405 = vunpack.c.h.b16 %v2760
    %v3406 = vunpack.c.l.b16 %v2761
    %v3407 = vunpack.c.h.b16 %v2761
    %v3408 = vunpack.c.l.b16 %v2762
    %v3409 = vunpack.c.h.b16 %v2762
    %v3410 = vunpack.c.l.b16 %v2763
    %v3411 = vunpack.c.h.b16 %v2763
    %v3412 = vunpack.c.l.b16 %v2764
    %v3413 = vunpack.c.h.b16 %v2764
    %v3414 = vunpack.c.l.b16 %v2765
    %v3415 = vunpack.c.h.b16 %v2765
    %v3416 = vunpack.c.l.b16 %v2766
    %v3417 = vunpack.c.h.b16 %v2766
    %v3418 = vunpack.c.l.b16 %v2767
    %v3419 = vunpack.c.h.b16 %v2767
    %v3420 = vunpack.c.l.b16 %v2768
    %v3421 = vunpack.c.h.b16 %v2768
    %v3422 = vunpack.c.l.b16 %v2769
    %v3423 = vunpack.c.h.b16 %v2769
    %v3424 = vunpack.c.l.b16 %v2770
    %v3425 = vunpack.c.h.b16 %v2770
    %v3426 = vunpack.c.l.b16 %v2771
    %v3427 = vunpack.c.h.b16 %v2771
    %v3428 = vunpack.c.l.b16 %v2772
    %v3429 = vunpack.c.h.b16 %v2772
    %v3430 = vunpack.c.l.b16 %v2773
    %v3431 = vunpack.c.h.b16 %v2773
    %v3432 = vunpack.c.l.b16 %v2774
    %v3433 = vunpack.c.h.b16 %v2774
    %v3434 = vunpack.c.l.b16 %v2775
    %v3435 = vunpack.c.h.b16 %v2775
    %v3436 = vunpack.c.l.b16 %v2776
    %v3437 = vunpack.c.h.b16 %v2776
    %v3438 = vunpack.c.l.b16 %v2777
    %v3439 = vunpack.c.h.b16 %v2777
    %v3440 = vunpack.c.l.b16 %v2778
    %v3441 = vunpack.c.h.b16 %v2778
    %v3442 = vunpack.c.l.b16 %v2779
    %v3443 = vunpack.c.h.b16 %v2779
    %v3444 = vunpack.c.l.b16 %v2780
    %v3445 = vunpack.c.h.b16 %v2780
    %v3446 = vunpack.c.l.b16 %v2781
    %v3447 = vunpack.c.h.b16 %v2781
    %v3448 = vunpack.c.l.b16 %v2782
    %v3449 = vunpack.c.h.b16 %v2782
    %v3450 = vunpack.c.l.b16 %v2783
    %v3451 = vunpack.c.h.b16 %v2783
    %v3452 = vunpack.c.l.b16 %v2784
    %v3453 = vunpack.c.h.b16 %v2784
    %v3454 = vunpack.c.l.b16 %v2785
    %v3455 = vunpack.c.h.b16 %v2785
    %v3456 = vunpack.c.l.b16 %v2786
    %v3457 = vunpack.c.h.b16 %v2786
    %v3458 = vunpack.c.l.b16 %v2787
    %v3459 = vunpack.c.h.b16 %v2787
    %v3460 = vunpack.c.l.b16 %v2788
    %v3461 = vunpack.c.h.b16 %v2788
    %v3462 = vunpack.c.l.b16 %v2789
    %v3463 = vunpack.c.h.b16 %v2789
    %v3464 = vunpack.c.l.b16 %v2790
    %v3465 = vunpack.c.h.b16 %v2790
    %v3466 = vunpack.c.l.b16 %v2791
    %v3467 = vunpack.c.h.b16 %v2791
    %v3468 = vunpack.c.l.b16 %v2792
    %v3469 = vunpack.c.h.b16 %v2792
    %v3470 = vunpack.c.l.b16 %v2793
    %v3471 = vunpack.c.h.b16 %v2793
    %v3472 = vunpack.c.l.b16 %v2794
    %v3473 = vunpack.c.h.b16 %v2794
    %v3474 = vunpack.c.l.b16 %v2795
    %v3475 = vunpack.c.h.b16 %v2795
    %v3476 = vunpack.c.l.b16 %v2796
    %v3477 = vunpack.c.h.b16 %v2796
    %v3478 = vunpack.c.l.b16 %v2797
    %v3479 = vunpack.c.h.b16 %v2797
    %v3480 = vunpack.c.l.b16 %v2798
    %v3481 = vunpack.c.h.b16 %v2798
    %v3482 = vunpack.c.l.b16 %v2799
    %v3483 = vunpack.c.h.b16 %v2799
    %v3484 = vunpack.c.l.b16 %v2800
    %v3485 = vunpack.c.h.b16 %v2800
    %v3486 = vunpack.c.l.b16 %v2801
    %v3487 = vunpack.c.h.b16 %v2801
    %v3488 = vunpack.c.l.b16 %v2802
    %v3489 = vunpack.c.h.b16 %v2802
    %v3490 = vunpack.c.l.b16 %v2803
    %v3491 = vunpack.c.h.b16 %v2803
    %v3492 = vunpack.c.l.b16 %v2804
    %v3493 = vunpack.c.h.b16 %v2804
    %v3494 = vunpack.c.l.b16 %v2805
    %v3495 = vunpack.c.h.b16 %v2805
    %v3496 = vunpack.c.l.b16 %v2806
    %v3497 = vunpack.c.h.b16 %v2806
    %v3498 = vunpack.c.l.b16 %v2807
    %v3499 = vunpack.c.h.b16 %v2807
    %v3500 = vunpack.c.l.b16 %v2808
    %v3501 = vunpack.c.h.b16 %v2808
    %v3502 = vunpack.c.l.b16 %v2809
    %v3503 = vunpack.c.h.b16 %v2809
    %v3504 = vunpack.c.l.b16 %v2810
    %v3505 = vunpack.c.h.b16 %v2810
    %v3506 = vunpack.c.l.b16 %v2811
    %v3507 = vunpack.c.h.b16 %v2811
    %v3508 = vunpack.c.l.b16 %v2812
    %v3509 = vunpack.c.h.b16 %v2812
    %v3510 = vunpack.c.l.b16 %v2813
    %v3511 = vunpack.c.h.b16 %v2813
    %v3512 = vunpack.c.l.b16 %v2814
    %v3513 = vunpack.c.h.b16 %v2814
    %v3514 = vunpack.c.l.b16 %v2815
    %v3515 = vunpack.c.h.b16 %v2815
    %v3516 = vunpack.c.l.b16 %v2816
    %v3517 = vunpack.c.h.b16 %v2816
    %v3518 = vunpack.c.l.b16 %v2817
    %v3519 = vunpack.c.h.b16 %v2817
    %v3520 = vunpack.c.l.b16 %v2818
    %v3521 = vunpack.c.h.b16 %v2818
    %v3522 = vunpack.c.l.b16 %v2819
    %v3523 = vunpack.c.h.b16 %v2819
    %v3524 = vunpack.c.l.b16 %v2820
    %v3525 = vunpack.c.h.b16 %v2820
    %v3526 = vunpack.c.l.b16 %v2821
    %v3527 = vunpack.c.h.b16 %v2821
    %v3528 = vunpack.c.l.b16 %v2822
    %v3529 = vunpack.c.h.b16 %v2822
    %v3530 = vunpack.c.l.b16 %v2823
    %v3531 = vunpack.c.h.b16 %v2823
    %v3532 = vunpack.c.l.b16 %v2824
    %v3533 = vunpack.c.h.b16 %v2824
    %v3534 = vunpack.c.l.b16 %v2825
    %v3535 = vunpack.c.h.b16 %v2825
    %v3536 = vunpack.c.l.b16 %v2826
    %v3537 = vunpack.c.h.b16 %v2826
    %v3538 = vunpack.c.l.b16 %v2827
    %v3539 = vunpack.c.h.b16 %v2827
    %v3540 = vunpack.c.l.b16 %v2828
    %v3541 = vunpack.c.h.b16 %v2828
    %v3542 = vunpack.c.l.b16 %v2829
    %v3543 = vunpack.c.h.b16 %v2829
    %v3544 = vunpack.c.l.b16 %v2830
    %v3545 = vunpack.c.h.b16 %v2830
    %v3546 = vunpack.c.l.b16 %v2831
    %v3547 = vunpack.c.h.b16 %v2831
    %v3548 = vunpack.c.l.b16 %v2832
    %v3549 = vunpack.c.h.b16 %v2832
    %v3550 = vunpack.c.l.b16 %v2833
    %v3551 = vunpack.c.h.b16 %v2833
    %v3552 = vunpack.c.l.b16 %v2834
    %v3553 = vunpack.c.h.b16 %v2834
    %v3554 = vunpack.c.l.b16 %v2835
    %v3555 = vunpack.c.h.b16 %v2835
    %v3556 = vunpack.c.l.b16 %v2836
    %v3557 = vunpack.c.h.b16 %v2836
    %v3558 = vunpack.c.l.b16 %v2837
    %v3559 = vunpack.c.h.b16 %v2837
    %v3560 = vunpack.c.l.b16 %v2838
    %v3561 = vunpack.c.h.b16 %v2838
    %v3562 = vunpack.c.l.b16 %v2839
    %v3563 = vunpack.c.h.b16 %v2839
    %v3564 = vunpack.c.l.b16 %v2840
    %v3565 = vunpack.c.h.b16 %v2840
    %v3566 = vunpack.c.l.b16 %v2841
    %v3567 = vunpack.c.h.b16 %v2841
    %v3568 = vunpack.c.l.b16 %v2842
    %v3569 = vunpack.c.h.b16 %v2842
    %v3570 = vunpack.c.l.b16 %v2843
    %v3571 = vunpack.c.h.b16 %v2843
    %v3572 = vunpack.c.l.b16 %v2844
    %v3573 = vunpack.c.h.b16 %v2844
    %v3574 = vunpack.c.l.b16 %v2845
    %v3575 = vunpack.c.h.b16 %v2845
    %v3576 = vunpack.c.l.b16 %v2846
    %v3577 = vunpack.c.h.b16 %v2846
    %v3578 = vunpack.c.l.b16 %v2847
    %v3579 = vunpack.c.h.b16 %v2847
    %v3580 = vunpack.c.l.b16 %v2848
    %v3581 = vunpack.c.h.b16 %v2848
    %v3582 = vunpack.c.l.b16 %v2849
    %v3583 = vunpack.c.h.b16 %v2849
    %v3584 = vunpack.c.l.b16 %v2850
    %v3585 = vunpack.c.h.b16 %v2850
    %v3586 = vunpack.c.l.b16 %v2851
    %v3587 = vunpack.c.h.b16 %v2851
    %v3588 = vunpack.c.l.b16 %v2852
    %v3589 = vunpack.c.h.b16 %v2852
    %v3590 = vunpack.c.l.b16 %v2853
    %v3591 = vunpack.c.h.b16 %v2853
    %v3592 = vunpack.c.l.b16 %v2854
    %v3593 = vunpack.c.h.b16 %v2854
    %v3594 = vunpack.c.l.b16 %v2855
    %v3595 = vunpack.c.h.b16 %v2855
    %v3596 = vunpack.c.l.b16 %v2856
    %v3597 = vunpack.c.h.b16 %v2856
    %v3598 = vunpack.c.l.b16 %v2857
    %v3599 = vunpack.c.h.b16 %v2857
    %v3600 = vunpack.c.l.b16 %v2858
    %v3601 = vunpack.c.h.b16 %v2858
    %v3602 = vunpack.c.l.b16 %v2859
    %v3603 = vunpack.c.h.b16 %v2859
    %v3604 = vunpack.c.l.b16 %v2860
    %v3605 = vunpack.c.h.b16 %v2860
    %v3606 = vunpack.c.l.b16 %v2861
    %v3607 = vunpack.c.h.b16 %v2861
    %v3608 = vunpack.c.l.b16 %v2862
    %v3609 = vunpack.c.h.b16 %v2862
    %v3610 = vunpack.c.l.b16 %v2863
    %v3611 = vunpack.c.h.b16 %v2863
    %v3612 = vunpack.c.l.b16 %v2864
    %v3613 = vunpack.c.h.b16 %v2864
    %v3614 = vunpack.c.l.b16 %v2865
    %v3615 = vunpack.c.h.b16 %v2865
    %v3616 = vunpack.c.l.b16 %v2866
    %v3617 = vunpack.c.h.b16 %v2866
    %v3618 = vunpack.c.l.b16 %v2867
    %v3619 = vunpack.c.h.b16 %v2867
    %v3620 = vunpack.c.l.b16 %v2868
    %v3621 = vunpack.c.h.b16 %v2868
    %v3622 = vunpack.c.l.b16 %v2869
    %v3623 = vunpack.c.h.b16 %v2869
    %v3624 = vunpack.c.l.b16 %v2870
    %v3625 = vunpack.c.h.b16 %v2870
    %v3626 = vunpack.c.l.b16 %v2871
    %v3627 = vunpack.c.h.b16 %v2871
    %v3628 = vunpack.c.l.b16 %v2872
    %v3629 = vunpack.c.h.b16 %v2872
    %v3630 = vunpack.c.l.b16 %v2873
    %v3631 = vunpack.c.h.b16 %v2873
    %v3632 = vunpack.c.l.b16 %v2874
    %v3633 = vunpack.c.h.b16 %v2874
    %v3634 = vunpack.c.l.b16 %v2875
    %v3635 = vunpack.c.h.b16 %v2875
    %v3636 = vunpack.c.l.b16 %v2876
    %v3637 = vunpack.c.h.b16 %v2876
    %v3638 = vunpack.c.l.b16 %v2877
    %v3639 = vunpack.c.h.b16 %v2877
    %v3640 = vunpack.c.l.b16 %v2878
    %v3641 = vunpack.c.h.b16 %v2878
    %v3642 = vunpack.c.l.b16 %v2879
    %v3643 = vunpack.c.h.b16 %v2879
    %v3644 = vunpack.c.l.b16 %v2880
    %v3645 = vunpack.c.h.b16 %v2880
    %v3646 = vunpack.c.l.b16 %v2881
    %v3647 = vunpack.c.h.b16 %v2881
    %v3648 = vunpack.c.l.b16 %v2882
    %v3649 = vunpack.c.h.b16 %v2882
    %v3650 = vunpack.c.l.b16 %v2883
    %v3651 = vunpack.c.h.b16 %v2883
    %v3652 = vunpack.c.l.b16 %v2884
    %v3653 = vunpack.c.h.b16 %v2884
    %v3654 = vunpack.c.l.b16 %v2885
    %v3655 = vunpack.c.h.b16 %v2885
    %v3656 = vunpack.c.l.b16 %v2886
    %v3657 = vunpack.c.h.b16 %v2886
    %v3658 = vunpack.c.l.b16 %v2887
    %v3659 = vunpack.c.h.b16 %v2887
    %v3660 = vunpack.c.l.b16 %v2888
    %v3661 = vunpack.c.h.b16 %v2888
    %v3662 = vunpack.c.l.b16 %v2889
    %v3663 = vunpack.c.h.b16 %v2889
    %v3664 = vunpack.c.l.b16 %v2890
    %v3665 = vunpack.c.h.b16 %v2890
    %v3666 = vunpack.c.l.b16 %v2891
    %v3667 = vunpack.c.h.b16 %v2891
    %v3668 = vunpack.c.l.b16 %v2892
    %v3669 = vunpack.c.h.b16 %v2892
    %v3670 = vunpack.c.l.b16 %v2893
    %v3671 = vunpack.c.h.b16 %v2893
    %v3672 = vunpack.c.l.b16 %v2894
    %v3673 = vunpack.c.h.b16 %v2894
    %v3674 = vunpack.c.l.b16 %v2895
    %v3675 = vunpack.c.h.b16 %v2895
    %v3676 = vpack.c.b16 %v3166, %v3164
    %v3677 = vpack.c.b16 %v3167, %v3165
    %v3678 = vpack.c.b16 %v3170, %v3168
    %v3679 = vpack.c.b16 %v3171, %v3169
    %v3680 = vpack.c.b16 %v3174, %v3172
    %v3681 = vpack.c.b16 %v3175, %v3173
    %v3682 = vpack.c.b16 %v3178, %v3176
    %v3683 = vpack.c.b16 %v3179, %v3177
    %v3684 = vpack.c.b16 %v3182, %v3180
    %v3685 = vpack.c.b16 %v3183, %v3181
    %v3686 = vpack.c.b16 %v3186, %v3184
    %v3687 = vpack.c.b16 %v3187, %v3185
    %v3688 = vpack.c.b16 %v3190, %v3188
    %v3689 = vpack.c.b16 %v3191, %v3189
    %v3690 = vpack.c.b16 %v3194, %v3192
    %v3691 = vpack.c.b16 %v3195, %v3193
    %v3692 = vpack.c.b16 %v3198, %v3196
    %v3693 = vpack.c.b16 %v3199, %v3197
    %v3694 = vpack.c.b16 %v3202, %v3200
    %v3695 = vpack.c.b16 %v3203, %v3201
    %v3696 = vpack.c.b16 %v3206, %v3204
    %v3697 = vpack.c.b16 %v3207, %v3205
    %v3698 = vpack.c.b16 %v3210, %v3208
    %v3699 = vpack.c.b16 %v3211, %v3209
    %v3700 = vpack.c.b16 %v3214, %v3212
    %v3701 = vpack.c.b16 %v3215, %v3213
    %v3702 = vpack.c.b16 %v3218, %v3216
    %v3703 = vpack.c.b16 %v3219, %v3217
    %v3704 = vpack.c.b16 %v3222, %v3220
    %v3705 = vpack.c.b16 %v3223, %v3221
    %v3706 = vpack.c.b16 %v3226, %v3224
    %v3707 = vpack.c.b16 %v3227, %v3225
    %v3708 = vpack.c.b16 %v3230, %v3228
    %v3709 = vpack.c.b16 %v3231, %v3229
    %v3710 = vpack.c.b16 %v3234, %v3232
    %v3711 = vpack.c.b16 %v3235, %v3233
    %v3712 = vpack.c.b16 %v3238, %v3236
    %v3713 = vpack.c.b16 %v3239, %v3237
    %v3714 = vpack.c.b16 %v3242, %v3240
    %v3715 = vpack.c.b16 %v3243, %v3241
    %v3716 = vpack.c.b16 %v3246, %v3244
    %v3717 = vpack.c.b16 %v3247, %v3245
    %v3718 = vpack.c.b16 %v3250, %v3248
    %v3719 = vpack.c.b16 %v3251, %v3249
    %v3720 = vpack.c.b16 %v3254, %v3252
    %v3721 = vpack.c.b16 %v3255, %v3253
    %v3722 = vpack.c.b16 %v3258, %v3256
    %v3723 = vpack.c.b16 %v3259, %v3257
    %v3724 = vpack.c.b16 %v3262, %v3260
    %v3725 = vpack.c.b16 %v3263, %v3261
    %v3726 = vpack.c.b16 %v3266, %v3264
    %v3727 = vpack.c.b16 %v3267, %v3265
    %v3728 = vpack.c.b16 %v3270, %v3268
    %v3729 = vpack.c.b16 %v3271, %v3269
    %v3730 = vpack.c.b16 %v3274, %v3272
    %v3731 = vpack.c.b16 %v3275, %v3273
    %v3732 = vpack.c.b16 %v3278, %v3276
    %v3733 = vpack.c.b16 %v3279, %v3277
    %v3734 = vpack.c.b16 %v3282, %v3280
    %v3735 = vpack.c.b16 %v3283, %v3281
    %v3736 = vpack.c.b16 %v3286, %v3284
    %v3737 = vpack.c.b16 %v3287, %v3285
    %v3738 = vpack.c.b16 %v3290, %v3288
    %v3739 = vpack.c.b16 %v3291, %v3289
    %v3740 = vpack.c.b16 %v3294, %v3292
    %v3741 = vpack.c.b16 %v3295, %v3293
    %v3742 = vpack.c.b16 %v3298, %v3296
    %v3743 = vpack.c.b16 %v3299, %v3297
    %v3744 = vpack.c.b16 %v3302, %v3300
    %v3745 = vpack.c.b16 %v3303, %v3301
    %v3746 = vpack.c.b16 %v3306, %v3304
    %v3747 = vpack.c.b16 %v3307, %v3305
    %v3748 = vpack.c.b16 %v3310, %v3308
    %v3749 = vpack.c.b16 %v3311, %v3309
    %v3750 = vpack.c.b16 %v3314, %v3312
    %v3751 = vpack.c.b16 %v3315, %v3313
    %v3752 = vpack.c.b16 %v3318, %v3316
    %v3753 = vpack.c.b16 %v3319, %v3317
    %v3754 = vpack.c.b16 %v3322, %v3320
    %v3755 = vpack.c.b16 %v3323, %v3321
    %v3756 = vpack.c.b16 %v3326, %v3324
    %v3757 = vpack.c.b16 %v3327, %v3325
    %v3758 = vpack.c.b16 %v3330, %v3328
    %v3759 = vpack.c.b16 %v3331, %v3329
    %v3760 = vpack.c.b16 %v3334, %v3332
    %v3761 = vpack.c.b16 %v3335, %v3333
    %v3762 = vpack.c.b16 %v3338, %v3336
    %v3763 = vpack.c.b16 %v3339, %v3337
    %v3764 = vpack.c.b16 %v3342, %v3340
    %v3765 = vpack.c.b16 %v3343, %v3341
    %v3766 = vpack.c.b16 %v3346, %v3344
    %v3767 = vpack.c.b16 %v3347, %v3345
    %v3768 = vpack.c.b16 %v3350, %v3348
    %v3769 = vpack.c.b16 %v3351, %v3349
    %v3770 = vpack.c.b16 %v3354, %v3352
    %v3771 = vpack.c.b16 %v3355, %v3353
    %v3772 = vpack.c.b16 %v3358, %v3356
    %v3773 = vpack.c.b16 %v3359, %v3357
    %v3774 = vpack.c.b16 %v3362, %v3360
    %v3775 = vpack.c.b16 %v3363, %v3361
    %v3776 = vpack.c.b16 %v3366, %v3364
    %v3777 = vpack.c.b16 %v3367, %v3365
    %v3778 = vpack.c.b16 %v3370, %v3368
    %v3779 = vpack.c.b16 %v3371, %v3369
    %v3780 = vpack.c.b16 %v3374, %v3372
    %v3781 = vpack.c.b16 %v3375, %v3373
    %v3782 = vpack.c.b16 %v3378, %v3376
    %v3783 = vpack.c.b16 %v3379, %v3377
    %v3784 = vpack.c.b16 %v3382, %v3380
    %v3785 = vpack.c.b16 %v3383, %v3381
    %v3786 = vpack.c.b16 %v3386, %v3384
    %v3787 = vpack.c.b16 %v3387, %v3385
    %v3788 = vpack.c.b16 %v3390, %v3388
    %v3789 = vpack.c.b16 %v3391, %v3389
    %v3790 = vpack.c.b16 %v3394, %v3392
    %v3791 = vpack.c.b16 %v3395, %v3393
    %v3792 = vpack.c.b16 %v3398, %v3396
    %v3793 = vpack.c.b16 %v3399, %v3397
    %v3794 = vpack.c.b16 %v3402, %v3400
    %v3795 = vpack.c.b16 %v3403, %v3401
    %v3796 = vpack.c.b16 %v3406, %v3404
    %v3797 = vpack.c.b16 %v3407, %v3405
    %v3798 = vpack.c.b16 %v3410, %v3408
    %v3799 = vpack.c.b16 %v3411, %v3409
    %v3800 = vpack.c.b16 %v3414, %v3412
    %v3801 = vpack.c.b16 %v3415, %v3413
    %v3802 = vpack.c.b16 %v3418, %v3416
    %v3803 = vpack.c.b16 %v3419, %v3417
    %v3804 = vpack.c.b16 %v3422, %v3420
    %v3805 = vpack.c.b16 %v3423, %v3421
    %v3806 = vpack.c.b16 %v3426, %v3424
    %v3807 = vpack.c.b16 %v3427, %v3425
    %v3808 = vpack.c.b16 %v3430, %v3428
    %v3809 = vpack.c.b16 %v3431, %v3429
    %v3810 = vpack.c.b16 %v3434, %v3432
    %v3811 = vpack.c.b16 %v3435, %v3433
    %v3812 = vpack.c.b16 %v3438, %v3436
    %v3813 = vpack.c.b16 %v3439, %v3437
    %v3814 = vpack.c.b16 %v3442, %v3440
    %v3815 = vpack.c.b16 %v3443, %v3441
    %v3816 = vpack.c.b16 %v3446, %v3444
    %v3817 = vpack.c.b16 %v3447, %v3445
    %v3818 = vpack.c.b16 %v3450, %v3448
    %v3819 = vpack.c.b16 %v3451, %v3449
    %v3820 = vpack.c.b16 %v3454, %v3452
    %v3821 = vpack.c.b16 %v3455, %v3453
    %v3822 = vpack.c.b16 %v3458, %v3456
    %v3823 = vpack.c.b16 %v3459, %v3457
    %v3824 = vpack.c.b16 %v3462, %v3460
    %v3825 = vpack.c.b16 %v3463, %v3461
    %v3826 = vpack.c.b16 %v3466, %v3464
    %v3827 = vpack.c.b16 %v3467, %v3465
    %v3828 = vpack.c.b16 %v3470, %v3468
    %v3829 = vpack.c.b16 %v3471, %v3469
    %v3830 = vpack.c.b16 %v3474, %v3472
    %v3831 = vpack.c.b16 %v3475, %v3473
    %v3832 = vpack.c.b16 %v3478, %v3476
    %v3833 = vpack.c.b16 %v3479, %v3477
    %v3834 = vpack.c.b16 %v3482, %v3480
    %v3835 = vpack.c.b16 %v3483, %v3481
    %v3836 = vpack.c.b16 %v3486, %v3484
    %v3837 = vpack.c.b16 %v3487, %v3485
    %v3838 = vpack.c.b16 %v3490, %v3488
    %v3839 = vpack.c.b16 %v3491, %v3489
    %v3840 = vpack.c.b16 %v3494, %v3492
    %v3841 = vpack.c.b16 %v3495, %v3493
    %v3842 = vpack.c.b16 %v3498, %v3496
    %v3843 = vpack.c.b16 %v3499, %v3497
    %v3844 = vpack.c.b16 %v3502, %v3500
    %v3845 = vpack.c.b16 %v3503, %v3501
    %v3846 = vpack.c.b16 %v3506, %v3504
    %v3847 = vpack.c.b16 %v3507, %v3505
    %v3848 = vpack.c.b16 %v3510, %v3508
    %v3849 = vpack.c.b16 %v3511, %v3509
    %v3850 = vpack.c.b16 %v3514, %v3512
    %v3851 = vpack.c.b16 %v3515, %v3513
    %v3852 = vpack.c.b16 %v3518, %v3516
    %v3853 = vpack.c.b16 %v3519, %v3517
    %v3854 = vpack.c.b16 %v3522, %v3520
    %v3855 = vpack.c.b16 %v3523, %v3521
    %v3856 = vpack.c.b16 %v3526, %v3524
    %v3857 = vpack.c.b16 %v3527, %v3525
    %v3858 = vpack.c.b16 %v3530, %v3528
    %v3859 = vpack.c.b16 %v3531, %v3529
    %v3860 = vpack.c.b16 %v3534, %v3532
    %v3861 = vpack.c.b16 %v3535, %v3533
    %v3862 = vpack.c.b16 %v3538, %v3536
    %v3863 = vpack.c.b16 %v3539, %v3537
    %v3864 = vpack.c.b16 %v3542, %v3540
    %v3865 = vpack.c.b16 %v3543, %v3541
    %v3866 = vpack.c.b16 %v3546, %v3544
    %v3867 = vpack.c.b16 %v3547, %v3545
    %v3868 = vpack.c.b16 %v3550, %v3548
    %v3869 = vpack.c.b16 %v3551, %v3549
    %v3870 = vpack.c.b16 %v3554, %v3552
    %v3871 = vpack.c.b16 %v3555, %v3553
    %v3872 = vpack.c.b16 %v3558, %v3556
    %v3873 = vpack.c.b16 %v3559, %v3557
    %v3874 = vpack.c.b16 %v3562, %v3560
    %v3875 = vpack.c.b16 %v3563, %v3561
    %v3876 = vpack.c.b16 %v3566, %v3564
    %v3877 = vpack.c.b16 %v3567, %v3565
    %v3878 = vpack.c.b16 %v3570, %v3568
    %v3879 = vpack.c.b16 %v3571, %v3569
    %v3880 = vpack.c.b16 %v3574, %v3572
    %v3881 = vpack.c.b16 %v3575, %v3573
    %v3882 = vpack.c.b16 %v3578, %v3576
    %v3883 = vpack.c.b16 %v3579, %v3577
    %v3884 = vpack.c.b16 %v3582, %v3580
    %v3885 = vpack.c.b16 %v3583, %v3581
    %v3886 = vpack.c.b16 %v3586, %v3584
    %v3887 = vpack.c.b16 %v3587, %v3585
    %v3888 = vpack.c.b16 %v3590, %v3588
    %v3889 = vpack.c.b16 %v3591, %v3589
    %v3890 = vpack.c.b16 %v3594, %v3592
    %v3891 = vpack.c.b16 %v3595, %v3593
    %v3892 = vpack.c.b16 %v3598, %v3596
    %v3893 = vpack.c.b16 %v3599, %v3597
    %v3894 = vpack.c.b16 %v3602, %v3600
    %v3895 = vpack.c.b16 %v3603, %v3601
    %v3896 = vpack.c.b16 %v3606, %v3604
    %v3897 = vpack.c.b16 %v3607, %v3605
    %v3898 = vpack.c.b16 %v3610, %v3608
    %v3899 = vpack.c.b16 %v3611, %v3609
    %v3900 = vpack.c.b16 %v3614, %v3612
    %v3901 = vpack.c.b16 %v3615, %v3613
    %v3902 = vpack.c.b16 %v3618, %v3616
    %v3903 = vpack.c.b16 %v3619, %v3617
    %v3904 = vpack.c.b16 %v3622, %v3620
    %v3905 = vpack.c.b16 %v3623, %v3621
    %v3906 = vpack.c.b16 %v3626, %v3624
    %v3907 = vpack.c.b16 %v3627, %v3625
    %v3908 = vpack.c.b16 %v3630, %v3628
    %v3909 = vpack.c.b16 %v3631, %v3629
    %v3910 = vpack.c.b16 %v3634, %v3632
    %v3911 = vpack.c.b16 %v3635, %v3633
    %v3912 = vpack.c.b16 %v3638, %v3636
    %v3913 = vpack.c.b16 %v3639, %v3637
    %v3914 = vpack.c.b16 %v3642, %v3640
    %v3915 = vpack.c.b16 %v3643, %v3641
    %v3916 = vpack.c.b16 %v3646, %v3644
    %v3917 = vpack.c.b16 %v3647, %v3645
    %v3918 = vpack.c.b16 %v3650, %v3648
    %v3919 = vpack.c.b16 %v3651, %v3649
    %v3920 = vpack.c.b16 %v3654, %v3652
    %v3921 = vpack.c.b16 %v3655, %v3653
    %v3922 = vpack.c.b16 %v3658, %v3656
    %v3923 = vpack.c.b16 %v3659, %v3657
    %v3924 = vpack.c.b16 %v3662, %v3660
    %v3925 = vpack.c.b16 %v3663, %v3661
    %v3926 = vpack.c.b16 %v3666, %v3664
    %v3927 = vpack.c.b16 %v3667, %v3665
    %v3928 = vpack.c.b16 %v3670, %v3668
    %v3929 = vpack.c.b16 %v3671, %v3669
    %v3930 = vpack.c.b16 %v3674, %v3672
    %v3931 = vpack.c.b16 %v3675, %v3673
    %4188 = vmatprep.subr.bf16.mxu0 %v3677
    %4189 = vmatpush1.bf16.msra.mxu0 %v3676
    %4190 = vmatprep.subr.bf16.mxu0 %v3679
    %4191 = vmatpush1.bf16.msra.mxu0 %v3678
    %4192 = vmatprep.subr.bf16.mxu0 %v3681
    %4193 = vmatpush1.bf16.msra.mxu0 %v3680
    %4194 = vmatprep.subr.bf16.mxu0 %v3683
    %4195 = vmatpush1.bf16.msra.mxu0 %v3682
    %4196 = vmatprep.subr.bf16.mxu0 %v3685
    %4197 = vmatpush1.bf16.msra.mxu0 %v3684
    %4198 = vmatprep.subr.bf16.mxu0 %v3687
    %4199 = vmatpush1.bf16.msra.mxu0 %v3686
    %4200 = vmatprep.subr.bf16.mxu0 %v3689
    %4201 = vmatpush1.bf16.msra.mxu0 %v3688
    %4202 = vmatprep.subr.bf16.mxu0 %v3691
    %4203 = vmatpush1.bf16.msra.mxu0 %v3690
    %4204 = vmatprep.subr.bf16.mxu0 %v3693
    %4205 = vmatpush1.bf16.msra.mxu0 %v3692
    %4206 = vmatprep.subr.bf16.mxu0 %v3695
    %4207 = vmatpush1.bf16.msra.mxu0 %v3694
    %4208 = vmatprep.subr.bf16.mxu0 %v3697
    %4209 = vmatpush1.bf16.msra.mxu0 %v3696
    %4210 = vmatprep.subr.bf16.mxu0 %v3699
    %4211 = vmatpush1.bf16.msra.mxu0 %v3698
    %4212 = vmatprep.subr.bf16.mxu0 %v3701
    %4213 = vmatpush1.bf16.msra.mxu0 %v3700
    %4214 = vmatprep.subr.bf16.mxu0 %v3703
    %4215 = vmatpush1.bf16.msra.mxu0 %v3702
    %4216 = vmatprep.subr.bf16.mxu0 %v3705
    %4217 = vmatpush1.bf16.msra.mxu0 %v3704
    %4218 = vmatprep.subr.bf16.mxu0 %v3707
    %4219 = vmatpush1.bf16.msra.mxu0 %v3706
    %4220 = vmatprep.mubr.bf16.mxu0 %v2625
    %4221 = vmatmul.mubr.bf16.gmra.mrb[0].mxu0 %v2624
    %v4222 = vpop.f32.mrb[0].mxu0
    %v4223 = vadd.f32 %v2901, %v4222
    %v4224 = vpop.f32.mrb[0].mxu0
    %v4225 = vadd.f32 %v2905, %v4224
    %v4226 = vpop.f32.mrb[0].mxu0
    %v4227 = vpop.f32.mrb[0].mxu0
    %4228 = vdwg.mxu0
    %4229 = vmatprep.subr.bf16.mxu0 %v3709
    %4230 = vmatpush1.bf16.msra.mxu0 %v3708
    %4231 = vmatprep.subr.bf16.mxu0 %v3711
    %4232 = vmatpush1.bf16.msra.mxu0 %v3710
    %4233 = vmatprep.subr.bf16.mxu0 %v3713
    %4234 = vmatpush1.bf16.msra.mxu0 %v3712
    %4235 = vmatprep.subr.bf16.mxu0 %v3715
    %4236 = vmatpush1.bf16.msra.mxu0 %v3714
    %4237 = vmatprep.subr.bf16.mxu0 %v3717
    %4238 = vmatpush1.bf16.msra.mxu0 %v3716
    %4239 = vmatprep.subr.bf16.mxu0 %v3719
    %4240 = vmatpush1.bf16.msra.mxu0 %v3718
    %4241 = vmatprep.subr.bf16.mxu0 %v3721
    %4242 = vmatpush1.bf16.msra.mxu0 %v3720
    %4243 = vmatprep.subr.bf16.mxu0 %v3723
    %4244 = vmatpush1.bf16.msra.mxu0 %v3722
    %4245 = vmatprep.subr.bf16.mxu0 %v3725
    %4246 = vmatpush1.bf16.msra.mxu0 %v3724
    %4247 = vmatprep.subr.bf16.mxu0 %v3727
    %4248 = vmatpush1.bf16.msra.mxu0 %v3726
    %4249 = vmatprep.subr.bf16.mxu0 %v3729
    %4250 = vmatpush1.bf16.msra.mxu0 %v3728
    %4251 = vmatprep.subr.bf16.mxu0 %v3731
    %4252 = vmatpush1.bf16.msra.mxu0 %v3730
    %4253 = vmatprep.subr.bf16.mxu0 %v3733
    %4254 = vmatpush1.bf16.msra.mxu0 %v3732
    %4255 = vmatprep.subr.bf16.mxu0 %v3735
    %4256 = vmatpush1.bf16.msra.mxu0 %v3734
    %4257 = vmatprep.subr.bf16.mxu0 %v3737
    %4258 = vmatpush1.bf16.msra.mxu0 %v3736
    %4259 = vmatprep.subr.bf16.mxu0 %v3739
    %4260 = vmatpush1.bf16.msra.mxu0 %v3738
    %4261 = vmatprep.mubr.bf16.mxu0 %v2627
    %4262 = vmatmul.mubr.bf16.gmra.mrb[0].mxu0 %v2626
    %v4263 = vpop.f32.mrb[0].mxu0
    %v4264 = vadd.f32 %v4223, %v4263
    %v4265 = vpop.f32.mrb[0].mxu0
    %v4266 = vadd.f32 %v4225, %v4265
    %v4267 = vpop.f32.mrb[0].mxu0
    %v4268 = vpop.f32.mrb[0].mxu0
    %4269 = vdwg.mxu0
    %4270 = vmatprep.subr.bf16.mxu0 %v3741
    %4271 = vmatpush1.bf16.msra.mxu0 %v3740
    %4272 = vmatprep.subr.bf16.mxu0 %v3743
    %4273 = vmatpush1.bf16.msra.mxu0 %v3742
    %4274 = vmatprep.subr.bf16.mxu0 %v3745
    %4275 = vmatpush1.bf16.msra.mxu0 %v3744
    %4276 = vmatprep.subr.bf16.mxu0 %v3747
    %4277 = vmatpush1.bf16.msra.mxu0 %v3746
    %4278 = vmatprep.subr.bf16.mxu0 %v3749
    %4279 = vmatpush1.bf16.msra.mxu0 %v3748
    %4280 = vmatprep.subr.bf16.mxu0 %v3751
    %4281 = vmatpush1.bf16.msra.mxu0 %v3750
    %4282 = vmatprep.subr.bf16.mxu0 %v3753
    %4283 = vmatpush1.bf16.msra.mxu0 %v3752
    %4284 = vmatprep.subr.bf16.mxu0 %v3755
    %4285 = vmatpush1.bf16.msra.mxu0 %v3754
    %4286 = vmatprep.subr.bf16.mxu0 %v3757
    %4287 = vmatpush1.bf16.msra.mxu0 %v3756
    %4288 = vmatprep.subr.bf16.mxu0 %v3759
    %4289 = vmatpush1.bf16.msra.mxu0 %v3758
    %4290 = vmatprep.subr.bf16.mxu0 %v3761
    %4291 = vmatpush1.bf16.msra.mxu0 %v3760
    %4292 = vmatprep.subr.bf16.mxu0 %v3763
    %4293 = vmatpush1.bf16.msra.mxu0 %v3762
    %4294 = vmatprep.subr.bf16.mxu0 %v3765
    %4295 = vmatpush1.bf16.msra.mxu0 %v3764
    %4296 = vmatprep.subr.bf16.mxu0 %v3767
    %4297 = vmatpush1.bf16.msra.mxu0 %v3766
    %4298 = vmatprep.subr.bf16.mxu0 %v3769
    %4299 = vmatpush1.bf16.msra.mxu0 %v3768
    %4300 = vmatprep.subr.bf16.mxu0 %v3771
    %4301 = vmatpush1.bf16.msra.mxu0 %v3770
    %4302 = vmatprep.mubr.bf16.mxu0 %v2629
    %4303 = vmatmul.mubr.bf16.gmra.mrb[0].mxu0 %v2628
    %v4304 = vpop.f32.mrb[0].mxu0
    %v4305 = vadd.f32 %v4264, %v4304
    %v4306 = vpop.f32.mrb[0].mxu0
    %v4307 = vadd.f32 %v4266, %v4306
    %v4308 = vpop.f32.mrb[0].mxu0
    %v4309 = vpop.f32.mrb[0].mxu0
    %4310 = vdwg.mxu0
    %4311 = vmatprep.subr.bf16.mxu0 %v3773
    %4312 = vmatpush1.bf16.msra.mxu0 %v3772
    %4313 = vmatprep.subr.bf16.mxu0 %v3775
    %4314 = vmatpush1.bf16.msra.mxu0 %v3774
    %4315 = vmatprep.subr.bf16.mxu0 %v3777
    %4316 = vmatpush1.bf16.msra.mxu0 %v3776
    %4317 = vmatprep.subr.bf16.mxu0 %v3779
    %4318 = vmatpush1.bf16.msra.mxu0 %v3778
    %4319 = vmatprep.subr.bf16.mxu0 %v3781
    %4320 = vmatpush1.bf16.msra.mxu0 %v3780
    %4321 = vmatprep.subr.bf16.mxu0 %v3783
    %4322 = vmatpush1.bf16.msra.mxu0 %v3782
    %4323 = vmatprep.subr.bf16.mxu0 %v3785
    %4324 = vmatpush1.bf16.msra.mxu0 %v3784
    %4325 = vmatprep.subr.bf16.mxu0 %v3787
    %4326 = vmatpush1.bf16.msra.mxu0 %v3786
    %4327 = vmatprep.subr.bf16.mxu0 %v3789
    %4328 = vmatpush1.bf16.msra.mxu0 %v3788
    %4329 = vmatprep.subr.bf16.mxu0 %v3791
    %4330 = vmatpush1.bf16.msra.mxu0 %v3790
    %4331 = vmatprep.subr.bf16.mxu0 %v3793
    %4332 = vmatpush1.bf16.msra.mxu0 %v3792
    %4333 = vmatprep.subr.bf16.mxu0 %v3795
    %4334 = vmatpush1.bf16.msra.mxu0 %v3794
    %4335 = vmatprep.subr.bf16.mxu0 %v3797
    %4336 = vmatpush1.bf16.msra.mxu0 %v3796
    %4337 = vmatprep.subr.bf16.mxu0 %v3799
    %4338 = vmatpush1.bf16.msra.mxu0 %v3798
    %4339 = vmatprep.subr.bf16.mxu0 %v3801
    %4340 = vmatpush1.bf16.msra.mxu0 %v3800
    %4341 = vmatprep.subr.bf16.mxu0 %v3803
    %4342 = vmatpush1.bf16.msra.mxu0 %v3802
    %4343 = vmatprep.mubr.bf16.mxu0 %v2631
    %4344 = vmatmul.mubr.bf16.gmra.mrb[0].mxu0 %v2630
    %v4345 = vpop.f32.mrb[0].mxu0
    %v4346 = vadd.f32 %v4305, %v4345
    %v4347 = vpop.f32.mrb[0].mxu0
    %v4348 = vadd.f32 %v4307, %v4347
    %v4349 = vpop.f32.mrb[0].mxu0
    %v4350 = vpop.f32.mrb[0].mxu0
    %4351 = vdwg.mxu0
    %4352 = vmatprep.subr.bf16.mxu0 %v3805
    %4353 = vmatpush1.bf16.msra.mxu0 %v3804
    %4354 = vmatprep.subr.bf16.mxu0 %v3807
    %4355 = vmatpush1.bf16.msra.mxu0 %v3806
    %4356 = vmatprep.subr.bf16.mxu0 %v3809
    %4357 = vmatpush1.bf16.msra.mxu0 %v3808
    %4358 = vmatprep.subr.bf16.mxu0 %v3811
    %4359 = vmatpush1.bf16.msra.mxu0 %v3810
    %4360 = vmatprep.subr.bf16.mxu0 %v3813
    %4361 = vmatpush1.bf16.msra.mxu0 %v3812
    %4362 = vmatprep.subr.bf16.mxu0 %v3815
    %4363 = vmatpush1.bf16.msra.mxu0 %v3814
    %4364 = vmatprep.subr.bf16.mxu0 %v3817
    %4365 = vmatpush1.bf16.msra.mxu0 %v3816
    %4366 = vmatprep.subr.bf16.mxu0 %v3819
    %4367 = vmatpush1.bf16.msra.mxu0 %v3818
    %4368 = vmatprep.subr.bf16.mxu0 %v3821
    %4369 = vmatpush1.bf16.msra.mxu0 %v3820
    %4370 = vmatprep.subr.bf16.mxu0 %v3823
    %4371 = vmatpush1.bf16.msra.mxu0 %v3822
    %4372 = vmatprep.subr.bf16.mxu0 %v3825
    %4373 = vmatpush1.bf16.msra.mxu0 %v3824
    %4374 = vmatprep.subr.bf16.mxu0 %v3827
    %4375 = vmatpush1.bf16.msra.mxu0 %v3826
    %4376 = vmatprep.subr.bf16.mxu0 %v3829
    %4377 = vmatpush1.bf16.msra.mxu0 %v3828
    %4378 = vmatprep.subr.bf16.mxu0 %v3831
    %4379 = vmatpush1.bf16.msra.mxu0 %v3830
    %4380 = vmatprep.subr.bf16.mxu0 %v3833
    %4381 = vmatpush1.bf16.msra.mxu0 %v3832
    %4382 = vmatprep.subr.bf16.mxu0 %v3835
    %4383 = vmatpush1.bf16.msra.mxu0 %v3834
    %4384 = vmatprep.mubr.bf16.mxu0 %v2633
    %4385 = vmatmul.mubr.bf16.gmra.mrb[0].mxu0 %v2632
    %v4386 = vpop.f32.mrb[0].mxu0
    %v4387 = vadd.f32 %v4346, %v4386
    %v4388 = vpop.f32.mrb[0].mxu0
    %v4389 = vadd.f32 %v4348, %v4388
    %v4390 = vpop.f32.mrb[0].mxu0
    %v4391 = vpop.f32.mrb[0].mxu0
    %4392 = vdwg.mxu0
    %4393 = vmatprep.subr.bf16.mxu0 %v3837
    %4394 = vmatpush1.bf16.msra.mxu0 %v3836
    %4395 = vmatprep.subr.bf16.mxu0 %v3839
    %4396 = vmatpush1.bf16.msra.mxu0 %v3838
    %4397 = vmatprep.subr.bf16.mxu0 %v3841
    %4398 = vmatpush1.bf16.msra.mxu0 %v3840
    %4399 = vmatprep.subr.bf16.mxu0 %v3843
    %4400 = vmatpush1.bf16.msra.mxu0 %v3842
    %4401 = vmatprep.subr.bf16.mxu0 %v3845
    %4402 = vmatpush1.bf16.msra.mxu0 %v3844
    %4403 = vmatprep.subr.bf16.mxu0 %v3847
    %4404 = vmatpush1.bf16.msra.mxu0 %v3846
    %4405 = vmatprep.subr.bf16.mxu0 %v3849
    %4406 = vmatpush1.bf16.msra.mxu0 %v3848
    %4407 = vmatprep.subr.bf16.mxu0 %v3851
    %4408 = vmatpush1.bf16.msra.mxu0 %v3850
    %4409 = vmatprep.subr.bf16.mxu0 %v3853
    %4410 = vmatpush1.bf16.msra.mxu0 %v3852
    %4411 = vmatprep.subr.bf16.mxu0 %v3855
    %4412 = vmatpush1.bf16.msra.mxu0 %v3854
    %4413 = vmatprep.subr.bf16.mxu0 %v3857
    %4414 = vmatpush1.bf16.msra.mxu0 %v3856
    %4415 = vmatprep.subr.bf16.mxu0 %v3859
    %4416 = vmatpush1.bf16.msra.mxu0 %v3858
    %4417 = vmatprep.subr.bf16.mxu0 %v3861
    %4418 = vmatpush1.bf16.msra.mxu0 %v3860
    %4419 = vmatprep.subr.bf16.mxu0 %v3863
    %4420 = vmatpush1.bf16.msra.mxu0 %v3862
    %4421 = vmatprep.subr.bf16.mxu0 %v3865
    %4422 = vmatpush1.bf16.msra.mxu0 %v3864
    %4423 = vmatprep.subr.bf16.mxu0 %v3867
    %4424 = vmatpush1.bf16.msra.mxu0 %v3866
    %4425 = vmatprep.mubr.bf16.mxu0 %v2635
    %4426 = vmatmul.mubr.bf16.gmra.mrb[0].mxu0 %v2634
    %v4427 = vpop.f32.mrb[0].mxu0
    %v4428 = vadd.f32 %v4387, %v4427
    %v4429 = vpop.f32.mrb[0].mxu0
    %v4430 = vadd.f32 %v4389, %v4429
    %v4431 = vpop.f32.mrb[0].mxu0
    %v4432 = vpop.f32.mrb[0].mxu0
    %4433 = vdwg.mxu0
    %4434 = vmatprep.subr.bf16.mxu0 %v3869
    %4435 = vmatpush1.bf16.msra.mxu0 %v3868
    %4436 = vmatprep.subr.bf16.mxu0 %v3871
    %4437 = vmatpush1.bf16.msra.mxu0 %v3870
    %4438 = vmatprep.subr.bf16.mxu0 %v3873
    %4439 = vmatpush1.bf16.msra.mxu0 %v3872
    %4440 = vmatprep.subr.bf16.mxu0 %v3875
    %4441 = vmatpush1.bf16.msra.mxu0 %v3874
    %4442 = vmatprep.subr.bf16.mxu0 %v3877
    %4443 = vmatpush1.bf16.msra.mxu0 %v3876
    %4444 = vmatprep.subr.bf16.mxu0 %v3879
    %4445 = vmatpush1.bf16.msra.mxu0 %v3878
    %4446 = vmatprep.subr.bf16.mxu0 %v3881
    %4447 = vmatpush1.bf16.msra.mxu0 %v3880
    %4448 = vmatprep.subr.bf16.mxu0 %v3883
    %4449 = vmatpush1.bf16.msra.mxu0 %v3882
    %4450 = vmatprep.subr.bf16.mxu0 %v3885
    %4451 = vmatpush1.bf16.msra.mxu0 %v3884
    %4452 = vmatprep.subr.bf16.mxu0 %v3887
    %4453 = vmatpush1.bf16.msra.mxu0 %v3886
    %4454 = vmatprep.subr.bf16.mxu0 %v3889
    %4455 = vmatpush1.bf16.msra.mxu0 %v3888
    %4456 = vmatprep.subr.bf16.mxu0 %v3891
    %4457 = vmatpush1.bf16.msra.mxu0 %v3890
    %4458 = vmatprep.subr.bf16.mxu0 %v3893
    %4459 = vmatpush1.bf16.msra.mxu0 %v3892
    %4460 = vmatprep.subr.bf16.mxu0 %v3895
    %4461 = vmatpush1.bf16.msra.mxu0 %v3894
    %4462 = vmatprep.subr.bf16.mxu0 %v3897
    %4463 = vmatpush1.bf16.msra.mxu0 %v3896
    %4464 = vmatprep.subr.bf16.mxu0 %v3899
    %4465 = vmatpush1.bf16.msra.mxu0 %v3898
    %4466 = vmatprep.mubr.bf16.mxu0 %v2637
    %4467 = vmatmul.mubr.bf16.gmra.mrb[0].mxu0 %v2636
    %v4468 = vpop.f32.mrb[0].mxu0
    %v4469 = vadd.f32 %v4428, %v4468
    %v4470 = vpop.f32.mrb[0].mxu0
    %v4471 = vadd.f32 %v4430, %v4470
    %v4472 = vpop.f32.mrb[0].mxu0
    %v4473 = vpop.f32.mrb[0].mxu0
    %4474 = vdwg.mxu0
    %4475 = vmatprep.subr.bf16.mxu0 %v3901
    %4476 = vmatpush1.bf16.msra.mxu0 %v3900
    %4477 = vmatprep.subr.bf16.mxu0 %v3903
    %4478 = vmatpush1.bf16.msra.mxu0 %v3902
    %4479 = vmatprep.subr.bf16.mxu0 %v3905
    %4480 = vmatpush1.bf16.msra.mxu0 %v3904
    %4481 = vmatprep.subr.bf16.mxu0 %v3907
    %4482 = vmatpush1.bf16.msra.mxu0 %v3906
    %4483 = vmatprep.subr.bf16.mxu0 %v3909
    %4484 = vmatpush1.bf16.msra.mxu0 %v3908
    %4485 = vmatprep.subr.bf16.mxu0 %v3911
    %4486 = vmatpush1.bf16.msra.mxu0 %v3910
    %4487 = vmatprep.subr.bf16.mxu0 %v3913
    %4488 = vmatpush1.bf16.msra.mxu0 %v3912
    %4489 = vmatprep.subr.bf16.mxu0 %v3915
    %4490 = vmatpush1.bf16.msra.mxu0 %v3914
    %4491 = vmatprep.subr.bf16.mxu0 %v3917
    %4492 = vmatpush1.bf16.msra.mxu0 %v3916
    %4493 = vmatprep.subr.bf16.mxu0 %v3919
    %4494 = vmatpush1.bf16.msra.mxu0 %v3918
    %4495 = vmatprep.subr.bf16.mxu0 %v3921
    %4496 = vmatpush1.bf16.msra.mxu0 %v3920
    %4497 = vmatprep.subr.bf16.mxu0 %v3923
    %4498 = vmatpush1.bf16.msra.mxu0 %v3922
    %4499 = vmatprep.subr.bf16.mxu0 %v3925
    %4500 = vmatpush1.bf16.msra.mxu0 %v3924
    %4501 = vmatprep.subr.bf16.mxu0 %v3927
    %4502 = vmatpush1.bf16.msra.mxu0 %v3926
    %4503 = vmatprep.subr.bf16.mxu0 %v3929
    %4504 = vmatpush1.bf16.msra.mxu0 %v3928
    %4505 = vmatprep.subr.bf16.mxu0 %v3931
    %4506 = vmatpush1.bf16.msra.mxu0 %v3930
    %4507 = vmatprep.mubr.bf16.mxu0 %v2639
    %4508 = vmatmul.mubr.bf16.gmra.mrb[0].mxu0 %v2638
    %v4509 = vpop.f32.mrb[0].mxu0
    %v4510 = vadd.f32 %v4469, %v4509
    %v4511 = vpop.f32.mrb[0].mxu0
    %v4512 = vadd.f32 %v4471, %v4511
    %v4513 = vpop.f32.mrb[0].mxu0
    %v4514 = vpop.f32.mrb[0].mxu0
    %4515 = vdwg.mxu0
    %v4516 = vadd.f32 %v1325, %v4510
    %v4517 = vadd.f32 %v1326, %v4512
    %v4518 = vsel %vm250, %v4517, 0.0
    %v4519 = vadd.f32 %v4516, %v4518
    %4520 = vadd.xlane.f32.xlu0 %v4519
    %v4521 = vpop.xlane.xlu0 %4520
    %v4522 = vmul.f32 %v4521, %v1284
    %v4523 = vsub.f32 %v4516, %v4522
    %v4524 = vsub.f32 %v4517, %v4522
    %v4525 = vmul.f32 %v4523, %v4523
    %v4526 = vmul.f32 %v4524, %v4524
    %v4527 = vsel %vm250, %v4526, 0.0
    %v4528 = vadd.f32 %v4525, %v4527
    %4529 = vadd.xlane.f32.xlu0 %v4528
    %v4530 = vpop.xlane.xlu0 %4529
    %v4531 = vmul.f32 %v4530, %v1284
    %v4532 = vadd.f32 %v4531, 1e-05
    %v4533 = vrsqrt.pop %v4532
    %v4534 = vmul.f32 %v4523, %v4533
    %v4535 = vmul.f32 %v4524, %v4533
    %v4536 = vld [vmem:[#allocation16] sm:$0x3]
    %v4538 = vlaneseq
    %v4539 = vshrl.u32 %v4538, 7
    %v4540 = vsub.s32 0, %v4539
    %v4541 = vrot.slane %v4536, %v4540
    %v4542 = vlaneseq
    %v4543 = vshrl.u32 %v4542, 7
    %v4544 = vsub.s32 1, %v4543
    %v4545 = vrot.slane %v4536, %v4544
    %v4548 = vmul.f32 %v4534, %v4541
    %v4549 = vmul.f32 %v4535, %v4545
    %v4550 = vld [vmem:[#allocation17] sm:$0x3]
    %v4552 = vlaneseq
    %v4553 = vshrl.u32 %v4552, 7
    %v4554 = vsub.s32 0, %v4553
    %v4555 = vrot.slane %v4550, %v4554
    %v4556 = vlaneseq
    %v4557 = vshrl.u32 %v4556, 7
    %v4558 = vsub.s32 1, %v4557
    %v4559 = vrot.slane %v4550, %v4558
    %v4562 = vadd.f32 %v4548, %v4555
    %v4563 = vadd.f32 %v4549, %v4559
    %s4564 = scalar_lea.vmem %s1, 288
    %v4565 = vld [vmem:[%s4564] sm:$0xff]
    %v4566 = vld [vmem:[%s4564 + $0x8] sm:$0xff]
    %v4567 = vld [vmem:[%s4564 + $0x10] sm:$0xff]
    %v4568 = vld [vmem:[%s4564 + $0x18] sm:$0xff]
    %v4569 = vld [vmem:[%s4564 + $0x20] sm:$0xff]
    %v4570 = vld [vmem:[%s4564 + $0x28] sm:$0xff]
    %v4571 = vld [vmem:[%s4564 + $0x30] sm:$0xff]
    %v4572 = vld [vmem:[%s4564 + $0x38] sm:$0xff]
    %v4573 = vld [vmem:[%s4564 + $0x40] sm:$0xff]
    %v4574 = vld [vmem:[%s4564 + $0x48] sm:$0xff]
    %v4575 = vld [vmem:[%s4564 + $0x50] sm:$0xff]
    %v4576 = vld [vmem:[%s4564 + $0x58] sm:$0xff]
    %v4577 = vld [vmem:[%s4564 + $0x60] sm:$0xff]
    %v4578 = vld [vmem:[%s4564 + $0x68] sm:$0xff]
    %v4579 = vld [vmem:[%s4564 + $0x70] sm:$0xff]
    %v4580 = vld [vmem:[%s4564 + $0x78] sm:$0xff]
    %v4581 = vld [vmem:[%s4564 + $0x80] sm:$0xff]
    %v4582 = vld [vmem:[%s4564 + $0x88] sm:$0xff]
    %v4583 = vld [vmem:[%s4564 + $0x90] sm:$0xff]
    %v4584 = vld [vmem:[%s4564 + $0x98] sm:$0xff]
    %v4585 = vld [vmem:[%s4564 + $0xa0] sm:$0xff]
    %v4586 = vld [vmem:[%s4564 + $0xa8] sm:$0xff]
    %v4587 = vld [vmem:[%s4564 + $0xb0] sm:$0xff]
    %v4588 = vld [vmem:[%s4564 + $0xb8] sm:$0xff]
    %v4589 = vld [vmem:[%s4564 + $0xc0] sm:$0xff]
    %v4590 = vld [vmem:[%s4564 + $0xc8] sm:$0xff]
    %v4591 = vld [vmem:[%s4564 + $0xd0] sm:$0xff]
    %v4592 = vld [vmem:[%s4564 + $0xd8] sm:$0xff]
    %v4593 = vld [vmem:[%s4564 + $0xe0] sm:$0xff]
    %v4594 = vld [vmem:[%s4564 + $0xe8] sm:$0xff]
    %v4595 = vld [vmem:[%s4564 + $0xf0] sm:$0xff]
    %v4596 = vld [vmem:[%s4564 + $0xf8] sm:$0xff]
    %v4597 = vld [vmem:[%s4564 + $0x100] sm:$0xff]
    %v4598 = vld [vmem:[%s4564 + $0x108] sm:$0xff]
    %v4599 = vld [vmem:[%s4564 + $0x110] sm:$0xff]
    %v4600 = vld [vmem:[%s4564 + $0x118] sm:$0xff]
    %s4601 = scalar_lea.vmem [#allocation2], 2
    %v4602 = vld [vmem:[%s4601] sm:$0x3]
    %v4604 = vlaneseq
    %v4605 = vshrl.u32 %v4604, 7
    %v4606 = vsub.s32 0, %v4605
    %v4607 = vrot.slane %v4602, %v4606
    %v4608 = vlaneseq
    %v4609 = vshrl.u32 %v4608, 7
    %v4610 = vsub.s32 1, %v4609
    %v4611 = vrot.slane %v4602, %v4610
    %v4615 = vsel %vm250, %v4563, 0
    %4617 = vmatprep.subr.mxu0 %v4566
    %4618 = vmatpush1.msra.mxu0 %v4565
    %4619 = vmatprep.subr.mxu0 %v4568
    %4620 = vmatpush1.msra.mxu0 %v4567
    %4621 = vmatprep.subr.mxu0 %v4570
    %4622 = vmatpush1.msra.mxu0 %v4569
    %4623 = vmatprep.subr.mxu0 %v4572
    %4624 = vmatpush1.msra.mxu0 %v4571
    %4625 = vmatprep.subr.mxu0 %v4574
    %4626 = vmatpush1.msra.mxu0 %v4573
    %4627 = vmatprep.subr.mxu0 %v4576
    %4628 = vmatpush1.msra.mxu0 %v4575
    %4629 = vmatprep.subr.mxu0 %v4578
    %4630 = vmatpush1.msra.mxu0 %v4577
    %4631 = vmatprep.subr.mxu0 %v4580
    %4632 = vmatpush1.msra.mxu0 %v4579
    %4633 = vmatprep.subr.mxu0 %v4582
    %4634 = vmatpush1.msra.mxu0 %v4581
    %4635 = vmatprep.subr.mxu0 %v4584
    %4636 = vmatpush1.msra.mxu0 %v4583
    %4637 = vmatprep.subr.mxu0 %v4586
    %4638 = vmatpush1.msra.mxu0 %v4585
    %4639 = vmatprep.subr.mxu0 %v4588
    %4640 = vmatpush1.msra.mxu0 %v4587
    %4641 = vmatprep.subr.mxu0 %v4590
    %4642 = vmatpush1.msra.mxu0 %v4589
    %4643 = vmatprep.subr.mxu0 %v4592
    %4644 = vmatpush1.msra.mxu0 %v4591
    %4645 = vmatprep.subr.mxu0 %v4594
    %4646 = vmatpush1.msra.mxu0 %v4593
    %4647 = vmatprep.subr.mxu0 %v4596
    %4648 = vmatpush1.msra.mxu0 %v4595
    %4649 = vmatprep.subr.mxu0 %v4598
    %4650 = vmatpush1.msra.mxu0 %v4597
    %4651 = vmatprep.subr.mxu0 %v4600
    %4652 = vmatpush1.msra.mxu0 %v4599
    %4653 = vmatprep.subr.mxu0 0.0
    %4654 = vmatpush1.msra.mxu0 0.0
    %4655 = vmatprep.subr.mxu0 0.0
    %4656 = vmatpush1.msra.mxu0 0.0
    %4657 = vmatprep.subr.mxu0 0.0
    %4658 = vmatpush1.msra.mxu0 0.0
    %4659 = vmatprep.subr.mxu0 0.0
    %4660 = vmatpush1.msra.mxu0 0.0
    %4661 = vmatprep.subr.mxu0 0.0
    %4662 = vmatpush1.msra.mxu0 0.0
    %4663 = vmatprep.subr.mxu0 0.0
    %4664 = vmatpush1.msra.mxu0 0.0
    %4665 = vmatprep.subr.mxu0 0.0
    %4666 = vmatpush1.msra.mxu0 0.0
    %4667 = vmatprep.subr.mxu0 0.0
    %4668 = vmatpush1.msra.mxu0 0.0
    %4669 = vmatprep.subr.mxu0 0.0
    %4670 = vmatpush1.msra.mxu0 0.0
    %4671 = vmatprep.subr.mxu0 0.0
    %4672 = vmatpush1.msra.mxu0 0.0
    %4673 = vmatprep.subr.mxu0 0.0
    %4674 = vmatpush1.msra.mxu0 0.0
    %4675 = vmatprep.subr.mxu0 0.0
    %4676 = vmatpush1.msra.mxu0 0.0
    %4677 = vmatprep.subr.mxu0 0.0
    %4678 = vmatpush1.msra.mxu0 0.0
    %4679 = vmatprep.subr.mxu0 0.0
    %4680 = vmatpush1.msra.mxu0 0.0
    %4681 = vmatprep.mubr.f32.mxu0 %v4615
    %4682 = vmatmul.mubr.f32.gmra.mrb[0].mxu0 %v4562
    %v4683 = vpop.f32.mrb[0].mxu0
    %v4684 = vadd.f32 %v4607, %v4683
    %v4685 = vpop.f32.mrb[0].mxu0
    %v4686 = vadd.f32 %v4611, %v4685
    %4687 = vdwg.mxu0
    %s4688 = scalar_lea.vmem %s3, 288
    %v4689 = vld [vmem:[%s4688] sm:$0xff]
    %v4690 = vld [vmem:[%s4688 + $0x8] sm:$0xff]
    %v4691 = vld [vmem:[%s4688 + $0x10] sm:$0xff]
    %v4692 = vld [vmem:[%s4688 + $0x18] sm:$0xff]
    %v4693 = vld [vmem:[%s4688 + $0x20] sm:$0xff]
    %v4694 = vld [vmem:[%s4688 + $0x28] sm:$0xff]
    %v4695 = vld [vmem:[%s4688 + $0x30] sm:$0xff]
    %v4696 = vld [vmem:[%s4688 + $0x38] sm:$0xff]
    %v4697 = vld [vmem:[%s4688 + $0x40] sm:$0xff]
    %v4698 = vld [vmem:[%s4688 + $0x48] sm:$0xff]
    %v4699 = vld [vmem:[%s4688 + $0x50] sm:$0xff]
    %v4700 = vld [vmem:[%s4688 + $0x58] sm:$0xff]
    %v4701 = vld [vmem:[%s4688 + $0x60] sm:$0xff]
    %v4702 = vld [vmem:[%s4688 + $0x68] sm:$0xff]
    %v4703 = vld [vmem:[%s4688 + $0x70] sm:$0xff]
    %v4704 = vld [vmem:[%s4688 + $0x78] sm:$0xff]
    %v4705 = vld [vmem:[%s4688 + $0x80] sm:$0xff]
    %v4706 = vld [vmem:[%s4688 + $0x88] sm:$0xff]
    %v4707 = vld [vmem:[%s4688 + $0x90] sm:$0xff]
    %v4708 = vld [vmem:[%s4688 + $0x98] sm:$0xff]
    %v4709 = vld [vmem:[%s4688 + $0xa0] sm:$0xff]
    %v4710 = vld [vmem:[%s4688 + $0xa8] sm:$0xff]
    %v4711 = vld [vmem:[%s4688 + $0xb0] sm:$0xff]
    %v4712 = vld [vmem:[%s4688 + $0xb8] sm:$0xff]
    %v4713 = vld [vmem:[%s4688 + $0xc0] sm:$0xff]
    %v4714 = vld [vmem:[%s4688 + $0xc8] sm:$0xff]
    %v4715 = vld [vmem:[%s4688 + $0xd0] sm:$0xff]
    %v4716 = vld [vmem:[%s4688 + $0xd8] sm:$0xff]
    %v4717 = vld [vmem:[%s4688 + $0xe0] sm:$0xff]
    %v4718 = vld [vmem:[%s4688 + $0xe8] sm:$0xff]
    %v4719 = vld [vmem:[%s4688 + $0xf0] sm:$0xff]
    %v4720 = vld [vmem:[%s4688 + $0xf8] sm:$0xff]
    %v4721 = vld [vmem:[%s4688 + $0x100] sm:$0xff]
    %v4722 = vld [vmem:[%s4688 + $0x108] sm:$0xff]
    %v4723 = vld [vmem:[%s4688 + $0x110] sm:$0xff]
    %v4724 = vld [vmem:[%s4688 + $0x118] sm:$0xff]
    %s4725 = scalar_lea.vmem [#allocation5], 2
    %v4726 = vld [vmem:[%s4725] sm:$0x3]
    %v4728 = vlaneseq
    %v4729 = vshrl.u32 %v4728, 7
    %v4730 = vsub.s32 0, %v4729
    %v4731 = vrot.slane %v4726, %v4730
    %v4732 = vlaneseq
    %v4733 = vshrl.u32 %v4732, 7
    %v4734 = vsub.s32 1, %v4733
    %v4735 = vrot.slane %v4726, %v4734
    %4738 = vmatprep.subr.mxu0 %v4690
    %4739 = vmatpush1.msra.mxu0 %v4689
    %4740 = vmatprep.subr.mxu0 %v4692
    %4741 = vmatpush1.msra.mxu0 %v4691
    %4742 = vmatprep.subr.mxu0 %v4694
    %4743 = vmatpush1.msra.mxu0 %v4693
    %4744 = vmatprep.subr.mxu0 %v4696
    %4745 = vmatpush1.msra.mxu0 %v4695
    %4746 = vmatprep.subr.mxu0 %v4698
    %4747 = vmatpush1.msra.mxu0 %v4697
    %4748 = vmatprep.subr.mxu0 %v4700
    %4749 = vmatpush1.msra.mxu0 %v4699
    %4750 = vmatprep.subr.mxu0 %v4702
    %4751 = vmatpush1.msra.mxu0 %v4701
    %4752 = vmatprep.subr.mxu0 %v4704
    %4753 = vmatpush1.msra.mxu0 %v4703
    %4754 = vmatprep.subr.mxu0 %v4706
    %4755 = vmatpush1.msra.mxu0 %v4705
    %4756 = vmatprep.subr.mxu0 %v4708
    %4757 = vmatpush1.msra.mxu0 %v4707
    %4758 = vmatprep.subr.mxu0 %v4710
    %4759 = vmatpush1.msra.mxu0 %v4709
    %4760 = vmatprep.subr.mxu0 %v4712
    %4761 = vmatpush1.msra.mxu0 %v4711
    %4762 = vmatprep.subr.mxu0 %v4714
    %4763 = vmatpush1.msra.mxu0 %v4713
    %4764 = vmatprep.subr.mxu0 %v4716
    %4765 = vmatpush1.msra.mxu0 %v4715
    %4766 = vmatprep.subr.mxu0 %v4718
    %4767 = vmatpush1.msra.mxu0 %v4717
    %4768 = vmatprep.subr.mxu0 %v4720
    %4769 = vmatpush1.msra.mxu0 %v4719
    %4770 = vmatprep.subr.mxu0 %v4722
    %4771 = vmatpush1.msra.mxu0 %v4721
    %4772 = vmatprep.subr.mxu0 %v4724
    %4773 = vmatpush1.msra.mxu0 %v4723
    %4774 = vmatprep.subr.mxu0 0.0
    %4775 = vmatpush1.msra.mxu0 0.0
    %4776 = vmatprep.subr.mxu0 0.0
    %4777 = vmatpush1.msra.mxu0 0.0
    %4778 = vmatprep.subr.mxu0 0.0
    %4779 = vmatpush1.msra.mxu0 0.0
    %4780 = vmatprep.subr.mxu0 0.0
    %4781 = vmatpush1.msra.mxu0 0.0
    %4782 = vmatprep.subr.mxu0 0.0
    %4783 = vmatpush1.msra.mxu0 0.0
    %4784 = vmatprep.subr.mxu0 0.0
    %4785 = vmatpush1.msra.mxu0 0.0
    %4786 = vmatprep.subr.mxu0 0.0
    %4787 = vmatpush1.msra.mxu0 0.0
    %4788 = vmatprep.subr.mxu0 0.0
    %4789 = vmatpush1.msra.mxu0 0.0
    %4790 = vmatprep.subr.mxu0 0.0
    %4791 = vmatpush1.msra.mxu0 0.0
    %4792 = vmatprep.subr.mxu0 0.0
    %4793 = vmatpush1.msra.mxu0 0.0
    %4794 = vmatprep.subr.mxu0 0.0
    %4795 = vmatpush1.msra.mxu0 0.0
    %4796 = vmatprep.subr.mxu0 0.0
    %4797 = vmatpush1.msra.mxu0 0.0
    %4798 = vmatprep.subr.mxu0 0.0
    %4799 = vmatpush1.msra.mxu0 0.0
    %4800 = vmatprep.subr.mxu0 0.0
    %4801 = vmatpush1.msra.mxu0 0.0
    %4802 = vmatprep.mubr.f32.mxu0 %v4615
    %4803 = vmatmul.mubr.f32.gmra.mrb[0].mxu0 %v4562
    %v4804 = vpop.f32.mrb[0].mxu0
    %v4805 = vadd.f32 %v4731, %v4804
    %v4806 = vpop.f32.mrb[0].mxu0
    %v4807 = vadd.f32 %v4735, %v4806
    %4808 = vdwg.mxu0
    %s4809 = scalar_lea.vmem %s5, 288
    %v4810 = vld [vmem:[%s4809] sm:$0xff]
    %v4811 = vld [vmem:[%s4809 + $0x8] sm:$0xff]
    %v4812 = vld [vmem:[%s4809 + $0x10] sm:$0xff]
    %v4813 = vld [vmem:[%s4809 + $0x18] sm:$0xff]
    %v4814 = vld [vmem:[%s4809 + $0x20] sm:$0xff]
    %v4815 = vld [vmem:[%s4809 + $0x28] sm:$0xff]
    %v4816 = vld [vmem:[%s4809 + $0x30] sm:$0xff]
    %v4817 = vld [vmem:[%s4809 + $0x38] sm:$0xff]
    %v4818 = vld [vmem:[%s4809 + $0x40] sm:$0xff]
    %v4819 = vld [vmem:[%s4809 + $0x48] sm:$0xff]
    %v4820 = vld [vmem:[%s4809 + $0x50] sm:$0xff]
    %v4821 = vld [vmem:[%s4809 + $0x58] sm:$0xff]
    %v4822 = vld [vmem:[%s4809 + $0x60] sm:$0xff]
    %v4823 = vld [vmem:[%s4809 + $0x68] sm:$0xff]
    %v4824 = vld [vmem:[%s4809 + $0x70] sm:$0xff]
    %v4825 = vld [vmem:[%s4809 + $0x78] sm:$0xff]
    %v4826 = vld [vmem:[%s4809 + $0x80] sm:$0xff]
    %v4827 = vld [vmem:[%s4809 + $0x88] sm:$0xff]
    %v4828 = vld [vmem:[%s4809 + $0x90] sm:$0xff]
    %v4829 = vld [vmem:[%s4809 + $0x98] sm:$0xff]
    %v4830 = vld [vmem:[%s4809 + $0xa0] sm:$0xff]
    %v4831 = vld [vmem:[%s4809 + $0xa8] sm:$0xff]
    %v4832 = vld [vmem:[%s4809 + $0xb0] sm:$0xff]
    %v4833 = vld [vmem:[%s4809 + $0xb8] sm:$0xff]
    %v4834 = vld [vmem:[%s4809 + $0xc0] sm:$0xff]
    %v4835 = vld [vmem:[%s4809 + $0xc8] sm:$0xff]
    %v4836 = vld [vmem:[%s4809 + $0xd0] sm:$0xff]
    %v4837 = vld [vmem:[%s4809 + $0xd8] sm:$0xff]
    %v4838 = vld [vmem:[%s4809 + $0xe0] sm:$0xff]
    %v4839 = vld [vmem:[%s4809 + $0xe8] sm:$0xff]
    %v4840 = vld [vmem:[%s4809 + $0xf0] sm:$0xff]
    %v4841 = vld [vmem:[%s4809 + $0xf8] sm:$0xff]
    %v4842 = vld [vmem:[%s4809 + $0x100] sm:$0xff]
    %v4843 = vld [vmem:[%s4809 + $0x108] sm:$0xff]
    %v4844 = vld [vmem:[%s4809 + $0x110] sm:$0xff]
    %v4845 = vld [vmem:[%s4809 + $0x118] sm:$0xff]
    %s4846 = scalar_lea.vmem [#allocation7], 2
    %v4847 = vld [vmem:[%s4846] sm:$0x3]
    %v4849 = vlaneseq
    %v4850 = vshrl.u32 %v4849, 7
    %v4851 = vsub.s32 0, %v4850
    %v4852 = vrot.slane %v4847, %v4851
    %v4853 = vlaneseq
    %v4854 = vshrl.u32 %v4853, 7
    %v4855 = vsub.s32 1, %v4854
    %v4856 = vrot.slane %v4847, %v4855
    %4859 = vmatprep.subr.mxu0 %v4811
    %4860 = vmatpush1.msra.mxu0 %v4810
    %4861 = vmatprep.subr.mxu0 %v4813
    %4862 = vmatpush1.msra.mxu0 %v4812
    %4863 = vmatprep.subr.mxu0 %v4815
    %4864 = vmatpush1.msra.mxu0 %v4814
    %4865 = vmatprep.subr.mxu0 %v4817
    %4866 = vmatpush1.msra.mxu0 %v4816
    %4867 = vmatprep.subr.mxu0 %v4819
    %4868 = vmatpush1.msra.mxu0 %v4818
    %4869 = vmatprep.subr.mxu0 %v4821
    %4870 = vmatpush1.msra.mxu0 %v4820
    %4871 = vmatprep.subr.mxu0 %v4823
    %4872 = vmatpush1.msra.mxu0 %v4822
    %4873 = vmatprep.subr.mxu0 %v4825
    %4874 = vmatpush1.msra.mxu0 %v4824
    %4875 = vmatprep.subr.mxu0 %v4827
    %4876 = vmatpush1.msra.mxu0 %v4826
    %4877 = vmatprep.subr.mxu0 %v4829
    %4878 = vmatpush1.msra.mxu0 %v4828
    %4879 = vmatprep.subr.mxu0 %v4831
    %4880 = vmatpush1.msra.mxu0 %v4830
    %4881 = vmatprep.subr.mxu0 %v4833
    %4882 = vmatpush1.msra.mxu0 %v4832
    %4883 = vmatprep.subr.mxu0 %v4835
    %4884 = vmatpush1.msra.mxu0 %v4834
    %4885 = vmatprep.subr.mxu0 %v4837
    %4886 = vmatpush1.msra.mxu0 %v4836
    %4887 = vmatprep.subr.mxu0 %v4839
    %4888 = vmatpush1.msra.mxu0 %v4838
    %4889 = vmatprep.subr.mxu0 %v4841
    %4890 = vmatpush1.msra.mxu0 %v4840
    %4891 = vmatprep.subr.mxu0 %v4843
    %4892 = vmatpush1.msra.mxu0 %v4842
    %4893 = vmatprep.subr.mxu0 %v4845
    %4894 = vmatpush1.msra.mxu0 %v4844
    %4895 = vmatprep.subr.mxu0 0.0
    %4896 = vmatpush1.msra.mxu0 0.0
    %4897 = vmatprep.subr.mxu0 0.0
    %4898 = vmatpush1.msra.mxu0 0.0
    %4899 = vmatprep.subr.mxu0 0.0
    %4900 = vmatpush1.msra.mxu0 0.0
    %4901 = vmatprep.subr.mxu0 0.0
    %4902 = vmatpush1.msra.mxu0 0.0
    %4903 = vmatprep.subr.mxu0 0.0
    %4904 = vmatpush1.msra.mxu0 0.0
    %4905 = vmatprep.subr.mxu0 0.0
    %4906 = vmatpush1.msra.mxu0 0.0
    %4907 = vmatprep.subr.mxu0 0.0
    %4908 = vmatpush1.msra.mxu0 0.0
    %4909 = vmatprep.subr.mxu0 0.0
    %4910 = vmatpush1.msra.mxu0 0.0
    %4911 = vmatprep.subr.mxu0 0.0
    %4912 = vmatpush1.msra.mxu0 0.0
    %4913 = vmatprep.subr.mxu0 0.0
    %4914 = vmatpush1.msra.mxu0 0.0
    %4915 = vmatprep.subr.mxu0 0.0
    %4916 = vmatpush1.msra.mxu0 0.0
    %4917 = vmatprep.subr.mxu0 0.0
    %4918 = vmatpush1.msra.mxu0 0.0
    %4919 = vmatprep.subr.mxu0 0.0
    %4920 = vmatpush1.msra.mxu0 0.0
    %4921 = vmatprep.subr.mxu0 0.0
    %4922 = vmatpush1.msra.mxu0 0.0
    %4923 = vmatprep.mubr.f32.mxu0 %v4615
    %4924 = vmatmul.mubr.f32.gmra.mrb[0].mxu0 %v4562
    %v4925 = vpop.f32.mrb[0].mxu0
    %v4926 = vadd.f32 %v4852, %v4925
    %v4927 = vpop.f32.mrb[0].mxu0
    %v4928 = vadd.f32 %v4856, %v4927
    %4929 = vdwg.mxu0
    %v4932 = vcombine.low %v4684, %v4686
    %v4933 = vcombine.high %v4684, %v4686
    %v4935 = vunpack.c.l.s4 1966171168
    %v4936 = vunpack.c.0.s8 %v4935
    %v4937 = vlaneseq
    %v4938 = vshrl.u32 %v4937, 7
    %v4939 = vsub.s32 %v4936, %v4938
    %v4940 = vrot.slane %v4932, %v4939
    %v4942 = vunpack.c.l.s4 1966171168
    %v4943 = vunpack.c.0.s8 %v4942
    %v4944 = vlaneseq
    %v4945 = vshrl.u32 %v4944, 7
    %v4946 = vsub.s32 %v4943, %v4945
    %v4947 = vrot.slane %v4933, %v4946
    %v4948 = vcombine.high %v4940, %v4940
    %v4949 = vcombine.high %v4947, %v4947
    %v4951 = vunpack.c.l.s4 1966171168
    %v4952 = vunpack.c.0.s8 %v4951
    %v4953 = vlaneseq
    %v4954 = vshrl.u32 %v4953, 7
    %v4955 = vsub.s32 %v4952, %v4954
    %v4956 = vrot.slane %v4940, %v4955
    %v4958 = vunpack.c.l.s4 1966171168
    %v4959 = vunpack.c.0.s8 %v4958
    %v4960 = vlaneseq
    %v4961 = vshrl.u32 %v4960, 7
    %v4962 = vsub.s32 %v4959, %v4961
    %v4963 = vrot.slane %v4947, %v4962
    %v4965 = vunpack.c.l.s4 1966171168
    %v4966 = vunpack.c.0.s8 %v4965
    %v4967 = vlaneseq
    %v4968 = vshrl.u32 %v4967, 7
    %v4969 = vsub.s32 %v4966, %v4968
    %v4970 = vrot.slane %v4948, %v4969
    %v4972 = vunpack.c.l.s4 1966171168
    %v4973 = vunpack.c.0.s8 %v4972
    %v4974 = vlaneseq
    %v4975 = vshrl.u32 %v4974, 7
    %v4976 = vsub.s32 %v4973, %v4975
    %v4977 = vrot.slane %v4949, %v4976
    %v4978 = vcombine.high %v4956, %v4956
    %v4979 = vcombine.high %v4963, %v4963
    %v4980 = vcombine.high %v4970, %v4970
    %v4981 = vcombine.high %v4977, %v4977
    %v4982 = vlaneseq
    %v4983 = vshrl.u32 %v4982, 7
    %v4984 = vsub.s32 0, %v4983
    %v4985 = vrot.slane %v4956, %v4984
    %v4986 = vlaneseq
    %v4987 = vshrl.u32 %v4986, 7
    %v4988 = vsub.s32 1, %v4987
    %v4989 = vrot.slane %v4956, %v4988
    %v4990 = vlaneseq
    %v4991 = vshrl.u32 %v4990, 7
    %v4992 = vsub.s32 0, %v4991
    %v4993 = vrot.slane %v4970, %v4992
    %v4994 = vlaneseq
    %v4995 = vshrl.u32 %v4994, 7
    %v4996 = vsub.s32 1, %v4995
    %v4997 = vrot.slane %v4970, %v4996
    %v4998 = vlaneseq
    %v4999 = vshrl.u32 %v4998, 7
    %v5000 = vsub.s32 0, %v4999
    %v5001 = vrot.slane %v4978, %v5000
    %v5002 = vlaneseq
    %v5003 = vshrl.u32 %v5002, 7
    %v5004 = vsub.s32 1, %v5003
    %v5005 = vrot.slane %v4978, %v5004
    %v5006 = vlaneseq
    %v5007 = vshrl.u32 %v5006, 7
    %v5008 = vsub.s32 0, %v5007
    %v5009 = vrot.slane %v4980, %v5008
    %v5010 = vlaneseq
    %v5011 = vshrl.u32 %v5010, 7
    %v5012 = vsub.s32 1, %v5011
    %v5013 = vrot.slane %v4980, %v5012
    %v5014 = vlaneseq
    %v5015 = vshrl.u32 %v5014, 7
    %v5016 = vsub.s32 0, %v5015
    %v5017 = vrot.slane %v4963, %v5016
    %v5018 = vlaneseq
    %v5019 = vshrl.u32 %v5018, 7
    %v5020 = vsub.s32 1, %v5019
    %v5021 = vrot.slane %v4963, %v5020
    %v5022 = vlaneseq
    %v5023 = vshrl.u32 %v5022, 7
    %v5024 = vsub.s32 0, %v5023
    %v5025 = vrot.slane %v4977, %v5024
    %v5026 = vlaneseq
    %v5027 = vshrl.u32 %v5026, 7
    %v5028 = vsub.s32 1, %v5027
    %v5029 = vrot.slane %v4977, %v5028
    %v5030 = vlaneseq
    %v5031 = vshrl.u32 %v5030, 7
    %v5032 = vsub.s32 0, %v5031
    %v5033 = vrot.slane %v4979, %v5032
    %v5034 = vlaneseq
    %v5035 = vshrl.u32 %v5034, 7
    %v5036 = vsub.s32 1, %v5035
    %v5037 = vrot.slane %v4979, %v5036
    %v5038 = vlaneseq
    %v5039 = vshrl.u32 %v5038, 7
    %v5040 = vsub.s32 0, %v5039
    %v5041 = vrot.slane %v4981, %v5040
    %v5042 = vlaneseq
    %v5043 = vshrl.u32 %v5042, 7
    %v5044 = vsub.s32 1, %v5043
    %v5045 = vrot.slane %v4981, %v5044
    %v5062 = vmul.f32 %v4985, %v4805
    %v5063 = vmul.f32 %v4989, %v4807
    %v5064 = vmul.f32 %v4993, %v4805
    %v5065 = vmul.f32 %v4997, %v4807
    %v5066 = vmul.f32 %v5001, %v4805
    %v5067 = vmul.f32 %v5005, %v4807
    %v5068 = vmul.f32 %v5009, %v4805
    %v5069 = vmul.f32 %v5013, %v4807
    %v5070 = vmul.f32 %v5017, %v4805
    %v5071 = vmul.f32 %v5021, %v4807
    %v5072 = vmul.f32 %v5025, %v4805
    %v5073 = vmul.f32 %v5029, %v4807
    %v5074 = vmul.f32 %v5033, %v4805
    %v5075 = vmul.f32 %v5037, %v4807
    %v5076 = vmul.f32 %v5041, %v4805
    %v5077 = vmul.f32 %v5045, %v4807
    %v5078 = vrot.slane %v5062, 4
    %v5079 = vmax.f32 %v5062, %v5078
    %v5080 = vrot.slane %v5079, 2
    %v5081 = vmax.f32 %v5079, %v5080
    %v5082 = vrot.slane %v5081, 1
    %v5083 = vmax.f32 %v5081, %v5082
    %v5084 = vsel %vm250, %v5063, -inf
    %v5085 = vrot.slane %v5084, 4
    %v5086 = vmax.f32 %v5084, %v5085
    %v5087 = vrot.slane %v5086, 2
    %v5088 = vmax.f32 %v5086, %v5087
    %v5089 = vrot.slane %v5088, 1
    %v5090 = vmax.f32 %v5088, %v5089
    %v5091 = vrot.slane %v5064, 4
    %v5092 = vmax.f32 %v5064, %v5091
    %v5093 = vrot.slane %v5092, 2
    %v5094 = vmax.f32 %v5092, %v5093
    %v5095 = vrot.slane %v5094, 1
    %v5096 = vmax.f32 %v5094, %v5095
    %v5097 = vsel %vm250, %v5065, -inf
    %v5098 = vrot.slane %v5097, 4
    %v5099 = vmax.f32 %v5097, %v5098
    %v5100 = vrot.slane %v5099, 2
    %v5101 = vmax.f32 %v5099, %v5100
    %v5102 = vrot.slane %v5101, 1
    %v5103 = vmax.f32 %v5101, %v5102
    %v5104 = vrot.slane %v5066, 4
    %v5105 = vmax.f32 %v5066, %v5104
    %v5106 = vrot.slane %v5105, 2
    %v5107 = vmax.f32 %v5105, %v5106
    %v5108 = vrot.slane %v5107, 1
    %v5109 = vmax.f32 %v5107, %v5108
    %v5110 = vsel %vm250, %v5067, -inf
    %v5111 = vrot.slane %v5110, 4
    %v5112 = vmax.f32 %v5110, %v5111
    %v5113 = vrot.slane %v5112, 2
    %v5114 = vmax.f32 %v5112, %v5113
    %v5115 = vrot.slane %v5114, 1
    %v5116 = vmax.f32 %v5114, %v5115
    %v5117 = vrot.slane %v5068, 4
    %v5118 = vmax.f32 %v5068, %v5117
    %v5119 = vrot.slane %v5118, 2
    %v5120 = vmax.f32 %v5118, %v5119
    %v5121 = vrot.slane %v5120, 1
    %v5122 = vmax.f32 %v5120, %v5121
    %v5123 = vsel %vm250, %v5069, -inf
    %v5124 = vrot.slane %v5123, 4
    %v5125 = vmax.f32 %v5123, %v5124
    %v5126 = vrot.slane %v5125, 2
    %v5127 = vmax.f32 %v5125, %v5126
    %v5128 = vrot.slane %v5127, 1
    %v5129 = vmax.f32 %v5127, %v5128
    %v5130 = vrot.slane %v5070, 4
    %v5131 = vmax.f32 %v5070, %v5130
    %v5132 = vrot.slane %v5131, 2
    %v5133 = vmax.f32 %v5131, %v5132
    %v5134 = vrot.slane %v5133, 1
    %v5135 = vmax.f32 %v5133, %v5134
    %v5136 = vsel %vm250, %v5071, -inf
    %v5137 = vrot.slane %v5136, 4
    %v5138 = vmax.f32 %v5136, %v5137
    %v5139 = vrot.slane %v5138, 2
    %v5140 = vmax.f32 %v5138, %v5139
    %v5141 = vrot.slane %v5140, 1
    %v5142 = vmax.f32 %v5140, %v5141
    %v5143 = vrot.slane %v5072, 4
    %v5144 = vmax.f32 %v5072, %v5143
    %v5145 = vrot.slane %v5144, 2
    %v5146 = vmax.f32 %v5144, %v5145
    %v5147 = vrot.slane %v5146, 1
    %v5148 = vmax.f32 %v5146, %v5147
    %v5149 = vsel %vm250, %v5073, -inf
    %v5150 = vrot.slane %v5149, 4
    %v5151 = vmax.f32 %v5149, %v5150
    %v5152 = vrot.slane %v5151, 2
    %v5153 = vmax.f32 %v5151, %v5152
    %v5154 = vrot.slane %v5153, 1
    %v5155 = vmax.f32 %v5153, %v5154
    %v5156 = vrot.slane %v5074, 4
    %v5157 = vmax.f32 %v5074, %v5156
    %v5158 = vrot.slane %v5157, 2
    %v5159 = vmax.f32 %v5157, %v5158
    %v5160 = vrot.slane %v5159, 1
    %v5161 = vmax.f32 %v5159, %v5160
    %v5162 = vsel %vm250, %v5075, -inf
    %v5163 = vrot.slane %v5162, 4
    %v5164 = vmax.f32 %v5162, %v5163
    %v5165 = vrot.slane %v5164, 2
    %v5166 = vmax.f32 %v5164, %v5165
    %v5167 = vrot.slane %v5166, 1
    %v5168 = vmax.f32 %v5166, %v5167
    %v5169 = vrot.slane %v5076, 4
    %v5170 = vmax.f32 %v5076, %v5169
    %v5171 = vrot.slane %v5170, 2
    %v5172 = vmax.f32 %v5170, %v5171
    %v5173 = vrot.slane %v5172, 1
    %v5174 = vmax.f32 %v5172, %v5173
    %v5175 = vsel %vm250, %v5077, -inf
    %v5176 = vrot.slane %v5175, 4
    %v5177 = vmax.f32 %v5175, %v5176
    %v5178 = vrot.slane %v5177, 2
    %v5179 = vmax.f32 %v5177, %v5178
    %v5180 = vrot.slane %v5179, 1
    %v5181 = vmax.f32 %v5179, %v5180
    %v5182 = vsub.f32 %v5062, %v5083
    %v5183 = vsub.f32 %v5063, %v5090
    %v5184 = vsub.f32 %v5064, %v5096
    %v5185 = vsub.f32 %v5065, %v5103
    %v5186 = vsub.f32 %v5066, %v5109
    %v5187 = vsub.f32 %v5067, %v5116
    %v5188 = vsub.f32 %v5068, %v5122
    %v5189 = vsub.f32 %v5069, %v5129
    %v5190 = vsub.f32 %v5070, %v5135
    %v5191 = vsub.f32 %v5071, %v5142
    %v5192 = vsub.f32 %v5072, %v5148
    %v5193 = vsub.f32 %v5073, %v5155
    %v5194 = vsub.f32 %v5074, %v5161
    %v5195 = vsub.f32 %v5075, %v5168
    %v5196 = vsub.f32 %v5076, %v5174
    %v5197 = vsub.f32 %v5077, %v5181
    %v5198 = vmul.f32 %v5182, 1.442695
    %v5199 = vpow.pop %v5198
    %v5200 = vmul.f32 %v5183, 1.442695
    %v5201 = vpow.pop %v5200
    %v5202 = vmul.f32 %v5184, 1.442695
    %v5203 = vpow.pop %v5202
    %v5204 = vmul.f32 %v5185, 1.442695
    %v5205 = vpow.pop %v5204
    %v5206 = vmul.f32 %v5186, 1.442695
    %v5207 = vpow.pop %v5206
    %v5208 = vmul.f32 %v5187, 1.442695
    %v5209 = vpow.pop %v5208
    %v5210 = vmul.f32 %v5188, 1.442695
    %v5211 = vpow.pop %v5210
    %v5212 = vmul.f32 %v5189, 1.442695
    %v5213 = vpow.pop %v5212
    %v5214 = vmul.f32 %v5190, 1.442695
    %v5215 = vpow.pop %v5214
    %v5216 = vmul.f32 %v5191, 1.442695
    %v5217 = vpow.pop %v5216
    %v5218 = vmul.f32 %v5192, 1.442695
    %v5219 = vpow.pop %v5218
    %v5220 = vmul.f32 %v5193, 1.442695
    %v5221 = vpow.pop %v5220
    %v5222 = vmul.f32 %v5194, 1.442695
    %v5223 = vpow.pop %v5222
    %v5224 = vmul.f32 %v5195, 1.442695
    %v5225 = vpow.pop %v5224
    %v5226 = vmul.f32 %v5196, 1.442695
    %v5227 = vpow.pop %v5226
    %v5228 = vmul.f32 %v5197, 1.442695
    %v5229 = vpow.pop %v5228
    %v5230 = vmul.f32 %v5199, %v4926
    %v5231 = vmul.f32 %v5201, %v4928
    %v5232 = vmul.f32 %v5203, %v4926
    %v5233 = vmul.f32 %v5205, %v4928
    %v5234 = vmul.f32 %v5207, %v4926
    %v5235 = vmul.f32 %v5209, %v4928
    %v5236 = vmul.f32 %v5211, %v4926
    %v5237 = vmul.f32 %v5213, %v4928
    %v5238 = vmul.f32 %v5215, %v4926
    %v5239 = vmul.f32 %v5217, %v4928
    %v5240 = vmul.f32 %v5219, %v4926
    %v5241 = vmul.f32 %v5221, %v4928
    %v5242 = vmul.f32 %v5223, %v4926
    %v5243 = vmul.f32 %v5225, %v4928
    %v5244 = vmul.f32 %v5227, %v4926
    %v5245 = vmul.f32 %v5229, %v4928
    %v5246 = vrot.slane %v5230, 4
    %v5247 = vadd.f32 %v5230, %v5246
    %v5248 = vrot.slane %v5247, 2
    %v5249 = vadd.f32 %v5247, %v5248
    %v5250 = vrot.slane %v5249, 1
    %v5251 = vadd.f32 %v5249, %v5250
    %v5252 = vsel %vm250, %v5231, 0.0
    %v5253 = vrot.slane %v5252, 4
    %v5254 = vadd.f32 %v5252, %v5253
    %v5255 = vrot.slane %v5254, 2
    %v5256 = vadd.f32 %v5254, %v5255
    %v5257 = vrot.slane %v5256, 1
    %v5258 = vadd.f32 %v5256, %v5257
    %v5259 = vrot.slane %v5232, 4
    %v5260 = vadd.f32 %v5232, %v5259
    %v5261 = vrot.slane %v5260, 2
    %v5262 = vadd.f32 %v5260, %v5261
    %v5263 = vrot.slane %v5262, 1
    %v5264 = vadd.f32 %v5262, %v5263
    %v5265 = vsel %vm250, %v5233, 0.0
    %v5266 = vrot.slane %v5265, 4
    %v5267 = vadd.f32 %v5265, %v5266
    %v5268 = vrot.slane %v5267, 2
    %v5269 = vadd.f32 %v5267, %v5268
    %v5270 = vrot.slane %v5269, 1
    %v5271 = vadd.f32 %v5269, %v5270
    %v5272 = vrot.slane %v5234, 4
    %v5273 = vadd.f32 %v5234, %v5272
    %v5274 = vrot.slane %v5273, 2
    %v5275 = vadd.f32 %v5273, %v5274
    %v5276 = vrot.slane %v5275, 1
    %v5277 = vadd.f32 %v5275, %v5276
    %v5278 = vsel %vm250, %v5235, 0.0
    %v5279 = vrot.slane %v5278, 4
    %v5280 = vadd.f32 %v5278, %v5279
    %v5281 = vrot.slane %v5280, 2
    %v5282 = vadd.f32 %v5280, %v5281
    %v5283 = vrot.slane %v5282, 1
    %v5284 = vadd.f32 %v5282, %v5283
    %v5285 = vrot.slane %v5236, 4
    %v5286 = vadd.f32 %v5236, %v5285
    %v5287 = vrot.slane %v5286, 2
    %v5288 = vadd.f32 %v5286, %v5287
    %v5289 = vrot.slane %v5288, 1
    %v5290 = vadd.f32 %v5288, %v5289
    %v5291 = vsel %vm250, %v5237, 0.0
    %v5292 = vrot.slane %v5291, 4
    %v5293 = vadd.f32 %v5291, %v5292
    %v5294 = vrot.slane %v5293, 2
    %v5295 = vadd.f32 %v5293, %v5294
    %v5296 = vrot.slane %v5295, 1
    %v5297 = vadd.f32 %v5295, %v5296
    %v5298 = vrot.slane %v5238, 4
    %v5299 = vadd.f32 %v5238, %v5298
    %v5300 = vrot.slane %v5299, 2
    %v5301 = vadd.f32 %v5299, %v5300
    %v5302 = vrot.slane %v5301, 1
    %v5303 = vadd.f32 %v5301, %v5302
    %v5304 = vsel %vm250, %v5239, 0.0
    %v5305 = vrot.slane %v5304, 4
    %v5306 = vadd.f32 %v5304, %v5305
    %v5307 = vrot.slane %v5306, 2
    %v5308 = vadd.f32 %v5306, %v5307
    %v5309 = vrot.slane %v5308, 1
    %v5310 = vadd.f32 %v5308, %v5309
    %v5311 = vrot.slane %v5240, 4
    %v5312 = vadd.f32 %v5240, %v5311
    %v5313 = vrot.slane %v5312, 2
    %v5314 = vadd.f32 %v5312, %v5313
    %v5315 = vrot.slane %v5314, 1
    %v5316 = vadd.f32 %v5314, %v5315
    %v5317 = vsel %vm250, %v5241, 0.0
    %v5318 = vrot.slane %v5317, 4
    %v5319 = vadd.f32 %v5317, %v5318
    %v5320 = vrot.slane %v5319, 2
    %v5321 = vadd.f32 %v5319, %v5320
    %v5322 = vrot.slane %v5321, 1
    %v5323 = vadd.f32 %v5321, %v5322
    %v5324 = vrot.slane %v5242, 4
    %v5325 = vadd.f32 %v5242, %v5324
    %v5326 = vrot.slane %v5325, 2
    %v5327 = vadd.f32 %v5325, %v5326
    %v5328 = vrot.slane %v5327, 1
    %v5329 = vadd.f32 %v5327, %v5328
    %v5330 = vsel %vm250, %v5243, 0.0
    %v5331 = vrot.slane %v5330, 4
    %v5332 = vadd.f32 %v5330, %v5331
    %v5333 = vrot.slane %v5332, 2
    %v5334 = vadd.f32 %v5332, %v5333
    %v5335 = vrot.slane %v5334, 1
    %v5336 = vadd.f32 %v5334, %v5335
    %v5337 = vrot.slane %v5244, 4
    %v5338 = vadd.f32 %v5244, %v5337
    %v5339 = vrot.slane %v5338, 2
    %v5340 = vadd.f32 %v5338, %v5339
    %v5341 = vrot.slane %v5340, 1
    %v5342 = vadd.f32 %v5340, %v5341
    %v5343 = vsel %vm250, %v5245, 0.0
    %v5344 = vrot.slane %v5343, 4
    %v5345 = vadd.f32 %v5343, %v5344
    %v5346 = vrot.slane %v5345, 2
    %v5347 = vadd.f32 %v5345, %v5346
    %v5348 = vrot.slane %v5347, 1
    %v5349 = vadd.f32 %v5347, %v5348
    %v5350 = vrot.slane %v5199, 4
    %v5351 = vadd.f32 %v5199, %v5350
    %v5352 = vrot.slane %v5351, 2
    %v5353 = vadd.f32 %v5351, %v5352
    %v5354 = vrot.slane %v5353, 1
    %v5355 = vadd.f32 %v5353, %v5354
    %v5356 = vsel %vm250, %v5201, 0.0
    %v5357 = vrot.slane %v5356, 4
    %v5358 = vadd.f32 %v5356, %v5357
    %v5359 = vrot.slane %v5358, 2
    %v5360 = vadd.f32 %v5358, %v5359
    %v5361 = vrot.slane %v5360, 1
    %v5362 = vadd.f32 %v5360, %v5361
    %v5363 = vrot.slane %v5203, 4
    %v5364 = vadd.f32 %v5203, %v5363
    %v5365 = vrot.slane %v5364, 2
    %v5366 = vadd.f32 %v5364, %v5365
    %v5367 = vrot.slane %v5366, 1
    %v5368 = vadd.f32 %v5366, %v5367
    %v5369 = vsel %vm250, %v5205, 0.0
    %v5370 = vrot.slane %v5369, 4
    %v5371 = vadd.f32 %v5369, %v5370
    %v5372 = vrot.slane %v5371, 2
    %v5373 = vadd.f32 %v5371, %v5372
    %v5374 = vrot.slane %v5373, 1
    %v5375 = vadd.f32 %v5373, %v5374
    %v5376 = vrot.slane %v5207, 4
    %v5377 = vadd.f32 %v5207, %v5376
    %v5378 = vrot.slane %v5377, 2
    %v5379 = vadd.f32 %v5377, %v5378
    %v5380 = vrot.slane %v5379, 1
    %v5381 = vadd.f32 %v5379, %v5380
    %v5382 = vsel %vm250, %v5209, 0.0
    %v5383 = vrot.slane %v5382, 4
    %v5384 = vadd.f32 %v5382, %v5383
    %v5385 = vrot.slane %v5384, 2
    %v5386 = vadd.f32 %v5384, %v5385
    %v5387 = vrot.slane %v5386, 1
    %v5388 = vadd.f32 %v5386, %v5387
    %v5389 = vrot.slane %v5211, 4
    %v5390 = vadd.f32 %v5211, %v5389
    %v5391 = vrot.slane %v5390, 2
    %v5392 = vadd.f32 %v5390, %v5391
    %v5393 = vrot.slane %v5392, 1
    %v5394 = vadd.f32 %v5392, %v5393
    %v5395 = vsel %vm250, %v5213, 0.0
    %v5396 = vrot.slane %v5395, 4
    %v5397 = vadd.f32 %v5395, %v5396
    %v5398 = vrot.slane %v5397, 2
    %v5399 = vadd.f32 %v5397, %v5398
    %v5400 = vrot.slane %v5399, 1
    %v5401 = vadd.f32 %v5399, %v5400
    %v5402 = vrot.slane %v5215, 4
    %v5403 = vadd.f32 %v5215, %v5402
    %v5404 = vrot.slane %v5403, 2
    %v5405 = vadd.f32 %v5403, %v5404
    %v5406 = vrot.slane %v5405, 1
    %v5407 = vadd.f32 %v5405, %v5406
    %v5408 = vsel %vm250, %v5217, 0.0
    %v5409 = vrot.slane %v5408, 4
    %v5410 = vadd.f32 %v5408, %v5409
    %v5411 = vrot.slane %v5410, 2
    %v5412 = vadd.f32 %v5410, %v5411
    %v5413 = vrot.slane %v5412, 1
    %v5414 = vadd.f32 %v5412, %v5413
    %v5415 = vrot.slane %v5219, 4
    %v5416 = vadd.f32 %v5219, %v5415
    %v5417 = vrot.slane %v5416, 2
    %v5418 = vadd.f32 %v5416, %v5417
    %v5419 = vrot.slane %v5418, 1
    %v5420 = vadd.f32 %v5418, %v5419
    %v5421 = vsel %vm250, %v5221, 0.0
    %v5422 = vrot.slane %v5421, 4
    %v5423 = vadd.f32 %v5421, %v5422
    %v5424 = vrot.slane %v5423, 2
    %v5425 = vadd.f32 %v5423, %v5424
    %v5426 = vrot.slane %v5425, 1
    %v5427 = vadd.f32 %v5425, %v5426
    %v5428 = vrot.slane %v5223, 4
    %v5429 = vadd.f32 %v5223, %v5428
    %v5430 = vrot.slane %v5429, 2
    %v5431 = vadd.f32 %v5429, %v5430
    %v5432 = vrot.slane %v5431, 1
    %v5433 = vadd.f32 %v5431, %v5432
    %v5434 = vsel %vm250, %v5225, 0.0
    %v5435 = vrot.slane %v5434, 4
    %v5436 = vadd.f32 %v5434, %v5435
    %v5437 = vrot.slane %v5436, 2
    %v5438 = vadd.f32 %v5436, %v5437
    %v5439 = vrot.slane %v5438, 1
    %v5440 = vadd.f32 %v5438, %v5439
    %v5441 = vrot.slane %v5227, 4
    %v5442 = vadd.f32 %v5227, %v5441
    %v5443 = vrot.slane %v5442, 2
    %v5444 = vadd.f32 %v5442, %v5443
    %v5445 = vrot.slane %v5444, 1
    %v5446 = vadd.f32 %v5444, %v5445
    %v5447 = vsel %vm250, %v5229, 0.0
    %v5448 = vrot.slane %v5447, 4
    %v5449 = vadd.f32 %v5447, %v5448
    %v5450 = vrot.slane %v5449, 2
    %v5451 = vadd.f32 %v5449, %v5450
    %v5452 = vrot.slane %v5451, 1
    %v5453 = vadd.f32 %v5451, %v5452
    %v5454 = vrcp.pop %v5355
    %v5455 = vmul.f32 %v5251, %v5454
    %v5456 = vrcp.pop %v5362
    %v5457 = vmul.f32 %v5258, %v5456
    %v5458 = vrcp.pop %v5368
    %v5459 = vmul.f32 %v5264, %v5458
    %v5460 = vrcp.pop %v5375
    %v5461 = vmul.f32 %v5271, %v5460
    %v5462 = vrcp.pop %v5381
    %v5463 = vmul.f32 %v5277, %v5462
    %v5464 = vrcp.pop %v5388
    %v5465 = vmul.f32 %v5284, %v5464
    %v5466 = vrcp.pop %v5394
    %v5467 = vmul.f32 %v5290, %v5466
    %v5468 = vrcp.pop %v5401
    %v5469 = vmul.f32 %v5297, %v5468
    %v5470 = vrcp.pop %v5407
    %v5471 = vmul.f32 %v5303, %v5470
    %v5472 = vrcp.pop %v5414
    %v5473 = vmul.f32 %v5310, %v5472
    %v5474 = vrcp.pop %v5420
    %v5475 = vmul.f32 %v5316, %v5474
    %v5476 = vrcp.pop %v5427
    %v5477 = vmul.f32 %v5323, %v5476
    %v5478 = vrcp.pop %v5433
    %v5479 = vmul.f32 %v5329, %v5478
    %v5480 = vrcp.pop %v5440
    %v5481 = vmul.f32 %v5336, %v5480
    %v5482 = vrcp.pop %v5446
    %v5483 = vmul.f32 %v5342, %v5482
    %v5484 = vrcp.pop %v5453
    %v5485 = vmul.f32 %v5349, %v5484
    %s5486 = scalar_lea.vmem [#allocation8], 288
    %v5487 = vld [vmem:[%s5486] sm:$0xff]
    %v5488 = vld [vmem:[%s5486 + $0x8] sm:$0xff]
    %v5489 = vld [vmem:[%s5486 + $0x10] sm:$0xff]
    %v5490 = vld [vmem:[%s5486 + $0x18] sm:$0xff]
    %v5491 = vld [vmem:[%s5486 + $0x20] sm:$0xff]
    %v5492 = vld [vmem:[%s5486 + $0x28] sm:$0xff]
    %v5493 = vld [vmem:[%s5486 + $0x30] sm:$0xff]
    %v5494 = vld [vmem:[%s5486 + $0x38] sm:$0xff]
    %v5495 = vld [vmem:[%s5486 + $0x40] sm:$0xff]
    %v5496 = vld [vmem:[%s5486 + $0x48] sm:$0xff]
    %v5497 = vld [vmem:[%s5486 + $0x50] sm:$0xff]
    %v5498 = vld [vmem:[%s5486 + $0x58] sm:$0xff]
    %v5499 = vld [vmem:[%s5486 + $0x60] sm:$0xff]
    %v5500 = vld [vmem:[%s5486 + $0x68] sm:$0xff]
    %v5501 = vld [vmem:[%s5486 + $0x70] sm:$0xff]
    %v5502 = vld [vmem:[%s5486 + $0x78] sm:$0xff]
    %v5503 = vld [vmem:[%s5486 + $0x80] sm:$0xff]
    %v5504 = vld [vmem:[%s5486 + $0x88] sm:$0xff]
    %v5505 = vld [vmem:[%s5486 + $0x90] sm:$0xff]
    %v5506 = vld [vmem:[%s5486 + $0x98] sm:$0xff]
    %v5507 = vld [vmem:[%s5486 + $0xa0] sm:$0xff]
    %v5508 = vld [vmem:[%s5486 + $0xa8] sm:$0xff]
    %v5509 = vld [vmem:[%s5486 + $0xb0] sm:$0xff]
    %v5510 = vld [vmem:[%s5486 + $0xb8] sm:$0xff]
    %v5511 = vld [vmem:[%s5486 + $0xc0] sm:$0xff]
    %v5512 = vld [vmem:[%s5486 + $0xc8] sm:$0xff]
    %v5513 = vld [vmem:[%s5486 + $0xd0] sm:$0xff]
    %v5514 = vld [vmem:[%s5486 + $0xd8] sm:$0xff]
    %v5515 = vld [vmem:[%s5486 + $0xe0] sm:$0xff]
    %v5516 = vld [vmem:[%s5486 + $0xe8] sm:$0xff]
    %v5517 = vld [vmem:[%s5486 + $0xf0] sm:$0xff]
    %v5518 = vld [vmem:[%s5486 + $0xf8] sm:$0xff]
    %v5519 = vld [vmem:[%s5486 + $0x100] sm:$0xff]
    %v5520 = vld [vmem:[%s5486 + $0x108] sm:$0xff]
    %v5521 = vld [vmem:[%s5486 + $0x110] sm:$0xff]
    %v5522 = vld [vmem:[%s5486 + $0x118] sm:$0xff]
    %s5523 = scalar_lea.vmem [#allocation10], 2
    %v5524 = vld [vmem:[%s5523] sm:$0x3]
    %v5526 = vlaneseq
    %v5527 = vshrl.u32 %v5526, 7
    %v5528 = vsub.s32 0, %v5527
    %v5529 = vrot.slane %v5524, %v5528
    %v5530 = vlaneseq
    %v5531 = vshrl.u32 %v5530, 7
    %v5532 = vsub.s32 1, %v5531
    %v5533 = vrot.slane %v5524, %v5532
    %v5552 = vsel %vm1183, %v5459, %v5455
    %v5553 = vsel %vm1185, %v5463, %v5552
    %v5554 = vsel %vm1187, %v5467, %v5553
    %v5555 = vsel %vm1189, %v5471, %v5554
    %v5556 = vsel %vm1191, %v5475, %v5555
    %v5557 = vsel %vm1193, %v5479, %v5556
    %v5558 = vsel %vm1195, %v5483, %v5557
    %v5559 = vsel %vm1183, %v5461, %v5457
    %v5560 = vsel %vm1185, %v5465, %v5559
    %v5561 = vsel %vm1187, %v5469, %v5560
    %v5562 = vsel %vm1189, %v5473, %v5561
    %v5563 = vsel %vm1191, %v5477, %v5562
    %v5564 = vsel %vm1193, %v5481, %v5563
    %v5565 = vsel %vm1195, %v5485, %v5564
    %v5567 = vsel %vm250, %v5565, 0
    %5569 = vmatprep.subr.mxu0 %v5488
    %5570 = vmatpush1.msra.mxu0 %v5487
    %5571 = vmatprep.subr.mxu0 %v5490
    %5572 = vmatpush1.msra.mxu0 %v5489
    %5573 = vmatprep.subr.mxu0 %v5492
    %5574 = vmatpush1.msra.mxu0 %v5491
    %5575 = vmatprep.subr.mxu0 %v5494
    %5576 = vmatpush1.msra.mxu0 %v5493
    %5577 = vmatprep.subr.mxu0 %v5496
    %5578 = vmatpush1.msra.mxu0 %v5495
    %5579 = vmatprep.subr.mxu0 %v5498
    %5580 = vmatpush1.msra.mxu0 %v5497
    %5581 = vmatprep.subr.mxu0 %v5500
    %5582 = vmatpush1.msra.mxu0 %v5499
    %5583 = vmatprep.subr.mxu0 %v5502
    %5584 = vmatpush1.msra.mxu0 %v5501
    %5585 = vmatprep.subr.mxu0 %v5504
    %5586 = vmatpush1.msra.mxu0 %v5503
    %5587 = vmatprep.subr.mxu0 %v5506
    %5588 = vmatpush1.msra.mxu0 %v5505
    %5589 = vmatprep.subr.mxu0 %v5508
    %5590 = vmatpush1.msra.mxu0 %v5507
    %5591 = vmatprep.subr.mxu0 %v5510
    %5592 = vmatpush1.msra.mxu0 %v5509
    %5593 = vmatprep.subr.mxu0 %v5512
    %5594 = vmatpush1.msra.mxu0 %v5511
    %5595 = vmatprep.subr.mxu0 %v5514
    %5596 = vmatpush1.msra.mxu0 %v5513
    %5597 = vmatprep.subr.mxu0 %v5516
    %5598 = vmatpush1.msra.mxu0 %v5515
    %5599 = vmatprep.subr.mxu0 %v5518
    %5600 = vmatpush1.msra.mxu0 %v5517
    %5601 = vmatprep.subr.mxu0 %v5520
    %5602 = vmatpush1.msra.mxu0 %v5519
    %5603 = vmatprep.subr.mxu0 %v5522
    %5604 = vmatpush1.msra.mxu0 %v5521
    %5605 = vmatprep.subr.mxu0 0.0
    %5606 = vmatpush1.msra.mxu0 0.0
    %5607 = vmatprep.subr.mxu0 0.0
    %5608 = vmatpush1.msra.mxu0 0.0
    %5609 = vmatprep.subr.mxu0 0.0
    %5610 = vmatpush1.msra.mxu0 0.0
    %5611 = vmatprep.subr.mxu0 0.0
    %5612 = vmatpush1.msra.mxu0 0.0
    %5613 = vmatprep.subr.mxu0 0.0
    %5614 = vmatpush1.msra.mxu0 0.0
    %5615 = vmatprep.subr.mxu0 0.0
    %5616 = vmatpush1.msra.mxu0 0.0
    %5617 = vmatprep.subr.mxu0 0.0
    %5618 = vmatpush1.msra.mxu0 0.0
    %5619 = vmatprep.subr.mxu0 0.0
    %5620 = vmatpush1.msra.mxu0 0.0
    %5621 = vmatprep.subr.mxu0 0.0
    %5622 = vmatpush1.msra.mxu0 0.0
    %5623 = vmatprep.subr.mxu0 0.0
    %5624 = vmatpush1.msra.mxu0 0.0
    %5625 = vmatprep.subr.mxu0 0.0
    %5626 = vmatpush1.msra.mxu0 0.0
    %5627 = vmatprep.subr.mxu0 0.0
    %5628 = vmatpush1.msra.mxu0 0.0
    %5629 = vmatprep.subr.mxu0 0.0
    %5630 = vmatpush1.msra.mxu0 0.0
    %5631 = vmatprep.subr.mxu0 0.0
    %5632 = vmatpush1.msra.mxu0 0.0
    %5633 = vmatprep.mubr.f32.mxu0 %v5567
    %5634 = vmatmul.mubr.f32.gmra.mrb[0].mxu0 %v5558
    %v5635 = vpop.f32.mrb[0].mxu0
    %v5636 = vadd.f32 %v5529, %v5635
    %v5637 = vpop.f32.mrb[0].mxu0
    %v5638 = vadd.f32 %v5533, %v5637
    %5639 = vdwg.mxu0
    %v5640 = vadd.f32 %v4562, %v5636
    %v5641 = vadd.f32 %v4563, %v5638
    %v5642 = vsel %vm250, %v5641, 0.0
    %v5643 = vadd.f32 %v5640, %v5642
    %5644 = vadd.xlane.f32.xlu0 %v5643
    %v5645 = vpop.xlane.xlu0 %5644
    %v5646 = vmul.f32 %v5645, %v1284
    %v5647 = vsub.f32 %v5640, %v5646
    %v5648 = vsub.f32 %v5641, %v5646
    %v5649 = vmul.f32 %v5647, %v5647
    %v5650 = vmul.f32 %v5648, %v5648
    %v5651 = vsel %vm250, %v5650, 0.0
    %v5652 = vadd.f32 %v5649, %v5651
    %5653 = vadd.xlane.f32.xlu0 %v5652
    %v5654 = vpop.xlane.xlu0 %5653
    %v5655 = vmul.f32 %v5654, %v1284
    %v5656 = vadd.f32 %v5655, 1e-05
    %v5657 = vrsqrt.pop %v5656
    %v5658 = vmul.f32 %v5647, %v5657
    %v5659 = vmul.f32 %v5648, %v5657
    %s5660 = scalar_lea.vmem [#allocation11], 2
    %v5661 = vld [vmem:[%s5660] sm:$0x3]
    %v5663 = vlaneseq
    %v5664 = vshrl.u32 %v5663, 7
    %v5665 = vsub.s32 0, %v5664
    %v5666 = vrot.slane %v5661, %v5665
    %v5667 = vlaneseq
    %v5668 = vshrl.u32 %v5667, 7
    %v5669 = vsub.s32 1, %v5668
    %v5670 = vrot.slane %v5661, %v5669
    %v5673 = vmul.f32 %v5658, %v5666
    %v5674 = vmul.f32 %v5659, %v5670
    %s5675 = scalar_lea.vmem [#allocation13], 2
    %v5676 = vld [vmem:[%s5675] sm:$0x3]
    %v5678 = vlaneseq
    %v5679 = vshrl.u32 %v5678, 7
    %v5680 = vsub.s32 0, %v5679
    %v5681 = vrot.slane %v5676, %v5680
    %v5682 = vlaneseq
    %v5683 = vshrl.u32 %v5682, 7
    %v5684 = vsub.s32 1, %v5683
    %v5685 = vrot.slane %v5676, %v5684
    %v5688 = vadd.f32 %v5673, %v5681
    %v5689 = vadd.f32 %v5674, %v5685
    %v5690 = vpack.c.bf16 %v5688, %v5688
    %v5691 = vpack.c.bf16 %v5689, %v5689
    %s5692 = scalar_lea.vmem %s11, 1152
    %v5693 = vld [vmem:[%s5692] sm:$0xff]
    %v5694 = vld [vmem:[%s5692 + $0x8] sm:$0xff]
    %v5695 = vld [vmem:[%s5692 + $0x10] sm:$0xff]
    %v5696 = vld [vmem:[%s5692 + $0x18] sm:$0xff]
    %v5697 = vld [vmem:[%s5692 + $0x20] sm:$0xff]
    %v5698 = vld [vmem:[%s5692 + $0x28] sm:$0xff]
    %v5699 = vld [vmem:[%s5692 + $0x30] sm:$0xff]
    %v5700 = vld [vmem:[%s5692 + $0x38] sm:$0xff]
    %v5701 = vld [vmem:[%s5692 + $0x40] sm:$0xff]
    %v5702 = vld [vmem:[%s5692 + $0x48] sm:$0xff]
    %v5703 = vld [vmem:[%s5692 + $0x50] sm:$0xff]
    %v5704 = vld [vmem:[%s5692 + $0x58] sm:$0xff]
    %v5705 = vld [vmem:[%s5692 + $0x60] sm:$0xff]
    %v5706 = vld [vmem:[%s5692 + $0x68] sm:$0xff]
    %v5707 = vld [vmem:[%s5692 + $0x70] sm:$0xff]
    %v5708 = vld [vmem:[%s5692 + $0x78] sm:$0xff]
    %v5709 = vld [vmem:[%s5692 + $0x80] sm:$0xff]
    %v5710 = vld [vmem:[%s5692 + $0x88] sm:$0xff]
    %v5711 = vld [vmem:[%s5692 + $0x90] sm:$0xff]
    %v5712 = vld [vmem:[%s5692 + $0x98] sm:$0xff]
    %v5713 = vld [vmem:[%s5692 + $0xa0] sm:$0xff]
    %v5714 = vld [vmem:[%s5692 + $0xa8] sm:$0xff]
    %v5715 = vld [vmem:[%s5692 + $0xb0] sm:$0xff]
    %v5716 = vld [vmem:[%s5692 + $0xb8] sm:$0xff]
    %v5717 = vld [vmem:[%s5692 + $0xc0] sm:$0xff]
    %v5718 = vld [vmem:[%s5692 + $0xc8] sm:$0xff]
    %v5719 = vld [vmem:[%s5692 + $0xd0] sm:$0xff]
    %v5720 = vld [vmem:[%s5692 + $0xd8] sm:$0xff]
    %v5721 = vld [vmem:[%s5692 + $0xe0] sm:$0xff]
    %v5722 = vld [vmem:[%s5692 + $0xe8] sm:$0xff]
    %v5723 = vld [vmem:[%s5692 + $0xf0] sm:$0xff]
    %v5724 = vld [vmem:[%s5692 + $0xf8] sm:$0xff]
    %v5725 = vld [vmem:[%s5692 + $0x100] sm:$0xff]
    %v5726 = vld [vmem:[%s5692 + $0x108] sm:$0xff]
    %v5727 = vld [vmem:[%s5692 + $0x110] sm:$0xff]
    %v5728 = vld [vmem:[%s5692 + $0x118] sm:$0xff]
    %v5729 = vld [vmem:[%s5692 + $0x120] sm:$0xff]
    %v5730 = vld [vmem:[%s5692 + $0x128] sm:$0xff]
    %v5731 = vld [vmem:[%s5692 + $0x130] sm:$0xff]
    %v5732 = vld [vmem:[%s5692 + $0x138] sm:$0xff]
    %v5733 = vld [vmem:[%s5692 + $0x140] sm:$0xff]
    %v5734 = vld [vmem:[%s5692 + $0x148] sm:$0xff]
    %v5735 = vld [vmem:[%s5692 + $0x150] sm:$0xff]
    %v5736 = vld [vmem:[%s5692 + $0x158] sm:$0xff]
    %v5737 = vld [vmem:[%s5692 + $0x160] sm:$0xff]
    %v5738 = vld [vmem:[%s5692 + $0x168] sm:$0xff]
    %v5739 = vld [vmem:[%s5692 + $0x170] sm:$0xff]
    %v5740 = vld [vmem:[%s5692 + $0x178] sm:$0xff]
    %v5741 = vld [vmem:[%s5692 + $0x180] sm:$0xff]
    %v5742 = vld [vmem:[%s5692 + $0x188] sm:$0xff]
    %v5743 = vld [vmem:[%s5692 + $0x190] sm:$0xff]
    %v5744 = vld [vmem:[%s5692 + $0x198] sm:$0xff]
    %v5745 = vld [vmem:[%s5692 + $0x1a0] sm:$0xff]
    %v5746 = vld [vmem:[%s5692 + $0x1a8] sm:$0xff]
    %v5747 = vld [vmem:[%s5692 + $0x1b0] sm:$0xff]
    %v5748 = vld [vmem:[%s5692 + $0x1b8] sm:$0xff]
    %v5749 = vld [vmem:[%s5692 + $0x1c0] sm:$0xff]
    %v5750 = vld [vmem:[%s5692 + $0x1c8] sm:$0xff]
    %v5751 = vld [vmem:[%s5692 + $0x1d0] sm:$0xff]
    %v5752 = vld [vmem:[%s5692 + $0x1d8] sm:$0xff]
    %v5753 = vld [vmem:[%s5692 + $0x1e0] sm:$0xff]
    %v5754 = vld [vmem:[%s5692 + $0x1e8] sm:$0xff]
    %v5755 = vld [vmem:[%s5692 + $0x1f0] sm:$0xff]
    %v5756 = vld [vmem:[%s5692 + $0x1f8] sm:$0xff]
    %v5757 = vld [vmem:[%s5692 + $0x200] sm:$0xff]
    %v5758 = vld [vmem:[%s5692 + $0x208] sm:$0xff]
    %v5759 = vld [vmem:[%s5692 + $0x210] sm:$0xff]
    %v5760 = vld [vmem:[%s5692 + $0x218] sm:$0xff]
    %v5761 = vld [vmem:[%s5692 + $0x220] sm:$0xff]
    %v5762 = vld [vmem:[%s5692 + $0x228] sm:$0xff]
    %v5763 = vld [vmem:[%s5692 + $0x230] sm:$0xff]
    %v5764 = vld [vmem:[%s5692 + $0x238] sm:$0xff]
    %v5765 = vld [vmem:[%s5692 + $0x240] sm:$0xff]
    %v5766 = vld [vmem:[%s5692 + $0x248] sm:$0xff]
    %v5767 = vld [vmem:[%s5692 + $0x250] sm:$0xff]
    %v5768 = vld [vmem:[%s5692 + $0x258] sm:$0xff]
    %v5769 = vld [vmem:[%s5692 + $0x260] sm:$0xff]
    %v5770 = vld [vmem:[%s5692 + $0x268] sm:$0xff]
    %v5771 = vld [vmem:[%s5692 + $0x270] sm:$0xff]
    %v5772 = vld [vmem:[%s5692 + $0x278] sm:$0xff]
    %v5773 = vld [vmem:[%s5692 + $0x280] sm:$0xff]
    %v5774 = vld [vmem:[%s5692 + $0x288] sm:$0xff]
    %v5775 = vld [vmem:[%s5692 + $0x290] sm:$0xff]
    %v5776 = vld [vmem:[%s5692 + $0x298] sm:$0xff]
    %v5777 = vld [vmem:[%s5692 + $0x2a0] sm:$0xff]
    %v5778 = vld [vmem:[%s5692 + $0x2a8] sm:$0xff]
    %v5779 = vld [vmem:[%s5692 + $0x2b0] sm:$0xff]
    %v5780 = vld [vmem:[%s5692 + $0x2b8] sm:$0xff]
    %v5781 = vld [vmem:[%s5692 + $0x2c0] sm:$0xff]
    %v5782 = vld [vmem:[%s5692 + $0x2c8] sm:$0xff]
    %v5783 = vld [vmem:[%s5692 + $0x2d0] sm:$0xff]
    %v5784 = vld [vmem:[%s5692 + $0x2d8] sm:$0xff]
    %v5785 = vld [vmem:[%s5692 + $0x2e0] sm:$0xff]
    %v5786 = vld [vmem:[%s5692 + $0x2e8] sm:$0xff]
    %v5787 = vld [vmem:[%s5692 + $0x2f0] sm:$0xff]
    %v5788 = vld [vmem:[%s5692 + $0x2f8] sm:$0xff]
    %v5789 = vld [vmem:[%s5692 + $0x300] sm:$0xff]
    %v5790 = vld [vmem:[%s5692 + $0x308] sm:$0xff]
    %v5791 = vld [vmem:[%s5692 + $0x310] sm:$0xff]
    %v5792 = vld [vmem:[%s5692 + $0x318] sm:$0xff]
    %v5793 = vld [vmem:[%s5692 + $0x320] sm:$0xff]
    %v5794 = vld [vmem:[%s5692 + $0x328] sm:$0xff]
    %v5795 = vld [vmem:[%s5692 + $0x330] sm:$0xff]
    %v5796 = vld [vmem:[%s5692 + $0x338] sm:$0xff]
    %v5797 = vld [vmem:[%s5692 + $0x340] sm:$0xff]
    %v5798 = vld [vmem:[%s5692 + $0x348] sm:$0xff]
    %v5799 = vld [vmem:[%s5692 + $0x350] sm:$0xff]
    %v5800 = vld [vmem:[%s5692 + $0x358] sm:$0xff]
    %v5801 = vld [vmem:[%s5692 + $0x360] sm:$0xff]
    %v5802 = vld [vmem:[%s5692 + $0x368] sm:$0xff]
    %v5803 = vld [vmem:[%s5692 + $0x370] sm:$0xff]
    %v5804 = vld [vmem:[%s5692 + $0x378] sm:$0xff]
    %v5805 = vld [vmem:[%s5692 + $0x380] sm:$0xff]
    %v5806 = vld [vmem:[%s5692 + $0x388] sm:$0xff]
    %v5807 = vld [vmem:[%s5692 + $0x390] sm:$0xff]
    %v5808 = vld [vmem:[%s5692 + $0x398] sm:$0xff]
    %v5809 = vld [vmem:[%s5692 + $0x3a0] sm:$0xff]
    %v5810 = vld [vmem:[%s5692 + $0x3a8] sm:$0xff]
    %v5811 = vld [vmem:[%s5692 + $0x3b0] sm:$0xff]
    %v5812 = vld [vmem:[%s5692 + $0x3b8] sm:$0xff]
    %v5813 = vld [vmem:[%s5692 + $0x3c0] sm:$0xff]
    %v5814 = vld [vmem:[%s5692 + $0x3c8] sm:$0xff]
    %v5815 = vld [vmem:[%s5692 + $0x3d0] sm:$0xff]
    %v5816 = vld [vmem:[%s5692 + $0x3d8] sm:$0xff]
    %v5817 = vld [vmem:[%s5692 + $0x3e0] sm:$0xff]
    %v5818 = vld [vmem:[%s5692 + $0x3e8] sm:$0xff]
    %v5819 = vld [vmem:[%s5692 + $0x3f0] sm:$0xff]
    %v5820 = vld [vmem:[%s5692 + $0x3f8] sm:$0xff]
    %v5821 = vld [vmem:[%s5692 + $0x400] sm:$0xff]
    %v5822 = vld [vmem:[%s5692 + $0x408] sm:$0xff]
    %v5823 = vld [vmem:[%s5692 + $0x410] sm:$0xff]
    %v5824 = vld [vmem:[%s5692 + $0x418] sm:$0xff]
    %v5825 = vld [vmem:[%s5692 + $0x420] sm:$0xff]
    %v5826 = vld [vmem:[%s5692 + $0x428] sm:$0xff]
    %v5827 = vld [vmem:[%s5692 + $0x430] sm:$0xff]
    %v5828 = vld [vmem:[%s5692 + $0x438] sm:$0xff]
    %v5829 = vld [vmem:[%s5692 + $0x440] sm:$0xff]
    %v5830 = vld [vmem:[%s5692 + $0x448] sm:$0xff]
    %v5831 = vld [vmem:[%s5692 + $0x450] sm:$0xff]
    %v5832 = vld [vmem:[%s5692 + $0x458] sm:$0xff]
    %v5833 = vld [vmem:[%s5692 + $0x460] sm:$0xff]
    %v5834 = vld [vmem:[%s5692 + $0x468] sm:$0xff]
    %v5835 = vld [vmem:[%s5692 + $0x470] sm:$0xff]
    %v5836 = vld [vmem:[%s5692 + $0x478] sm:$0xff]
    %s5837 = scalar_lea.vmem %s12, 16
    %v5838 = vld [vmem:[%s5837] sm:$0xff]
    %v5839 = vld [vmem:[%s5837 + $0x8] sm:$0xff]
    %v5842 = vlaneseq
    %v5843 = vshrl.u32 %v5842, 7
    %v5844 = vsub.s32 0, %v5843
    %v5845 = vrot.slane %v5838, %v5844
    %v5846 = vlaneseq
    %v5847 = vshrl.u32 %v5846, 7
    %v5848 = vsub.s32 1, %v5847
    %v5849 = vrot.slane %v5838, %v5848
    %v5850 = vlaneseq
    %v5851 = vshrl.u32 %v5850, 7
    %v5852 = vsub.s32 2, %v5851
    %v5853 = vrot.slane %v5838, %v5852
    %v5854 = vlaneseq
    %v5855 = vshrl.u32 %v5854, 7
    %v5856 = vsub.s32 3, %v5855
    %v5857 = vrot.slane %v5838, %v5856
    %v5858 = vlaneseq
    %v5859 = vshrl.u32 %v5858, 7
    %v5860 = vsub.s32 4, %v5859
    %v5861 = vrot.slane %v5838, %v5860
    %v5862 = vlaneseq
    %v5863 = vshrl.u32 %v5862, 7
    %v5864 = vsub.s32 5, %v5863
    %v5865 = vrot.slane %v5838, %v5864
    %v5866 = vlaneseq
    %v5867 = vshrl.u32 %v5866, 7
    %v5868 = vsub.s32 6, %v5867
    %v5869 = vrot.slane %v5838, %v5868
    %v5870 = vlaneseq
    %v5871 = vshrl.u32 %v5870, 7
    %v5872 = vsub.s32 7, %v5871
    %v5873 = vrot.slane %v5838, %v5872
    %v5874 = vlaneseq
    %v5875 = vshrl.u32 %v5874, 7
    %v5876 = vsub.s32 0, %v5875
    %v5877 = vrot.slane %v5839, %v5876
    %v5878 = vlaneseq
    %v5879 = vshrl.u32 %v5878, 7
    %v5880 = vsub.s32 1, %v5879
    %v5881 = vrot.slane %v5839, %v5880
    %v5882 = vlaneseq
    %v5883 = vshrl.u32 %v5882, 7
    %v5884 = vsub.s32 2, %v5883
    %v5885 = vrot.slane %v5839, %v5884
    %v5886 = vlaneseq
    %v5887 = vshrl.u32 %v5886, 7
    %v5888 = vsub.s32 3, %v5887
    %v5889 = vrot.slane %v5839, %v5888
    %v5890 = vlaneseq
    %v5891 = vshrl.u32 %v5890, 7
    %v5892 = vsub.s32 4, %v5891
    %v5893 = vrot.slane %v5839, %v5892
    %v5894 = vlaneseq
    %v5895 = vshrl.u32 %v5894, 7
    %v5896 = vsub.s32 5, %v5895
    %v5897 = vrot.slane %v5839, %v5896
    %v5898 = vlaneseq
    %v5899 = vshrl.u32 %v5898, 7
    %v5900 = vsub.s32 6, %v5899
    %v5901 = vrot.slane %v5839, %v5900
    %v5902 = vlaneseq
    %v5903 = vshrl.u32 %v5902, 7
    %v5904 = vsub.s32 7, %v5903
    %v5905 = vrot.slane %v5839, %v5904
    %v6066 = vunpack.c.l.b16 %v5693
    %v6067 = vunpack.c.h.b16 %v5693
    %v6068 = vunpack.c.l.b16 %v5694
    %v6069 = vunpack.c.h.b16 %v5694
    %v6070 = vunpack.c.l.b16 %v5695
    %v6071 = vunpack.c.h.b16 %v5695
    %v6072 = vunpack.c.l.b16 %v5696
    %v6073 = vunpack.c.h.b16 %v5696
    %v6074 = vunpack.c.l.b16 %v5697
    %v6075 = vunpack.c.h.b16 %v5697
    %v6076 = vunpack.c.l.b16 %v5698
    %v6077 = vunpack.c.h.b16 %v5698
    %v6078 = vunpack.c.l.b16 %v5699
    %v6079 = vunpack.c.h.b16 %v5699
    %v6080 = vunpack.c.l.b16 %v5700
    %v6081 = vunpack.c.h.b16 %v5700
    %v6082 = vunpack.c.l.b16 %v5701
    %v6083 = vunpack.c.h.b16 %v5701
    %v6084 = vunpack.c.l.b16 %v5702
    %v6085 = vunpack.c.h.b16 %v5702
    %v6086 = vunpack.c.l.b16 %v5703
    %v6087 = vunpack.c.h.b16 %v5703
    %v6088 = vunpack.c.l.b16 %v5704
    %v6089 = vunpack.c.h.b16 %v5704
    %v6090 = vunpack.c.l.b16 %v5705
    %v6091 = vunpack.c.h.b16 %v5705
    %v6092 = vunpack.c.l.b16 %v5706
    %v6093 = vunpack.c.h.b16 %v5706
    %v6094 = vunpack.c.l.b16 %v5707
    %v6095 = vunpack.c.h.b16 %v5707
    %v6096 = vunpack.c.l.b16 %v5708
    %v6097 = vunpack.c.h.b16 %v5708
    %v6098 = vunpack.c.l.b16 %v5709
    %v6099 = vunpack.c.h.b16 %v5709
    %v6100 = vunpack.c.l.b16 %v5710
    %v6101 = vunpack.c.h.b16 %v5710
    %v6102 = vunpack.c.l.b16 %v5711
    %v6103 = vunpack.c.h.b16 %v5711
    %v6104 = vunpack.c.l.b16 %v5712
    %v6105 = vunpack.c.h.b16 %v5712
    %v6106 = vunpack.c.l.b16 %v5713
    %v6107 = vunpack.c.h.b16 %v5713
    %v6108 = vunpack.c.l.b16 %v5714
    %v6109 = vunpack.c.h.b16 %v5714
    %v6110 = vunpack.c.l.b16 %v5715
    %v6111 = vunpack.c.h.b16 %v5715
    %v6112 = vunpack.c.l.b16 %v5716
    %v6113 = vunpack.c.h.b16 %v5716
    %v6114 = vunpack.c.l.b16 %v5717
    %v6115 = vunpack.c.h.b16 %v5717
    %v6116 = vunpack.c.l.b16 %v5718
    %v6117 = vunpack.c.h.b16 %v5718
    %v6118 = vunpack.c.l.b16 %v5719
    %v6119 = vunpack.c.h.b16 %v5719
    %v6120 = vunpack.c.l.b16 %v5720
    %v6121 = vunpack.c.h.b16 %v5720
    %v6122 = vunpack.c.l.b16 %v5721
    %v6123 = vunpack.c.h.b16 %v5721
    %v6124 = vunpack.c.l.b16 %v5722
    %v6125 = vunpack.c.h.b16 %v5722
    %v6126 = vunpack.c.l.b16 %v5723
    %v6127 = vunpack.c.h.b16 %v5723
    %v6128 = vunpack.c.l.b16 %v5724
    %v6129 = vunpack.c.h.b16 %v5724
    %v6130 = vunpack.c.l.b16 %v5725
    %v6131 = vunpack.c.h.b16 %v5725
    %v6132 = vunpack.c.l.b16 %v5726
    %v6133 = vunpack.c.h.b16 %v5726
    %v6134 = vunpack.c.l.b16 %v5727
    %v6135 = vunpack.c.h.b16 %v5727
    %v6136 = vunpack.c.l.b16 %v5728
    %v6137 = vunpack.c.h.b16 %v5728
    %v6138 = vunpack.c.l.b16 %v5729
    %v6139 = vunpack.c.h.b16 %v5729
    %v6140 = vunpack.c.l.b16 %v5730
    %v6141 = vunpack.c.h.b16 %v5730
    %v6142 = vunpack.c.l.b16 %v5731
    %v6143 = vunpack.c.h.b16 %v5731
    %v6144 = vunpack.c.l.b16 %v5732
    %v6145 = vunpack.c.h.b16 %v5732
    %v6146 = vunpack.c.l.b16 %v5733
    %v6147 = vunpack.c.h.b16 %v5733
    %v6148 = vunpack.c.l.b16 %v5734
    %v6149 = vunpack.c.h.b16 %v5734
    %v6150 = vunpack.c.l.b16 %v5735
    %v6151 = vunpack.c.h.b16 %v5735
    %v6152 = vunpack.c.l.b16 %v5736
    %v6153 = vunpack.c.h.b16 %v5736
    %v6154 = vunpack.c.l.b16 %v5737
    %v6155 = vunpack.c.h.b16 %v5737
    %v6156 = vunpack.c.l.b16 %v5738
    %v6157 = vunpack.c.h.b16 %v5738
    %v6158 = vunpack.c.l.b16 %v5739
    %v6159 = vunpack.c.h.b16 %v5739
    %v6160 = vunpack.c.l.b16 %v5740
    %v6161 = vunpack.c.h.b16 %v5740
    %v6162 = vunpack.c.l.b16 %v5741
    %v6163 = vunpack.c.h.b16 %v5741
    %v6164 = vunpack.c.l.b16 %v5742
    %v6165 = vunpack.c.h.b16 %v5742
    %v6166 = vunpack.c.l.b16 %v5743
    %v6167 = vunpack.c.h.b16 %v5743
    %v6168 = vunpack.c.l.b16 %v5744
    %v6169 = vunpack.c.h.b16 %v5744
    %v6170 = vunpack.c.l.b16 %v5745
    %v6171 = vunpack.c.h.b16 %v5745
    %v6172 = vunpack.c.l.b16 %v5746
    %v6173 = vunpack.c.h.b16 %v5746
    %v6174 = vunpack.c.l.b16 %v5747
    %v6175 = vunpack.c.h.b16 %v5747
    %v6176 = vunpack.c.l.b16 %v5748
    %v6177 = vunpack.c.h.b16 %v5748
    %v6178 = vunpack.c.l.b16 %v5749
    %v6179 = vunpack.c.h.b16 %v5749
    %v6180 = vunpack.c.l.b16 %v5750
    %v6181 = vunpack.c.h.b16 %v5750
    %v6182 = vunpack.c.l.b16 %v5751
    %v6183 = vunpack.c.h.b16 %v5751
    %v6184 = vunpack.c.l.b16 %v5752
    %v6185 = vunpack.c.h.b16 %v5752
    %v6186 = vunpack.c.l.b16 %v5753
    %v6187 = vunpack.c.h.b16 %v5753
    %v6188 = vunpack.c.l.b16 %v5754
    %v6189 = vunpack.c.h.b16 %v5754
    %v6190 = vunpack.c.l.b16 %v5755
    %v6191 = vunpack.c.h.b16 %v5755
    %v6192 = vunpack.c.l.b16 %v5756
    %v6193 = vunpack.c.h.b16 %v5756
    %v6194 = vunpack.c.l.b16 %v5757
    %v6195 = vunpack.c.h.b16 %v5757
    %v6196 = vunpack.c.l.b16 %v5758
    %v6197 = vunpack.c.h.b16 %v5758
    %v6198 = vunpack.c.l.b16 %v5759
    %v6199 = vunpack.c.h.b16 %v5759
    %v6200 = vunpack.c.l.b16 %v5760
    %v6201 = vunpack.c.h.b16 %v5760
    %v6202 = vunpack.c.l.b16 %v5761
    %v6203 = vunpack.c.h.b16 %v5761
    %v6204 = vunpack.c.l.b16 %v5762
    %v6205 = vunpack.c.h.b16 %v5762
    %v6206 = vunpack.c.l.b16 %v5763
    %v6207 = vunpack.c.h.b16 %v5763
    %v6208 = vunpack.c.l.b16 %v5764
    %v6209 = vunpack.c.h.b16 %v5764
    %v6210 = vunpack.c.l.b16 %v5765
    %v6211 = vunpack.c.h.b16 %v5765
    %v6212 = vunpack.c.l.b16 %v5766
    %v6213 = vunpack.c.h.b16 %v5766
    %v6214 = vunpack.c.l.b16 %v5767
    %v6215 = vunpack.c.h.b16 %v5767
    %v6216 = vunpack.c.l.b16 %v5768
    %v6217 = vunpack.c.h.b16 %v5768
    %v6218 = vunpack.c.l.b16 %v5769
    %v6219 = vunpack.c.h.b16 %v5769
    %v6220 = vunpack.c.l.b16 %v5770
    %v6221 = vunpack.c.h.b16 %v5770
    %v6222 = vunpack.c.l.b16 %v5771
    %v6223 = vunpack.c.h.b16 %v5771
    %v6224 = vunpack.c.l.b16 %v5772
    %v6225 = vunpack.c.h.b16 %v5772
    %v6226 = vunpack.c.l.b16 %v5773
    %v6227 = vunpack.c.h.b16 %v5773
    %v6228 = vunpack.c.l.b16 %v5774
    %v6229 = vunpack.c.h.b16 %v5774
    %v6230 = vunpack.c.l.b16 %v5775
    %v6231 = vunpack.c.h.b16 %v5775
    %v6232 = vunpack.c.l.b16 %v5776
    %v6233 = vunpack.c.h.b16 %v5776
    %v6234 = vunpack.c.l.b16 %v5777
    %v6235 = vunpack.c.h.b16 %v5777
    %v6236 = vunpack.c.l.b16 %v5778
    %v6237 = vunpack.c.h.b16 %v5778
    %v6238 = vunpack.c.l.b16 %v5779
    %v6239 = vunpack.c.h.b16 %v5779
    %v6240 = vunpack.c.l.b16 %v5780
    %v6241 = vunpack.c.h.b16 %v5780
    %v6242 = vunpack.c.l.b16 %v5781
    %v6243 = vunpack.c.h.b16 %v5781
    %v6244 = vunpack.c.l.b16 %v5782
    %v6245 = vunpack.c.h.b16 %v5782
    %v6246 = vunpack.c.l.b16 %v5783
    %v6247 = vunpack.c.h.b16 %v5783
    %v6248 = vunpack.c.l.b16 %v5784
    %v6249 = vunpack.c.h.b16 %v5784
    %v6250 = vunpack.c.l.b16 %v5785
    %v6251 = vunpack.c.h.b16 %v5785
    %v6252 = vunpack.c.l.b16 %v5786
    %v6253 = vunpack.c.h.b16 %v5786
    %v6254 = vunpack.c.l.b16 %v5787
    %v6255 = vunpack.c.h.b16 %v5787
    %v6256 = vunpack.c.l.b16 %v5788
    %v6257 = vunpack.c.h.b16 %v5788
    %v6258 = vunpack.c.l.b16 %v5789
    %v6259 = vunpack.c.h.b16 %v5789
    %v6260 = vunpack.c.l.b16 %v5790
    %v6261 = vunpack.c.h.b16 %v5790
    %v6262 = vunpack.c.l.b16 %v5791
    %v6263 = vunpack.c.h.b16 %v5791
    %v6264 = vunpack.c.l.b16 %v5792
    %v6265 = vunpack.c.h.b16 %v5792
    %v6266 = vunpack.c.l.b16 %v5793
    %v6267 = vunpack.c.h.b16 %v5793
    %v6268 = vunpack.c.l.b16 %v5794
    %v6269 = vunpack.c.h.b16 %v5794
    %v6270 = vunpack.c.l.b16 %v5795
    %v6271 = vunpack.c.h.b16 %v5795
    %v6272 = vunpack.c.l.b16 %v5796
    %v6273 = vunpack.c.h.b16 %v5796
    %v6274 = vunpack.c.l.b16 %v5797
    %v6275 = vunpack.c.h.b16 %v5797
    %v6276 = vunpack.c.l.b16 %v5798
    %v6277 = vunpack.c.h.b16 %v5798
    %v6278 = vunpack.c.l.b16 %v5799
    %v6279 = vunpack.c.h.b16 %v5799
    %v6280 = vunpack.c.l.b16 %v5800
    %v6281 = vunpack.c.h.b16 %v5800
    %v6282 = vunpack.c.l.b16 %v5801
    %v6283 = vunpack.c.h.b16 %v5801
    %v6284 = vunpack.c.l.b16 %v5802
    %v6285 = vunpack.c.h.b16 %v5802
    %v6286 = vunpack.c.l.b16 %v5803
    %v6287 = vunpack.c.h.b16 %v5803
    %v6288 = vunpack.c.l.b16 %v5804
    %v6289 = vunpack.c.h.b16 %v5804
    %v6290 = vunpack.c.l.b16 %v5805
    %v6291 = vunpack.c.h.b16 %v5805
    %v6292 = vunpack.c.l.b16 %v5806
    %v6293 = vunpack.c.h.b16 %v5806
    %v6294 = vunpack.c.l.b16 %v5807
    %v6295 = vunpack.c.h.b16 %v5807
    %v6296 = vunpack.c.l.b16 %v5808
    %v6297 = vunpack.c.h.b16 %v5808
    %v6298 = vunpack.c.l.b16 %v5809
    %v6299 = vunpack.c.h.b16 %v5809
    %v6300 = vunpack.c.l.b16 %v5810
    %v6301 = vunpack.c.h.b16 %v5810
    %v6302 = vunpack.c.l.b16 %v5811
    %v6303 = vunpack.c.h.b16 %v5811
    %v6304 = vunpack.c.l.b16 %v5812
    %v6305 = vunpack.c.h.b16 %v5812
    %v6306 = vunpack.c.l.b16 %v5813
    %v6307 = vunpack.c.h.b16 %v5813
    %v6308 = vunpack.c.l.b16 %v5814
    %v6309 = vunpack.c.h.b16 %v5814
    %v6310 = vunpack.c.l.b16 %v5815
    %v6311 = vunpack.c.h.b16 %v5815
    %v6312 = vunpack.c.l.b16 %v5816
    %v6313 = vunpack.c.h.b16 %v5816
    %v6314 = vunpack.c.l.b16 %v5817
    %v6315 = vunpack.c.h.b16 %v5817
    %v6316 = vunpack.c.l.b16 %v5818
    %v6317 = vunpack.c.h.b16 %v5818
    %v6318 = vunpack.c.l.b16 %v5819
    %v6319 = vunpack.c.h.b16 %v5819
    %v6320 = vunpack.c.l.b16 %v5820
    %v6321 = vunpack.c.h.b16 %v5820
    %v6322 = vunpack.c.l.b16 %v5821
    %v6323 = vunpack.c.h.b16 %v5821
    %v6324 = vunpack.c.l.b16 %v5822
    %v6325 = vunpack.c.h.b16 %v5822
    %v6326 = vunpack.c.l.b16 %v5823
    %v6327 = vunpack.c.h.b16 %v5823
    %v6328 = vunpack.c.l.b16 %v5824
    %v6329 = vunpack.c.h.b16 %v5824
    %v6330 = vunpack.c.l.b16 %v5825
    %v6331 = vunpack.c.h.b16 %v5825
    %v6332 = vunpack.c.l.b16 %v5826
    %v6333 = vunpack.c.h.b16 %v5826
    %v6334 = vunpack.c.l.b16 %v5827
    %v6335 = vunpack.c.h.b16 %v5827
    %v6336 = vunpack.c.l.b16 %v5828
    %v6337 = vunpack.c.h.b16 %v5828
    %v6338 = vunpack.c.l.b16 %v5829
    %v6339 = vunpack.c.h.b16 %v5829
    %v6340 = vunpack.c.l.b16 %v5830
    %v6341 = vunpack.c.h.b16 %v5830
    %v6342 = vunpack.c.l.b16 %v5831
    %v6343 = vunpack.c.h.b16 %v5831
    %v6344 = vunpack.c.l.b16 %v5832
    %v6345 = vunpack.c.h.b16 %v5832
    %v6346 = vunpack.c.l.b16 %v5833
    %v6347 = vunpack.c.h.b16 %v5833
    %v6348 = vunpack.c.l.b16 %v5834
    %v6349 = vunpack.c.h.b16 %v5834
    %v6350 = vunpack.c.l.b16 %v5835
    %v6351 = vunpack.c.h.b16 %v5835
    %v6352 = vunpack.c.l.b16 %v5836
    %v6353 = vunpack.c.h.b16 %v5836
    %v6354 = vpack.c.b16 %v6082, %v6066
    %v6355 = vpack.c.b16 %v6083, %v6067
    %v6356 = vpack.c.b16 %v6084, %v6068
    %v6357 = vpack.c.b16 %v6085, %v6069
    %v6358 = vpack.c.b16 %v6086, %v6070
    %v6359 = vpack.c.b16 %v6087, %v6071
    %v6360 = vpack.c.b16 %v6088, %v6072
    %v6361 = vpack.c.b16 %v6089, %v6073
    %v6362 = vpack.c.b16 %v6090, %v6074
    %v6363 = vpack.c.b16 %v6091, %v6075
    %v6364 = vpack.c.b16 %v6092, %v6076
    %v6365 = vpack.c.b16 %v6093, %v6077
    %v6366 = vpack.c.b16 %v6094, %v6078
    %v6367 = vpack.c.b16 %v6095, %v6079
    %v6368 = vpack.c.b16 %v6096, %v6080
    %v6369 = vpack.c.b16 %v6097, %v6081
    %v6370 = vpack.c.b16 %v6114, %v6098
    %v6371 = vpack.c.b16 %v6115, %v6099
    %v6372 = vpack.c.b16 %v6116, %v6100
    %v6373 = vpack.c.b16 %v6117, %v6101
    %v6374 = vpack.c.b16 %v6118, %v6102
    %v6375 = vpack.c.b16 %v6119, %v6103
    %v6376 = vpack.c.b16 %v6120, %v6104
    %v6377 = vpack.c.b16 %v6121, %v6105
    %v6378 = vpack.c.b16 %v6122, %v6106
    %v6379 = vpack.c.b16 %v6123, %v6107
    %v6380 = vpack.c.b16 %v6124, %v6108
    %v6381 = vpack.c.b16 %v6125, %v6109
    %v6382 = vpack.c.b16 %v6126, %v6110
    %v6383 = vpack.c.b16 %v6127, %v6111
    %v6384 = vpack.c.b16 %v6128, %v6112
    %v6385 = vpack.c.b16 %v6129, %v6113
    %v6386 = vpack.c.b16 %v6146, %v6130
    %v6387 = vpack.c.b16 %v6147, %v6131
    %v6388 = vpack.c.b16 %v6148, %v6132
    %v6389 = vpack.c.b16 %v6149, %v6133
    %v6390 = vpack.c.b16 %v6150, %v6134
    %v6391 = vpack.c.b16 %v6151, %v6135
    %v6392 = vpack.c.b16 %v6152, %v6136
    %v6393 = vpack.c.b16 %v6153, %v6137
    %v6394 = vpack.c.b16 %v6154, %v6138
    %v6395 = vpack.c.b16 %v6155, %v6139
    %v6396 = vpack.c.b16 %v6156, %v6140
    %v6397 = vpack.c.b16 %v6157, %v6141
    %v6398 = vpack.c.b16 %v6158, %v6142
    %v6399 = vpack.c.b16 %v6159, %v6143
    %v6400 = vpack.c.b16 %v6160, %v6144
    %v6401 = vpack.c.b16 %v6161, %v6145
    %v6402 = vpack.c.b16 %v6178, %v6162
    %v6403 = vpack.c.b16 %v6179, %v6163
    %v6404 = vpack.c.b16 %v6180, %v6164
    %v6405 = vpack.c.b16 %v6181, %v6165
    %v6406 = vpack.c.b16 %v6182, %v6166
    %v6407 = vpack.c.b16 %v6183, %v6167
    %v6408 = vpack.c.b16 %v6184, %v6168
    %v6409 = vpack.c.b16 %v6185, %v6169
    %v6410 = vpack.c.b16 %v6186, %v6170
    %v6411 = vpack.c.b16 %v6187, %v6171
    %v6412 = vpack.c.b16 %v6188, %v6172
    %v6413 = vpack.c.b16 %v6189, %v6173
    %v6414 = vpack.c.b16 %v6190, %v6174
    %v6415 = vpack.c.b16 %v6191, %v6175
    %v6416 = vpack.c.b16 %v6192, %v6176
    %v6417 = vpack.c.b16 %v6193, %v6177
    %v6418 = vpack.c.b16 %v6210, %v6194
    %v6419 = vpack.c.b16 %v6211, %v6195
    %v6420 = vpack.c.b16 %v6212, %v6196
    %v6421 = vpack.c.b16 %v6213, %v6197
    %v6422 = vpack.c.b16 %v6214, %v6198
    %v6423 = vpack.c.b16 %v6215, %v6199
    %v6424 = vpack.c.b16 %v6216, %v6200
    %v6425 = vpack.c.b16 %v6217, %v6201
    %v6426 = vpack.c.b16 %v6218, %v6202
    %v6427 = vpack.c.b16 %v6219, %v6203
    %v6428 = vpack.c.b16 %v6220, %v6204
    %v6429 = vpack.c.b16 %v6221, %v6205
    %v6430 = vpack.c.b16 %v6222, %v6206
    %v6431 = vpack.c.b16 %v6223, %v6207
    %v6432 = vpack.c.b16 %v6224, %v6208
    %v6433 = vpack.c.b16 %v6225, %v6209
    %v6434 = vpack.c.b16 %v6242, %v6226
    %v6435 = vpack.c.b16 %v6243, %v6227
    %v6436 = vpack.c.b16 %v6244, %v6228
    %v6437 = vpack.c.b16 %v6245, %v6229
    %v6438 = vpack.c.b16 %v6246, %v6230
    %v6439 = vpack.c.b16 %v6247, %v6231
    %v6440 = vpack.c.b16 %v6248, %v6232
    %v6441 = vpack.c.b16 %v6249, %v6233
    %v6442 = vpack.c.b16 %v6250, %v6234
    %v6443 = vpack.c.b16 %v6251, %v6235
    %v6444 = vpack.c.b16 %v6252, %v6236
    %v6445 = vpack.c.b16 %v6253, %v6237
    %v6446 = vpack.c.b16 %v6254, %v6238
    %v6447 = vpack.c.b16 %v6255, %v6239
    %v6448 = vpack.c.b16 %v6256, %v6240
    %v6449 = vpack.c.b16 %v6257, %v6241
    %v6450 = vpack.c.b16 %v6274, %v6258
    %v6451 = vpack.c.b16 %v6275, %v6259
    %v6452 = vpack.c.b16 %v6276, %v6260
    %v6453 = vpack.c.b16 %v6277, %v6261
    %v6454 = vpack.c.b16 %v6278, %v6262
    %v6455 = vpack.c.b16 %v6279, %v6263
    %v6456 = vpack.c.b16 %v6280, %v6264
    %v6457 = vpack.c.b16 %v6281, %v6265
    %v6458 = vpack.c.b16 %v6282, %v6266
    %v6459 = vpack.c.b16 %v6283, %v6267
    %v6460 = vpack.c.b16 %v6284, %v6268
    %v6461 = vpack.c.b16 %v6285, %v6269
    %v6462 = vpack.c.b16 %v6286, %v6270
    %v6463 = vpack.c.b16 %v6287, %v6271
    %v6464 = vpack.c.b16 %v6288, %v6272
    %v6465 = vpack.c.b16 %v6289, %v6273
    %v6466 = vpack.c.b16 %v6306, %v6290
    %v6467 = vpack.c.b16 %v6307, %v6291
    %v6468 = vpack.c.b16 %v6308, %v6292
    %v6469 = vpack.c.b16 %v6309, %v6293
    %v6470 = vpack.c.b16 %v6310, %v6294
    %v6471 = vpack.c.b16 %v6311, %v6295
    %v6472 = vpack.c.b16 %v6312, %v6296
    %v6473 = vpack.c.b16 %v6313, %v6297
    %v6474 = vpack.c.b16 %v6314, %v6298
    %v6475 = vpack.c.b16 %v6315, %v6299
    %v6476 = vpack.c.b16 %v6316, %v6300
    %v6477 = vpack.c.b16 %v6317, %v6301
    %v6478 = vpack.c.b16 %v6318, %v6302
    %v6479 = vpack.c.b16 %v6319, %v6303
    %v6480 = vpack.c.b16 %v6320, %v6304
    %v6481 = vpack.c.b16 %v6321, %v6305
    %v6482 = vpack.c.b16 %v6338, %v6322
    %v6483 = vpack.c.b16 %v6339, %v6323
    %v6484 = vpack.c.b16 %v6340, %v6324
    %v6485 = vpack.c.b16 %v6341, %v6325
    %v6486 = vpack.c.b16 %v6342, %v6326
    %v6487 = vpack.c.b16 %v6343, %v6327
    %v6488 = vpack.c.b16 %v6344, %v6328
    %v6489 = vpack.c.b16 %v6345, %v6329
    %v6490 = vpack.c.b16 %v6346, %v6330
    %v6491 = vpack.c.b16 %v6347, %v6331
    %v6492 = vpack.c.b16 %v6348, %v6332
    %v6493 = vpack.c.b16 %v6349, %v6333
    %v6494 = vpack.c.b16 %v6350, %v6334
    %v6495 = vpack.c.b16 %v6351, %v6335
    %v6496 = vpack.c.b16 %v6352, %v6336
    %v6497 = vpack.c.b16 %v6353, %v6337
    %v6643 = vsel %vm250, %v5691, 0
    %6645 = vmatprep.subr.bf16.mxu0 %v6355
    %6646 = vmatpush1.bf16.msra.mxu0 %v6354
    %6647 = vmatprep.subr.bf16.mxu0 %v6371
    %6648 = vmatpush1.bf16.msra.mxu0 %v6370
    %6649 = vmatprep.subr.bf16.mxu0 %v6387
    %6650 = vmatpush1.bf16.msra.mxu0 %v6386
    %6651 = vmatprep.subr.bf16.mxu0 %v6403
    %6652 = vmatpush1.bf16.msra.mxu0 %v6402
    %6653 = vmatprep.subr.bf16.mxu0 %v6419
    %6654 = vmatpush1.bf16.msra.mxu0 %v6418
    %6655 = vmatprep.subr.bf16.mxu0 %v6435
    %6656 = vmatpush1.bf16.msra.mxu0 %v6434
    %6657 = vmatprep.subr.bf16.mxu0 %v6451
    %6658 = vmatpush1.bf16.msra.mxu0 %v6450
    %6659 = vmatprep.subr.bf16.mxu0 %v6467
    %6660 = vmatpush1.bf16.msra.mxu0 %v6466
    %6661 = vmatprep.subr.bf16.mxu0 %v6483
    %6662 = vmatpush1.bf16.msra.mxu0 %v6482
    %6663 = vmatprep.subr.bf16.mxu0 0
    %6664 = vmatpush1.bf16.msra.mxu0 0
    %6665 = vmatprep.subr.bf16.mxu0 0
    %6666 = vmatpush1.bf16.msra.mxu0 0
    %6667 = vmatprep.subr.bf16.mxu0 0
    %6668 = vmatpush1.bf16.msra.mxu0 0
    %6669 = vmatprep.subr.bf16.mxu0 0
    %6670 = vmatpush1.bf16.msra.mxu0 0
    %6671 = vmatprep.subr.bf16.mxu0 0
    %6672 = vmatpush1.bf16.msra.mxu0 0
    %6673 = vmatprep.subr.bf16.mxu0 0
    %6674 = vmatpush1.bf16.msra.mxu0 0
    %6675 = vmatprep.subr.bf16.mxu0 0
    %6676 = vmatpush1.bf16.msra.mxu0 0
    %6677 = vmatprep.mubr.bf16.mxu0 %v6643
    %6678 = vmatmul.mubr.bf16.gmra.mrb[0].mxu0 %v5690
    %v6679 = vpop.f32.mrb[0].mxu0
    %v6680 = vadd.f32 %v5845, %v6679
    %v6681 = vpop.f32.mrb[0].mxu0
    %v6682 = vadd.f32 %v5849, %v6681
    %v6683 = vpop.f32.mrb[0].mxu0
    %v6684 = vpop.f32.mrb[0].mxu0
    %6685 = vdwg.mxu0
    %6686 = vmatprep.subr.bf16.mxu0 %v6357
    %6687 = vmatpush1.bf16.msra.mxu0 %v6356
    %6688 = vmatprep.subr.bf16.mxu0 %v6373
    %6689 = vmatpush1.bf16.msra.mxu0 %v6372
    %6690 = vmatprep.subr.bf16.mxu0 %v6389
    %6691 = vmatpush1.bf16.msra.mxu0 %v6388
    %6692 = vmatprep.subr.bf16.mxu0 %v6405
    %6693 = vmatpush1.bf16.msra.mxu0 %v6404
    %6694 = vmatprep.subr.bf16.mxu0 %v6421
    %6695 = vmatpush1.bf16.msra.mxu0 %v6420
    %6696 = vmatprep.subr.bf16.mxu0 %v6437
    %6697 = vmatpush1.bf16.msra.mxu0 %v6436
    %6698 = vmatprep.subr.bf16.mxu0 %v6453
    %6699 = vmatpush1.bf16.msra.mxu0 %v6452
    %6700 = vmatprep.subr.bf16.mxu0 %v6469
    %6701 = vmatpush1.bf16.msra.mxu0 %v6468
    %6702 = vmatprep.subr.bf16.mxu0 %v6485
    %6703 = vmatpush1.bf16.msra.mxu0 %v6484
    %6704 = vmatprep.subr.bf16.mxu0 0
    %6705 = vmatpush1.bf16.msra.mxu0 0
    %6706 = vmatprep.subr.bf16.mxu0 0
    %6707 = vmatpush1.bf16.msra.mxu0 0
    %6708 = vmatprep.subr.bf16.mxu0 0
    %6709 = vmatpush1.bf16.msra.mxu0 0
    %6710 = vmatprep.subr.bf16.mxu0 0
    %6711 = vmatpush1.bf16.msra.mxu0 0
    %6712 = vmatprep.subr.bf16.mxu0 0
    %6713 = vmatpush1.bf16.msra.mxu0 0
    %6714 = vmatprep.subr.bf16.mxu0 0
    %6715 = vmatpush1.bf16.msra.mxu0 0
    %6716 = vmatprep.subr.bf16.mxu0 0
    %6717 = vmatpush1.bf16.msra.mxu0 0
    %6718 = vmatprep.mubr.bf16.mxu0 %v6643
    %6719 = vmatmul.mubr.bf16.gmra.mrb[0].mxu0 %v5690
    %v6720 = vpop.f32.mrb[0].mxu0
    %v6721 = vadd.f32 %v5853, %v6720
    %v6722 = vpop.f32.mrb[0].mxu0
    %v6723 = vadd.f32 %v5857, %v6722
    %v6724 = vpop.f32.mrb[0].mxu0
    %v6725 = vpop.f32.mrb[0].mxu0
    %6726 = vdwg.mxu0
    %6727 = vmatprep.subr.bf16.mxu0 %v6359
    %6728 = vmatpush1.bf16.msra.mxu0 %v6358
    %6729 = vmatprep.subr.bf16.mxu0 %v6375
    %6730 = vmatpush1.bf16.msra.mxu0 %v6374
    %6731 = vmatprep.subr.bf16.mxu0 %v6391
    %6732 = vmatpush1.bf16.msra.mxu0 %v6390
    %6733 = vmatprep.subr.bf16.mxu0 %v6407
    %6734 = vmatpush1.bf16.msra.mxu0 %v6406
    %6735 = vmatprep.subr.bf16.mxu0 %v6423
    %6736 = vmatpush1.bf16.msra.mxu0 %v6422
    %6737 = vmatprep.subr.bf16.mxu0 %v6439
    %6738 = vmatpush1.bf16.msra.mxu0 %v6438
    %6739 = vmatprep.subr.bf16.mxu0 %v6455
    %6740 = vmatpush1.bf16.msra.mxu0 %v6454
    %6741 = vmatprep.subr.bf16.mxu0 %v6471
    %6742 = vmatpush1.bf16.msra.mxu0 %v6470
    %6743 = vmatprep.subr.bf16.mxu0 %v6487
    %6744 = vmatpush1.bf16.msra.mxu0 %v6486
    %6745 = vmatprep.subr.bf16.mxu0 0
    %6746 = vmatpush1.bf16.msra.mxu0 0
    %6747 = vmatprep.subr.bf16.mxu0 0
    %6748 = vmatpush1.bf16.msra.mxu0 0
    %6749 = vmatprep.subr.bf16.mxu0 0
    %6750 = vmatpush1.bf16.msra.mxu0 0
    %6751 = vmatprep.subr.bf16.mxu0 0
    %6752 = vmatpush1.bf16.msra.mxu0 0
    %6753 = vmatprep.subr.bf16.mxu0 0
    %6754 = vmatpush1.bf16.msra.mxu0 0
    %6755 = vmatprep.subr.bf16.mxu0 0
    %6756 = vmatpush1.bf16.msra.mxu0 0
    %6757 = vmatprep.subr.bf16.mxu0 0
    %6758 = vmatpush1.bf16.msra.mxu0 0
    %6759 = vmatprep.mubr.bf16.mxu0 %v6643
    %6760 = vmatmul.mubr.bf16.gmra.mrb[0].mxu0 %v5690
    %v6761 = vpop.f32.mrb[0].mxu0
    %v6762 = vadd.f32 %v5861, %v6761
    %v6763 = vpop.f32.mrb[0].mxu0
    %v6764 = vadd.f32 %v5865, %v6763
    %v6765 = vpop.f32.mrb[0].mxu0
    %v6766 = vpop.f32.mrb[0].mxu0
    %6767 = vdwg.mxu0
    %6768 = vmatprep.subr.bf16.mxu0 %v6361
    %6769 = vmatpush1.bf16.msra.mxu0 %v6360
    %6770 = vmatprep.subr.bf16.mxu0 %v6377
    %6771 = vmatpush1.bf16.msra.mxu0 %v6376
    %6772 = vmatprep.subr.bf16.mxu0 %v6393
    %6773 = vmatpush1.bf16.msra.mxu0 %v6392
    %6774 = vmatprep.subr.bf16.mxu0 %v6409
    %6775 = vmatpush1.bf16.msra.mxu0 %v6408
    %6776 = vmatprep.subr.bf16.mxu0 %v6425
    %6777 = vmatpush1.bf16.msra.mxu0 %v6424
    %6778 = vmatprep.subr.bf16.mxu0 %v6441
    %6779 = vmatpush1.bf16.msra.mxu0 %v6440
    %6780 = vmatprep.subr.bf16.mxu0 %v6457
    %6781 = vmatpush1.bf16.msra.mxu0 %v6456
    %6782 = vmatprep.subr.bf16.mxu0 %v6473
    %6783 = vmatpush1.bf16.msra.mxu0 %v6472
    %6784 = vmatprep.subr.bf16.mxu0 %v6489
    %6785 = vmatpush1.bf16.msra.mxu0 %v6488
    %6786 = vmatprep.subr.bf16.mxu0 0
    %6787 = vmatpush1.bf16.msra.mxu0 0
    %6788 = vmatprep.subr.bf16.mxu0 0
    %6789 = vmatpush1.bf16.msra.mxu0 0
    %6790 = vmatprep.subr.bf16.mxu0 0
    %6791 = vmatpush1.bf16.msra.mxu0 0
    %6792 = vmatprep.subr.bf16.mxu0 0
    %6793 = vmatpush1.bf16.msra.mxu0 0
    %6794 = vmatprep.subr.bf16.mxu0 0
    %6795 = vmatpush1.bf16.msra.mxu0 0
    %6796 = vmatprep.subr.bf16.mxu0 0
    %6797 = vmatpush1.bf16.msra.mxu0 0
    %6798 = vmatprep.subr.bf16.mxu0 0
    %6799 = vmatpush1.bf16.msra.mxu0 0
    %6800 = vmatprep.mubr.bf16.mxu0 %v6643
    %6801 = vmatmul.mubr.bf16.gmra.mrb[0].mxu0 %v5690
    %v6802 = vpop.f32.mrb[0].mxu0
    %v6803 = vadd.f32 %v5869, %v6802
    %v6804 = vpop.f32.mrb[0].mxu0
    %v6805 = vadd.f32 %v5873, %v6804
    %v6806 = vpop.f32.mrb[0].mxu0
    %v6807 = vpop.f32.mrb[0].mxu0
    %6808 = vdwg.mxu0
    %6809 = vmatprep.subr.bf16.mxu0 %v6363
    %6810 = vmatpush1.bf16.msra.mxu0 %v6362
    %6811 = vmatprep.subr.bf16.mxu0 %v6379
    %6812 = vmatpush1.bf16.msra.mxu0 %v6378
    %6813 = vmatprep.subr.bf16.mxu0 %v6395
    %6814 = vmatpush1.bf16.msra.mxu0 %v6394
    %6815 = vmatprep.subr.bf16.mxu0 %v6411
    %6816 = vmatpush1.bf16.msra.mxu0 %v6410
    %6817 = vmatprep.subr.bf16.mxu0 %v6427
    %6818 = vmatpush1.bf16.msra.mxu0 %v6426
    %6819 = vmatprep.subr.bf16.mxu0 %v6443
    %6820 = vmatpush1.bf16.msra.mxu0 %v6442
    %6821 = vmatprep.subr.bf16.mxu0 %v6459
    %6822 = vmatpush1.bf16.msra.mxu0 %v6458
    %6823 = vmatprep.subr.bf16.mxu0 %v6475
    %6824 = vmatpush1.bf16.msra.mxu0 %v6474
    %6825 = vmatprep.subr.bf16.mxu0 %v6491
    %6826 = vmatpush1.bf16.msra.mxu0 %v6490
    %6827 = vmatprep.subr.bf16.mxu0 0
    %6828 = vmatpush1.bf16.msra.mxu0 0
    %6829 = vmatprep.subr.bf16.mxu0 0
    %6830 = vmatpush1.bf16.msra.mxu0 0
    %6831 = vmatprep.subr.bf16.mxu0 0
    %6832 = vmatpush1.bf16.msra.mxu0 0
    %6833 = vmatprep.subr.bf16.mxu0 0
    %6834 = vmatpush1.bf16.msra.mxu0 0
    %6835 = vmatprep.subr.bf16.mxu0 0
    %6836 = vmatpush1.bf16.msra.mxu0 0
    %6837 = vmatprep.subr.bf16.mxu0 0
    %6838 = vmatpush1.bf16.msra.mxu0 0
    %6839 = vmatprep.subr.bf16.mxu0 0
    %6840 = vmatpush1.bf16.msra.mxu0 0
    %6841 = vmatprep.mubr.bf16.mxu0 %v6643
    %6842 = vmatmul.mubr.bf16.gmra.mrb[0].mxu0 %v5690
    %v6843 = vpop.f32.mrb[0].mxu0
    %v6844 = vadd.f32 %v5877, %v6843
    %v6845 = vpop.f32.mrb[0].mxu0
    %v6846 = vadd.f32 %v5881, %v6845
    %v6847 = vpop.f32.mrb[0].mxu0
    %v6848 = vpop.f32.mrb[0].mxu0
    %6849 = vdwg.mxu0
    %6850 = vmatprep.subr.bf16.mxu0 %v6365
    %6851 = vmatpush1.bf16.msra.mxu0 %v6364
    %6852 = vmatprep.subr.bf16.mxu0 %v6381
    %6853 = vmatpush1.bf16.msra.mxu0 %v6380
    %6854 = vmatprep.subr.bf16.mxu0 %v6397
    %6855 = vmatpush1.bf16.msra.mxu0 %v6396
    %6856 = vmatprep.subr.bf16.mxu0 %v6413
    %6857 = vmatpush1.bf16.msra.mxu0 %v6412
    %6858 = vmatprep.subr.bf16.mxu0 %v6429
    %6859 = vmatpush1.bf16.msra.mxu0 %v6428
    %6860 = vmatprep.subr.bf16.mxu0 %v6445
    %6861 = vmatpush1.bf16.msra.mxu0 %v6444
    %6862 = vmatprep.subr.bf16.mxu0 %v6461
    %6863 = vmatpush1.bf16.msra.mxu0 %v6460
    %6864 = vmatprep.subr.bf16.mxu0 %v6477
    %6865 = vmatpush1.bf16.msra.mxu0 %v6476
    %6866 = vmatprep.subr.bf16.mxu0 %v6493
    %6867 = vmatpush1.bf16.msra.mxu0 %v6492
    %6868 = vmatprep.subr.bf16.mxu0 0
    %6869 = vmatpush1.bf16.msra.mxu0 0
    %6870 = vmatprep.subr.bf16.mxu0 0
    %6871 = vmatpush1.bf16.msra.mxu0 0
    %6872 = vmatprep.subr.bf16.mxu0 0
    %6873 = vmatpush1.bf16.msra.mxu0 0
    %6874 = vmatprep.subr.bf16.mxu0 0
    %6875 = vmatpush1.bf16.msra.mxu0 0
    %6876 = vmatprep.subr.bf16.mxu0 0
    %6877 = vmatpush1.bf16.msra.mxu0 0
    %6878 = vmatprep.subr.bf16.mxu0 0
    %6879 = vmatpush1.bf16.msra.mxu0 0
    %6880 = vmatprep.subr.bf16.mxu0 0
    %6881 = vmatpush1.bf16.msra.mxu0 0
    %6882 = vmatprep.mubr.bf16.mxu0 %v6643
    %6883 = vmatmul.mubr.bf16.gmra.mrb[0].mxu0 %v5690
    %v6884 = vpop.f32.mrb[0].mxu0
    %v6885 = vadd.f32 %v5885, %v6884
    %v6886 = vpop.f32.mrb[0].mxu0
    %v6887 = vadd.f32 %v5889, %v6886
    %v6888 = vpop.f32.mrb[0].mxu0
    %v6889 = vpop.f32.mrb[0].mxu0
    %6890 = vdwg.mxu0
    %6891 = vmatprep.subr.bf16.mxu0 %v6367
    %6892 = vmatpush1.bf16.msra.mxu0 %v6366
    %6893 = vmatprep.subr.bf16.mxu0 %v6383
    %6894 = vmatpush1.bf16.msra.mxu0 %v6382
    %6895 = vmatprep.subr.bf16.mxu0 %v6399
    %6896 = vmatpush1.bf16.msra.mxu0 %v6398
    %6897 = vmatprep.subr.bf16.mxu0 %v6415
    %6898 = vmatpush1.bf16.msra.mxu0 %v6414
    %6899 = vmatprep.subr.bf16.mxu0 %v6431
    %6900 = vmatpush1.bf16.msra.mxu0 %v6430
    %6901 = vmatprep.subr.bf16.mxu0 %v6447
    %6902 = vmatpush1.bf16.msra.mxu0 %v6446
    %6903 = vmatprep.subr.bf16.mxu0 %v6463
    %6904 = vmatpush1.bf16.msra.mxu0 %v6462
    %6905 = vmatprep.subr.bf16.mxu0 %v6479
    %6906 = vmatpush1.bf16.msra.mxu0 %v6478
    %6907 = vmatprep.subr.bf16.mxu0 %v6495
    %6908 = vmatpush1.bf16.msra.mxu0 %v6494
    %6909 = vmatprep.subr.bf16.mxu0 0
    %6910 = vmatpush1.bf16.msra.mxu0 0
    %6911 = vmatprep.subr.bf16.mxu0 0
    %6912 = vmatpush1.bf16.msra.mxu0 0
    %6913 = vmatprep.subr.bf16.mxu0 0
    %6914 = vmatpush1.bf16.msra.mxu0 0
    %6915 = vmatprep.subr.bf16.mxu0 0
    %6916 = vmatpush1.bf16.msra.mxu0 0
    %6917 = vmatprep.subr.bf16.mxu0 0
    %6918 = vmatpush1.bf16.msra.mxu0 0
    %6919 = vmatprep.subr.bf16.mxu0 0
    %6920 = vmatpush1.bf16.msra.mxu0 0
    %6921 = vmatprep.subr.bf16.mxu0 0
    %6922 = vmatpush1.bf16.msra.mxu0 0
    %6923 = vmatprep.mubr.bf16.mxu0 %v6643
    %6924 = vmatmul.mubr.bf16.gmra.mrb[0].mxu0 %v5690
    %v6925 = vpop.f32.mrb[0].mxu0
    %v6926 = vadd.f32 %v5893, %v6925
    %v6927 = vpop.f32.mrb[0].mxu0
    %v6928 = vadd.f32 %v5897, %v6927
    %v6929 = vpop.f32.mrb[0].mxu0
    %v6930 = vpop.f32.mrb[0].mxu0
    %6931 = vdwg.mxu0
    %6932 = vmatprep.subr.bf16.mxu0 %v6369
    %6933 = vmatpush1.bf16.msra.mxu0 %v6368
    %6934 = vmatprep.subr.bf16.mxu0 %v6385
    %6935 = vmatpush1.bf16.msra.mxu0 %v6384
    %6936 = vmatprep.subr.bf16.mxu0 %v6401
    %6937 = vmatpush1.bf16.msra.mxu0 %v6400
    %6938 = vmatprep.subr.bf16.mxu0 %v6417
    %6939 = vmatpush1.bf16.msra.mxu0 %v6416
    %6940 = vmatprep.subr.bf16.mxu0 %v6433
    %6941 = vmatpush1.bf16.msra.mxu0 %v6432
    %6942 = vmatprep.subr.bf16.mxu0 %v6449
    %6943 = vmatpush1.bf16.msra.mxu0 %v6448
    %6944 = vmatprep.subr.bf16.mxu0 %v6465
    %6945 = vmatpush1.bf16.msra.mxu0 %v6464
    %6946 = vmatprep.subr.bf16.mxu0 %v6481
    %6947 = vmatpush1.bf16.msra.mxu0 %v6480
    %6948 = vmatprep.subr.bf16.mxu0 %v6497
    %6949 = vmatpush1.bf16.msra.mxu0 %v6496
    %6950 = vmatprep.subr.bf16.mxu0 0
    %6951 = vmatpush1.bf16.msra.mxu0 0
    %6952 = vmatprep.subr.bf16.mxu0 0
    %6953 = vmatpush1.bf16.msra.mxu0 0
    %6954 = vmatprep.subr.bf16.mxu0 0
    %6955 = vmatpush1.bf16.msra.mxu0 0
    %6956 = vmatprep.subr.bf16.mxu0 0
    %6957 = vmatpush1.bf16.msra.mxu0 0
    %6958 = vmatprep.subr.bf16.mxu0 0
    %6959 = vmatpush1.bf16.msra.mxu0 0
    %6960 = vmatprep.subr.bf16.mxu0 0
    %6961 = vmatpush1.bf16.msra.mxu0 0
    %6962 = vmatprep.subr.bf16.mxu0 0
    %6963 = vmatpush1.bf16.msra.mxu0 0
    %6964 = vmatprep.mubr.bf16.mxu0 %v6643
    %6965 = vmatmul.mubr.bf16.gmra.mrb[0].mxu0 %v5690
    %v6966 = vpop.f32.mrb[0].mxu0
    %v6967 = vadd.f32 %v5901, %v6966
    %v6968 = vpop.f32.mrb[0].mxu0
    %v6969 = vadd.f32 %v5905, %v6968
    %v6970 = vpop.f32.mrb[0].mxu0
    %v6971 = vpop.f32.mrb[0].mxu0
    %6972 = vdwg.mxu0
    %v6973 = vmax.f32 %v6680, 0.0
    %v6974 = vmax.f32 %v6682, 0.0
    %v6975 = vmax.f32 %v6721, 0.0
    %v6976 = vmax.f32 %v6723, 0.0
    %v6977 = vmax.f32 %v6762, 0.0
    %v6978 = vmax.f32 %v6764, 0.0
    %v6979 = vmax.f32 %v6803, 0.0
    %v6980 = vmax.f32 %v6805, 0.0
    %v6981 = vmax.f32 %v6844, 0.0
    %v6982 = vmax.f32 %v6846, 0.0
    %v6983 = vmax.f32 %v6885, 0.0
    %v6984 = vmax.f32 %v6887, 0.0
    %v6985 = vmax.f32 %v6926, 0.0
    %v6986 = vmax.f32 %v6928, 0.0
    %v6987 = vmax.f32 %v6967, 0.0
    %v6988 = vmax.f32 %v6969, 0.0
    %v6989 = vpack.c.bf16 %v6973, %v6973
    %v6990 = vpack.c.bf16 %v6974, %v6974
    %v6991 = vpack.c.bf16 %v6975, %v6975
    %v6992 = vpack.c.bf16 %v6976, %v6976
    %v6993 = vpack.c.bf16 %v6977, %v6977
    %v6994 = vpack.c.bf16 %v6978, %v6978
    %v6995 = vpack.c.bf16 %v6979, %v6979
    %v6996 = vpack.c.bf16 %v6980, %v6980
    %v6997 = vpack.c.bf16 %v6981, %v6981
    %v6998 = vpack.c.bf16 %v6982, %v6982
    %v6999 = vpack.c.bf16 %v6983, %v6983
    %v7000 = vpack.c.bf16 %v6984, %v6984
    %v7001 = vpack.c.bf16 %v6985, %v6985
    %v7002 = vpack.c.bf16 %v6986, %v6986
    %v7003 = vpack.c.bf16 %v6987, %v6987
    %v7004 = vpack.c.bf16 %v6988, %v6988
    %s7005 = scalar_lea.vmem %s13, 2048
    %v7006 = vld [vmem:[%s7005] sm:$0xff]
    %v7007 = vld [vmem:[%s7005 + $0x8] sm:$0xff]
    %v7008 = vld [vmem:[%s7005 + $0x10] sm:$0xff]
    %v7009 = vld [vmem:[%s7005 + $0x18] sm:$0xff]
    %v7010 = vld [vmem:[%s7005 + $0x20] sm:$0xff]
    %v7011 = vld [vmem:[%s7005 + $0x28] sm:$0xff]
    %v7012 = vld [vmem:[%s7005 + $0x30] sm:$0xff]
    %v7013 = vld [vmem:[%s7005 + $0x38] sm:$0xff]
    %v7014 = vld [vmem:[%s7005 + $0x40] sm:$0xff]
    %v7015 = vld [vmem:[%s7005 + $0x48] sm:$0xff]
    %v7016 = vld [vmem:[%s7005 + $0x50] sm:$0xff]
    %v7017 = vld [vmem:[%s7005 + $0x58] sm:$0xff]
    %v7018 = vld [vmem:[%s7005 + $0x60] sm:$0xff]
    %v7019 = vld [vmem:[%s7005 + $0x68] sm:$0xff]
    %v7020 = vld [vmem:[%s7005 + $0x70] sm:$0xff]
    %v7021 = vld [vmem:[%s7005 + $0x78] sm:$0xff]
    %v7022 = vld [vmem:[%s7005 + $0x80] sm:$0xff]
    %v7023 = vld [vmem:[%s7005 + $0x88] sm:$0xff]
    %v7024 = vld [vmem:[%s7005 + $0x90] sm:$0xff]
    %v7025 = vld [vmem:[%s7005 + $0x98] sm:$0xff]
    %v7026 = vld [vmem:[%s7005 + $0xa0] sm:$0xff]
    %v7027 = vld [vmem:[%s7005 + $0xa8] sm:$0xff]
    %v7028 = vld [vmem:[%s7005 + $0xb0] sm:$0xff]
    %v7029 = vld [vmem:[%s7005 + $0xb8] sm:$0xff]
    %v7030 = vld [vmem:[%s7005 + $0xc0] sm:$0xff]
    %v7031 = vld [vmem:[%s7005 + $0xc8] sm:$0xff]
    %v7032 = vld [vmem:[%s7005 + $0xd0] sm:$0xff]
    %v7033 = vld [vmem:[%s7005 + $0xd8] sm:$0xff]
    %v7034 = vld [vmem:[%s7005 + $0xe0] sm:$0xff]
    %v7035 = vld [vmem:[%s7005 + $0xe8] sm:$0xff]
    %v7036 = vld [vmem:[%s7005 + $0xf0] sm:$0xff]
    %v7037 = vld [vmem:[%s7005 + $0xf8] sm:$0xff]
    %v7038 = vld [vmem:[%s7005 + $0x100] sm:$0xff]
    %v7039 = vld [vmem:[%s7005 + $0x108] sm:$0xff]
    %v7040 = vld [vmem:[%s7005 + $0x110] sm:$0xff]
    %v7041 = vld [vmem:[%s7005 + $0x118] sm:$0xff]
    %v7042 = vld [vmem:[%s7005 + $0x120] sm:$0xff]
    %v7043 = vld [vmem:[%s7005 + $0x128] sm:$0xff]
    %v7044 = vld [vmem:[%s7005 + $0x130] sm:$0xff]
    %v7045 = vld [vmem:[%s7005 + $0x138] sm:$0xff]
    %v7046 = vld [vmem:[%s7005 + $0x140] sm:$0xff]
    %v7047 = vld [vmem:[%s7005 + $0x148] sm:$0xff]
    %v7048 = vld [vmem:[%s7005 + $0x150] sm:$0xff]
    %v7049 = vld [vmem:[%s7005 + $0x158] sm:$0xff]
    %v7050 = vld [vmem:[%s7005 + $0x160] sm:$0xff]
    %v7051 = vld [vmem:[%s7005 + $0x168] sm:$0xff]
    %v7052 = vld [vmem:[%s7005 + $0x170] sm:$0xff]
    %v7053 = vld [vmem:[%s7005 + $0x178] sm:$0xff]
    %v7054 = vld [vmem:[%s7005 + $0x180] sm:$0xff]
    %v7055 = vld [vmem:[%s7005 + $0x188] sm:$0xff]
    %v7056 = vld [vmem:[%s7005 + $0x190] sm:$0xff]
    %v7057 = vld [vmem:[%s7005 + $0x198] sm:$0xff]
    %v7058 = vld [vmem:[%s7005 + $0x1a0] sm:$0xff]
    %v7059 = vld [vmem:[%s7005 + $0x1a8] sm:$0xff]
    %v7060 = vld [vmem:[%s7005 + $0x1b0] sm:$0xff]
    %v7061 = vld [vmem:[%s7005 + $0x1b8] sm:$0xff]
    %v7062 = vld [vmem:[%s7005 + $0x1c0] sm:$0xff]
    %v7063 = vld [vmem:[%s7005 + $0x1c8] sm:$0xff]
    %v7064 = vld [vmem:[%s7005 + $0x1d0] sm:$0xff]
    %v7065 = vld [vmem:[%s7005 + $0x1d8] sm:$0xff]
    %v7066 = vld [vmem:[%s7005 + $0x1e0] sm:$0xff]
    %v7067 = vld [vmem:[%s7005 + $0x1e8] sm:$0xff]
    %v7068 = vld [vmem:[%s7005 + $0x1f0] sm:$0xff]
    %v7069 = vld [vmem:[%s7005 + $0x1f8] sm:$0xff]
    %v7070 = vld [vmem:[%s7005 + $0x200] sm:$0xff]
    %v7071 = vld [vmem:[%s7005 + $0x208] sm:$0xff]
    %v7072 = vld [vmem:[%s7005 + $0x210] sm:$0xff]
    %v7073 = vld [vmem:[%s7005 + $0x218] sm:$0xff]
    %v7074 = vld [vmem:[%s7005 + $0x220] sm:$0xff]
    %v7075 = vld [vmem:[%s7005 + $0x228] sm:$0xff]
    %v7076 = vld [vmem:[%s7005 + $0x230] sm:$0xff]
    %v7077 = vld [vmem:[%s7005 + $0x238] sm:$0xff]
    %v7078 = vld [vmem:[%s7005 + $0x240] sm:$0xff]
    %v7079 = vld [vmem:[%s7005 + $0x248] sm:$0xff]
    %v7080 = vld [vmem:[%s7005 + $0x250] sm:$0xff]
    %v7081 = vld [vmem:[%s7005 + $0x258] sm:$0xff]
    %v7082 = vld [vmem:[%s7005 + $0x260] sm:$0xff]
    %v7083 = vld [vmem:[%s7005 + $0x268] sm:$0xff]
    %v7084 = vld [vmem:[%s7005 + $0x270] sm:$0xff]
    %v7085 = vld [vmem:[%s7005 + $0x278] sm:$0xff]
    %v7086 = vld [vmem:[%s7005 + $0x280] sm:$0xff]
    %v7087 = vld [vmem:[%s7005 + $0x288] sm:$0xff]
    %v7088 = vld [vmem:[%s7005 + $0x290] sm:$0xff]
    %v7089 = vld [vmem:[%s7005 + $0x298] sm:$0xff]
    %v7090 = vld [vmem:[%s7005 + $0x2a0] sm:$0xff]
    %v7091 = vld [vmem:[%s7005 + $0x2a8] sm:$0xff]
    %v7092 = vld [vmem:[%s7005 + $0x2b0] sm:$0xff]
    %v7093 = vld [vmem:[%s7005 + $0x2b8] sm:$0xff]
    %v7094 = vld [vmem:[%s7005 + $0x2c0] sm:$0xff]
    %v7095 = vld [vmem:[%s7005 + $0x2c8] sm:$0xff]
    %v7096 = vld [vmem:[%s7005 + $0x2d0] sm:$0xff]
    %v7097 = vld [vmem:[%s7005 + $0x2d8] sm:$0xff]
    %v7098 = vld [vmem:[%s7005 + $0x2e0] sm:$0xff]
    %v7099 = vld [vmem:[%s7005 + $0x2e8] sm:$0xff]
    %v7100 = vld [vmem:[%s7005 + $0x2f0] sm:$0xff]
    %v7101 = vld [vmem:[%s7005 + $0x2f8] sm:$0xff]
    %v7102 = vld [vmem:[%s7005 + $0x300] sm:$0xff]
    %v7103 = vld [vmem:[%s7005 + $0x308] sm:$0xff]
    %v7104 = vld [vmem:[%s7005 + $0x310] sm:$0xff]
    %v7105 = vld [vmem:[%s7005 + $0x318] sm:$0xff]
    %v7106 = vld [vmem:[%s7005 + $0x320] sm:$0xff]
    %v7107 = vld [vmem:[%s7005 + $0x328] sm:$0xff]
    %v7108 = vld [vmem:[%s7005 + $0x330] sm:$0xff]
    %v7109 = vld [vmem:[%s7005 + $0x338] sm:$0xff]
    %v7110 = vld [vmem:[%s7005 + $0x340] sm:$0xff]
    %v7111 = vld [vmem:[%s7005 + $0x348] sm:$0xff]
    %v7112 = vld [vmem:[%s7005 + $0x350] sm:$0xff]
    %v7113 = vld [vmem:[%s7005 + $0x358] sm:$0xff]
    %v7114 = vld [vmem:[%s7005 + $0x360] sm:$0xff]
    %v7115 = vld [vmem:[%s7005 + $0x368] sm:$0xff]
    %v7116 = vld [vmem:[%s7005 + $0x370] sm:$0xff]
    %v7117 = vld [vmem:[%s7005 + $0x378] sm:$0xff]
    %v7118 = vld [vmem:[%s7005 + $0x380] sm:$0xff]
    %v7119 = vld [vmem:[%s7005 + $0x388] sm:$0xff]
    %v7120 = vld [vmem:[%s7005 + $0x390] sm:$0xff]
    %v7121 = vld [vmem:[%s7005 + $0x398] sm:$0xff]
    %v7122 = vld [vmem:[%s7005 + $0x3a0] sm:$0xff]
    %v7123 = vld [vmem:[%s7005 + $0x3a8] sm:$0xff]
    %v7124 = vld [vmem:[%s7005 + $0x3b0] sm:$0xff]
    %v7125 = vld [vmem:[%s7005 + $0x3b8] sm:$0xff]
    %v7126 = vld [vmem:[%s7005 + $0x3c0] sm:$0xff]
    %v7127 = vld [vmem:[%s7005 + $0x3c8] sm:$0xff]
    %v7128 = vld [vmem:[%s7005 + $0x3d0] sm:$0xff]
    %v7129 = vld [vmem:[%s7005 + $0x3d8] sm:$0xff]
    %v7130 = vld [vmem:[%s7005 + $0x3e0] sm:$0xff]
    %v7131 = vld [vmem:[%s7005 + $0x3e8] sm:$0xff]
    %v7132 = vld [vmem:[%s7005 + $0x3f0] sm:$0xff]
    %v7133 = vld [vmem:[%s7005 + $0x3f8] sm:$0xff]
    %v7134 = vld [vmem:[%s7005 + $0x400] sm:$0xff]
    %v7135 = vld [vmem:[%s7005 + $0x408] sm:$0xff]
    %v7136 = vld [vmem:[%s7005 + $0x410] sm:$0xff]
    %v7137 = vld [vmem:[%s7005 + $0x418] sm:$0xff]
    %v7138 = vld [vmem:[%s7005 + $0x420] sm:$0xff]
    %v7139 = vld [vmem:[%s7005 + $0x428] sm:$0xff]
    %v7140 = vld [vmem:[%s7005 + $0x430] sm:$0xff]
    %v7141 = vld [vmem:[%s7005 + $0x438] sm:$0xff]
    %v7142 = vld [vmem:[%s7005 + $0x440] sm:$0xff]
    %v7143 = vld [vmem:[%s7005 + $0x448] sm:$0xff]
    %v7144 = vld [vmem:[%s7005 + $0x450] sm:$0xff]
    %v7145 = vld [vmem:[%s7005 + $0x458] sm:$0xff]
    %v7146 = vld [vmem:[%s7005 + $0x460] sm:$0xff]
    %v7147 = vld [vmem:[%s7005 + $0x468] sm:$0xff]
    %v7148 = vld [vmem:[%s7005 + $0x470] sm:$0xff]
    %v7149 = vld [vmem:[%s7005 + $0x478] sm:$0xff]
    %v7150 = vld [vmem:[%s7005 + $0x480] sm:$0xff]
    %v7151 = vld [vmem:[%s7005 + $0x488] sm:$0xff]
    %v7152 = vld [vmem:[%s7005 + $0x490] sm:$0xff]
    %v7153 = vld [vmem:[%s7005 + $0x498] sm:$0xff]
    %v7154 = vld [vmem:[%s7005 + $0x4a0] sm:$0xff]
    %v7155 = vld [vmem:[%s7005 + $0x4a8] sm:$0xff]
    %v7156 = vld [vmem:[%s7005 + $0x4b0] sm:$0xff]
    %v7157 = vld [vmem:[%s7005 + $0x4b8] sm:$0xff]
    %v7158 = vld [vmem:[%s7005 + $0x4c0] sm:$0xff]
    %v7159 = vld [vmem:[%s7005 + $0x4c8] sm:$0xff]
    %v7160 = vld [vmem:[%s7005 + $0x4d0] sm:$0xff]
    %v7161 = vld [vmem:[%s7005 + $0x4d8] sm:$0xff]
    %v7162 = vld [vmem:[%s7005 + $0x4e0] sm:$0xff]
    %v7163 = vld [vmem:[%s7005 + $0x4e8] sm:$0xff]
    %v7164 = vld [vmem:[%s7005 + $0x4f0] sm:$0xff]
    %v7165 = vld [vmem:[%s7005 + $0x4f8] sm:$0xff]
    %v7166 = vld [vmem:[%s7005 + $0x500] sm:$0xff]
    %v7167 = vld [vmem:[%s7005 + $0x508] sm:$0xff]
    %v7168 = vld [vmem:[%s7005 + $0x510] sm:$0xff]
    %v7169 = vld [vmem:[%s7005 + $0x518] sm:$0xff]
    %v7170 = vld [vmem:[%s7005 + $0x520] sm:$0xff]
    %v7171 = vld [vmem:[%s7005 + $0x528] sm:$0xff]
    %v7172 = vld [vmem:[%s7005 + $0x530] sm:$0xff]
    %v7173 = vld [vmem:[%s7005 + $0x538] sm:$0xff]
    %v7174 = vld [vmem:[%s7005 + $0x540] sm:$0xff]
    %v7175 = vld [vmem:[%s7005 + $0x548] sm:$0xff]
    %v7176 = vld [vmem:[%s7005 + $0x550] sm:$0xff]
    %v7177 = vld [vmem:[%s7005 + $0x558] sm:$0xff]
    %v7178 = vld [vmem:[%s7005 + $0x560] sm:$0xff]
    %v7179 = vld [vmem:[%s7005 + $0x568] sm:$0xff]
    %v7180 = vld [vmem:[%s7005 + $0x570] sm:$0xff]
    %v7181 = vld [vmem:[%s7005 + $0x578] sm:$0xff]
    %v7182 = vld [vmem:[%s7005 + $0x580] sm:$0xff]
    %v7183 = vld [vmem:[%s7005 + $0x588] sm:$0xff]
    %v7184 = vld [vmem:[%s7005 + $0x590] sm:$0xff]
    %v7185 = vld [vmem:[%s7005 + $0x598] sm:$0xff]
    %v7186 = vld [vmem:[%s7005 + $0x5a0] sm:$0xff]
    %v7187 = vld [vmem:[%s7005 + $0x5a8] sm:$0xff]
    %v7188 = vld [vmem:[%s7005 + $0x5b0] sm:$0xff]
    %v7189 = vld [vmem:[%s7005 + $0x5b8] sm:$0xff]
    %v7190 = vld [vmem:[%s7005 + $0x5c0] sm:$0xff]
    %v7191 = vld [vmem:[%s7005 + $0x5c8] sm:$0xff]
    %v7192 = vld [vmem:[%s7005 + $0x5d0] sm:$0xff]
    %v7193 = vld [vmem:[%s7005 + $0x5d8] sm:$0xff]
    %v7194 = vld [vmem:[%s7005 + $0x5e0] sm:$0xff]
    %v7195 = vld [vmem:[%s7005 + $0x5e8] sm:$0xff]
    %v7196 = vld [vmem:[%s7005 + $0x5f0] sm:$0xff]
    %v7197 = vld [vmem:[%s7005 + $0x5f8] sm:$0xff]
    %v7198 = vld [vmem:[%s7005 + $0x600] sm:$0xff]
    %v7199 = vld [vmem:[%s7005 + $0x608] sm:$0xff]
    %v7200 = vld [vmem:[%s7005 + $0x610] sm:$0xff]
    %v7201 = vld [vmem:[%s7005 + $0x618] sm:$0xff]
    %v7202 = vld [vmem:[%s7005 + $0x620] sm:$0xff]
    %v7203 = vld [vmem:[%s7005 + $0x628] sm:$0xff]
    %v7204 = vld [vmem:[%s7005 + $0x630] sm:$0xff]
    %v7205 = vld [vmem:[%s7005 + $0x638] sm:$0xff]
    %v7206 = vld [vmem:[%s7005 + $0x640] sm:$0xff]
    %v7207 = vld [vmem:[%s7005 + $0x648] sm:$0xff]
    %v7208 = vld [vmem:[%s7005 + $0x650] sm:$0xff]
    %v7209 = vld [vmem:[%s7005 + $0x658] sm:$0xff]
    %v7210 = vld [vmem:[%s7005 + $0x660] sm:$0xff]
    %v7211 = vld [vmem:[%s7005 + $0x668] sm:$0xff]
    %v7212 = vld [vmem:[%s7005 + $0x670] sm:$0xff]
    %v7213 = vld [vmem:[%s7005 + $0x678] sm:$0xff]
    %v7214 = vld [vmem:[%s7005 + $0x680] sm:$0xff]
    %v7215 = vld [vmem:[%s7005 + $0x688] sm:$0xff]
    %v7216 = vld [vmem:[%s7005 + $0x690] sm:$0xff]
    %v7217 = vld [vmem:[%s7005 + $0x698] sm:$0xff]
    %v7218 = vld [vmem:[%s7005 + $0x6a0] sm:$0xff]
    %v7219 = vld [vmem:[%s7005 + $0x6a8] sm:$0xff]
    %v7220 = vld [vmem:[%s7005 + $0x6b0] sm:$0xff]
    %v7221 = vld [vmem:[%s7005 + $0x6b8] sm:$0xff]
    %v7222 = vld [vmem:[%s7005 + $0x6c0] sm:$0xff]
    %v7223 = vld [vmem:[%s7005 + $0x6c8] sm:$0xff]
    %v7224 = vld [vmem:[%s7005 + $0x6d0] sm:$0xff]
    %v7225 = vld [vmem:[%s7005 + $0x6d8] sm:$0xff]
    %v7226 = vld [vmem:[%s7005 + $0x6e0] sm:$0xff]
    %v7227 = vld [vmem:[%s7005 + $0x6e8] sm:$0xff]
    %v7228 = vld [vmem:[%s7005 + $0x6f0] sm:$0xff]
    %v7229 = vld [vmem:[%s7005 + $0x6f8] sm:$0xff]
    %v7230 = vld [vmem:[%s7005 + $0x700] sm:$0xff]
    %v7231 = vld [vmem:[%s7005 + $0x708] sm:$0xff]
    %v7232 = vld [vmem:[%s7005 + $0x710] sm:$0xff]
    %v7233 = vld [vmem:[%s7005 + $0x718] sm:$0xff]
    %v7234 = vld [vmem:[%s7005 + $0x720] sm:$0xff]
    %v7235 = vld [vmem:[%s7005 + $0x728] sm:$0xff]
    %v7236 = vld [vmem:[%s7005 + $0x730] sm:$0xff]
    %v7237 = vld [vmem:[%s7005 + $0x738] sm:$0xff]
    %v7238 = vld [vmem:[%s7005 + $0x740] sm:$0xff]
    %v7239 = vld [vmem:[%s7005 + $0x748] sm:$0xff]
    %v7240 = vld [vmem:[%s7005 + $0x750] sm:$0xff]
    %v7241 = vld [vmem:[%s7005 + $0x758] sm:$0xff]
    %v7242 = vld [vmem:[%s7005 + $0x760] sm:$0xff]
    %v7243 = vld [vmem:[%s7005 + $0x768] sm:$0xff]
    %v7244 = vld [vmem:[%s7005 + $0x770] sm:$0xff]
    %v7245 = vld [vmem:[%s7005 + $0x778] sm:$0xff]
    %v7246 = vld [vmem:[%s7005 + $0x780] sm:$0xff]
    %v7247 = vld [vmem:[%s7005 + $0x788] sm:$0xff]
    %v7248 = vld [vmem:[%s7005 + $0x790] sm:$0xff]
    %v7249 = vld [vmem:[%s7005 + $0x798] sm:$0xff]
    %v7250 = vld [vmem:[%s7005 + $0x7a0] sm:$0xff]
    %v7251 = vld [vmem:[%s7005 + $0x7a8] sm:$0xff]
    %v7252 = vld [vmem:[%s7005 + $0x7b0] sm:$0xff]
    %v7253 = vld [vmem:[%s7005 + $0x7b8] sm:$0xff]
    %v7254 = vld [vmem:[%s7005 + $0x7c0] sm:$0xff]
    %v7255 = vld [vmem:[%s7005 + $0x7c8] sm:$0xff]
    %v7256 = vld [vmem:[%s7005 + $0x7d0] sm:$0xff]
    %v7257 = vld [vmem:[%s7005 + $0x7d8] sm:$0xff]
    %v7258 = vld [vmem:[%s7005 + $0x7e0] sm:$0xff]
    %v7259 = vld [vmem:[%s7005 + $0x7e8] sm:$0xff]
    %v7260 = vld [vmem:[%s7005 + $0x7f0] sm:$0xff]
    %v7261 = vld [vmem:[%s7005 + $0x7f8] sm:$0xff]
    %s7262 = scalar_lea.vmem [#allocation14], 2
    %v7263 = vld [vmem:[%s7262] sm:$0x3]
    %v7265 = vlaneseq
    %v7266 = vshrl.u32 %v7265, 7
    %v7267 = vsub.s32 0, %v7266
    %v7268 = vrot.slane %v7263, %v7267
    %v7269 = vlaneseq
    %v7270 = vshrl.u32 %v7269, 7
    %v7271 = vsub.s32 1, %v7270
    %v7272 = vrot.slane %v7263, %v7271
    %v7531 = vunpack.c.l.b16 %v7006
    %v7532 = vunpack.c.h.b16 %v7006
    %v7533 = vunpack.c.l.b16 %v7007
    %v7534 = vunpack.c.h.b16 %v7007
    %v7535 = vunpack.c.l.b16 %v7008
    %v7536 = vunpack.c.h.b16 %v7008
    %v7537 = vunpack.c.l.b16 %v7009
    %v7538 = vunpack.c.h.b16 %v7009
    %v7539 = vunpack.c.l.b16 %v7010
    %v7540 = vunpack.c.h.b16 %v7010
    %v7541 = vunpack.c.l.b16 %v7011
    %v7542 = vunpack.c.h.b16 %v7011
    %v7543 = vunpack.c.l.b16 %v7012
    %v7544 = vunpack.c.h.b16 %v7012
    %v7545 = vunpack.c.l.b16 %v7013
    %v7546 = vunpack.c.h.b16 %v7013
    %v7547 = vunpack.c.l.b16 %v7014
    %v7548 = vunpack.c.h.b16 %v7014
    %v7549 = vunpack.c.l.b16 %v7015
    %v7550 = vunpack.c.h.b16 %v7015
    %v7551 = vunpack.c.l.b16 %v7016
    %v7552 = vunpack.c.h.b16 %v7016
    %v7553 = vunpack.c.l.b16 %v7017
    %v7554 = vunpack.c.h.b16 %v7017
    %v7555 = vunpack.c.l.b16 %v7018
    %v7556 = vunpack.c.h.b16 %v7018
    %v7557 = vunpack.c.l.b16 %v7019
    %v7558 = vunpack.c.h.b16 %v7019
    %v7559 = vunpack.c.l.b16 %v7020
    %v7560 = vunpack.c.h.b16 %v7020
    %v7561 = vunpack.c.l.b16 %v7021
    %v7562 = vunpack.c.h.b16 %v7021
    %v7563 = vunpack.c.l.b16 %v7022
    %v7564 = vunpack.c.h.b16 %v7022
    %v7565 = vunpack.c.l.b16 %v7023
    %v7566 = vunpack.c.h.b16 %v7023
    %v7567 = vunpack.c.l.b16 %v7024
    %v7568 = vunpack.c.h.b16 %v7024
    %v7569 = vunpack.c.l.b16 %v7025
    %v7570 = vunpack.c.h.b16 %v7025
    %v7571 = vunpack.c.l.b16 %v7026
    %v7572 = vunpack.c.h.b16 %v7026
    %v7573 = vunpack.c.l.b16 %v7027
    %v7574 = vunpack.c.h.b16 %v7027
    %v7575 = vunpack.c.l.b16 %v7028
    %v7576 = vunpack.c.h.b16 %v7028
    %v7577 = vunpack.c.l.b16 %v7029
    %v7578 = vunpack.c.h.b16 %v7029
    %v7579 = vunpack.c.l.b16 %v7030
    %v7580 = vunpack.c.h.b16 %v7030
    %v7581 = vunpack.c.l.b16 %v7031
    %v7582 = vunpack.c.h.b16 %v7031
    %v7583 = vunpack.c.l.b16 %v7032
    %v7584 = vunpack.c.h.b16 %v7032
    %v7585 = vunpack.c.l.b16 %v7033
    %v7586 = vunpack.c.h.b16 %v7033
    %v7587 = vunpack.c.l.b16 %v7034
    %v7588 = vunpack.c.h.b16 %v7034
    %v7589 = vunpack.c.l.b16 %v7035
    %v7590 = vunpack.c.h.b16 %v7035
    %v7591 = vunpack.c.l.b16 %v7036
    %v7592 = vunpack.c.h.b16 %v7036
    %v7593 = vunpack.c.l.b16 %v7037
    %v7594 = vunpack.c.h.b16 %v7037
    %v7595 = vunpack.c.l.b16 %v7038
    %v7596 = vunpack.c.h.b16 %v7038
    %v7597 = vunpack.c.l.b16 %v7039
    %v7598 = vunpack.c.h.b16 %v7039
    %v7599 = vunpack.c.l.b16 %v7040
    %v7600 = vunpack.c.h.b16 %v7040
    %v7601 = vunpack.c.l.b16 %v7041
    %v7602 = vunpack.c.h.b16 %v7041
    %v7603 = vunpack.c.l.b16 %v7042
    %v7604 = vunpack.c.h.b16 %v7042
    %v7605 = vunpack.c.l.b16 %v7043
    %v7606 = vunpack.c.h.b16 %v7043
    %v7607 = vunpack.c.l.b16 %v7044
    %v7608 = vunpack.c.h.b16 %v7044
    %v7609 = vunpack.c.l.b16 %v7045
    %v7610 = vunpack.c.h.b16 %v7045
    %v7611 = vunpack.c.l.b16 %v7046
    %v7612 = vunpack.c.h.b16 %v7046
    %v7613 = vunpack.c.l.b16 %v7047
    %v7614 = vunpack.c.h.b16 %v7047
    %v7615 = vunpack.c.l.b16 %v7048
    %v7616 = vunpack.c.h.b16 %v7048
    %v7617 = vunpack.c.l.b16 %v7049
    %v7618 = vunpack.c.h.b16 %v7049
    %v7619 = vunpack.c.l.b16 %v7050
    %v7620 = vunpack.c.h.b16 %v7050
    %v7621 = vunpack.c.l.b16 %v7051
    %v7622 = vunpack.c.h.b16 %v7051
    %v7623 = vunpack.c.l.b16 %v7052
    %v7624 = vunpack.c.h.b16 %v7052
    %v7625 = vunpack.c.l.b16 %v7053
    %v7626 = vunpack.c.h.b16 %v7053
    %v7627 = vunpack.c.l.b16 %v7054
    %v7628 = vunpack.c.h.b16 %v7054
    %v7629 = vunpack.c.l.b16 %v7055
    %v7630 = vunpack.c.h.b16 %v7055
    %v7631 = vunpack.c.l.b16 %v7056
    %v7632 = vunpack.c.h.b16 %v7056
    %v7633 = vunpack.c.l.b16 %v7057
    %v7634 = vunpack.c.h.b16 %v7057
    %v7635 = vunpack.c.l.b16 %v7058
    %v7636 = vunpack.c.h.b16 %v7058
    %v7637 = vunpack.c.l.b16 %v7059
    %v7638 = vunpack.c.h.b16 %v7059
    %v7639 = vunpack.c.l.b16 %v7060
    %v7640 = vunpack.c.h.b16 %v7060
    %v7641 = vunpack.c.l.b16 %v7061
    %v7642 = vunpack.c.h.b16 %v7061
    %v7643 = vunpack.c.l.b16 %v7062
    %v7644 = vunpack.c.h.b16 %v7062
    %v7645 = vunpack.c.l.b16 %v7063
    %v7646 = vunpack.c.h.b16 %v7063
    %v7647 = vunpack.c.l.b16 %v7064
    %v7648 = vunpack.c.h.b16 %v7064
    %v7649 = vunpack.c.l.b16 %v7065
    %v7650 = vunpack.c.h.b16 %v7065
    %v7651 = vunpack.c.l.b16 %v7066
    %v7652 = vunpack.c.h.b16 %v7066
    %v7653 = vunpack.c.l.b16 %v7067
    %v7654 = vunpack.c.h.b16 %v7067
    %v7655 = vunpack.c.l.b16 %v7068
    %v7656 = vunpack.c.h.b16 %v7068
    %v7657 = vunpack.c.l.b16 %v7069
    %v7658 = vunpack.c.h.b16 %v7069
    %v7659 = vunpack.c.l.b16 %v7070
    %v7660 = vunpack.c.h.b16 %v7070
    %v7661 = vunpack.c.l.b16 %v7071
    %v7662 = vunpack.c.h.b16 %v7071
    %v7663 = vunpack.c.l.b16 %v7072
    %v7664 = vunpack.c.h.b16 %v7072
    %v7665 = vunpack.c.l.b16 %v7073
    %v7666 = vunpack.c.h.b16 %v7073
    %v7667 = vunpack.c.l.b16 %v7074
    %v7668 = vunpack.c.h.b16 %v7074
    %v7669 = vunpack.c.l.b16 %v7075
    %v7670 = vunpack.c.h.b16 %v7075
    %v7671 = vunpack.c.l.b16 %v7076
    %v7672 = vunpack.c.h.b16 %v7076
    %v7673 = vunpack.c.l.b16 %v7077
    %v7674 = vunpack.c.h.b16 %v7077
    %v7675 = vunpack.c.l.b16 %v7078
    %v7676 = vunpack.c.h.b16 %v7078
    %v7677 = vunpack.c.l.b16 %v7079
    %v7678 = vunpack.c.h.b16 %v7079
    %v7679 = vunpack.c.l.b16 %v7080
    %v7680 = vunpack.c.h.b16 %v7080
    %v7681 = vunpack.c.l.b16 %v7081
    %v7682 = vunpack.c.h.b16 %v7081
    %v7683 = vunpack.c.l.b16 %v7082
    %v7684 = vunpack.c.h.b16 %v7082
    %v7685 = vunpack.c.l.b16 %v7083
    %v7686 = vunpack.c.h.b16 %v7083
    %v7687 = vunpack.c.l.b16 %v7084
    %v7688 = vunpack.c.h.b16 %v7084
    %v7689 = vunpack.c.l.b16 %v7085
    %v7690 = vunpack.c.h.b16 %v7085
    %v7691 = vunpack.c.l.b16 %v7086
    %v7692 = vunpack.c.h.b16 %v7086
    %v7693 = vunpack.c.l.b16 %v7087
    %v7694 = vunpack.c.h.b16 %v7087
    %v7695 = vunpack.c.l.b16 %v7088
    %v7696 = vunpack.c.h.b16 %v7088
    %v7697 = vunpack.c.l.b16 %v7089
    %v7698 = vunpack.c.h.b16 %v7089
    %v7699 = vunpack.c.l.b16 %v7090
    %v7700 = vunpack.c.h.b16 %v7090
    %v7701 = vunpack.c.l.b16 %v7091
    %v7702 = vunpack.c.h.b16 %v7091
    %v7703 = vunpack.c.l.b16 %v7092
    %v7704 = vunpack.c.h.b16 %v7092
    %v7705 = vunpack.c.l.b16 %v7093
    %v7706 = vunpack.c.h.b16 %v7093
    %v7707 = vunpack.c.l.b16 %v7094
    %v7708 = vunpack.c.h.b16 %v7094
    %v7709 = vunpack.c.l.b16 %v7095
    %v7710 = vunpack.c.h.b16 %v7095
    %v7711 = vunpack.c.l.b16 %v7096
    %v7712 = vunpack.c.h.b16 %v7096
    %v7713 = vunpack.c.l.b16 %v7097
    %v7714 = vunpack.c.h.b16 %v7097
    %v7715 = vunpack.c.l.b16 %v7098
    %v7716 = vunpack.c.h.b16 %v7098
    %v7717 = vunpack.c.l.b16 %v7099
    %v7718 = vunpack.c.h.b16 %v7099
    %v7719 = vunpack.c.l.b16 %v7100
    %v7720 = vunpack.c.h.b16 %v7100
    %v7721 = vunpack.c.l.b16 %v7101
    %v7722 = vunpack.c.h.b16 %v7101
    %v7723 = vunpack.c.l.b16 %v7102
    %v7724 = vunpack.c.h.b16 %v7102
    %v7725 = vunpack.c.l.b16 %v7103
    %v7726 = vunpack.c.h.b16 %v7103
    %v7727 = vunpack.c.l.b16 %v7104
    %v7728 = vunpack.c.h.b16 %v7104
    %v7729 = vunpack.c.l.b16 %v7105
    %v7730 = vunpack.c.h.b16 %v7105
    %v7731 = vunpack.c.l.b16 %v7106
    %v7732 = vunpack.c.h.b16 %v7106
    %v7733 = vunpack.c.l.b16 %v7107
    %v7734 = vunpack.c.h.b16 %v7107
    %v7735 = vunpack.c.l.b16 %v7108
    %v7736 = vunpack.c.h.b16 %v7108
    %v7737 = vunpack.c.l.b16 %v7109
    %v7738 = vunpack.c.h.b16 %v7109
    %v7739 = vunpack.c.l.b16 %v7110
    %v7740 = vunpack.c.h.b16 %v7110
    %v7741 = vunpack.c.l.b16 %v7111
    %v7742 = vunpack.c.h.b16 %v7111
    %v7743 = vunpack.c.l.b16 %v7112
    %v7744 = vunpack.c.h.b16 %v7112
    %v7745 = vunpack.c.l.b16 %v7113
    %v7746 = vunpack.c.h.b16 %v7113
    %v7747 = vunpack.c.l.b16 %v7114
    %v7748 = vunpack.c.h.b16 %v7114
    %v7749 = vunpack.c.l.b16 %v7115
    %v7750 = vunpack.c.h.b16 %v7115
    %v7751 = vunpack.c.l.b16 %v7116
    %v7752 = vunpack.c.h.b16 %v7116
    %v7753 = vunpack.c.l.b16 %v7117
    %v7754 = vunpack.c.h.b16 %v7117
    %v7755 = vunpack.c.l.b16 %v7118
    %v7756 = vunpack.c.h.b16 %v7118
    %v7757 = vunpack.c.l.b16 %v7119
    %v7758 = vunpack.c.h.b16 %v7119
    %v7759 = vunpack.c.l.b16 %v7120
    %v7760 = vunpack.c.h.b16 %v7120
    %v7761 = vunpack.c.l.b16 %v7121
    %v7762 = vunpack.c.h.b16 %v7121
    %v7763 = vunpack.c.l.b16 %v7122
    %v7764 = vunpack.c.h.b16 %v7122
    %v7765 = vunpack.c.l.b16 %v7123
    %v7766 = vunpack.c.h.b16 %v7123
    %v7767 = vunpack.c.l.b16 %v7124
    %v7768 = vunpack.c.h.b16 %v7124
    %v7769 = vunpack.c.l.b16 %v7125
    %v7770 = vunpack.c.h.b16 %v7125
    %v7771 = vunpack.c.l.b16 %v7126
    %v7772 = vunpack.c.h.b16 %v7126
    %v7773 = vunpack.c.l.b16 %v7127
    %v7774 = vunpack.c.h.b16 %v7127
    %v7775 = vunpack.c.l.b16 %v7128
    %v7776 = vunpack.c.h.b16 %v7128
    %v7777 = vunpack.c.l.b16 %v7129
    %v7778 = vunpack.c.h.b16 %v7129
    %v7779 = vunpack.c.l.b16 %v7130
    %v7780 = vunpack.c.h.b16 %v7130
    %v7781 = vunpack.c.l.b16 %v7131
    %v7782 = vunpack.c.h.b16 %v7131
    %v7783 = vunpack.c.l.b16 %v7132
    %v7784 = vunpack.c.h.b16 %v7132
    %v7785 = vunpack.c.l.b16 %v7133
    %v7786 = vunpack.c.h.b16 %v7133
    %v7787 = vunpack.c.l.b16 %v7134
    %v7788 = vunpack.c.h.b16 %v7134
    %v7789 = vunpack.c.l.b16 %v7135
    %v7790 = vunpack.c.h.b16 %v7135
    %v7791 = vunpack.c.l.b16 %v7136
    %v7792 = vunpack.c.h.b16 %v7136
    %v7793 = vunpack.c.l.b16 %v7137
    %v7794 = vunpack.c.h.b16 %v7137
    %v7795 = vunpack.c.l.b16 %v7138
    %v7796 = vunpack.c.h.b16 %v7138
    %v7797 = vunpack.c.l.b16 %v7139
    %v7798 = vunpack.c.h.b16 %v7139
    %v7799 = vunpack.c.l.b16 %v7140
    %v7800 = vunpack.c.h.b16 %v7140
    %v7801 = vunpack.c.l.b16 %v7141
    %v7802 = vunpack.c.h.b16 %v7141
    %v7803 = vunpack.c.l.b16 %v7142
    %v7804 = vunpack.c.h.b16 %v7142
    %v7805 = vunpack.c.l.b16 %v7143
    %v7806 = vunpack.c.h.b16 %v7143
    %v7807 = vunpack.c.l.b16 %v7144
    %v7808 = vunpack.c.h.b16 %v7144
    %v7809 = vunpack.c.l.b16 %v7145
    %v7810 = vunpack.c.h.b16 %v7145
    %v7811 = vunpack.c.l.b16 %v7146
    %v7812 = vunpack.c.h.b16 %v7146
    %v7813 = vunpack.c.l.b16 %v7147
    %v7814 = vunpack.c.h.b16 %v7147
    %v7815 = vunpack.c.l.b16 %v7148
    %v7816 = vunpack.c.h.b16 %v7148
    %v7817 = vunpack.c.l.b16 %v7149
    %v7818 = vunpack.c.h.b16 %v7149
    %v7819 = vunpack.c.l.b16 %v7150
    %v7820 = vunpack.c.h.b16 %v7150
    %v7821 = vunpack.c.l.b16 %v7151
    %v7822 = vunpack.c.h.b16 %v7151
    %v7823 = vunpack.c.l.b16 %v7152
    %v7824 = vunpack.c.h.b16 %v7152
    %v7825 = vunpack.c.l.b16 %v7153
    %v7826 = vunpack.c.h.b16 %v7153
    %v7827 = vunpack.c.l.b16 %v7154
    %v7828 = vunpack.c.h.b16 %v7154
    %v7829 = vunpack.c.l.b16 %v7155
    %v7830 = vunpack.c.h.b16 %v7155
    %v7831 = vunpack.c.l.b16 %v7156
    %v7832 = vunpack.c.h.b16 %v7156
    %v7833 = vunpack.c.l.b16 %v7157
    %v7834 = vunpack.c.h.b16 %v7157
    %v7835 = vunpack.c.l.b16 %v7158
    %v7836 = vunpack.c.h.b16 %v7158
    %v7837 = vunpack.c.l.b16 %v7159
    %v7838 = vunpack.c.h.b16 %v7159
    %v7839 = vunpack.c.l.b16 %v7160
    %v7840 = vunpack.c.h.b16 %v7160
    %v7841 = vunpack.c.l.b16 %v7161
    %v7842 = vunpack.c.h.b16 %v7161
    %v7843 = vunpack.c.l.b16 %v7162
    %v7844 = vunpack.c.h.b16 %v7162
    %v7845 = vunpack.c.l.b16 %v7163
    %v7846 = vunpack.c.h.b16 %v7163
    %v7847 = vunpack.c.l.b16 %v7164
    %v7848 = vunpack.c.h.b16 %v7164
    %v7849 = vunpack.c.l.b16 %v7165
    %v7850 = vunpack.c.h.b16 %v7165
    %v7851 = vunpack.c.l.b16 %v7166
    %v7852 = vunpack.c.h.b16 %v7166
    %v7853 = vunpack.c.l.b16 %v7167
    %v7854 = vunpack.c.h.b16 %v7167
    %v7855 = vunpack.c.l.b16 %v7168
    %v7856 = vunpack.c.h.b16 %v7168
    %v7857 = vunpack.c.l.b16 %v7169
    %v7858 = vunpack.c.h.b16 %v7169
    %v7859 = vunpack.c.l.b16 %v7170
    %v7860 = vunpack.c.h.b16 %v7170
    %v7861 = vunpack.c.l.b16 %v7171
    %v7862 = vunpack.c.h.b16 %v7171
    %v7863 = vunpack.c.l.b16 %v7172
    %v7864 = vunpack.c.h.b16 %v7172
    %v7865 = vunpack.c.l.b16 %v7173
    %v7866 = vunpack.c.h.b16 %v7173
    %v7867 = vunpack.c.l.b16 %v7174
    %v7868 = vunpack.c.h.b16 %v7174
    %v7869 = vunpack.c.l.b16 %v7175
    %v7870 = vunpack.c.h.b16 %v7175
    %v7871 = vunpack.c.l.b16 %v7176
    %v7872 = vunpack.c.h.b16 %v7176
    %v7873 = vunpack.c.l.b16 %v7177
    %v7874 = vunpack.c.h.b16 %v7177
    %v7875 = vunpack.c.l.b16 %v7178
    %v7876 = vunpack.c.h.b16 %v7178
    %v7877 = vunpack.c.l.b16 %v7179
    %v7878 = vunpack.c.h.b16 %v7179
    %v7879 = vunpack.c.l.b16 %v7180
    %v7880 = vunpack.c.h.b16 %v7180
    %v7881 = vunpack.c.l.b16 %v7181
    %v7882 = vunpack.c.h.b16 %v7181
    %v7883 = vunpack.c.l.b16 %v7182
    %v7884 = vunpack.c.h.b16 %v7182
    %v7885 = vunpack.c.l.b16 %v7183
    %v7886 = vunpack.c.h.b16 %v7183
    %v7887 = vunpack.c.l.b16 %v7184
    %v7888 = vunpack.c.h.b16 %v7184
    %v7889 = vunpack.c.l.b16 %v7185
    %v7890 = vunpack.c.h.b16 %v7185
    %v7891 = vunpack.c.l.b16 %v7186
    %v7892 = vunpack.c.h.b16 %v7186
    %v7893 = vunpack.c.l.b16 %v7187
    %v7894 = vunpack.c.h.b16 %v7187
    %v7895 = vunpack.c.l.b16 %v7188
    %v7896 = vunpack.c.h.b16 %v7188
    %v7897 = vunpack.c.l.b16 %v7189
    %v7898 = vunpack.c.h.b16 %v7189
    %v7899 = vunpack.c.l.b16 %v7190
    %v7900 = vunpack.c.h.b16 %v7190
    %v7901 = vunpack.c.l.b16 %v7191
    %v7902 = vunpack.c.h.b16 %v7191
    %v7903 = vunpack.c.l.b16 %v7192
    %v7904 = vunpack.c.h.b16 %v7192
    %v7905 = vunpack.c.l.b16 %v7193
    %v7906 = vunpack.c.h.b16 %v7193
    %v7907 = vunpack.c.l.b16 %v7194
    %v7908 = vunpack.c.h.b16 %v7194
    %v7909 = vunpack.c.l.b16 %v7195
    %v7910 = vunpack.c.h.b16 %v7195
    %v7911 = vunpack.c.l.b16 %v7196
    %v7912 = vunpack.c.h.b16 %v7196
    %v7913 = vunpack.c.l.b16 %v7197
    %v7914 = vunpack.c.h.b16 %v7197
    %v7915 = vunpack.c.l.b16 %v7198
    %v7916 = vunpack.c.h.b16 %v7198
    %v7917 = vunpack.c.l.b16 %v7199
    %v7918 = vunpack.c.h.b16 %v7199
    %v7919 = vunpack.c.l.b16 %v7200
    %v7920 = vunpack.c.h.b16 %v7200
    %v7921 = vunpack.c.l.b16 %v7201
    %v7922 = vunpack.c.h.b16 %v7201
    %v7923 = vunpack.c.l.b16 %v7202
    %v7924 = vunpack.c.h.b16 %v7202
    %v7925 = vunpack.c.l.b16 %v7203
    %v7926 = vunpack.c.h.b16 %v7203
    %v7927 = vunpack.c.l.b16 %v7204
    %v7928 = vunpack.c.h.b16 %v7204
    %v7929 = vunpack.c.l.b16 %v7205
    %v7930 = vunpack.c.h.b16 %v7205
    %v7931 = vunpack.c.l.b16 %v7206
    %v7932 = vunpack.c.h.b16 %v7206
    %v7933 = vunpack.c.l.b16 %v7207
    %v7934 = vunpack.c.h.b16 %v7207
    %v7935 = vunpack.c.l.b16 %v7208
    %v7936 = vunpack.c.h.b16 %v7208
    %v7937 = vunpack.c.l.b16 %v7209
    %v7938 = vunpack.c.h.b16 %v7209
    %v7939 = vunpack.c.l.b16 %v7210
    %v7940 = vunpack.c.h.b16 %v7210
    %v7941 = vunpack.c.l.b16 %v7211
    %v7942 = vunpack.c.h.b16 %v7211
    %v7943 = vunpack.c.l.b16 %v7212
    %v7944 = vunpack.c.h.b16 %v7212
    %v7945 = vunpack.c.l.b16 %v7213
    %v7946 = vunpack.c.h.b16 %v7213
    %v7947 = vunpack.c.l.b16 %v7214
    %v7948 = vunpack.c.h.b16 %v7214
    %v7949 = vunpack.c.l.b16 %v7215
    %v7950 = vunpack.c.h.b16 %v7215
    %v7951 = vunpack.c.l.b16 %v7216
    %v7952 = vunpack.c.h.b16 %v7216
    %v7953 = vunpack.c.l.b16 %v7217
    %v7954 = vunpack.c.h.b16 %v7217
    %v7955 = vunpack.c.l.b16 %v7218
    %v7956 = vunpack.c.h.b16 %v7218
    %v7957 = vunpack.c.l.b16 %v7219
    %v7958 = vunpack.c.h.b16 %v7219
    %v7959 = vunpack.c.l.b16 %v7220
    %v7960 = vunpack.c.h.b16 %v7220
    %v7961 = vunpack.c.l.b16 %v7221
    %v7962 = vunpack.c.h.b16 %v7221
    %v7963 = vunpack.c.l.b16 %v7222
    %v7964 = vunpack.c.h.b16 %v7222
    %v7965 = vunpack.c.l.b16 %v7223
    %v7966 = vunpack.c.h.b16 %v7223
    %v7967 = vunpack.c.l.b16 %v7224
    %v7968 = vunpack.c.h.b16 %v7224
    %v7969 = vunpack.c.l.b16 %v7225
    %v7970 = vunpack.c.h.b16 %v7225
    %v7971 = vunpack.c.l.b16 %v7226
    %v7972 = vunpack.c.h.b16 %v7226
    %v7973 = vunpack.c.l.b16 %v7227
    %v7974 = vunpack.c.h.b16 %v7227
    %v7975 = vunpack.c.l.b16 %v7228
    %v7976 = vunpack.c.h.b16 %v7228
    %v7977 = vunpack.c.l.b16 %v7229
    %v7978 = vunpack.c.h.b16 %v7229
    %v7979 = vunpack.c.l.b16 %v7230
    %v7980 = vunpack.c.h.b16 %v7230
    %v7981 = vunpack.c.l.b16 %v7231
    %v7982 = vunpack.c.h.b16 %v7231
    %v7983 = vunpack.c.l.b16 %v7232
    %v7984 = vunpack.c.h.b16 %v7232
    %v7985 = vunpack.c.l.b16 %v7233
    %v7986 = vunpack.c.h.b16 %v7233
    %v7987 = vunpack.c.l.b16 %v7234
    %v7988 = vunpack.c.h.b16 %v7234
    %v7989 = vunpack.c.l.b16 %v7235
    %v7990 = vunpack.c.h.b16 %v7235
    %v7991 = vunpack.c.l.b16 %v7236
    %v7992 = vunpack.c.h.b16 %v7236
    %v7993 = vunpack.c.l.b16 %v7237
    %v7994 = vunpack.c.h.b16 %v7237
    %v7995 = vunpack.c.l.b16 %v7238
    %v7996 = vunpack.c.h.b16 %v7238
    %v7997 = vunpack.c.l.b16 %v7239
    %v7998 = vunpack.c.h.b16 %v7239
    %v7999 = vunpack.c.l.b16 %v7240
    %v8000 = vunpack.c.h.b16 %v7240
    %v8001 = vunpack.c.l.b16 %v7241
    %v8002 = vunpack.c.h.b16 %v7241
    %v8003 = vunpack.c.l.b16 %v7242
    %v8004 = vunpack.c.h.b16 %v7242
    %v8005 = vunpack.c.l.b16 %v7243
    %v8006 = vunpack.c.h.b16 %v7243
    %v8007 = vunpack.c.l.b16 %v7244
    %v8008 = vunpack.c.h.b16 %v7244
    %v8009 = vunpack.c.l.b16 %v7245
    %v8010 = vunpack.c.h.b16 %v7245
    %v8011 = vunpack.c.l.b16 %v7246
    %v8012 = vunpack.c.h.b16 %v7246
    %v8013 = vunpack.c.l.b16 %v7247
    %v8014 = vunpack.c.h.b16 %v7247
    %v8015 = vunpack.c.l.b16 %v7248
    %v8016 = vunpack.c.h.b16 %v7248
    %v8017 = vunpack.c.l.b16 %v7249
    %v8018 = vunpack.c.h.b16 %v7249
    %v8019 = vunpack.c.l.b16 %v7250
    %v8020 = vunpack.c.h.b16 %v7250
    %v8021 = vunpack.c.l.b16 %v7251
    %v8022 = vunpack.c.h.b16 %v7251
    %v8023 = vunpack.c.l.b16 %v7252
    %v8024 = vunpack.c.h.b16 %v7252
    %v8025 = vunpack.c.l.b16 %v7253
    %v8026 = vunpack.c.h.b16 %v7253
    %v8027 = vunpack.c.l.b16 %v7254
    %v8028 = vunpack.c.h.b16 %v7254
    %v8029 = vunpack.c.l.b16 %v7255
    %v8030 = vunpack.c.h.b16 %v7255
    %v8031 = vunpack.c.l.b16 %v7256
    %v8032 = vunpack.c.h.b16 %v7256
    %v8033 = vunpack.c.l.b16 %v7257
    %v8034 = vunpack.c.h.b16 %v7257
    %v8035 = vunpack.c.l.b16 %v7258
    %v8036 = vunpack.c.h.b16 %v7258
    %v8037 = vunpack.c.l.b16 %v7259
    %v8038 = vunpack.c.h.b16 %v7259
    %v8039 = vunpack.c.l.b16 %v7260
    %v8040 = vunpack.c.h.b16 %v7260
    %v8041 = vunpack.c.l.b16 %v7261
    %v8042 = vunpack.c.h.b16 %v7261
    %v8043 = vpack.c.b16 %v7533, %v7531
    %v8044 = vpack.c.b16 %v7534, %v7532
    %v8045 = vpack.c.b16 %v7537, %v7535
    %v8046 = vpack.c.b16 %v7538, %v7536
    %v8047 = vpack.c.b16 %v7541, %v7539
    %v8048 = vpack.c.b16 %v7542, %v7540
    %v8049 = vpack.c.b16 %v7545, %v7543
    %v8050 = vpack.c.b16 %v7546, %v7544
    %v8051 = vpack.c.b16 %v7549, %v7547
    %v8052 = vpack.c.b16 %v7550, %v7548
    %v8053 = vpack.c.b16 %v7553, %v7551
    %v8054 = vpack.c.b16 %v7554, %v7552
    %v8055 = vpack.c.b16 %v7557, %v7555
    %v8056 = vpack.c.b16 %v7558, %v7556
    %v8057 = vpack.c.b16 %v7561, %v7559
    %v8058 = vpack.c.b16 %v7562, %v7560
    %v8059 = vpack.c.b16 %v7565, %v7563
    %v8060 = vpack.c.b16 %v7566, %v7564
    %v8061 = vpack.c.b16 %v7569, %v7567
    %v8062 = vpack.c.b16 %v7570, %v7568
    %v8063 = vpack.c.b16 %v7573, %v7571
    %v8064 = vpack.c.b16 %v7574, %v7572
    %v8065 = vpack.c.b16 %v7577, %v7575
    %v8066 = vpack.c.b16 %v7578, %v7576
    %v8067 = vpack.c.b16 %v7581, %v7579
    %v8068 = vpack.c.b16 %v7582, %v7580
    %v8069 = vpack.c.b16 %v7585, %v7583
    %v8070 = vpack.c.b16 %v7586, %v7584
    %v8071 = vpack.c.b16 %v7589, %v7587
    %v8072 = vpack.c.b16 %v7590, %v7588
    %v8073 = vpack.c.b16 %v7593, %v7591
    %v8074 = vpack.c.b16 %v7594, %v7592
    %v8075 = vpack.c.b16 %v7597, %v7595
    %v8076 = vpack.c.b16 %v7598, %v7596
    %v8077 = vpack.c.b16 %v7601, %v7599
    %v8078 = vpack.c.b16 %v7602, %v7600
    %v8079 = vpack.c.b16 %v7605, %v7603
    %v8080 = vpack.c.b16 %v7606, %v7604
    %v8081 = vpack.c.b16 %v7609, %v7607
    %v8082 = vpack.c.b16 %v7610, %v7608
    %v8083 = vpack.c.b16 %v7613, %v7611
    %v8084 = vpack.c.b16 %v7614, %v7612
    %v8085 = vpack.c.b16 %v7617, %v7615
    %v8086 = vpack.c.b16 %v7618, %v7616
    %v8087 = vpack.c.b16 %v7621, %v7619
    %v8088 = vpack.c.b16 %v7622, %v7620
    %v8089 = vpack.c.b16 %v7625, %v7623
    %v8090 = vpack.c.b16 %v7626, %v7624
    %v8091 = vpack.c.b16 %v7629, %v7627
    %v8092 = vpack.c.b16 %v7630, %v7628
    %v8093 = vpack.c.b16 %v7633, %v7631
    %v8094 = vpack.c.b16 %v7634, %v7632
    %v8095 = vpack.c.b16 %v7637, %v7635
    %v8096 = vpack.c.b16 %v7638, %v7636
    %v8097 = vpack.c.b16 %v7641, %v7639
    %v8098 = vpack.c.b16 %v7642, %v7640
    %v8099 = vpack.c.b16 %v7645, %v7643
    %v8100 = vpack.c.b16 %v7646, %v7644
    %v8101 = vpack.c.b16 %v7649, %v7647
    %v8102 = vpack.c.b16 %v7650, %v7648
    %v8103 = vpack.c.b16 %v7653, %v7651
    %v8104 = vpack.c.b16 %v7654, %v7652
    %v8105 = vpack.c.b16 %v7657, %v7655
    %v8106 = vpack.c.b16 %v7658, %v7656
    %v8107 = vpack.c.b16 %v7661, %v7659
    %v8108 = vpack.c.b16 %v7662, %v7660
    %v8109 = vpack.c.b16 %v7665, %v7663
    %v8110 = vpack.c.b16 %v7666, %v7664
    %v8111 = vpack.c.b16 %v7669, %v7667
    %v8112 = vpack.c.b16 %v7670, %v7668
    %v8113 = vpack.c.b16 %v7673, %v7671
    %v8114 = vpack.c.b16 %v7674, %v7672
    %v8115 = vpack.c.b16 %v7677, %v7675
    %v8116 = vpack.c.b16 %v7678, %v7676
    %v8117 = vpack.c.b16 %v7681, %v7679
    %v8118 = vpack.c.b16 %v7682, %v7680
    %v8119 = vpack.c.b16 %v7685, %v7683
    %v8120 = vpack.c.b16 %v7686, %v7684
    %v8121 = vpack.c.b16 %v7689, %v7687
    %v8122 = vpack.c.b16 %v7690, %v7688
    %v8123 = vpack.c.b16 %v7693, %v7691
    %v8124 = vpack.c.b16 %v7694, %v7692
    %v8125 = vpack.c.b16 %v7697, %v7695
    %v8126 = vpack.c.b16 %v7698, %v7696
    %v8127 = vpack.c.b16 %v7701, %v7699
    %v8128 = vpack.c.b16 %v7702, %v7700
    %v8129 = vpack.c.b16 %v7705, %v7703
    %v8130 = vpack.c.b16 %v7706, %v7704
    %v8131 = vpack.c.b16 %v7709, %v7707
    %v8132 = vpack.c.b16 %v7710, %v7708
    %v8133 = vpack.c.b16 %v7713, %v7711
    %v8134 = vpack.c.b16 %v7714, %v7712
    %v8135 = vpack.c.b16 %v7717, %v7715
    %v8136 = vpack.c.b16 %v7718, %v7716
    %v8137 = vpack.c.b16 %v7721, %v7719
    %v8138 = vpack.c.b16 %v7722, %v7720
    %v8139 = vpack.c.b16 %v7725, %v7723
    %v8140 = vpack.c.b16 %v7726, %v7724
    %v8141 = vpack.c.b16 %v7729, %v7727
    %v8142 = vpack.c.b16 %v7730, %v7728
    %v8143 = vpack.c.b16 %v7733, %v7731
    %v8144 = vpack.c.b16 %v7734, %v7732
    %v8145 = vpack.c.b16 %v7737, %v7735
    %v8146 = vpack.c.b16 %v7738, %v7736
    %v8147 = vpack.c.b16 %v7741, %v7739
    %v8148 = vpack.c.b16 %v7742, %v7740
    %v8149 = vpack.c.b16 %v7745, %v7743
    %v8150 = vpack.c.b16 %v7746, %v7744
    %v8151 = vpack.c.b16 %v7749, %v7747
    %v8152 = vpack.c.b16 %v7750, %v7748
    %v8153 = vpack.c.b16 %v7753, %v7751
    %v8154 = vpack.c.b16 %v7754, %v7752
    %v8155 = vpack.c.b16 %v7757, %v7755
    %v8156 = vpack.c.b16 %v7758, %v7756
    %v8157 = vpack.c.b16 %v7761, %v7759
    %v8158 = vpack.c.b16 %v7762, %v7760
    %v8159 = vpack.c.b16 %v7765, %v7763
    %v8160 = vpack.c.b16 %v7766, %v7764
    %v8161 = vpack.c.b16 %v7769, %v7767
    %v8162 = vpack.c.b16 %v7770, %v7768
    %v8163 = vpack.c.b16 %v7773, %v7771
    %v8164 = vpack.c.b16 %v7774, %v7772
    %v8165 = vpack.c.b16 %v7777, %v7775
    %v8166 = vpack.c.b16 %v7778, %v7776
    %v8167 = vpack.c.b16 %v7781, %v7779
    %v8168 = vpack.c.b16 %v7782, %v7780
    %v8169 = vpack.c.b16 %v7785, %v7783
    %v8170 = vpack.c.b16 %v7786, %v7784
    %v8171 = vpack.c.b16 %v7789, %v7787
    %v8172 = vpack.c.b16 %v7790, %v7788
    %v8173 = vpack.c.b16 %v7793, %v7791
    %v8174 = vpack.c.b16 %v7794, %v7792
    %v8175 = vpack.c.b16 %v7797, %v7795
    %v8176 = vpack.c.b16 %v7798, %v7796
    %v8177 = vpack.c.b16 %v7801, %v7799
    %v8178 = vpack.c.b16 %v7802, %v7800
    %v8179 = vpack.c.b16 %v7805, %v7803
    %v8180 = vpack.c.b16 %v7806, %v7804
    %v8181 = vpack.c.b16 %v7809, %v7807
    %v8182 = vpack.c.b16 %v7810, %v7808
    %v8183 = vpack.c.b16 %v7813, %v7811
    %v8184 = vpack.c.b16 %v7814, %v7812
    %v8185 = vpack.c.b16 %v7817, %v7815
    %v8186 = vpack.c.b16 %v7818, %v7816
    %v8187 = vpack.c.b16 %v7821, %v7819
    %v8188 = vpack.c.b16 %v7822, %v7820
    %v8189 = vpack.c.b16 %v7825, %v7823
    %v8190 = vpack.c.b16 %v7826, %v7824
    %v8191 = vpack.c.b16 %v7829, %v7827
    %v8192 = vpack.c.b16 %v7830, %v7828
    %v8193 = vpack.c.b16 %v7833, %v7831
    %v8194 = vpack.c.b16 %v7834, %v7832
    %v8195 = vpack.c.b16 %v7837, %v7835
    %v8196 = vpack.c.b16 %v7838, %v7836
    %v8197 = vpack.c.b16 %v7841, %v7839
    %v8198 = vpack.c.b16 %v7842, %v7840
    %v8199 = vpack.c.b16 %v7845, %v7843
    %v8200 = vpack.c.b16 %v7846, %v7844
    %v8201 = vpack.c.b16 %v7849, %v7847
    %v8202 = vpack.c.b16 %v7850, %v7848
    %v8203 = vpack.c.b16 %v7853, %v7851
    %v8204 = vpack.c.b16 %v7854, %v7852
    %v8205 = vpack.c.b16 %v7857, %v7855
    %v8206 = vpack.c.b16 %v7858, %v7856
    %v8207 = vpack.c.b16 %v7861, %v7859
    %v8208 = vpack.c.b16 %v7862, %v7860
    %v8209 = vpack.c.b16 %v7865, %v7863
    %v8210 = vpack.c.b16 %v7866, %v7864
    %v8211 = vpack.c.b16 %v7869, %v7867
    %v8212 = vpack.c.b16 %v7870, %v7868
    %v8213 = vpack.c.b16 %v7873, %v7871
    %v8214 = vpack.c.b16 %v7874, %v7872
    %v8215 = vpack.c.b16 %v7877, %v7875
    %v8216 = vpack.c.b16 %v7878, %v7876
    %v8217 = vpack.c.b16 %v7881, %v7879
    %v8218 = vpack.c.b16 %v7882, %v7880
    %v8219 = vpack.c.b16 %v7885, %v7883
    %v8220 = vpack.c.b16 %v7886, %v7884
    %v8221 = vpack.c.b16 %v7889, %v7887
    %v8222 = vpack.c.b16 %v7890, %v7888
    %v8223 = vpack.c.b16 %v7893, %v7891
    %v8224 = vpack.c.b16 %v7894, %v7892
    %v8225 = vpack.c.b16 %v7897, %v7895
    %v8226 = vpack.c.b16 %v7898, %v7896
    %v8227 = vpack.c.b16 %v7901, %v7899
    %v8228 = vpack.c.b16 %v7902, %v7900
    %v8229 = vpack.c.b16 %v7905, %v7903
    %v8230 = vpack.c.b16 %v7906, %v7904
    %v8231 = vpack.c.b16 %v7909, %v7907
    %v8232 = vpack.c.b16 %v7910, %v7908
    %v8233 = vpack.c.b16 %v7913, %v7911
    %v8234 = vpack.c.b16 %v7914, %v7912
    %v8235 = vpack.c.b16 %v7917, %v7915
    %v8236 = vpack.c.b16 %v7918, %v7916
    %v8237 = vpack.c.b16 %v7921, %v7919
    %v8238 = vpack.c.b16 %v7922, %v7920
    %v8239 = vpack.c.b16 %v7925, %v7923
    %v8240 = vpack.c.b16 %v7926, %v7924
    %v8241 = vpack.c.b16 %v7929, %v7927
    %v8242 = vpack.c.b16 %v7930, %v7928
    %v8243 = vpack.c.b16 %v7933, %v7931
    %v8244 = vpack.c.b16 %v7934, %v7932
    %v8245 = vpack.c.b16 %v7937, %v7935
    %v8246 = vpack.c.b16 %v7938, %v7936
    %v8247 = vpack.c.b16 %v7941, %v7939
    %v8248 = vpack.c.b16 %v7942, %v7940
    %v8249 = vpack.c.b16 %v7945, %v7943
    %v8250 = vpack.c.b16 %v7946, %v7944
    %v8251 = vpack.c.b16 %v7949, %v7947
    %v8252 = vpack.c.b16 %v7950, %v7948
    %v8253 = vpack.c.b16 %v7953, %v7951
    %v8254 = vpack.c.b16 %v7954, %v7952
    %v8255 = vpack.c.b16 %v7957, %v7955
    %v8256 = vpack.c.b16 %v7958, %v7956
    %v8257 = vpack.c.b16 %v7961, %v7959
    %v8258 = vpack.c.b16 %v7962, %v7960
    %v8259 = vpack.c.b16 %v7965, %v7963
    %v8260 = vpack.c.b16 %v7966, %v7964
    %v8261 = vpack.c.b16 %v7969, %v7967
    %v8262 = vpack.c.b16 %v7970, %v7968
    %v8263 = vpack.c.b16 %v7973, %v7971
    %v8264 = vpack.c.b16 %v7974, %v7972
    %v8265 = vpack.c.b16 %v7977, %v7975
    %v8266 = vpack.c.b16 %v7978, %v7976
    %v8267 = vpack.c.b16 %v7981, %v7979
    %v8268 = vpack.c.b16 %v7982, %v7980
    %v8269 = vpack.c.b16 %v7985, %v7983
    %v8270 = vpack.c.b16 %v7986, %v7984
    %v8271 = vpack.c.b16 %v7989, %v7987
    %v8272 = vpack.c.b16 %v7990, %v7988
    %v8273 = vpack.c.b16 %v7993, %v7991
    %v8274 = vpack.c.b16 %v7994, %v7992
    %v8275 = vpack.c.b16 %v7997, %v7995
    %v8276 = vpack.c.b16 %v7998, %v7996
    %v8277 = vpack.c.b16 %v8001, %v7999
    %v8278 = vpack.c.b16 %v8002, %v8000
    %v8279 = vpack.c.b16 %v8005, %v8003
    %v8280 = vpack.c.b16 %v8006, %v8004
    %v8281 = vpack.c.b16 %v8009, %v8007
    %v8282 = vpack.c.b16 %v8010, %v8008
    %v8283 = vpack.c.b16 %v8013, %v8011
    %v8284 = vpack.c.b16 %v8014, %v8012
    %v8285 = vpack.c.b16 %v8017, %v8015
    %v8286 = vpack.c.b16 %v8018, %v8016
    %v8287 = vpack.c.b16 %v8021, %v8019
    %v8288 = vpack.c.b16 %v8022, %v8020
    %v8289 = vpack.c.b16 %v8025, %v8023
    %v8290 = vpack.c.b16 %v8026, %v8024
    %v8291 = vpack.c.b16 %v8029, %v8027
    %v8292 = vpack.c.b16 %v8030, %v8028
    %v8293 = vpack.c.b16 %v8033, %v8031
    %v8294 = vpack.c.b16 %v8034, %v8032
    %v8295 = vpack.c.b16 %v8037, %v8035
    %v8296 = vpack.c.b16 %v8038, %v8036
    %v8297 = vpack.c.b16 %v8041, %v8039
    %v8298 = vpack.c.b16 %v8042, %v8040
    %8555 = vmatprep.subr.bf16.mxu0 %v8044
    %8556 = vmatpush1.bf16.msra.mxu0 %v8043
    %8557 = vmatprep.subr.bf16.mxu0 %v8046
    %8558 = vmatpush1.bf16.msra.mxu0 %v8045
    %8559 = vmatprep.subr.bf16.mxu0 %v8048
    %8560 = vmatpush1.bf16.msra.mxu0 %v8047
    %8561 = vmatprep.subr.bf16.mxu0 %v8050
    %8562 = vmatpush1.bf16.msra.mxu0 %v8049
    %8563 = vmatprep.subr.bf16.mxu0 %v8052
    %8564 = vmatpush1.bf16.msra.mxu0 %v8051
    %8565 = vmatprep.subr.bf16.mxu0 %v8054
    %8566 = vmatpush1.bf16.msra.mxu0 %v8053
    %8567 = vmatprep.subr.bf16.mxu0 %v8056
    %8568 = vmatpush1.bf16.msra.mxu0 %v8055
    %8569 = vmatprep.subr.bf16.mxu0 %v8058
    %8570 = vmatpush1.bf16.msra.mxu0 %v8057
    %8571 = vmatprep.subr.bf16.mxu0 %v8060
    %8572 = vmatpush1.bf16.msra.mxu0 %v8059
    %8573 = vmatprep.subr.bf16.mxu0 %v8062
    %8574 = vmatpush1.bf16.msra.mxu0 %v8061
    %8575 = vmatprep.subr.bf16.mxu0 %v8064
    %8576 = vmatpush1.bf16.msra.mxu0 %v8063
    %8577 = vmatprep.subr.bf16.mxu0 %v8066
    %8578 = vmatpush1.bf16.msra.mxu0 %v8065
    %8579 = vmatprep.subr.bf16.mxu0 %v8068
    %8580 = vmatpush1.bf16.msra.mxu0 %v8067
    %8581 = vmatprep.subr.bf16.mxu0 %v8070
    %8582 = vmatpush1.bf16.msra.mxu0 %v8069
    %8583 = vmatprep.subr.bf16.mxu0 %v8072
    %8584 = vmatpush1.bf16.msra.mxu0 %v8071
    %8585 = vmatprep.subr.bf16.mxu0 %v8074
    %8586 = vmatpush1.bf16.msra.mxu0 %v8073
    %8587 = vmatprep.mubr.bf16.mxu0 %v6990
    %8588 = vmatmul.mubr.bf16.gmra.mrb[0].mxu0 %v6989
    %v8589 = vpop.f32.mrb[0].mxu0
    %v8590 = vadd.f32 %v7268, %v8589
    %v8591 = vpop.f32.mrb[0].mxu0
    %v8592 = vadd.f32 %v7272, %v8591
    %v8593 = vpop.f32.mrb[0].mxu0
    %v8594 = vpop.f32.mrb[0].mxu0
    %8595 = vdwg.mxu0
    %8596 = vmatprep.subr.bf16.mxu0 %v8076
    %8597 = vmatpush1.bf16.msra.mxu0 %v8075
    %8598 = vmatprep.subr.bf16.mxu0 %v8078
    %8599 = vmatpush1.bf16.msra.mxu0 %v8077
    %8600 = vmatprep.subr.bf16.mxu0 %v8080
    %8601 = vmatpush1.bf16.msra.mxu0 %v8079
    %8602 = vmatprep.subr.bf16.mxu0 %v8082
    %8603 = vmatpush1.bf16.msra.mxu0 %v8081
    %8604 = vmatprep.subr.bf16.mxu0 %v8084
    %8605 = vmatpush1.bf16.msra.mxu0 %v8083
    %8606 = vmatprep.subr.bf16.mxu0 %v8086
    %8607 = vmatpush1.bf16.msra.mxu0 %v8085
    %8608 = vmatprep.subr.bf16.mxu0 %v8088
    %8609 = vmatpush1.bf16.msra.mxu0 %v8087
    %8610 = vmatprep.subr.bf16.mxu0 %v8090
    %8611 = vmatpush1.bf16.msra.mxu0 %v8089
    %8612 = vmatprep.subr.bf16.mxu0 %v8092
    %8613 = vmatpush1.bf16.msra.mxu0 %v8091
    %8614 = vmatprep.subr.bf16.mxu0 %v8094
    %8615 = vmatpush1.bf16.msra.mxu0 %v8093
    %8616 = vmatprep.subr.bf16.mxu0 %v8096
    %8617 = vmatpush1.bf16.msra.mxu0 %v8095
    %8618 = vmatprep.subr.bf16.mxu0 %v8098
    %8619 = vmatpush1.bf16.msra.mxu0 %v8097
    %8620 = vmatprep.subr.bf16.mxu0 %v8100
    %8621 = vmatpush1.bf16.msra.mxu0 %v8099
    %8622 = vmatprep.subr.bf16.mxu0 %v8102
    %8623 = vmatpush1.bf16.msra.mxu0 %v8101
    %8624 = vmatprep.subr.bf16.mxu0 %v8104
    %8625 = vmatpush1.bf16.msra.mxu0 %v8103
    %8626 = vmatprep.subr.bf16.mxu0 %v8106
    %8627 = vmatpush1.bf16.msra.mxu0 %v8105
    %8628 = vmatprep.mubr.bf16.mxu0 %v6992
    %8629 = vmatmul.mubr.bf16.gmra.mrb[0].mxu0 %v6991
    %v8630 = vpop.f32.mrb[0].mxu0
    %v8631 = vadd.f32 %v8590, %v8630
    %v8632 = vpop.f32.mrb[0].mxu0
    %v8633 = vadd.f32 %v8592, %v8632
    %v8634 = vpop.f32.mrb[0].mxu0
    %v8635 = vpop.f32.mrb[0].mxu0
    %8636 = vdwg.mxu0
    %8637 = vmatprep.subr.bf16.mxu0 %v8108
    %8638 = vmatpush1.bf16.msra.mxu0 %v8107
    %8639 = vmatprep.subr.bf16.mxu0 %v8110
    %8640 = vmatpush1.bf16.msra.mxu0 %v8109
    %8641 = vmatprep.subr.bf16.mxu0 %v8112
    %8642 = vmatpush1.bf16.msra.mxu0 %v8111
    %8643 = vmatprep.subr.bf16.mxu0 %v8114
    %8644 = vmatpush1.bf16.msra.mxu0 %v8113
    %8645 = vmatprep.subr.bf16.mxu0 %v8116
    %8646 = vmatpush1.bf16.msra.mxu0 %v8115
    %8647 = vmatprep.subr.bf16.mxu0 %v8118
    %8648 = vmatpush1.bf16.msra.mxu0 %v8117
    %8649 = vmatprep.subr.bf16.mxu0 %v8120
    %8650 = vmatpush1.bf16.msra.mxu0 %v8119
    %8651 = vmatprep.subr.bf16.mxu0 %v8122
    %8652 = vmatpush1.bf16.msra.mxu0 %v8121
    %8653 = vmatprep.subr.bf16.mxu0 %v8124
    %8654 = vmatpush1.bf16.msra.mxu0 %v8123
    %8655 = vmatprep.subr.bf16.mxu0 %v8126
    %8656 = vmatpush1.bf16.msra.mxu0 %v8125
    %8657 = vmatprep.subr.bf16.mxu0 %v8128
    %8658 = vmatpush1.bf16.msra.mxu0 %v8127
    %8659 = vmatprep.subr.bf16.mxu0 %v8130
    %8660 = vmatpush1.bf16.msra.mxu0 %v8129
    %8661 = vmatprep.subr.bf16.mxu0 %v8132
    %8662 = vmatpush1.bf16.msra.mxu0 %v8131
    %8663 = vmatprep.subr.bf16.mxu0 %v8134
    %8664 = vmatpush1.bf16.msra.mxu0 %v8133
    %8665 = vmatprep.subr.bf16.mxu0 %v8136
    %8666 = vmatpush1.bf16.msra.mxu0 %v8135
    %8667 = vmatprep.subr.bf16.mxu0 %v8138
    %8668 = vmatpush1.bf16.msra.mxu0 %v8137
    %8669 = vmatprep.mubr.bf16.mxu0 %v6994
    %8670 = vmatmul.mubr.bf16.gmra.mrb[0].mxu0 %v6993
    %v8671 = vpop.f32.mrb[0].mxu0
    %v8672 = vadd.f32 %v8631, %v8671
    %v8673 = vpop.f32.mrb[0].mxu0
    %v8674 = vadd.f32 %v8633, %v8673
    %v8675 = vpop.f32.mrb[0].mxu0
    %v8676 = vpop.f32.mrb[0].mxu0
    %8677 = vdwg.mxu0
    %8678 = vmatprep.subr.bf16.mxu0 %v8140
    %8679 = vmatpush1.bf16.msra.mxu0 %v8139
    %8680 = vmatprep.subr.bf16.mxu0 %v8142
    %8681 = vmatpush1.bf16.msra.mxu0 %v8141
    %8682 = vmatprep.subr.bf16.mxu0 %v8144
    %8683 = vmatpush1.bf16.msra.mxu0 %v8143
    %8684 = vmatprep.subr.bf16.mxu0 %v8146
    %8685 = vmatpush1.bf16.msra.mxu0 %v8145
    %8686 = vmatprep.subr.bf16.mxu0 %v8148
    %8687 = vmatpush1.bf16.msra.mxu0 %v8147
    %8688 = vmatprep.subr.bf16.mxu0 %v8150
    %8689 = vmatpush1.bf16.msra.mxu0 %v8149
    %8690 = vmatprep.subr.bf16.mxu0 %v8152
    %8691 = vmatpush1.bf16.msra.mxu0 %v8151
    %8692 = vmatprep.subr.bf16.mxu0 %v8154
    %8693 = vmatpush1.bf16.msra.mxu0 %v8153
    %8694 = vmatprep.subr.bf16.mxu0 %v8156
    %8695 = vmatpush1.bf16.msra.mxu0 %v8155
    %8696 = vmatprep.subr.bf16.mxu0 %v8158
    %8697 = vmatpush1.bf16.msra.mxu0 %v8157
    %8698 = vmatprep.subr.bf16.mxu0 %v8160
    %8699 = vmatpush1.bf16.msra.mxu0 %v8159
    %8700 = vmatprep.subr.bf16.mxu0 %v8162
    %8701 = vmatpush1.bf16.msra.mxu0 %v8161
    %8702 = vmatprep.subr.bf16.mxu0 %v8164
    %8703 = vmatpush1.bf16.msra.mxu0 %v8163
    %8704 = vmatprep.subr.bf16.mxu0 %v8166
    %8705 = vmatpush1.bf16.msra.mxu0 %v8165
    %8706 = vmatprep.subr.bf16.mxu0 %v8168
    %8707 = vmatpush1.bf16.msra.mxu0 %v8167
    %8708 = vmatprep.subr.bf16.mxu0 %v8170
    %8709 = vmatpush1.bf16.msra.mxu0 %v8169
    %8710 = vmatprep.mubr.bf16.mxu0 %v6996
    %8711 = vmatmul.mubr.bf16.gmra.mrb[0].mxu0 %v6995
    %v8712 = vpop.f32.mrb[0].mxu0
    %v8713 = vadd.f32 %v8672, %v8712
    %v8714 = vpop.f32.mrb[0].mxu0
    %v8715 = vadd.f32 %v8674, %v8714
    %v8716 = vpop.f32.mrb[0].mxu0
    %v8717 = vpop.f32.mrb[0].mxu0
    %8718 = vdwg.mxu0
    %8719 = vmatprep.subr.bf16.mxu0 %v8172
    %8720 = vmatpush1.bf16.msra.mxu0 %v8171
    %8721 = vmatprep.subr.bf16.mxu0 %v8174
    %8722 = vmatpush1.bf16.msra.mxu0 %v8173
    %8723 = vmatprep.subr.bf16.mxu0 %v8176
    %8724 = vmatpush1.bf16.msra.mxu0 %v8175
    %8725 = vmatprep.subr.bf16.mxu0 %v8178
    %8726 = vmatpush1.bf16.msra.mxu0 %v8177
    %8727 = vmatprep.subr.bf16.mxu0 %v8180
    %8728 = vmatpush1.bf16.msra.mxu0 %v8179
    %8729 = vmatprep.subr.bf16.mxu0 %v8182
    %8730 = vmatpush1.bf16.msra.mxu0 %v8181
    %8731 = vmatprep.subr.bf16.mxu0 %v8184
    %8732 = vmatpush1.bf16.msra.mxu0 %v8183
    %8733 = vmatprep.subr.bf16.mxu0 %v8186
    %8734 = vmatpush1.bf16.msra.mxu0 %v8185
    %8735 = vmatprep.subr.bf16.mxu0 %v8188
    %8736 = vmatpush1.bf16.msra.mxu0 %v8187
    %8737 = vmatprep.subr.bf16.mxu0 %v8190
    %8738 = vmatpush1.bf16.msra.mxu0 %v8189
    %8739 = vmatprep.subr.bf16.mxu0 %v8192
    %8740 = vmatpush1.bf16.msra.mxu0 %v8191
    %8741 = vmatprep.subr.bf16.mxu0 %v8194
    %8742 = vmatpush1.bf16.msra.mxu0 %v8193
    %8743 = vmatprep.subr.bf16.mxu0 %v8196
    %8744 = vmatpush1.bf16.msra.mxu0 %v8195
    %8745 = vmatprep.subr.bf16.mxu0 %v8198
    %8746 = vmatpush1.bf16.msra.mxu0 %v8197
    %8747 = vmatprep.subr.bf16.mxu0 %v8200
    %8748 = vmatpush1.bf16.msra.mxu0 %v8199
    %8749 = vmatprep.subr.bf16.mxu0 %v8202
    %8750 = vmatpush1.bf16.msra.mxu0 %v8201
    %8751 = vmatprep.mubr.bf16.mxu0 %v6998
    %8752 = vmatmul.mubr.bf16.gmra.mrb[0].mxu0 %v6997
    %v8753 = vpop.f32.mrb[0].mxu0
    %v8754 = vadd.f32 %v8713, %v8753
    %v8755 = vpop.f32.mrb[0].mxu0
    %v8756 = vadd.f32 %v8715, %v8755
    %v8757 = vpop.f32.mrb[0].mxu0
    %v8758 = vpop.f32.mrb[0].mxu0
    %8759 = vdwg.mxu0
    %8760 = vmatprep.subr.bf16.mxu0 %v8204
    %8761 = vmatpush1.bf16.msra.mxu0 %v8203
    %8762 = vmatprep.subr.bf16.mxu0 %v8206
    %8763 = vmatpush1.bf16.msra.mxu0 %v8205
    %8764 = vmatprep.subr.bf16.mxu0 %v8208
    %8765 = vmatpush1.bf16.msra.mxu0 %v8207
    %8766 = vmatprep.subr.bf16.mxu0 %v8210
    %8767 = vmatpush1.bf16.msra.mxu0 %v8209
    %8768 = vmatprep.subr.bf16.mxu0 %v8212
    %8769 = vmatpush1.bf16.msra.mxu0 %v8211
    %8770 = vmatprep.subr.bf16.mxu0 %v8214
    %8771 = vmatpush1.bf16.msra.mxu0 %v8213
    %8772 = vmatprep.subr.bf16.mxu0 %v8216
    %8773 = vmatpush1.bf16.msra.mxu0 %v8215
    %8774 = vmatprep.subr.bf16.mxu0 %v8218
    %8775 = vmatpush1.bf16.msra.mxu0 %v8217
    %8776 = vmatprep.subr.bf16.mxu0 %v8220
    %8777 = vmatpush1.bf16.msra.mxu0 %v8219
    %8778 = vmatprep.subr.bf16.mxu0 %v8222
    %8779 = vmatpush1.bf16.msra.mxu0 %v8221
    %8780 = vmatprep.subr.bf16.mxu0 %v8224
    %8781 = vmatpush1.bf16.msra.mxu0 %v8223
    %8782 = vmatprep.subr.bf16.mxu0 %v8226
    %8783 = vmatpush1.bf16.msra.mxu0 %v8225
    %8784 = vmatprep.subr.bf16.mxu0 %v8228
    %8785 = vmatpush1.bf16.msra.mxu0 %v8227
    %8786 = vmatprep.subr.bf16.mxu0 %v8230
    %8787 = vmatpush1.bf16.msra.mxu0 %v8229
    %8788 = vmatprep.subr.bf16.mxu0 %v8232
    %8789 = vmatpush1.bf16.msra.mxu0 %v8231
    %8790 = vmatprep.subr.bf16.mxu0 %v8234
    %8791 = vmatpush1.bf16.msra.mxu0 %v8233
    %8792 = vmatprep.mubr.bf16.mxu0 %v7000
    %8793 = vmatmul.mubr.bf16.gmra.mrb[0].mxu0 %v6999
    %v8794 = vpop.f32.mrb[0].mxu0
    %v8795 = vadd.f32 %v8754, %v8794
    %v8796 = vpop.f32.mrb[0].mxu0
    %v8797 = vadd.f32 %v8756, %v8796
    %v8798 = vpop.f32.mrb[0].mxu0
    %v8799 = vpop.f32.mrb[0].mxu0
    %8800 = vdwg.mxu0
    %8801 = vmatprep.subr.bf16.mxu0 %v8236
    %8802 = vmatpush1.bf16.msra.mxu0 %v8235
    %8803 = vmatprep.subr.bf16.mxu0 %v8238
    %8804 = vmatpush1.bf16.msra.mxu0 %v8237
    %8805 = vmatprep.subr.bf16.mxu0 %v8240
    %8806 = vmatpush1.bf16.msra.mxu0 %v8239
    %8807 = vmatprep.subr.bf16.mxu0 %v8242
    %8808 = vmatpush1.bf16.msra.mxu0 %v8241
    %8809 = vmatprep.subr.bf16.mxu0 %v8244
    %8810 = vmatpush1.bf16.msra.mxu0 %v8243
    %8811 = vmatprep.subr.bf16.mxu0 %v8246
    %8812 = vmatpush1.bf16.msra.mxu0 %v8245
    %8813 = vmatprep.subr.bf16.mxu0 %v8248
    %8814 = vmatpush1.bf16.msra.mxu0 %v8247
    %8815 = vmatprep.subr.bf16.mxu0 %v8250
    %8816 = vmatpush1.bf16.msra.mxu0 %v8249
    %8817 = vmatprep.subr.bf16.mxu0 %v8252
    %8818 = vmatpush1.bf16.msra.mxu0 %v8251
    %8819 = vmatprep.subr.bf16.mxu0 %v8254
    %8820 = vmatpush1.bf16.msra.mxu0 %v8253
    %8821 = vmatprep.subr.bf16.mxu0 %v8256
    %8822 = vmatpush1.bf16.msra.mxu0 %v8255
    %8823 = vmatprep.subr.bf16.mxu0 %v8258
    %8824 = vmatpush1.bf16.msra.mxu0 %v8257
    %8825 = vmatprep.subr.bf16.mxu0 %v8260
    %8826 = vmatpush1.bf16.msra.mxu0 %v8259
    %8827 = vmatprep.subr.bf16.mxu0 %v8262
    %8828 = vmatpush1.bf16.msra.mxu0 %v8261
    %8829 = vmatprep.subr.bf16.mxu0 %v8264
    %8830 = vmatpush1.bf16.msra.mxu0 %v8263
    %8831 = vmatprep.subr.bf16.mxu0 %v8266
    %8832 = vmatpush1.bf16.msra.mxu0 %v8265
    %8833 = vmatprep.mubr.bf16.mxu0 %v7002
    %8834 = vmatmul.mubr.bf16.gmra.mrb[0].mxu0 %v7001
    %v8835 = vpop.f32.mrb[0].mxu0
    %v8836 = vadd.f32 %v8795, %v8835
    %v8837 = vpop.f32.mrb[0].mxu0
    %v8838 = vadd.f32 %v8797, %v8837
    %v8839 = vpop.f32.mrb[0].mxu0
    %v8840 = vpop.f32.mrb[0].mxu0
    %8841 = vdwg.mxu0
    %8842 = vmatprep.subr.bf16.mxu0 %v8268
    %8843 = vmatpush1.bf16.msra.mxu0 %v8267
    %8844 = vmatprep.subr.bf16.mxu0 %v8270
    %8845 = vmatpush1.bf16.msra.mxu0 %v8269
    %8846 = vmatprep.subr.bf16.mxu0 %v8272
    %8847 = vmatpush1.bf16.msra.mxu0 %v8271
    %8848 = vmatprep.subr.bf16.mxu0 %v8274
    %8849 = vmatpush1.bf16.msra.mxu0 %v8273
    %8850 = vmatprep.subr.bf16.mxu0 %v8276
    %8851 = vmatpush1.bf16.msra.mxu0 %v8275
    %8852 = vmatprep.subr.bf16.mxu0 %v8278
    %8853 = vmatpush1.bf16.msra.mxu0 %v8277
    %8854 = vmatprep.subr.bf16.mxu0 %v8280
    %8855 = vmatpush1.bf16.msra.mxu0 %v8279
    %8856 = vmatprep.subr.bf16.mxu0 %v8282
    %8857 = vmatpush1.bf16.msra.mxu0 %v8281
    %8858 = vmatprep.subr.bf16.mxu0 %v8284
    %8859 = vmatpush1.bf16.msra.mxu0 %v8283
    %8860 = vmatprep.subr.bf16.mxu0 %v8286
    %8861 = vmatpush1.bf16.msra.mxu0 %v8285
    %8862 = vmatprep.subr.bf16.mxu0 %v8288
    %8863 = vmatpush1.bf16.msra.mxu0 %v8287
    %8864 = vmatprep.subr.bf16.mxu0 %v8290
    %8865 = vmatpush1.bf16.msra.mxu0 %v8289
    %8866 = vmatprep.subr.bf16.mxu0 %v8292
    %8867 = vmatpush1.bf16.msra.mxu0 %v8291
    %8868 = vmatprep.subr.bf16.mxu0 %v8294
    %8869 = vmatpush1.bf16.msra.mxu0 %v8293
    %8870 = vmatprep.subr.bf16.mxu0 %v8296
    %8871 = vmatpush1.bf16.msra.mxu0 %v8295
    %8872 = vmatprep.subr.bf16.mxu0 %v8298
    %8873 = vmatpush1.bf16.msra.mxu0 %v8297
    %8874 = vmatprep.mubr.bf16.mxu0 %v7004
    %8875 = vmatmul.mubr.bf16.gmra.mrb[0].mxu0 %v7003
    %v8876 = vpop.f32.mrb[0].mxu0
    %v8877 = vadd.f32 %v8836, %v8876
    %v8878 = vpop.f32.mrb[0].mxu0
    %v8879 = vadd.f32 %v8838, %v8878
    %v8880 = vpop.f32.mrb[0].mxu0
    %v8881 = vpop.f32.mrb[0].mxu0
    %8882 = vdwg.mxu0
    %v8883 = vadd.f32 %v5688, %v8877
    %v8884 = vadd.f32 %v5689, %v8879
    %v8885 = vsel %vm250, %v8884, 0.0
    %v8886 = vadd.f32 %v8883, %v8885
    %8887 = vadd.xlane.f32.xlu0 %v8886
    %v8888 = vpop.xlane.xlu0 %8887
    %v8889 = vmul.f32 %v8888, %v1284
    %v8890 = vsub.f32 %v8883, %v8889
    %v8891 = vsub.f32 %v8884, %v8889
    %v8892 = vmul.f32 %v8890, %v8890
    %v8893 = vmul.f32 %v8891, %v8891
    %v8894 = vsel %vm250, %v8893, 0.0
    %v8895 = vadd.f32 %v8892, %v8894
    %8896 = vadd.xlane.f32.xlu0 %v8895
    %v8897 = vpop.xlane.xlu0 %8896
    %v8898 = vmul.f32 %v8897, %v1284
    %v8899 = vadd.f32 %v8898, 1e-05
    %v8900 = vrsqrt.pop %v8899
    %v8901 = vmul.f32 %v8890, %v8900
    %v8902 = vmul.f32 %v8891, %v8900
    %s8903 = scalar_lea.vmem [#allocation16], 2
    %v8904 = vld [vmem:[%s8903] sm:$0x3]
    %v8906 = vlaneseq
    %v8907 = vshrl.u32 %v8906, 7
    %v8908 = vsub.s32 0, %v8907
    %v8909 = vrot.slane %v8904, %v8908
    %v8910 = vlaneseq
    %v8911 = vshrl.u32 %v8910, 7
    %v8912 = vsub.s32 1, %v8911
    %v8913 = vrot.slane %v8904, %v8912
    %v8916 = vmul.f32 %v8901, %v8909
    %v8917 = vmul.f32 %v8902, %v8913
    %s8918 = scalar_lea.vmem [#allocation17], 2
    %v8919 = vld [vmem:[%s8918] sm:$0x3]
    %v8921 = vlaneseq
    %v8922 = vshrl.u32 %v8921, 7
    %v8923 = vsub.s32 0, %v8922
    %v8924 = vrot.slane %v8919, %v8923
    %v8925 = vlaneseq
    %v8926 = vshrl.u32 %v8925, 7
    %v8927 = vsub.s32 1, %v8926
    %v8928 = vrot.slane %v8919, %v8927
    %v8931 = vadd.f32 %v8916, %v8924
    %v8932 = vadd.f32 %v8917, %v8928
    %v8933 = vld [vmem:[%s17] sm:$0xff]
    %v8934 = vld [vmem:[%s17 + $0x8] sm:$0xff]
    %v8935 = vld [vmem:[%s17 + $0x10] sm:$0xff]
    %v8936 = vld [vmem:[%s17 + $0x18] sm:$0xff]
    %v8937 = vld [vmem:[%s17 + $0x20] sm:$0xff]
    %v8938 = vld [vmem:[%s17 + $0x28] sm:$0xff]
    %v8939 = vld [vmem:[%s17 + $0x30] sm:$0xff]
    %v8940 = vld [vmem:[%s17 + $0x38] sm:$0xff]
    %v8941 = vld [vmem:[%s17 + $0x40] sm:$0xff]
    %v8942 = vld [vmem:[%s17 + $0x48] sm:$0xff]
    %v8943 = vld [vmem:[%s17 + $0x50] sm:$0xff]
    %v8944 = vld [vmem:[%s17 + $0x58] sm:$0xff]
    %v8945 = vld [vmem:[%s17 + $0x60] sm:$0xff]
    %v8946 = vld [vmem:[%s17 + $0x68] sm:$0xff]
    %v8947 = vld [vmem:[%s17 + $0x70] sm:$0xff]
    %v8948 = vld [vmem:[%s17 + $0x78] sm:$0xff]
    %v8949 = vld [vmem:[%s17 + $0x80] sm:$0xff]
    %v8950 = vld [vmem:[%s17 + $0x88] sm:$0xff]
    %v8951 = vld [vmem:[%s17 + $0x90] sm:$0xff]
    %v8952 = vld [vmem:[%s17 + $0x98] sm:$0xff]
    %v8953 = vld [vmem:[%s17 + $0xa0] sm:$0xff]
    %v8954 = vld [vmem:[%s17 + $0xa8] sm:$0xff]
    %v8955 = vld [vmem:[%s17 + $0xb0] sm:$0xff]
    %v8956 = vld [vmem:[%s17 + $0xb8] sm:$0xff]
    %v8957 = vld [vmem:[%s17 + $0xc0] sm:$0xff]
    %v8958 = vld [vmem:[%s17 + $0xc8] sm:$0xff]
    %v8959 = vld [vmem:[%s17 + $0xd0] sm:$0xff]
    %v8960 = vld [vmem:[%s17 + $0xd8] sm:$0xff]
    %v8961 = vld [vmem:[%s17 + $0xe0] sm:$0xff]
    %v8962 = vld [vmem:[%s17 + $0xe8] sm:$0xff]
    %v8963 = vld [vmem:[%s17 + $0xf0] sm:$0xff]
    %v8964 = vld [vmem:[%s17 + $0xf8] sm:$0xff]
    %v8965 = vld [vmem:[%s17 + $0x100] sm:$0xff]
    %v8966 = vld [vmem:[%s17 + $0x108] sm:$0xff]
    %v8967 = vld [vmem:[%s17 + $0x110] sm:$0xff]
    %v8968 = vld [vmem:[%s17 + $0x118] sm:$0xff]
    %v8969 = vld [vmem:[%s17 + $0x120] sm:$0xff]
    %v8970 = vld [vmem:[%s17 + $0x128] sm:$0xff]
    %v8971 = vld [vmem:[%s17 + $0x130] sm:$0xff]
    %v8972 = vld [vmem:[%s17 + $0x138] sm:$0xff]
    %v8973 = vld [vmem:[%s17 + $0x140] sm:$0xff]
    %v8974 = vld [vmem:[%s17 + $0x148] sm:$0xff]
    %v8975 = vld [vmem:[%s17 + $0x150] sm:$0xff]
    %v8976 = vld [vmem:[%s17 + $0x158] sm:$0xff]
    %v8977 = vld [vmem:[%s17 + $0x160] sm:$0xff]
    %v8978 = vld [vmem:[%s17 + $0x168] sm:$0xff]
    %v8979 = vld [vmem:[%s17 + $0x170] sm:$0xff]
    %v8980 = vld [vmem:[%s17 + $0x178] sm:$0xff]
    %v8981 = vld [vmem:[%s17 + $0x180] sm:$0xff]
    %v8982 = vld [vmem:[%s17 + $0x188] sm:$0xff]
    %v8983 = vld [vmem:[%s17 + $0x190] sm:$0xff]
    %v8984 = vld [vmem:[%s17 + $0x198] sm:$0xff]
    %v8985 = vld [vmem:[%s17 + $0x1a0] sm:$0xff]
    %v8986 = vld [vmem:[%s17 + $0x1a8] sm:$0xff]
    %v8987 = vld [vmem:[%s17 + $0x1b0] sm:$0xff]
    %v8988 = vld [vmem:[%s17 + $0x1b8] sm:$0xff]
    %v8989 = vld [vmem:[%s17 + $0x1c0] sm:$0xff]
    %v8990 = vld [vmem:[%s17 + $0x1c8] sm:$0xff]
    %v8991 = vld [vmem:[%s17 + $0x1d0] sm:$0xff]
    %v8992 = vld [vmem:[%s17 + $0x1d8] sm:$0xff]
    %v8993 = vld [vmem:[%s17 + $0x1e0] sm:$0xff]
    %v8994 = vld [vmem:[%s17 + $0x1e8] sm:$0xff]
    %v8995 = vld [vmem:[%s17 + $0x1f0] sm:$0xff]
    %v8996 = vld [vmem:[%s17 + $0x1f8] sm:$0xff]
    %v8997 = vld [vmem:[%s17 + $0x200] sm:$0xff]
    %v8998 = vld [vmem:[%s17 + $0x208] sm:$0xff]
    %v8999 = vld [vmem:[%s17 + $0x210] sm:$0xff]
    %v9000 = vld [vmem:[%s17 + $0x218] sm:$0xff]
    %v9001 = vld [vmem:[%s17 + $0x220] sm:$0xff]
    %v9002 = vld [vmem:[%s17 + $0x228] sm:$0xff]
    %v9003 = vld [vmem:[%s17 + $0x230] sm:$0xff]
    %v9004 = vld [vmem:[%s17 + $0x238] sm:$0xff]
    %v9005 = vld [vmem:[%s17 + $0x240] sm:$0xff]
    %v9006 = vld [vmem:[%s17 + $0x248] sm:$0xff]
    %v9007 = vld [vmem:[%s17 + $0x250] sm:$0xff]
    %v9008 = vld [vmem:[%s17 + $0x258] sm:$0xff]
    %v9009 = vld [vmem:[%s17 + $0x260] sm:$0xff]
    %v9010 = vld [vmem:[%s17 + $0x268] sm:$0xff]
    %v9011 = vld [vmem:[%s17 + $0x270] sm:$0xff]
    %v9012 = vld [vmem:[%s17 + $0x278] sm:$0xff]
    %v9013 = vld [vmem:[%s17 + $0x280] sm:$0xff]
    %v9014 = vld [vmem:[%s17 + $0x288] sm:$0xff]
    %v9015 = vld [vmem:[%s17 + $0x290] sm:$0xff]
    %v9016 = vld [vmem:[%s17 + $0x298] sm:$0xff]
    %v9017 = vld [vmem:[%s17 + $0x2a0] sm:$0xff]
    %v9018 = vld [vmem:[%s17 + $0x2a8] sm:$0xff]
    %v9019 = vld [vmem:[%s17 + $0x2b0] sm:$0xff]
    %v9020 = vld [vmem:[%s17 + $0x2b8] sm:$0xff]
    %v9021 = vld [vmem:[%s17 + $0x2c0] sm:$0xff]
    %v9022 = vld [vmem:[%s17 + $0x2c8] sm:$0xff]
    %v9023 = vld [vmem:[%s17 + $0x2d0] sm:$0xff]
    %v9024 = vld [vmem:[%s17 + $0x2d8] sm:$0xff]
    %v9025 = vld [vmem:[%s17 + $0x2e0] sm:$0xff]
    %v9026 = vld [vmem:[%s17 + $0x2e8] sm:$0xff]
    %v9027 = vld [vmem:[%s17 + $0x2f0] sm:$0xff]
    %v9028 = vld [vmem:[%s17 + $0x2f8] sm:$0xff]
    %v9029 = vld [vmem:[%s17 + $0x300] sm:$0xff]
    %v9030 = vld [vmem:[%s17 + $0x308] sm:$0xff]
    %v9031 = vld [vmem:[%s17 + $0x310] sm:$0xff]
    %v9032 = vld [vmem:[%s17 + $0x318] sm:$0xff]
    %v9033 = vld [vmem:[%s17 + $0x320] sm:$0xff]
    %v9034 = vld [vmem:[%s17 + $0x328] sm:$0xff]
    %v9035 = vld [vmem:[%s17 + $0x330] sm:$0xff]
    %v9036 = vld [vmem:[%s17 + $0x338] sm:$0xff]
    %v9037 = vld [vmem:[%s17 + $0x340] sm:$0xff]
    %v9038 = vld [vmem:[%s17 + $0x348] sm:$0xff]
    %v9039 = vld [vmem:[%s17 + $0x350] sm:$0xff]
    %v9040 = vld [vmem:[%s17 + $0x358] sm:$0xff]
    %v9041 = vld [vmem:[%s17 + $0x360] sm:$0xff]
    %v9042 = vld [vmem:[%s17 + $0x368] sm:$0xff]
    %v9043 = vld [vmem:[%s17 + $0x370] sm:$0xff]
    %v9044 = vld [vmem:[%s17 + $0x378] sm:$0xff]
    %v9045 = vld [vmem:[%s17 + $0x380] sm:$0xff]
    %v9046 = vld [vmem:[%s17 + $0x388] sm:$0xff]
    %v9047 = vld [vmem:[%s17 + $0x390] sm:$0xff]
    %v9048 = vld [vmem:[%s17 + $0x398] sm:$0xff]
    %v9049 = vld [vmem:[%s17 + $0x3a0] sm:$0xff]
    %v9050 = vld [vmem:[%s17 + $0x3a8] sm:$0xff]
    %v9051 = vld [vmem:[%s17 + $0x3b0] sm:$0xff]
    %v9052 = vld [vmem:[%s17 + $0x3b8] sm:$0xff]
    %v9053 = vld [vmem:[%s17 + $0x3c0] sm:$0xff]
    %v9054 = vld [vmem:[%s17 + $0x3c8] sm:$0xff]
    %v9055 = vld [vmem:[%s17 + $0x3d0] sm:$0xff]
    %v9056 = vld [vmem:[%s17 + $0x3d8] sm:$0xff]
    %v9057 = vld [vmem:[%s17 + $0x3e0] sm:$0xff]
    %v9058 = vld [vmem:[%s17 + $0x3e8] sm:$0xff]
    %v9059 = vld [vmem:[%s17 + $0x3f0] sm:$0xff]
    %v9060 = vld [vmem:[%s17 + $0x3f8] sm:$0xff]
    %v9061 = vld [vmem:[%s17 + $0x400] sm:$0xff]
    %v9062 = vld [vmem:[%s17 + $0x408] sm:$0xff]
    %v9063 = vld [vmem:[%s17 + $0x410] sm:$0xff]
    %v9064 = vld [vmem:[%s17 + $0x418] sm:$0xff]
    %v9065 = vld [vmem:[%s17 + $0x420] sm:$0xff]
    %v9066 = vld [vmem:[%s17 + $0x428] sm:$0xff]
    %v9067 = vld [vmem:[%s17 + $0x430] sm:$0xff]
    %v9068 = vld [vmem:[%s17 + $0x438] sm:$0xff]
    %v9069 = vld [vmem:[%s17 + $0x440] sm:$0xff]
    %v9070 = vld [vmem:[%s17 + $0x448] sm:$0xff]
    %v9071 = vld [vmem:[%s17 + $0x450] sm:$0xff]
    %v9072 = vld [vmem:[%s17 + $0x458] sm:$0xff]
    %v9073 = vld [vmem:[%s17 + $0x460] sm:$0xff]
    %v9074 = vld [vmem:[%s17 + $0x468] sm:$0xff]
    %v9075 = vld [vmem:[%s17 + $0x470] sm:$0xff]
    %v9076 = vld [vmem:[%s17 + $0x478] sm:$0xff]
    %v9077 = vld [vmem:[%s17 + $0x480] sm:$0xff]
    %v9078 = vld [vmem:[%s17 + $0x488] sm:$0xff]
    %v9079 = vld [vmem:[%s17 + $0x490] sm:$0xff]
    %v9080 = vld [vmem:[%s17 + $0x498] sm:$0xff]
    %v9081 = vld [vmem:[%s17 + $0x4a0] sm:$0xff]
    %v9082 = vld [vmem:[%s17 + $0x4a8] sm:$0xff]
    %v9083 = vld [vmem:[%s17 + $0x4b0] sm:$0xff]
    %v9084 = vld [vmem:[%s17 + $0x4b8] sm:$0xff]
    %v9085 = vld [vmem:[%s17 + $0x4c0] sm:$0xff]
    %v9086 = vld [vmem:[%s17 + $0x4c8] sm:$0xff]
    %v9087 = vld [vmem:[%s17 + $0x4d0] sm:$0xff]
    %v9088 = vld [vmem:[%s17 + $0x4d8] sm:$0xff]
    %v9089 = vld [vmem:[%s17 + $0x4e0] sm:$0xff]
    %v9090 = vld [vmem:[%s17 + $0x4e8] sm:$0xff]
    %v9091 = vld [vmem:[%s17 + $0x4f0] sm:$0xff]
    %v9092 = vld [vmem:[%s17 + $0x4f8] sm:$0xff]
    %v9093 = vld [vmem:[%s17 + $0x500] sm:$0xff]
    %v9094 = vld [vmem:[%s17 + $0x508] sm:$0xff]
    %v9095 = vld [vmem:[%s17 + $0x510] sm:$0xff]
    %v9096 = vld [vmem:[%s17 + $0x518] sm:$0xff]
    %v9097 = vld [vmem:[%s17 + $0x520] sm:$0xff]
    %v9098 = vld [vmem:[%s17 + $0x528] sm:$0xff]
    %v9099 = vld [vmem:[%s17 + $0x530] sm:$0xff]
    %v9100 = vld [vmem:[%s17 + $0x538] sm:$0xff]
    %v9101 = vld [vmem:[%s17 + $0x540] sm:$0xff]
    %v9102 = vld [vmem:[%s17 + $0x548] sm:$0xff]
    %v9103 = vld [vmem:[%s17 + $0x550] sm:$0xff]
    %v9104 = vld [vmem:[%s17 + $0x558] sm:$0xff]
    %v9105 = vld [vmem:[%s17 + $0x560] sm:$0xff]
    %v9106 = vld [vmem:[%s17 + $0x568] sm:$0xff]
    %v9107 = vld [vmem:[%s17 + $0x570] sm:$0xff]
    %v9108 = vld [vmem:[%s17 + $0x578] sm:$0xff]
    %v9109 = vld [vmem:[%s17 + $0x580] sm:$0xff]
    %v9110 = vld [vmem:[%s17 + $0x588] sm:$0xff]
    %v9111 = vld [vmem:[%s17 + $0x590] sm:$0xff]
    %v9112 = vld [vmem:[%s17 + $0x598] sm:$0xff]
    %v9113 = vld [vmem:[%s17 + $0x5a0] sm:$0xff]
    %v9114 = vld [vmem:[%s17 + $0x5a8] sm:$0xff]
    %v9115 = vld [vmem:[%s17 + $0x5b0] sm:$0xff]
    %v9116 = vld [vmem:[%s17 + $0x5b8] sm:$0xff]
    %v9117 = vld [vmem:[%s17 + $0x5c0] sm:$0xff]
    %v9118 = vld [vmem:[%s17 + $0x5c8] sm:$0xff]
    %v9119 = vld [vmem:[%s17 + $0x5d0] sm:$0xff]
    %v9120 = vld [vmem:[%s17 + $0x5d8] sm:$0xff]
    %v9121 = vld [vmem:[%s17 + $0x5e0] sm:$0xff]
    %v9122 = vld [vmem:[%s17 + $0x5e8] sm:$0xff]
    %v9123 = vld [vmem:[%s17 + $0x5f0] sm:$0xff]
    %v9124 = vld [vmem:[%s17 + $0x5f8] sm:$0xff]
    %v9125 = vld [vmem:[%s17 + $0x600] sm:$0xff]
    %v9126 = vld [vmem:[%s17 + $0x608] sm:$0xff]
    %v9127 = vld [vmem:[%s17 + $0x610] sm:$0xff]
    %v9128 = vld [vmem:[%s17 + $0x618] sm:$0xff]
    %v9129 = vld [vmem:[%s17 + $0x620] sm:$0xff]
    %v9130 = vld [vmem:[%s17 + $0x628] sm:$0xff]
    %v9131 = vld [vmem:[%s17 + $0x630] sm:$0xff]
    %v9132 = vld [vmem:[%s17 + $0x638] sm:$0xff]
    %v9133 = vld [vmem:[%s17 + $0x640] sm:$0xff]
    %v9134 = vld [vmem:[%s17 + $0x648] sm:$0xff]
    %v9135 = vld [vmem:[%s17 + $0x650] sm:$0xff]
    %v9136 = vld [vmem:[%s17 + $0x658] sm:$0xff]
    %v9137 = vld [vmem:[%s17 + $0x660] sm:$0xff]
    %v9138 = vld [vmem:[%s17 + $0x668] sm:$0xff]
    %v9139 = vld [vmem:[%s17 + $0x670] sm:$0xff]
    %v9140 = vld [vmem:[%s17 + $0x678] sm:$0xff]
    %v9141 = vld [vmem:[%s17 + $0x680] sm:$0xff]
    %v9142 = vld [vmem:[%s17 + $0x688] sm:$0xff]
    %v9143 = vld [vmem:[%s17 + $0x690] sm:$0xff]
    %v9144 = vld [vmem:[%s17 + $0x698] sm:$0xff]
    %v9145 = vld [vmem:[%s17 + $0x6a0] sm:$0xff]
    %v9146 = vld [vmem:[%s17 + $0x6a8] sm:$0xff]
    %v9147 = vld [vmem:[%s17 + $0x6b0] sm:$0xff]
    %v9148 = vld [vmem:[%s17 + $0x6b8] sm:$0xff]
    %v9149 = vld [vmem:[%s17 + $0x6c0] sm:$0xff]
    %v9150 = vld [vmem:[%s17 + $0x6c8] sm:$0xff]
    %v9151 = vld [vmem:[%s17 + $0x6d0] sm:$0xff]
    %v9152 = vld [vmem:[%s17 + $0x6d8] sm:$0xff]
    %v9153 = vld [vmem:[%s17 + $0x6e0] sm:$0xff]
    %v9154 = vld [vmem:[%s17 + $0x6e8] sm:$0xff]
    %v9155 = vld [vmem:[%s17 + $0x6f0] sm:$0xff]
    %v9156 = vld [vmem:[%s17 + $0x6f8] sm:$0xff]
    %v9157 = vld [vmem:[%s17 + $0x700] sm:$0xff]
    %v9158 = vld [vmem:[%s17 + $0x708] sm:$0xff]
    %v9159 = vld [vmem:[%s17 + $0x710] sm:$0xff]
    %v9160 = vld [vmem:[%s17 + $0x718] sm:$0xff]
    %v9161 = vld [vmem:[%s17 + $0x720] sm:$0xff]
    %v9162 = vld [vmem:[%s17 + $0x728] sm:$0xff]
    %v9163 = vld [vmem:[%s17 + $0x730] sm:$0xff]
    %v9164 = vld [vmem:[%s17 + $0x738] sm:$0xff]
    %v9165 = vld [vmem:[%s17 + $0x740] sm:$0xff]
    %v9166 = vld [vmem:[%s17 + $0x748] sm:$0xff]
    %v9167 = vld [vmem:[%s17 + $0x750] sm:$0xff]
    %v9168 = vld [vmem:[%s17 + $0x758] sm:$0xff]
    %v9169 = vld [vmem:[%s17 + $0x760] sm:$0xff]
    %v9170 = vld [vmem:[%s17 + $0x768] sm:$0xff]
    %v9171 = vld [vmem:[%s17 + $0x770] sm:$0xff]
    %v9172 = vld [vmem:[%s17 + $0x778] sm:$0xff]
    %v9173 = vld [vmem:[%s17 + $0x780] sm:$0xff]
    %v9174 = vld [vmem:[%s17 + $0x788] sm:$0xff]
    %v9175 = vld [vmem:[%s17 + $0x790] sm:$0xff]
    %v9176 = vld [vmem:[%s17 + $0x798] sm:$0xff]
    %v9177 = vld [vmem:[%s17 + $0x7a0] sm:$0xff]
    %v9178 = vld [vmem:[%s17 + $0x7a8] sm:$0xff]
    %v9179 = vld [vmem:[%s17 + $0x7b0] sm:$0xff]
    %v9180 = vld [vmem:[%s17 + $0x7b8] sm:$0xff]
    %v9181 = vld [vmem:[%s17 + $0x7c0] sm:$0xff]
    %v9182 = vld [vmem:[%s17 + $0x7c8] sm:$0xff]
    %v9183 = vld [vmem:[%s17 + $0x7d0] sm:$0xff]
    %v9184 = vld [vmem:[%s17 + $0x7d8] sm:$0xff]
    %v9185 = vld [vmem:[%s17 + $0x7e0] sm:$0xff]
    %v9186 = vld [vmem:[%s17 + $0x7e8] sm:$0xff]
    %v9187 = vld [vmem:[%s17 + $0x7f0] sm:$0xff]
    %v9188 = vld [vmem:[%s17 + $0x7f8] sm:$0xff]
    %v9189 = vld [vmem:[%s17 + $0x800] sm:$0xff]
    %v9190 = vld [vmem:[%s17 + $0x808] sm:$0xff]
    %v9191 = vld [vmem:[%s17 + $0x810] sm:$0xff]
    %v9192 = vld [vmem:[%s17 + $0x818] sm:$0xff]
    %v9193 = vld [vmem:[%s17 + $0x820] sm:$0xff]
    %v9194 = vld [vmem:[%s17 + $0x828] sm:$0xff]
    %v9195 = vld [vmem:[%s17 + $0x830] sm:$0xff]
    %v9196 = vld [vmem:[%s17 + $0x838] sm:$0xff]
    %v9197 = vld [vmem:[%s17 + $0x840] sm:$0xff]
    %v9198 = vld [vmem:[%s17 + $0x848] sm:$0xff]
    %v9199 = vld [vmem:[%s17 + $0x850] sm:$0xff]
    %v9200 = vld [vmem:[%s17 + $0x858] sm:$0xff]
    %v9201 = vld [vmem:[%s17 + $0x860] sm:$0xff]
    %v9202 = vld [vmem:[%s17 + $0x868] sm:$0xff]
    %v9203 = vld [vmem:[%s17 + $0x870] sm:$0xff]
    %v9204 = vld [vmem:[%s17 + $0x878] sm:$0xff]
    %v9205 = vld [vmem:[%s17 + $0x880] sm:$0xff]
    %v9206 = vld [vmem:[%s17 + $0x888] sm:$0xff]
    %v9207 = vld [vmem:[%s17 + $0x890] sm:$0xff]
    %v9208 = vld [vmem:[%s17 + $0x898] sm:$0xff]
    %v9209 = vld [vmem:[%s17 + $0x8a0] sm:$0xff]
    %v9210 = vld [vmem:[%s17 + $0x8a8] sm:$0xff]
    %v9211 = vld [vmem:[%s17 + $0x8b0] sm:$0xff]
    %v9212 = vld [vmem:[%s17 + $0x8b8] sm:$0xff]
    %v9213 = vld [vmem:[%s17 + $0x8c0] sm:$0xff]
    %v9214 = vld [vmem:[%s17 + $0x8c8] sm:$0xff]
    %v9215 = vld [vmem:[%s17 + $0x8d0] sm:$0xff]
    %v9216 = vld [vmem:[%s17 + $0x8d8] sm:$0xff]
    %v9217 = vld [vmem:[%s17 + $0x8e0] sm:$0xff]
    %v9218 = vld [vmem:[%s17 + $0x8e8] sm:$0xff]
    %v9219 = vld [vmem:[%s17 + $0x8f0] sm:$0xff]
    %v9220 = vld [vmem:[%s17 + $0x8f8] sm:$0xff]
    %v9221 = vld [vmem:[%s18] sm:$0xff]
    %v9222 = vld [vmem:[%s18 + $0x8] sm:$0xff]
    %v9225 = vlaneseq
    %v9226 = vshrl.u32 %v9225, 7
    %v9227 = vsub.s32 0, %v9226
    %v9228 = vrot.slane %v9221, %v9227
    %v9229 = vlaneseq
    %v9230 = vshrl.u32 %v9229, 7
    %v9231 = vsub.s32 1, %v9230
    %v9232 = vrot.slane %v9221, %v9231
    %v9233 = vlaneseq
    %v9234 = vshrl.u32 %v9233, 7
    %v9235 = vsub.s32 2, %v9234
    %v9236 = vrot.slane %v9221, %v9235
    %v9237 = vlaneseq
    %v9238 = vshrl.u32 %v9237, 7
    %v9239 = vsub.s32 3, %v9238
    %v9240 = vrot.slane %v9221, %v9239
    %v9241 = vlaneseq
    %v9242 = vshrl.u32 %v9241, 7
    %v9243 = vsub.s32 4, %v9242
    %v9244 = vrot.slane %v9221, %v9243
    %v9245 = vlaneseq
    %v9246 = vshrl.u32 %v9245, 7
    %v9247 = vsub.s32 5, %v9246
    %v9248 = vrot.slane %v9221, %v9247
    %v9249 = vlaneseq
    %v9250 = vshrl.u32 %v9249, 7
    %v9251 = vsub.s32 6, %v9250
    %v9252 = vrot.slane %v9221, %v9251
    %v9253 = vlaneseq
    %v9254 = vshrl.u32 %v9253, 7
    %v9255 = vsub.s32 7, %v9254
    %v9256 = vrot.slane %v9221, %v9255
    %v9257 = vlaneseq
    %v9258 = vshrl.u32 %v9257, 7
    %v9259 = vsub.s32 0, %v9258
    %v9260 = vrot.slane %v9222, %v9259
    %v9261 = vlaneseq
    %v9262 = vshrl.u32 %v9261, 7
    %v9263 = vsub.s32 1, %v9262
    %v9264 = vrot.slane %v9222, %v9263
    %v9265 = vlaneseq
    %v9266 = vshrl.u32 %v9265, 7
    %v9267 = vsub.s32 2, %v9266
    %v9268 = vrot.slane %v9222, %v9267
    %v9269 = vlaneseq
    %v9270 = vshrl.u32 %v9269, 7
    %v9271 = vsub.s32 3, %v9270
    %v9272 = vrot.slane %v9222, %v9271
    %v9273 = vlaneseq
    %v9274 = vshrl.u32 %v9273, 7
    %v9275 = vsub.s32 4, %v9274
    %v9276 = vrot.slane %v9222, %v9275
    %v9277 = vlaneseq
    %v9278 = vshrl.u32 %v9277, 7
    %v9279 = vsub.s32 5, %v9278
    %v9280 = vrot.slane %v9222, %v9279
    %v9281 = vlaneseq
    %v9282 = vshrl.u32 %v9281, 7
    %v9283 = vsub.s32 6, %v9282
    %v9284 = vrot.slane %v9222, %v9283
    %v9285 = vlaneseq
    %v9286 = vshrl.u32 %v9285, 7
    %v9287 = vsub.s32 7, %v9286
    %v9288 = vrot.slane %v9222, %v9287
    %v9306 = vsel %vm250, %v8932, 0
    %9308 = vmatprep.subr.mxu0 %v8934
    %9309 = vmatpush1.msra.mxu0 %v8933
    %9310 = vmatprep.subr.mxu0 %v8950
    %9311 = vmatpush1.msra.mxu0 %v8949
    %9312 = vmatprep.subr.mxu0 %v8966
    %9313 = vmatpush1.msra.mxu0 %v8965
    %9314 = vmatprep.subr.mxu0 %v8982
    %9315 = vmatpush1.msra.mxu0 %v8981
    %9316 = vmatprep.subr.mxu0 %v8998
    %9317 = vmatpush1.msra.mxu0 %v8997
    %9318 = vmatprep.subr.mxu0 %v9014
    %9319 = vmatpush1.msra.mxu0 %v9013
    %9320 = vmatprep.subr.mxu0 %v9030
    %9321 = vmatpush1.msra.mxu0 %v9029
    %9322 = vmatprep.subr.mxu0 %v9046
    %9323 = vmatpush1.msra.mxu0 %v9045
    %9324 = vmatprep.subr.mxu0 %v9062
    %9325 = vmatpush1.msra.mxu0 %v9061
    %9326 = vmatprep.subr.mxu0 %v9078
    %9327 = vmatpush1.msra.mxu0 %v9077
    %9328 = vmatprep.subr.mxu0 %v9094
    %9329 = vmatpush1.msra.mxu0 %v9093
    %9330 = vmatprep.subr.mxu0 %v9110
    %9331 = vmatpush1.msra.mxu0 %v9109
    %9332 = vmatprep.subr.mxu0 %v9126
    %9333 = vmatpush1.msra.mxu0 %v9125
    %9334 = vmatprep.subr.mxu0 %v9142
    %9335 = vmatpush1.msra.mxu0 %v9141
    %9336 = vmatprep.subr.mxu0 %v9158
    %9337 = vmatpush1.msra.mxu0 %v9157
    %9338 = vmatprep.subr.mxu0 %v9174
    %9339 = vmatpush1.msra.mxu0 %v9173
    %9340 = vmatprep.subr.mxu0 %v9190
    %9341 = vmatpush1.msra.mxu0 %v9189
    %9342 = vmatprep.subr.mxu0 %v9206
    %9343 = vmatpush1.msra.mxu0 %v9205
    %9344 = vmatprep.subr.mxu0 0.0
    %9345 = vmatpush1.msra.mxu0 0.0
    %9346 = vmatprep.subr.mxu0 0.0
    %9347 = vmatpush1.msra.mxu0 0.0
    %9348 = vmatprep.subr.mxu0 0.0
    %9349 = vmatpush1.msra.mxu0 0.0
    %9350 = vmatprep.subr.mxu0 0.0
    %9351 = vmatpush1.msra.mxu0 0.0
    %9352 = vmatprep.subr.mxu0 0.0
    %9353 = vmatpush1.msra.mxu0 0.0
    %9354 = vmatprep.subr.mxu0 0.0
    %9355 = vmatpush1.msra.mxu0 0.0
    %9356 = vmatprep.subr.mxu0 0.0
    %9357 = vmatpush1.msra.mxu0 0.0
    %9358 = vmatprep.subr.mxu0 0.0
    %9359 = vmatpush1.msra.mxu0 0.0
    %9360 = vmatprep.subr.mxu0 0.0
    %9361 = vmatpush1.msra.mxu0 0.0
    %9362 = vmatprep.subr.mxu0 0.0
    %9363 = vmatpush1.msra.mxu0 0.0
    %9364 = vmatprep.subr.mxu0 0.0
    %9365 = vmatpush1.msra.mxu0 0.0
    %9366 = vmatprep.subr.mxu0 0.0
    %9367 = vmatpush1.msra.mxu0 0.0
    %9368 = vmatprep.subr.mxu0 0.0
    %9369 = vmatpush1.msra.mxu0 0.0
    %9370 = vmatprep.subr.mxu0 0.0
    %9371 = vmatpush1.msra.mxu0 0.0
    %9372 = vmatprep.mubr.f32.mxu0 %v9306
    %9373 = vmatmul.mubr.f32.gmra.mrb[0].mxu0 %v8931
    %v9374 = vpop.f32.mrb[0].mxu0
    %v9375 = vadd.f32 %v9228, %v9374
    %v9376 = vpop.f32.mrb[0].mxu0
    %v9377 = vadd.f32 %v9232, %v9376
    %9378 = vdwg.mxu0
    %9379 = vmatprep.subr.mxu0 %v8936
    %9380 = vmatpush1.msra.mxu0 %v8935
    %9381 = vmatprep.subr.mxu0 %v8952
    %9382 = vmatpush1.msra.mxu0 %v8951
    %9383 = vmatprep.subr.mxu0 %v8968
    %9384 = vmatpush1.msra.mxu0 %v8967
    %9385 = vmatprep.subr.mxu0 %v8984
    %9386 = vmatpush1.msra.mxu0 %v8983
    %9387 = vmatprep.subr.mxu0 %v9000
    %9388 = vmatpush1.msra.mxu0 %v8999
    %9389 = vmatprep.subr.mxu0 %v9016
    %9390 = vmatpush1.msra.mxu0 %v9015
    %9391 = vmatprep.subr.mxu0 %v9032
    %9392 = vmatpush1.msra.mxu0 %v9031
    %9393 = vmatprep.subr.mxu0 %v9048
    %9394 = vmatpush1.msra.mxu0 %v9047
    %9395 = vmatprep.subr.mxu0 %v9064
    %9396 = vmatpush1.msra.mxu0 %v9063
    %9397 = vmatprep.subr.mxu0 %v9080
    %9398 = vmatpush1.msra.mxu0 %v9079
    %9399 = vmatprep.subr.mxu0 %v9096
    %9400 = vmatpush1.msra.mxu0 %v9095
    %9401 = vmatprep.subr.mxu0 %v9112
    %9402 = vmatpush1.msra.mxu0 %v9111
    %9403 = vmatprep.subr.mxu0 %v9128
    %9404 = vmatpush1.msra.mxu0 %v9127
    %9405 = vmatprep.subr.mxu0 %v9144
    %9406 = vmatpush1.msra.mxu0 %v9143
    %9407 = vmatprep.subr.mxu0 %v9160
    %9408 = vmatpush1.msra.mxu0 %v9159
    %9409 = vmatprep.subr.mxu0 %v9176
    %9410 = vmatpush1.msra.mxu0 %v9175
    %9411 = vmatprep.subr.mxu0 %v9192
    %9412 = vmatpush1.msra.mxu0 %v9191
    %9413 = vmatprep.subr.mxu0 %v9208
    %9414 = vmatpush1.msra.mxu0 %v9207
    %9415 = vmatprep.subr.mxu0 0.0
    %9416 = vmatpush1.msra.mxu0 0.0
    %9417 = vmatprep.subr.mxu0 0.0
    %9418 = vmatpush1.msra.mxu0 0.0
    %9419 = vmatprep.subr.mxu0 0.0
    %9420 = vmatpush1.msra.mxu0 0.0
    %9421 = vmatprep.subr.mxu0 0.0
    %9422 = vmatpush1.msra.mxu0 0.0
    %9423 = vmatprep.subr.mxu0 0.0
    %9424 = vmatpush1.msra.mxu0 0.0
    %9425 = vmatprep.subr.mxu0 0.0
    %9426 = vmatpush1.msra.mxu0 0.0
    %9427 = vmatprep.subr.mxu0 0.0
    %9428 = vmatpush1.msra.mxu0 0.0
    %9429 = vmatprep.subr.mxu0 0.0
    %9430 = vmatpush1.msra.mxu0 0.0
    %9431 = vmatprep.subr.mxu0 0.0
    %9432 = vmatpush1.msra.mxu0 0.0
    %9433 = vmatprep.subr.mxu0 0.0
    %9434 = vmatpush1.msra.mxu0 0.0
    %9435 = vmatprep.subr.mxu0 0.0
    %9436 = vmatpush1.msra.mxu0 0.0
    %9437 = vmatprep.subr.mxu0 0.0
    %9438 = vmatpush1.msra.mxu0 0.0
    %9439 = vmatprep.subr.mxu0 0.0
    %9440 = vmatpush1.msra.mxu0 0.0
    %9441 = vmatprep.subr.mxu0 0.0
    %9442 = vmatpush1.msra.mxu0 0.0
    %9443 = vmatprep.mubr.f32.mxu0 %v9306
    %9444 = vmatmul.mubr.f32.gmra.mrb[0].mxu0 %v8931
    %v9445 = vpop.f32.mrb[0].mxu0
    %v9446 = vadd.f32 %v9236, %v9445
    %v9447 = vpop.f32.mrb[0].mxu0
    %v9448 = vadd.f32 %v9240, %v9447
    %9449 = vdwg.mxu0
    %9450 = vmatprep.subr.mxu0 %v8938
    %9451 = vmatpush1.msra.mxu0 %v8937
    %9452 = vmatprep.subr.mxu0 %v8954
    %9453 = vmatpush1.msra.mxu0 %v8953
    %9454 = vmatprep.subr.mxu0 %v8970
    %9455 = vmatpush1.msra.mxu0 %v8969
    %9456 = vmatprep.subr.mxu0 %v8986
    %9457 = vmatpush1.msra.mxu0 %v8985
    %9458 = vmatprep.subr.mxu0 %v9002
    %9459 = vmatpush1.msra.mxu0 %v9001
    %9460 = vmatprep.subr.mxu0 %v9018
    %9461 = vmatpush1.msra.mxu0 %v9017
    %9462 = vmatprep.subr.mxu0 %v9034
    %9463 = vmatpush1.msra.mxu0 %v9033
    %9464 = vmatprep.subr.mxu0 %v9050
    %9465 = vmatpush1.msra.mxu0 %v9049
    %9466 = vmatprep.subr.mxu0 %v9066
    %9467 = vmatpush1.msra.mxu0 %v9065
    %9468 = vmatprep.subr.mxu0 %v9082
    %9469 = vmatpush1.msra.mxu0 %v9081
    %9470 = vmatprep.subr.mxu0 %v9098
    %9471 = vmatpush1.msra.mxu0 %v9097
    %9472 = vmatprep.subr.mxu0 %v9114
    %9473 = vmatpush1.msra.mxu0 %v9113
    %9474 = vmatprep.subr.mxu0 %v9130
    %9475 = vmatpush1.msra.mxu0 %v9129
    %9476 = vmatprep.subr.mxu0 %v9146
    %9477 = vmatpush1.msra.mxu0 %v9145
    %9478 = vmatprep.subr.mxu0 %v9162
    %9479 = vmatpush1.msra.mxu0 %v9161
    %9480 = vmatprep.subr.mxu0 %v9178
    %9481 = vmatpush1.msra.mxu0 %v9177
    %9482 = vmatprep.subr.mxu0 %v9194
    %9483 = vmatpush1.msra.mxu0 %v9193
    %9484 = vmatprep.subr.mxu0 %v9210
    %9485 = vmatpush1.msra.mxu0 %v9209
    %9486 = vmatprep.subr.mxu0 0.0
    %9487 = vmatpush1.msra.mxu0 0.0
    %9488 = vmatprep.subr.mxu0 0.0
    %9489 = vmatpush1.msra.mxu0 0.0
    %9490 = vmatprep.subr.mxu0 0.0
    %9491 = vmatpush1.msra.mxu0 0.0
    %9492 = vmatprep.subr.mxu0 0.0
    %9493 = vmatpush1.msra.mxu0 0.0
    %9494 = vmatprep.subr.mxu0 0.0
    %9495 = vmatpush1.msra.mxu0 0.0
    %9496 = vmatprep.subr.mxu0 0.0
    %9497 = vmatpush1.msra.mxu0 0.0
    %9498 = vmatprep.subr.mxu0 0.0
    %9499 = vmatpush1.msra.mxu0 0.0
    %9500 = vmatprep.subr.mxu0 0.0
    %9501 = vmatpush1.msra.mxu0 0.0
    %9502 = vmatprep.subr.mxu0 0.0
    %9503 = vmatpush1.msra.mxu0 0.0
    %9504 = vmatprep.subr.mxu0 0.0
    %9505 = vmatpush1.msra.mxu0 0.0
    %9506 = vmatprep.subr.mxu0 0.0
    %9507 = vmatpush1.msra.mxu0 0.0
    %9508 = vmatprep.subr.mxu0 0.0
    %9509 = vmatpush1.msra.mxu0 0.0
    %9510 = vmatprep.subr.mxu0 0.0
    %9511 = vmatpush1.msra.mxu0 0.0
    %9512 = vmatprep.subr.mxu0 0.0
    %9513 = vmatpush1.msra.mxu0 0.0
    %9514 = vmatprep.mubr.f32.mxu0 %v9306
    %9515 = vmatmul.mubr.f32.gmra.mrb[0].mxu0 %v8931
    %v9516 = vpop.f32.mrb[0].mxu0
    %v9517 = vadd.f32 %v9244, %v9516
    %v9518 = vpop.f32.mrb[0].mxu0
    %v9519 = vadd.f32 %v9248, %v9518
    %9520 = vdwg.mxu0
    %9521 = vmatprep.subr.mxu0 %v8940
    %9522 = vmatpush1.msra.mxu0 %v8939
    %9523 = vmatprep.subr.mxu0 %v8956
    %9524 = vmatpush1.msra.mxu0 %v8955
    %9525 = vmatprep.subr.mxu0 %v8972
    %9526 = vmatpush1.msra.mxu0 %v8971
    %9527 = vmatprep.subr.mxu0 %v8988
    %9528 = vmatpush1.msra.mxu0 %v8987
    %9529 = vmatprep.subr.mxu0 %v9004
    %9530 = vmatpush1.msra.mxu0 %v9003
    %9531 = vmatprep.subr.mxu0 %v9020
    %9532 = vmatpush1.msra.mxu0 %v9019
    %9533 = vmatprep.subr.mxu0 %v9036
    %9534 = vmatpush1.msra.mxu0 %v9035
    %9535 = vmatprep.subr.mxu0 %v9052
    %9536 = vmatpush1.msra.mxu0 %v9051
    %9537 = vmatprep.subr.mxu0 %v9068
    %9538 = vmatpush1.msra.mxu0 %v9067
    %9539 = vmatprep.subr.mxu0 %v9084
    %9540 = vmatpush1.msra.mxu0 %v9083
    %9541 = vmatprep.subr.mxu0 %v9100
    %9542 = vmatpush1.msra.mxu0 %v9099
    %9543 = vmatprep.subr.mxu0 %v9116
    %9544 = vmatpush1.msra.mxu0 %v9115
    %9545 = vmatprep.subr.mxu0 %v9132
    %9546 = vmatpush1.msra.mxu0 %v9131
    %9547 = vmatprep.subr.mxu0 %v9148
    %9548 = vmatpush1.msra.mxu0 %v9147
    %9549 = vmatprep.subr.mxu0 %v9164
    %9550 = vmatpush1.msra.mxu0 %v9163
    %9551 = vmatprep.subr.mxu0 %v9180
    %9552 = vmatpush1.msra.mxu0 %v9179
    %9553 = vmatprep.subr.mxu0 %v9196
    %9554 = vmatpush1.msra.mxu0 %v9195
    %9555 = vmatprep.subr.mxu0 %v9212
    %9556 = vmatpush1.msra.mxu0 %v9211
    %9557 = vmatprep.subr.mxu0 0.0
    %9558 = vmatpush1.msra.mxu0 0.0
    %9559 = vmatprep.subr.mxu0 0.0
    %9560 = vmatpush1.msra.mxu0 0.0
    %9561 = vmatprep.subr.mxu0 0.0
    %9562 = vmatpush1.msra.mxu0 0.0
    %9563 = vmatprep.subr.mxu0 0.0
    %9564 = vmatpush1.msra.mxu0 0.0
    %9565 = vmatprep.subr.mxu0 0.0
    %9566 = vmatpush1.msra.mxu0 0.0
    %9567 = vmatprep.subr.mxu0 0.0
    %9568 = vmatpush1.msra.mxu0 0.0
    %9569 = vmatprep.subr.mxu0 0.0
    %9570 = vmatpush1.msra.mxu0 0.0
    %9571 = vmatprep.subr.mxu0 0.0
    %9572 = vmatpush1.msra.mxu0 0.0
    %9573 = vmatprep.subr.mxu0 0.0
    %9574 = vmatpush1.msra.mxu0 0.0
    %9575 = vmatprep.subr.mxu0 0.0
    %9576 = vmatpush1.msra.mxu0 0.0
    %9577 = vmatprep.subr.mxu0 0.0
    %9578 = vmatpush1.msra.mxu0 0.0
    %9579 = vmatprep.subr.mxu0 0.0
    %9580 = vmatpush1.msra.mxu0 0.0
    %9581 = vmatprep.subr.mxu0 0.0
    %9582 = vmatpush1.msra.mxu0 0.0
    %9583 = vmatprep.subr.mxu0 0.0
    %9584 = vmatpush1.msra.mxu0 0.0
    %9585 = vmatprep.mubr.f32.mxu0 %v9306
    %9586 = vmatmul.mubr.f32.gmra.mrb[0].mxu0 %v8931
    %v9587 = vpop.f32.mrb[0].mxu0
    %v9588 = vadd.f32 %v9252, %v9587
    %v9589 = vpop.f32.mrb[0].mxu0
    %v9590 = vadd.f32 %v9256, %v9589
    %9591 = vdwg.mxu0
    %9592 = vmatprep.subr.mxu0 %v8942
    %9593 = vmatpush1.msra.mxu0 %v8941
    %9594 = vmatprep.subr.mxu0 %v8958
    %9595 = vmatpush1.msra.mxu0 %v8957
    %9596 = vmatprep.subr.mxu0 %v8974
    %9597 = vmatpush1.msra.mxu0 %v8973
    %9598 = vmatprep.subr.mxu0 %v8990
    %9599 = vmatpush1.msra.mxu0 %v8989
    %9600 = vmatprep.subr.mxu0 %v9006
    %9601 = vmatpush1.msra.mxu0 %v9005
    %9602 = vmatprep.subr.mxu0 %v9022
    %9603 = vmatpush1.msra.mxu0 %v9021
    %9604 = vmatprep.subr.mxu0 %v9038
    %9605 = vmatpush1.msra.mxu0 %v9037
    %9606 = vmatprep.subr.mxu0 %v9054
    %9607 = vmatpush1.msra.mxu0 %v9053
    %9608 = vmatprep.subr.mxu0 %v9070
    %9609 = vmatpush1.msra.mxu0 %v9069
    %9610 = vmatprep.subr.mxu0 %v9086
    %9611 = vmatpush1.msra.mxu0 %v9085
    %9612 = vmatprep.subr.mxu0 %v9102
    %9613 = vmatpush1.msra.mxu0 %v9101
    %9614 = vmatprep.subr.mxu0 %v9118
    %9615 = vmatpush1.msra.mxu0 %v9117
    %9616 = vmatprep.subr.mxu0 %v9134
    %9617 = vmatpush1.msra.mxu0 %v9133
    %9618 = vmatprep.subr.mxu0 %v9150
    %9619 = vmatpush1.msra.mxu0 %v9149
    %9620 = vmatprep.subr.mxu0 %v9166
    %9621 = vmatpush1.msra.mxu0 %v9165
    %9622 = vmatprep.subr.mxu0 %v9182
    %9623 = vmatpush1.msra.mxu0 %v9181
    %9624 = vmatprep.subr.mxu0 %v9198
    %9625 = vmatpush1.msra.mxu0 %v9197
    %9626 = vmatprep.subr.mxu0 %v9214
    %9627 = vmatpush1.msra.mxu0 %v9213
    %9628 = vmatprep.subr.mxu0 0.0
    %9629 = vmatpush1.msra.mxu0 0.0
    %9630 = vmatprep.subr.mxu0 0.0
    %9631 = vmatpush1.msra.mxu0 0.0
    %9632 = vmatprep.subr.mxu0 0.0
    %9633 = vmatpush1.msra.mxu0 0.0
    %9634 = vmatprep.subr.mxu0 0.0
    %9635 = vmatpush1.msra.mxu0 0.0
    %9636 = vmatprep.subr.mxu0 0.0
    %9637 = vmatpush1.msra.mxu0 0.0
    %9638 = vmatprep.subr.mxu0 0.0
    %9639 = vmatpush1.msra.mxu0 0.0
    %9640 = vmatprep.subr.mxu0 0.0
    %9641 = vmatpush1.msra.mxu0 0.0
    %9642 = vmatprep.subr.mxu0 0.0
    %9643 = vmatpush1.msra.mxu0 0.0
    %9644 = vmatprep.subr.mxu0 0.0
    %9645 = vmatpush1.msra.mxu0 0.0
    %9646 = vmatprep.subr.mxu0 0.0
    %9647 = vmatpush1.msra.mxu0 0.0
    %9648 = vmatprep.subr.mxu0 0.0
    %9649 = vmatpush1.msra.mxu0 0.0
    %9650 = vmatprep.subr.mxu0 0.0
    %9651 = vmatpush1.msra.mxu0 0.0
    %9652 = vmatprep.subr.mxu0 0.0
    %9653 = vmatpush1.msra.mxu0 0.0
    %9654 = vmatprep.subr.mxu0 0.0
    %9655 = vmatpush1.msra.mxu0 0.0
    %9656 = vmatprep.mubr.f32.mxu0 %v9306
    %9657 = vmatmul.mubr.f32.gmra.mrb[0].mxu0 %v8931
    %v9658 = vpop.f32.mrb[0].mxu0
    %v9659 = vadd.f32 %v9260, %v9658
    %v9660 = vpop.f32.mrb[0].mxu0
    %v9661 = vadd.f32 %v9264, %v9660
    %9662 = vdwg.mxu0
    %9663 = vmatprep.subr.mxu0 %v8944
    %9664 = vmatpush1.msra.mxu0 %v8943
    %9665 = vmatprep.subr.mxu0 %v8960
    %9666 = vmatpush1.msra.mxu0 %v8959
    %9667 = vmatprep.subr.mxu0 %v8976
    %9668 = vmatpush1.msra.mxu0 %v8975
    %9669 = vmatprep.subr.mxu0 %v8992
    %9670 = vmatpush1.msra.mxu0 %v8991
    %9671 = vmatprep.subr.mxu0 %v9008
    %9672 = vmatpush1.msra.mxu0 %v9007
    %9673 = vmatprep.subr.mxu0 %v9024
    %9674 = vmatpush1.msra.mxu0 %v9023
    %9675 = vmatprep.subr.mxu0 %v9040
    %9676 = vmatpush1.msra.mxu0 %v9039
    %9677 = vmatprep.subr.mxu0 %v9056
    %9678 = vmatpush1.msra.mxu0 %v9055
    %9679 = vmatprep.subr.mxu0 %v9072
    %9680 = vmatpush1.msra.mxu0 %v9071
    %9681 = vmatprep.subr.mxu0 %v9088
    %9682 = vmatpush1.msra.mxu0 %v9087
    %9683 = vmatprep.subr.mxu0 %v9104
    %9684 = vmatpush1.msra.mxu0 %v9103
    %9685 = vmatprep.subr.mxu0 %v9120
    %9686 = vmatpush1.msra.mxu0 %v9119
    %9687 = vmatprep.subr.mxu0 %v9136
    %9688 = vmatpush1.msra.mxu0 %v9135
    %9689 = vmatprep.subr.mxu0 %v9152
    %9690 = vmatpush1.msra.mxu0 %v9151
    %9691 = vmatprep.subr.mxu0 %v9168
    %9692 = vmatpush1.msra.mxu0 %v9167
    %9693 = vmatprep.subr.mxu0 %v9184
    %9694 = vmatpush1.msra.mxu0 %v9183
    %9695 = vmatprep.subr.mxu0 %v9200
    %9696 = vmatpush1.msra.mxu0 %v9199
    %9697 = vmatprep.subr.mxu0 %v9216
    %9698 = vmatpush1.msra.mxu0 %v9215
    %9699 = vmatprep.subr.mxu0 0.0
    %9700 = vmatpush1.msra.mxu0 0.0
    %9701 = vmatprep.subr.mxu0 0.0
    %9702 = vmatpush1.msra.mxu0 0.0
    %9703 = vmatprep.subr.mxu0 0.0
    %9704 = vmatpush1.msra.mxu0 0.0
    %9705 = vmatprep.subr.mxu0 0.0
    %9706 = vmatpush1.msra.mxu0 0.0
    %9707 = vmatprep.subr.mxu0 0.0
    %9708 = vmatpush1.msra.mxu0 0.0
    %9709 = vmatprep.subr.mxu0 0.0
    %9710 = vmatpush1.msra.mxu0 0.0
    %9711 = vmatprep.subr.mxu0 0.0
    %9712 = vmatpush1.msra.mxu0 0.0
    %9713 = vmatprep.subr.mxu0 0.0
    %9714 = vmatpush1.msra.mxu0 0.0
    %9715 = vmatprep.subr.mxu0 0.0
    %9716 = vmatpush1.msra.mxu0 0.0
    %9717 = vmatprep.subr.mxu0 0.0
    %9718 = vmatpush1.msra.mxu0 0.0
    %9719 = vmatprep.subr.mxu0 0.0
    %9720 = vmatpush1.msra.mxu0 0.0
    %9721 = vmatprep.subr.mxu0 0.0
    %9722 = vmatpush1.msra.mxu0 0.0
    %9723 = vmatprep.subr.mxu0 0.0
    %9724 = vmatpush1.msra.mxu0 0.0
    %9725 = vmatprep.subr.mxu0 0.0
    %9726 = vmatpush1.msra.mxu0 0.0
    %9727 = vmatprep.mubr.f32.mxu0 %v9306
    %9728 = vmatmul.mubr.f32.gmra.mrb[0].mxu0 %v8931
    %v9729 = vpop.f32.mrb[0].mxu0
    %v9730 = vadd.f32 %v9268, %v9729
    %v9731 = vpop.f32.mrb[0].mxu0
    %v9732 = vadd.f32 %v9272, %v9731
    %9733 = vdwg.mxu0
    %9734 = vmatprep.subr.mxu0 %v8946
    %9735 = vmatpush1.msra.mxu0 %v8945
    %9736 = vmatprep.subr.mxu0 %v8962
    %9737 = vmatpush1.msra.mxu0 %v8961
    %9738 = vmatprep.subr.mxu0 %v8978
    %9739 = vmatpush1.msra.mxu0 %v8977
    %9740 = vmatprep.subr.mxu0 %v8994
    %9741 = vmatpush1.msra.mxu0 %v8993
    %9742 = vmatprep.subr.mxu0 %v9010
    %9743 = vmatpush1.msra.mxu0 %v9009
    %9744 = vmatprep.subr.mxu0 %v9026
    %9745 = vmatpush1.msra.mxu0 %v9025
    %9746 = vmatprep.subr.mxu0 %v9042
    %9747 = vmatpush1.msra.mxu0 %v9041
    %9748 = vmatprep.subr.mxu0 %v9058
    %9749 = vmatpush1.msra.mxu0 %v9057
    %9750 = vmatprep.subr.mxu0 %v9074
    %9751 = vmatpush1.msra.mxu0 %v9073
    %9752 = vmatprep.subr.mxu0 %v9090
    %9753 = vmatpush1.msra.mxu0 %v9089
    %9754 = vmatprep.subr.mxu0 %v9106
    %9755 = vmatpush1.msra.mxu0 %v9105
    %9756 = vmatprep.subr.mxu0 %v9122
    %9757 = vmatpush1.msra.mxu0 %v9121
    %9758 = vmatprep.subr.mxu0 %v9138
    %9759 = vmatpush1.msra.mxu0 %v9137
    %9760 = vmatprep.subr.mxu0 %v9154
    %9761 = vmatpush1.msra.mxu0 %v9153
    %9762 = vmatprep.subr.mxu0 %v9170
    %9763 = vmatpush1.msra.mxu0 %v9169
    %9764 = vmatprep.subr.mxu0 %v9186
    %9765 = vmatpush1.msra.mxu0 %v9185
    %9766 = vmatprep.subr.mxu0 %v9202
    %9767 = vmatpush1.msra.mxu0 %v9201
    %9768 = vmatprep.subr.mxu0 %v9218
    %9769 = vmatpush1.msra.mxu0 %v9217
    %9770 = vmatprep.subr.mxu0 0.0
    %9771 = vmatpush1.msra.mxu0 0.0
    %9772 = vmatprep.subr.mxu0 0.0
    %9773 = vmatpush1.msra.mxu0 0.0
    %9774 = vmatprep.subr.mxu0 0.0
    %9775 = vmatpush1.msra.mxu0 0.0
    %9776 = vmatprep.subr.mxu0 0.0
    %9777 = vmatpush1.msra.mxu0 0.0
    %9778 = vmatprep.subr.mxu0 0.0
    %9779 = vmatpush1.msra.mxu0 0.0
    %9780 = vmatprep.subr.mxu0 0.0
    %9781 = vmatpush1.msra.mxu0 0.0
    %9782 = vmatprep.subr.mxu0 0.0
    %9783 = vmatpush1.msra.mxu0 0.0
    %9784 = vmatprep.subr.mxu0 0.0
    %9785 = vmatpush1.msra.mxu0 0.0
    %9786 = vmatprep.subr.mxu0 0.0
    %9787 = vmatpush1.msra.mxu0 0.0
    %9788 = vmatprep.subr.mxu0 0.0
    %9789 = vmatpush1.msra.mxu0 0.0
    %9790 = vmatprep.subr.mxu0 0.0
    %9791 = vmatpush1.msra.mxu0 0.0
    %9792 = vmatprep.subr.mxu0 0.0
    %9793 = vmatpush1.msra.mxu0 0.0
    %9794 = vmatprep.subr.mxu0 0.0
    %9795 = vmatpush1.msra.mxu0 0.0
    %9796 = vmatprep.subr.mxu0 0.0
    %9797 = vmatpush1.msra.mxu0 0.0
    %9798 = vmatprep.mubr.f32.mxu0 %v9306
    %9799 = vmatmul.mubr.f32.gmra.mrb[0].mxu0 %v8931
    %v9800 = vpop.f32.mrb[0].mxu0
    %v9801 = vadd.f32 %v9276, %v9800
    %v9802 = vpop.f32.mrb[0].mxu0
    %v9803 = vadd.f32 %v9280, %v9802
    %9804 = vdwg.mxu0
    %9805 = vmatprep.subr.mxu0 %v8948
    %9806 = vmatpush1.msra.mxu0 %v8947
    %9807 = vmatprep.subr.mxu0 %v8964
    %9808 = vmatpush1.msra.mxu0 %v8963
    %9809 = vmatprep.subr.mxu0 %v8980
    %9810 = vmatpush1.msra.mxu0 %v8979
    %9811 = vmatprep.subr.mxu0 %v8996
    %9812 = vmatpush1.msra.mxu0 %v8995
    %9813 = vmatprep.subr.mxu0 %v9012
    %9814 = vmatpush1.msra.mxu0 %v9011
    %9815 = vmatprep.subr.mxu0 %v9028
    %9816 = vmatpush1.msra.mxu0 %v9027
    %9817 = vmatprep.subr.mxu0 %v9044
    %9818 = vmatpush1.msra.mxu0 %v9043
    %9819 = vmatprep.subr.mxu0 %v9060
    %9820 = vmatpush1.msra.mxu0 %v9059
    %9821 = vmatprep.subr.mxu0 %v9076
    %9822 = vmatpush1.msra.mxu0 %v9075
    %9823 = vmatprep.subr.mxu0 %v9092
    %9824 = vmatpush1.msra.mxu0 %v9091
    %9825 = vmatprep.subr.mxu0 %v9108
    %9826 = vmatpush1.msra.mxu0 %v9107
    %9827 = vmatprep.subr.mxu0 %v9124
    %9828 = vmatpush1.msra.mxu0 %v9123
    %9829 = vmatprep.subr.mxu0 %v9140
    %9830 = vmatpush1.msra.mxu0 %v9139
    %9831 = vmatprep.subr.mxu0 %v9156
    %9832 = vmatpush1.msra.mxu0 %v9155
    %9833 = vmatprep.subr.mxu0 %v9172
    %9834 = vmatpush1.msra.mxu0 %v9171
    %9835 = vmatprep.subr.mxu0 %v9188
    %9836 = vmatpush1.msra.mxu0 %v9187
    %9837 = vmatprep.subr.mxu0 %v9204
    %9838 = vmatpush1.msra.mxu0 %v9203
    %9839 = vmatprep.subr.mxu0 %v9220
    %9840 = vmatpush1.msra.mxu0 %v9219
    %9841 = vmatprep.subr.mxu0 0.0
    %9842 = vmatpush1.msra.mxu0 0.0
    %9843 = vmatprep.subr.mxu0 0.0
    %9844 = vmatpush1.msra.mxu0 0.0
    %9845 = vmatprep.subr.mxu0 0.0
    %9846 = vmatpush1.msra.mxu0 0.0
    %9847 = vmatprep.subr.mxu0 0.0
    %9848 = vmatpush1.msra.mxu0 0.0
    %9849 = vmatprep.subr.mxu0 0.0
    %9850 = vmatpush1.msra.mxu0 0.0
    %9851 = vmatprep.subr.mxu0 0.0
    %9852 = vmatpush1.msra.mxu0 0.0
    %9853 = vmatprep.subr.mxu0 0.0
    %9854 = vmatpush1.msra.mxu0 0.0
    %9855 = vmatprep.subr.mxu0 0.0
    %9856 = vmatpush1.msra.mxu0 0.0
    %9857 = vmatprep.subr.mxu0 0.0
    %9858 = vmatpush1.msra.mxu0 0.0
    %9859 = vmatprep.subr.mxu0 0.0
    %9860 = vmatpush1.msra.mxu0 0.0
    %9861 = vmatprep.subr.mxu0 0.0
    %9862 = vmatpush1.msra.mxu0 0.0
    %9863 = vmatprep.subr.mxu0 0.0
    %9864 = vmatpush1.msra.mxu0 0.0
    %9865 = vmatprep.subr.mxu0 0.0
    %9866 = vmatpush1.msra.mxu0 0.0
    %9867 = vmatprep.subr.mxu0 0.0
    %9868 = vmatpush1.msra.mxu0 0.0
    %9869 = vmatprep.mubr.f32.mxu0 %v9306
    %9870 = vmatmul.mubr.f32.gmra.mrb[0].mxu0 %v8931
    %v9871 = vpop.f32.mrb[0].mxu0
    %v9872 = vadd.f32 %v9284, %v9871
    %v9873 = vpop.f32.mrb[0].mxu0
    %v9874 = vadd.f32 %v9288, %v9873
    %9875 = vdwg.mxu0
    %v9876 = vmax.f32 %v9375, 0.0
    %v9877 = vmax.f32 %v9377, 0.0
    %v9878 = vmax.f32 %v9446, 0.0
    %v9879 = vmax.f32 %v9448, 0.0
    %v9880 = vmax.f32 %v9517, 0.0
    %v9881 = vmax.f32 %v9519, 0.0
    %v9882 = vmax.f32 %v9588, 0.0
    %v9883 = vmax.f32 %v9590, 0.0
    %v9884 = vmax.f32 %v9659, 0.0
    %v9885 = vmax.f32 %v9661, 0.0
    %v9886 = vmax.f32 %v9730, 0.0
    %v9887 = vmax.f32 %v9732, 0.0
    %v9888 = vmax.f32 %v9801, 0.0
    %v9889 = vmax.f32 %v9803, 0.0
    %v9890 = vmax.f32 %v9872, 0.0
    %v9891 = vmax.f32 %v9874, 0.0
    %v9892 = vpack.c.bf16 %v9876, %v9876
    %v9893 = vpack.c.bf16 %v9877, %v9877
    %v9894 = vpack.c.bf16 %v9878, %v9878
    %v9895 = vpack.c.bf16 %v9879, %v9879
    %v9896 = vpack.c.bf16 %v9880, %v9880
    %v9897 = vpack.c.bf16 %v9881, %v9881
    %v9898 = vpack.c.bf16 %v9882, %v9882
    %v9899 = vpack.c.bf16 %v9883, %v9883
    %v9900 = vpack.c.bf16 %v9884, %v9884
    %v9901 = vpack.c.bf16 %v9885, %v9885
    %v9902 = vpack.c.bf16 %v9886, %v9886
    %v9903 = vpack.c.bf16 %v9887, %v9887
    %v9904 = vpack.c.bf16 %v9888, %v9888
    %v9905 = vpack.c.bf16 %v9889, %v9889
    %v9906 = vpack.c.bf16 %v9890, %v9890
    %v9907 = vpack.c.bf16 %v9891, %v9891
    %v9924 = vunpack.c.l.b16 %v9892
    %v9925 = vunpack.c.l.b16 %v9893
    %v9926 = vunpack.c.l.b16 %v9894
    %v9927 = vunpack.c.l.b16 %v9895
    %v9928 = vunpack.c.l.b16 %v9896
    %v9929 = vunpack.c.l.b16 %v9897
    %v9930 = vunpack.c.l.b16 %v9898
    %v9931 = vunpack.c.l.b16 %v9899
    %v9932 = vunpack.c.l.b16 %v9900
    %v9933 = vunpack.c.l.b16 %v9901
    %v9934 = vunpack.c.l.b16 %v9902
    %v9935 = vunpack.c.l.b16 %v9903
    %v9936 = vunpack.c.l.b16 %v9904
    %v9937 = vunpack.c.l.b16 %v9905
    %v9938 = vunpack.c.l.b16 %v9906
    %v9939 = vunpack.c.l.b16 %v9907
    %v9940 = vpack.c.b16 %v9925, %v9924
    %v9941 = vpack.c.b16 %v9927, %v9926
    %v9942 = vpack.c.b16 %v9929, %v9928
    %v9943 = vpack.c.b16 %v9931, %v9930
    %v9944 = vpack.c.b16 %v9933, %v9932
    %v9945 = vpack.c.b16 %v9935, %v9934
    %v9946 = vpack.c.b16 %v9937, %v9936
    %v9947 = vpack.c.b16 %v9939, %v9938
    %9956 = vst [vmem:[#allocation19] sm:$0xff] %v9940
    %9957 = vst [vmem:[#allocation19 + $0x8] sm:$0xff] %v9941
    %9958 = vst [vmem:[#allocation19 + $0x10] sm:$0xff] %v9942
    %9959 = vst [vmem:[#allocation19 + $0x18] sm:$0xff] %v9943
    %9960 = vst [vmem:[#allocation19 + $0x20] sm:$0xff] %v9944
    %9961 = vst [vmem:[#allocation19 + $0x28] sm:$0xff] %v9945
    %9962 = vst [vmem:[#allocation19 + $0x30] sm:$0xff] %v9946
    %9963 = vst [vmem:[#allocation19 + $0x38] sm:$0xff] %v9947
    // Predicated region
    $region118: #{tpu_custom_call.1} parent=1 // pred_check
      _
    $region119: #{tpu_custom_call.1} parent=1 // pred_check_branch
      %9965 = sbr.rel (0) target = $region121
    $region120: #{tpu_custom_call.1} parent=1 // pred_region
      %s9967 = ssub.s32 1024, 1024
      %9968 = vsyncadd [#allocation4], %s9967
      %s9970 = sshll.u32 [#allocation19], 4
      %s9971 = int_to_ptr.vmem [resolvable:$true] %s9970
      %9973 = dma.vmem_to_hbm [thread:$0]  %s9971, 1024, %s19, [#allocation4]
    $region121: #{tpu_custom_call.1} parent=1 // pred_fallthru
      _
    // Predicated region
    $region122: #{tpu_custom_call.1} parent=1 // pred_check
      _
    $region123: #{tpu_custom_call.1} parent=1 // pred_check_branch
      %9975 = sbr.rel (0) target = $region125
    $region124: #{tpu_custom_call.1} parent=1 // pred_region
      %9976 = dma.done [#allocation4], 1024
    $region125: #{tpu_custom_call.1} parent=1 // pred_fallthru
      _
    %9977 = vsyncpa [#allocation3], 1
    %9978 = vsyncpa [#allocation6], 1
    %9979 = vsyncpa [#allocation9], 1
    %9980 = vsyncpa [#allocation12], 1
    %9981 = vsyncpa [#allocation15], 1
    %9982 = vsyncpa [#allocation18], 1
    %9983 = vsyncpa [#allocation4], 1

</llo_original>
